<compile_context>
chip_gen: v6e
topology: v6e:2x2x1
jax: 0.10.0
libtpu: 0.0.40
codegen_flags: <defaults>
</compile_context>

<pallas_src>
import functools
import numpy as np

import jax
import jax.numpy as jnp
from jax.experimental import pallas as pl
from jax.experimental.pallas import tpu as pltpu


def _round_up(x, m):
    return ((x + m - 1) // m) * m


# ----------------------------------------------------------------------------
# Pallas kernels
# ----------------------------------------------------------------------------

def _mm_epilogue_kernel(a_ref, w_ref, scale_ref, shift_ref, alpha_ref, o_ref,
                        *, act, compute_dtype):
    """out = act((A @ W) * scale + shift), per-output-channel scale/shift/alpha.

    act in {'none', 'prelu', 'gelu'}; epilogue math stays f32 (safe on v5e too)."""
    a = a_ref[...].astype(compute_dtype)
    w = w_ref[...].astype(compute_dtype)
    y = jnp.dot(a, w, preferred_element_type=jnp.float32)
    y = y * scale_ref[...] + shift_ref[...]                 # (1, N) lane broadcast
    if act == "prelu":
        y = jnp.where(y >= 0.0, y, alpha_ref[...] * y)
    elif act == "gelu":
        c = np.float32(np.sqrt(2.0 / np.pi))
        y = 0.5 * y * (1.0 + jnp.tanh(c * (y + 0.044715 * y * y * y)))
    o_ref[...] = y


def fused_matmul(a, w, scale, shift, alpha, *, act="none", bf16=True, tm_max=512):
    """a:(M,K) f32, w:(K,N) f32/bf16, scale/shift/alpha:(1,N) f32 -> (M,N) f32.

    Grid only over M; K and N are full-extent blocks.  For every matmul in this model
    the whole operand set is one VMEM-resident block (grid=(1,)), so there is no
    K-accumulator scratch and no padding round trips."""
    M, K = a.shape
    K2, N = w.shape
    assert K == K2, (K, K2)
    Mp = _round_up(M, 8)
    if Mp > tm_max:
        tm = tm_max
        Mp = _round_up(Mp, tm)
    else:
        tm = Mp
    if Mp != M:
        a = jnp.pad(a, ((0, Mp - M), (0, 0)))      # never taken at this model's shapes
    compute_dtype = jnp.bfloat16 if bf16 else jnp.float32
    kernel = functools.partial(_mm_epilogue_kernel, act=act,
                               compute_dtype=compute_dtype)
    out = pl.pallas_call(
        kernel,
        out_shape=jax.ShapeDtypeStruct((Mp, N), jnp.float32),
        grid_spec=pltpu.PrefetchScalarGridSpec(
            num_scalar_prefetch=0,
            grid=(Mp // tm,),
            in_specs=[
                pl.BlockSpec((tm, K), lambda i: (i, 0)),
                pl.BlockSpec((K, N), lambda i: (0, 0)),
                pl.BlockSpec((1, N), lambda i: (0, 0)),
                pl.BlockSpec((1, N), lambda i: (0, 0)),
                pl.BlockSpec((1, N), lambda i: (0, 0)),
            ],
            out_specs=pl.BlockSpec((tm, N), lambda i: (i, 0)),
        ),
        compiler_params=pltpu.CompilerParams(
            dimension_semantics=("parallel",)),
    )(a, w, scale, shift, alpha)
    return out if Mp == M else out[:M]


def _dw3x3_residual_kernel(xp_ref, w_ref, o_ref, *, H, W):
    """RepMixer inference form: out = x + depthwise3x3(x), residual fused in-kernel.

    xp_ref: (N, H+2, W+2, C) zero-padded NHWC input; w_ref: (3,3,C); o_ref: (N,H,W,C)."""
    xp = xp_ref[...]
    w = w_ref[...]
    acc = xp[:, 1:1 + H, 1:1 + W, :]              # the residual = unpadded input
    for i in range(3):
        for j in range(3):
            acc = acc + xp[:, i:i + H, j:j + W, :] * w[i, j][None, None, None, :]
    o_ref[...] = acc


def repmixer(x, w):
    # TODO(synk): RepMixer source not provided; using the re-parameterized inference
    #             form x + dwconv3x3(x).
    # TODO(synk): for real image sizes this needs a grid/BlockSpecs (flatten (N,H) onto
    #             sublanes, pad C to 128 lanes, pltpu.roll shifts); trivial at 8x8/4x4.
    N, H, W, C = x.shape
    xp = jnp.pad(x, ((0, 0), (1, 1), (1, 1), (0, 0)))
    return pl.pallas_call(
        functools.partial(_dw3x3_residual_kernel, H=H, W=W),
        out_shape=jax.ShapeDtypeStruct((N, H, W, C), jnp.float32),
    )(xp, w)


# ----------------------------------------------------------------------------
# Layer helpers (NHWC-resident glue around the Pallas hot path)
# ----------------------------------------------------------------------------

def _im2col_nhwc(x, k, stride, pad, k_round=8):
    """NHWC im2col -> (N*Ho*Wo, round_up(k*k*C, 8)); column order is (i, j, cin).
    TODO(synk): fold this into the matmul K grid via element-offset BlockSpecs for
                large resolutions; at 16x16 the matmul launch dominates, not this."""
    N, H, W, C = x.shape
    xp = jnp.pad(x, ((0, 0), (pad, pad), (pad, pad), (0, 0)))
    Ho = (H + 2 * pad - k) // stride + 1
    Wo = (W + 2 * pad - k) // stride + 1
    cols = []
    for i in range(k):
        for j in range(k):
            cols.append(xp[:, i:i + (Ho - 1) * stride + 1:stride,
                            j:j + (Wo - 1) * stride + 1:stride, :])
    k_tot = k * k * C
    k_pad = _round_up(k_tot, k_round)
    if k_pad != k_tot:
        cols.append(jnp.zeros((N, Ho, Wo, k_pad - k_tot), x.dtype))
    cols = jnp.concatenate(cols, axis=-1).reshape(N * Ho * Wo, k_pad)
    return cols, Ho, Wo


def conv_block(x, layer, *, k, stride, pad, act, bf16=True):
    """Conv (+folded bias/BN/activation epilogue) as one fused Pallas matmul."""
    w2, scale, shift, alpha = layer
    N = x.shape[0]
    cols, Ho, Wo = _im2col_nhwc(x, k, stride, pad)
    y = fused_matmul(cols, w2, scale, shift, alpha, act=act, bf16=bf16)
    return y.reshape(N, Ho, Wo, w2.shape[1])


def conv_ffn(x, layer):
    # TODO(synk): ConvFFN source not provided; using 1x1-conv -> GELU -> 1x1-conv + res.
    (w1, s1, t1, a1), (w2, s2, t2, a2) = layer
    N, H, W, C = x.shape
    xt = x.reshape(N * H * W, C)
    h = fused_matmul(xt, w1, s1, t1, a1, act="gelu")
    o = fused_matmul(h, w2, s2, t2, a2, act="none")
    return x + o.reshape(N, H, W, C)


def eca(x, w):
    """ECA: GAP over space + 1D conv (k=3, pad=1, no bias) over channels + sigmoid gate.
    Stays in XLA: it needs a global reduce of the conv output (tiny (N,C) math)."""
    y = x.mean(axis=(1, 2))                      # (N, C), C on lanes
    yp = jnp.pad(y, ((0, 0), (1, 1)))
    g = w[0] * yp[:, :-2] + w[1] * yp[:, 1:-1] + w[2] * yp[:, 2:]
    return x * jax.nn.sigmoid(g)[:, None, None, :]


# ----------------------------------------------------------------------------
# Srnet forward (NHWC resident)
# ----------------------------------------------------------------------------

def srnet_forward(x_nchw, p):
    x = jnp.transpose(x_nchw, (0, 2, 3, 1))      # the ONLY layout transpose

    # pre_layer: conv1 (SRM, 30ch) & conv3 (Gabor, 32ch) fused into one 62-channel
    # matmul (output padded 62->64 with exact zeros); conv2/conv4 outputs are discarded
    # by the PyTorch forward so they are skipped.  Kept in f32 (see correctness note).
    h = conv_block(x, p["pre"], k=5, stride=1, pad=2, act="none", bf16=False)
    h = eca(h, p["eca_w"])
    h = jnp.clip(h, -3.0, 3.0)                   # Hardtanh(-3, 3)

    # BatchNorm2d(62) + PReLU1 as a short elementwise chain (XLA fuses; C on lanes).
    h = h * p["bn0_scale"] + p["bn0_shift"]
    h = jnp.where(h >= 0.0, h, p["prelu1_a"] * h)

    # conv3: 62(->64) -> 32, 3x3; BN + PReLU fused into the matmul epilogue.
    h = conv_block(h, p["c3"], k=3, stride=1, pad=1, act="prelu")

    # type1s: PatchEmbed(s=2, 32->64) + RepMixer(64) + ConvFFN(64,128,64)
    h = conv_block(h, p["pe1"], k=3, stride=2, pad=1, act="gelu")
    h = repmixer(h, p["rm1_w"])
    h = conv_ffn(h, p["ffn1"])
    # type2s: PatchEmbed(s=2, 64->128) + RepMixer(128) + ConvFFN(128,256,128)
    h = conv_block(h, p["pe2"], k=3, stride=2, pad=1, act="gelu")
    h = repmixer(h, p["rm2_w"])
    h = conv_ffn(h, p["ffn2"])
    # type3s: PatchEmbed(s=1, 128->256)
    h = conv_block(h, p["pe3"], k=3, stride=1, pad=1, act="gelu")

    # GAP + classifier head in XLA (2-row matmuls; padding to MXU tiles is slower).
    g = h.mean(axis=(1, 2))
    f = jnp.dot(g, p["fc1_w"]) + p["fc1_b"]
    f = jnp.where(f >= 0.0, f, p["clsp_a"] * f)
    logits = jnp.dot(f, p["fc2_w"]) + p["fc2_b"]
    return jax.nn.sigmoid(logits)


# ----------------------------------------------------------------------------
# Deterministic parameter init + one-time prep (reshape / BN-fold / bf16 cast)
# ----------------------------------------------------------------------------

def _conv_init(key, cout, cin, k, zero_bias=False):
    kw_, kb_ = jax.random.split(key)
    bound = 1.0 / np.sqrt(cin * k * k)
    w = jax.random.uniform(kw_, (cout, cin, k, k), jnp.float32, -bound, bound)
    b = (jnp.zeros((cout,), jnp.float32) if zero_bias else
         jax.random.uniform(kb_, (cout,), jnp.float32, -bound, bound))
    return w, b


def _linear_init(key, cin, cout):
    kw_, kb_ = jax.random.split(key)
    bound = 1.0 / np.sqrt(cin)
    w = jax.random.uniform(kw_, (cin, cout), jnp.float32, -bound, bound)
    b = jax.random.uniform(kb_, (cout,), jnp.float32, -bound, bound)
    return w, b


def _fresh_bn(c):
    # (gamma, beta, running_mean, running_var) for a fresh nn.BatchNorm2d in eval mode.
    return (jnp.ones((c,), jnp.float32), jnp.zeros((c,), jnp.float32),
            jnp.zeros((c,), jnp.float32), jnp.ones((c,), jnp.float32))


def _fold_bn(gamma, beta, mean, var, eps=1e-5):
    s = gamma / jnp.sqrt(var + eps)
    return s, beta - mean * s


def _prep_conv(w, b, *, bn=None, cin_pad=None, cout_pad=None, k_round=8,
               mm_dtype=jnp.bfloat16):
    """PyTorch conv weight (Cout,Cin,kh,kw) -> matmul-ready (K,Cout), rows ordered
    (i, j, cin) to match _im2col_nhwc; bias + eval-BN folded to (scale, shift)."""
    cout, cin, kh, kw = w.shape
    if cin_pad is not None and cin_pad > cin:
        w = jnp.pad(w, ((0, 0), (0, cin_pad - cin), (0, 0), (0, 0)))
        cin = cin_pad
    if cout_pad is not None and cout_pad > cout:
        w = jnp.pad(w, ((0, cout_pad - cout), (0, 0), (0, 0), (0, 0)))
        b = jnp.pad(b, (0, cout_pad - cout))
        cout = cout_pad
    w2 = jnp.transpose(w, (2, 3, 1, 0)).reshape(kh * kw * cin, cout)
    k_tot = kh * kw * cin
    k_pad = _round_up(k_tot, k_round)
    if k_pad != k_tot:
        w2 = jnp.pad(w2, ((0, k_pad - k_tot), (0, 0)))
    if bn is None:
        scale = jnp.ones((cout,), jnp.float32)
        shift = b.astype(jnp.float32)
    else:
        s, t = _fold_bn(*bn)
        scale = s
        shift = b * s + t
    return (w2.astype(mm_dtype),
            scale.reshape(1, cout).astype(jnp.float32),
            shift.reshape(1, cout).astype(jnp.float32))


def _prep_linear(w, b, mm_dtype=jnp.bfloat16):
    cout = w.shape[1]
    ones = jnp.ones((1, cout), jnp.float32)
    return (w.astype(mm_dtype), ones, b.reshape(1, cout).astype(jnp.float32), ones)


def prepare_params(key):
    """Deterministic stand-in weights, pre-reshaped / BN-folded / bf16-cast once so the
    per-call path has zero pad/reshape/transpose work."""
    keys = jax.random.split(key, 32)
    p = {}

    # pre_layer (SRM / Gabor .npy checkpoint weights unavailable -> random stand-ins).
    srm_w, srm_b = _conv_init(keys[0], 30, 1, 5, zero_bias=True)
    gab_w, gab_b = _conv_init(keys[1], 32, 1, 5, zero_bias=True)
    pre_w = jnp.concatenate([srm_w, gab_w], axis=0)          # fuse conv1+conv3: 62 ch
    pre_b = jnp.concatenate([srm_b, gab_b], axis=0)
    w2, s, t = _prep_conv(pre_w, pre_b, cout_pad=64, mm_dtype=jnp.float32)
    p["pre"] = (w2, s, t, jnp.ones_like(s))
    p["eca_w"] = jax.random.normal(keys[2], (3,), jnp.float32) * 0.1

    # BatchNorm2d(62) folded to scale/shift, padded to 64 (padded channels stay 0).
    s0, t0 = _fold_bn(*_fresh_bn(62))
    p["bn0_scale"] = jnp.pad(s0, (0, 2), constant_values=1.0)
    p["bn0_shift"] = jnp.pad(t0, (0, 2))
    p["prelu1_a"] = jnp.float32(0.25)

    # conv3: 62 -> 32, 3x3 (Cin padded to 64); BN(32) + PReLU fused into the epilogue.
    c3_w, c3_b = _conv_init(keys[3], 32, 62, 3)
    prelu_a = jnp.float32(0.25)
    w2, s, t = _prep_conv(c3_w, c3_b, bn=_fresh_bn(32), cin_pad=64)
    p["c3"] = (w2, s, t, jnp.full((1, 32), prelu_a, jnp.float32))

    # TODO(synk): PatchEmbed source not provided; using conv3x3(stride)+BN+GELU.
    w2, s, t = _prep_conv(*_conv_init(keys[4], 64, 32, 3), bn=_fresh_bn(64))
    p["pe1"] = (w2, s, t, jnp.ones_like(s))
    p["rm1_w"] = jax.random.normal(keys[5], (3, 3, 64), jnp.float32) * 0.1
    p["ffn1"] = (_prep_linear(*_linear_init(keys[6], 64, 128)),
                 _prep_linear(*_linear_init(keys[7], 128, 64)))

    w2, s, t = _prep_conv(*_conv_init(keys[8], 128, 64, 3), bn=_fresh_bn(128))
    p["pe2"] = (w2, s, t, jnp.ones_like(s))
    p["rm2_w"] = jax.random.normal(keys[9], (3, 3, 128), jnp.float32) * 0.1
    p["ffn2"] = (_prep_linear(*_linear_init(keys[10], 128, 256)),
                 _prep_linear(*_linear_init(keys[11], 256, 128)))

    w2, s, t = _prep_conv(*_conv_init(keys[12], 256, 128, 3), bn=_fresh_bn(256))
    p["pe3"] = (w2, s, t, jnp.ones_like(s))

    # classifier head (kept in XLA, f32).
    p["fc1_w"], p["fc1_b"] = _linear_init(keys[13], 256, 128)
    p["clsp_a"] = jnp.float32(0.25)
    p["fc2_w"], p["fc2_b"] = _linear_init(keys[14], 128, 2)
    return p


# ----------------------------------------------------------------------------
# main
# ----------------------------------------------------------------------------

if __name__ == "__main__":
    key = jax.random.PRNGKey(0)
    k_in, k_params = jax.random.split(key)

    # Srnet's first convs take a single-channel image: (N=2, C=1, H=16, W=16), NCHW.
    x = jax.random.normal(k_in, (2, 1, 16, 16), jnp.float32)
    params = prepare_params(k_params)

    fwd = jax.jit(srnet_forward)
    out = jax.block_until_ready(fwd(x, params))

    assert out.shape == (2, 2), out.shape
    assert bool(jnp.all(jnp.isfinite(out)))
    print("KERNEL_OK")
</pallas_src>

<mosaic_0001>
module attributes {stable_mosaic.version = 11 : i64} {
  func.func @_mm_epilogue_kernel(%arg0: i32, %arg1: memref<512x32xf32, #tpu.memory_space<vmem>>, %arg2: memref<32x64xf32, #tpu.memory_space<vmem>>, %arg3: memref<1x64xf32, #tpu.memory_space<vmem>>, %arg4: memref<1x64xf32, #tpu.memory_space<vmem>>, %arg5: memref<1x64xf32, #tpu.memory_space<vmem>>, %arg6: memref<512x64xf32, #tpu.memory_space<vmem>>) attributes {dimension_semantics = [#tpu.dimension_semantics<parallel>], iteration_bounds = array<i64: 1>, scalar_prefetch = 0 : i64, scratch_operands = 0 : i64, tpu.core_type = #tpu.core_type<tc>, window_params = [{transform_indices = @transform_0, window_bounds = array<i64: 512, 32>}, {pipeline_mode = #tpu.pipeline_mode<synchronous>, transform_indices = @transform_1, window_bounds = array<i64: 32, 64>}, {pipeline_mode = #tpu.pipeline_mode<synchronous>, transform_indices = @transform_2, window_bounds = array<i64: 1, 64>}, {pipeline_mode = #tpu.pipeline_mode<synchronous>, transform_indices = @transform_3, window_bounds = array<i64: 1, 64>}, {pipeline_mode = #tpu.pipeline_mode<synchronous>, transform_indices = @transform_4, window_bounds = array<i64: 1, 64>}, {transform_indices = @transform_5, window_bounds = array<i64: 512, 64>}]} {
    %c0 = arith.constant 0 : index
    %c0_0 = arith.constant 0 : index
    %0 = vector.load %arg1[%c0, %c0_0] : memref<512x32xf32, #tpu.memory_space<vmem>>, vector<512x32xf32>
    %c0_1 = arith.constant 0 : index
    %c0_2 = arith.constant 0 : index
    %1 = vector.load %arg2[%c0_1, %c0_2] : memref<32x64xf32, #tpu.memory_space<vmem>>, vector<32x64xf32>
    %cst = arith.constant dense<0.000000e+00> : vector<512x64xf32>
    %2 = tpu.matmul %0, %1, %cst {dimension_numbers = #tpu.dot_dimension_numbers<[1], [0], [0], [1], [0, 0, 1, 1], [], []>} : vector<512x32xf32>, vector<32x64xf32>, vector<512x64xf32> -> vector<512x64xf32>
    %c0_3 = arith.constant 0 : index
    %c0_4 = arith.constant 0 : index
    %3 = vector.load %arg3[%c0_3, %c0_4] : memref<1x64xf32, #tpu.memory_space<vmem>>, vector<1x64xf32>
    %4 = vector.broadcast %3 : vector<1x64xf32> to vector<512x64xf32>
    %5 = arith.mulf %2, %4 : vector<512x64xf32>
    %c0_5 = arith.constant 0 : index
    %c0_6 = arith.constant 0 : index
    %6 = vector.load %arg4[%c0_5, %c0_6] : memref<1x64xf32, #tpu.memory_space<vmem>>, vector<1x64xf32>
    %7 = vector.broadcast %6 : vector<1x64xf32> to vector<512x64xf32>
    %8 = arith.addf %5, %7 : vector<512x64xf32>
    %c0_7 = arith.constant 0 : index
    %c0_8 = arith.constant 0 : index
    %9 = vector.load %arg6[%c0_7, %c0_8] : memref<512x64xf32, #tpu.memory_space<vmem>>, vector<512x64xf32>
    tpu.vector_store %arg6[%c0_7, %c0_8], %8 {strides = array<i32>} : memref<512x64xf32, #tpu.memory_space<vmem>>, vector<512x64xf32>,
    return
  }
  func.func @transform_0(%arg0: i32) -> (i32, i32) {
    %c0_i32 = arith.constant 0 : i32
    %c0_i32_0 = arith.constant 0 : i32
    return %arg0, %c0_i32 : i32, i32
  }
  func.func @transform_1(%arg0: i32) -> (i32, i32) {
    %c0_i32 = arith.constant 0 : i32
    %c0_i32_0 = arith.constant 0 : i32
    %c0_i32_1 = arith.constant 0 : i32
    return %c0_i32, %c0_i32_0 : i32, i32
  }
  func.func @transform_2(%arg0: i32) -> (i32, i32) {
    %c0_i32 = arith.constant 0 : i32
    %c0_i32_0 = arith.constant 0 : i32
    %c0_i32_1 = arith.constant 0 : i32
    return %c0_i32, %c0_i32_0 : i32, i32
  }
  func.func @transform_3(%arg0: i32) -> (i32, i32) {
    %c0_i32 = arith.constant 0 : i32
    %c0_i32_0 = arith.constant 0 : i32
    %c0_i32_1 = arith.constant 0 : i32
    return %c0_i32, %c0_i32_0 : i32, i32
  }
  func.func @transform_4(%arg0: i32) -> (i32, i32) {
    %c0_i32 = arith.constant 0 : i32
    %c0_i32_0 = arith.constant 0 : i32
    %c0_i32_1 = arith.constant 0 : i32
    return %c0_i32, %c0_i32_0 : i32, i32
  }
  func.func @transform_5(%arg0: i32) -> (i32, i32) {
    %c0_i32 = arith.constant 0 : i32
    %c0_i32_0 = arith.constant 0 : i32
    return %arg0, %c0_i32 : i32, i32
  }
}

module attributes {stable_mosaic.version = 11 : i64} {
  func.func @_mm_epilogue_kernel(%arg0: i32, %arg1: memref<512x576xf32, #tpu.memory_space<vmem>>, %arg2: memref<576x32xbf16, #tpu.memory_space<vmem>>, %arg3: memref<1x32xf32, #tpu.memory_space<vmem>>, %arg4: memref<1x32xf32, #tpu.memory_space<vmem>>, %arg5: memref<1x32xf32, #tpu.memory_space<vmem>>, %arg6: memref<512x32xf32, #tpu.memory_space<vmem>>) attributes {dimension_semantics = [#tpu.dimension_semantics<parallel>], iteration_bounds = array<i64: 1>, scalar_prefetch = 0 : i64, scratch_operands = 0 : i64, tpu.core_type = #tpu.core_type<tc>, window_params = [{transform_indices = @transform_0, window_bounds = array<i64: 512, 576>}, {pipeline_mode = #tpu.pipeline_mode<synchronous>, transform_indices = @transform_1, window_bounds = array<i64: 576, 32>}, {pipeline_mode = #tpu.pipeline_mode<synchronous>, transform_indices = @transform_2, window_bounds = array<i64: 1, 32>}, {pipeline_mode = #tpu.pipeline_mode<synchronous>, transform_indices = @transform_3, window_bounds = array<i64: 1, 32>}, {pipeline_mode = #tpu.pipeline_mode<synchronous>, transform_indices = @transform_4, window_bounds = array<i64: 1, 32>}, {transform_indices = @transform_5, window_bounds = array<i64: 512, 32>}]} {
    %c0 = arith.constant 0 : index
    %c0_0 = arith.constant 0 : index
    %0 = vector.load %arg1[%c0, %c0_0] : memref<512x576xf32, #tpu.memory_space<vmem>>, vector<512x576xf32>
    %1 = arith.truncf %0 : vector<512x576xf32> to vector<512x576xbf16>
    %c0_1 = arith.constant 0 : index
    %c0_2 = arith.constant 0 : index
    %2 = vector.load %arg2[%c0_1, %c0_2] : memref<576x32xbf16, #tpu.memory_space<vmem>>, vector<576x32xbf16>
    %cst = arith.constant dense<0.000000e+00> : vector<512x32xf32>
    %3 = tpu.matmul %1, %2, %cst {dimension_numbers = #tpu.dot_dimension_numbers<[1], [0], [0], [1], [0, 0, 1, 1], [], []>} : vector<512x576xbf16>, vector<576x32xbf16>, vector<512x32xf32> -> vector<512x32xf32>
    %c0_3 = arith.constant 0 : index
    %c0_4 = arith.constant 0 : index
    %4 = vector.load %arg3[%c0_3, %c0_4] : memref<1x32xf32, #tpu.memory_space<vmem>>, vector<1x32xf32>
    %5 = vector.broadcast %4 : vector<1x32xf32> to vector<512x32xf32>
    %6 = arith.mulf %3, %5 : vector<512x32xf32>
    %c0_5 = arith.constant 0 : index
    %c0_6 = arith.constant 0 : index
    %7 = vector.load %arg4[%c0_5, %c0_6] : memref<1x32xf32, #tpu.memory_space<vmem>>, vector<1x32xf32>
    %8 = vector.broadcast %7 : vector<1x32xf32> to vector<512x32xf32>
    %9 = arith.addf %6, %8 : vector<512x32xf32>
    %cst_7 = arith.constant 0.000000e+00 : f32
    %10 = vector.broadcast %cst_7 : f32 to vector<512x32xf32>
    %11 = arith.cmpf oge, %9, %10 : vector<512x32xf32>
    %c0_8 = arith.constant 0 : index
    %c0_9 = arith.constant 0 : index
    %12 = vector.load %arg5[%c0_8, %c0_9] : memref<1x32xf32, #tpu.memory_space<vmem>>, vector<1x32xf32>
    %13 = vector.broadcast %12 : vector<1x32xf32> to vector<512x32xf32>
    %14 = arith.mulf %13, %9 : vector<512x32xf32>
    %15 = arith.select %11, %9, %14 : vector<512x32xi1>, vector<512x32xf32>
    %c0_10 = arith.constant 0 : index
    %c0_11 = arith.constant 0 : index
    %16 = vector.load %arg6[%c0_10, %c0_11] : memref<512x32xf32, #tpu.memory_space<vmem>>, vector<512x32xf32>
    tpu.vector_store %arg6[%c0_10, %c0_11], %15 {strides = array<i32>} : memref<512x32xf32, #tpu.memory_space<vmem>>, vector<512x32xf32>,
    return
  }
  func.func @transform_0(%arg0: i32) -> (i32, i32) {
    %c0_i32 = arith.constant 0 : i32
    %c0_i32_0 = arith.constant 0 : i32
    return %arg0, %c0_i32 : i32, i32
  }
  func.func @transform_1(%arg0: i32) -> (i32, i32) {
    %c0_i32 = arith.constant 0 : i32
    %c0_i32_0 = arith.constant 0 : i32
    %c0_i32_1 = arith.constant 0 : i32
    return %c0_i32, %c0_i32_0 : i32, i32
  }
  func.func @transform_2(%arg0: i32) -> (i32, i32) {
    %c0_i32 = arith.constant 0 : i32
    %c0_i32_0 = arith.constant 0 : i32
    %c0_i32_1 = arith.constant 0 : i32
    return %c0_i32, %c0_i32_0 : i32, i32
  }
  func.func @transform_3(%arg0: i32) -> (i32, i32) {
    %c0_i32 = arith.constant 0 : i32
    %c0_i32_0 = arith.constant 0 : i32
    %c0_i32_1 = arith.constant 0 : i32
    return %c0_i32, %c0_i32_0 : i32, i32
  }
  func.func @transform_4(%arg0: i32) -> (i32, i32) {
    %c0_i32 = arith.constant 0 : i32
    %c0_i32_0 = arith.constant 0 : i32
    %c0_i32_1 = arith.constant 0 : i32
    return %c0_i32, %c0_i32_0 : i32, i32
  }
  func.func @transform_5(%arg0: i32) -> (i32, i32) {
    %c0_i32 = arith.constant 0 : i32
    %c0_i32_0 = arith.constant 0 : i32
    return %arg0, %c0_i32 : i32, i32
  }
}

module attributes {stable_mosaic.version = 11 : i64} {
  func.func @_mm_epilogue_kernel(%arg0: i32, %arg1: memref<128x288xf32, #tpu.memory_space<vmem>>, %arg2: memref<288x64xbf16, #tpu.memory_space<vmem>>, %arg3: memref<1x64xf32, #tpu.memory_space<vmem>>, %arg4: memref<1x64xf32, #tpu.memory_space<vmem>>, %arg5: memref<1x64xf32, #tpu.memory_space<vmem>>, %arg6: memref<128x64xf32, #tpu.memory_space<vmem>>) attributes {dimension_semantics = [#tpu.dimension_semantics<parallel>], iteration_bounds = array<i64: 1>, scalar_prefetch = 0 : i64, scratch_operands = 0 : i64, tpu.core_type = #tpu.core_type<tc>, window_params = [{transform_indices = @transform_0, window_bounds = array<i64: 128, 288>}, {pipeline_mode = #tpu.pipeline_mode<synchronous>, transform_indices = @transform_1, window_bounds = array<i64: 288, 64>}, {pipeline_mode = #tpu.pipeline_mode<synchronous>, transform_indices = @transform_2, window_bounds = array<i64: 1, 64>}, {pipeline_mode = #tpu.pipeline_mode<synchronous>, transform_indices = @transform_3, window_bounds = array<i64: 1, 64>}, {pipeline_mode = #tpu.pipeline_mode<synchronous>, transform_indices = @transform_4, window_bounds = array<i64: 1, 64>}, {transform_indices = @transform_5, window_bounds = array<i64: 128, 64>}]} {
    %c0 = arith.constant 0 : index
    %c0_0 = arith.constant 0 : index
    %0 = vector.load %arg1[%c0, %c0_0] : memref<128x288xf32, #tpu.memory_space<vmem>>, vector<128x288xf32>
    %1 = arith.truncf %0 : vector<128x288xf32> to vector<128x288xbf16>
    %c0_1 = arith.constant 0 : index
    %c0_2 = arith.constant 0 : index
    %2 = vector.load %arg2[%c0_1, %c0_2] : memref<288x64xbf16, #tpu.memory_space<vmem>>, vector<288x64xbf16>
    %cst = arith.constant dense<0.000000e+00> : vector<128x64xf32>
    %3 = tpu.matmul %1, %2, %cst {dimension_numbers = #tpu.dot_dimension_numbers<[1], [0], [0], [1], [0, 0, 1, 1], [], []>} : vector<128x288xbf16>, vector<288x64xbf16>, vector<128x64xf32> -> vector<128x64xf32>
    %c0_3 = arith.constant 0 : index
    %c0_4 = arith.constant 0 : index
    %4 = vector.load %arg3[%c0_3, %c0_4] : memref<1x64xf32, #tpu.memory_space<vmem>>, vector<1x64xf32>
    %5 = vector.broadcast %4 : vector<1x64xf32> to vector<128x64xf32>
    %6 = arith.mulf %3, %5 : vector<128x64xf32>
    %c0_5 = arith.constant 0 : index
    %c0_6 = arith.constant 0 : index
    %7 = vector.load %arg4[%c0_5, %c0_6] : memref<1x64xf32, #tpu.memory_space<vmem>>, vector<1x64xf32>
    %8 = vector.broadcast %7 : vector<1x64xf32> to vector<128x64xf32>
    %9 = arith.addf %6, %8 : vector<128x64xf32>
    %cst_7 = arith.constant 5.000000e-01 : f32
    %10 = vector.broadcast %cst_7 : f32 to vector<128x64xf32>
    %11 = arith.mulf %10, %9 : vector<128x64xf32>
    %cst_8 = arith.constant 4.471500e-02 : f32
    %12 = vector.broadcast %cst_8 : f32 to vector<128x64xf32>
    %13 = arith.mulf %12, %9 : vector<128x64xf32>
    %14 = arith.mulf %13, %9 : vector<128x64xf32>
    %15 = arith.mulf %14, %9 : vector<128x64xf32>
    %16 = arith.addf %9, %15 : vector<128x64xf32>
    %cst_9 = arith.constant 0.797884583 : f32
    %17 = vector.broadcast %cst_9 : f32 to vector<128x64xf32>
    %18 = arith.mulf %17, %16 : vector<128x64xf32>
    %19 = math.tanh %18 : vector<128x64xf32>
    %cst_10 = arith.constant 1.000000e+00 : f32
    %20 = vector.broadcast %cst_10 : f32 to vector<128x64xf32>
    %21 = arith.addf %20, %19 : vector<128x64xf32>
    %22 = arith.mulf %11, %21 : vector<128x64xf32>
    %c0_11 = arith.constant 0 : index
    %c0_12 = arith.constant 0 : index
    %23 = vector.load %arg6[%c0_11, %c0_12] : memref<128x64xf32, #tpu.memory_space<vmem>>, vector<128x64xf32>
    tpu.vector_store %arg6[%c0_11, %c0_12], %22 {strides = array<i32>} : memref<128x64xf32, #tpu.memory_space<vmem>>, vector<128x64xf32>,
    return
  }
  func.func @transform_0(%arg0: i32) -> (i32, i32) {
    %c0_i32 = arith.constant 0 : i32
    %c0_i32_0 = arith.constant 0 : i32
    return %arg0, %c0_i32 : i32, i32
  }
  func.func @transform_1(%arg0: i32) -> (i32, i32) {
    %c0_i32 = arith.constant 0 : i32
    %c0_i32_0 = arith.constant 0 : i32
    %c0_i32_1 = arith.constant 0 : i32
    return %c0_i32, %c0_i32_0 : i32, i32
  }
  func.func @transform_2(%arg0: i32) -> (i32, i32) {
    %c0_i32 = arith.constant 0 : i32
    %c0_i32_0 = arith.constant 0 : i32
    %c0_i32_1 = arith.constant 0 : i32
    return %c0_i32, %c0_i32_0 : i32, i32
  }
  func.func @transform_3(%arg0: i32) -> (i32, i32) {
    %c0_i32 = arith.constant 0 : i32
    %c0_i32_0 = arith.constant 0 : i32
    %c0_i32_1 = arith.constant 0 : i32
    return %c0_i32, %c0_i32_0 : i32, i32
  }
  func.func @transform_4(%arg0: i32) -> (i32, i32) {
    %c0_i32 = arith.constant 0 : i32
    %c0_i32_0 = arith.constant 0 : i32
    %c0_i32_1 = arith.constant 0 : i32
    return %c0_i32, %c0_i32_0 : i32, i32
  }
  func.func @transform_5(%arg0: i32) -> (i32, i32) {
    %c0_i32 = arith.constant 0 : i32
    %c0_i32_0 = arith.constant 0 : i32
    return %arg0, %c0_i32 : i32, i32
  }
}

module attributes {stable_mosaic.version = 11 : i64} {
  func.func @_dw3x3_residual_kernel(%arg0: memref<2x10x10x64xf32, #tpu.memory_space<vmem>>, %arg1: memref<3x3x64xf32, #tpu.memory_space<vmem>>, %arg2: memref<2x8x8x64xf32, #tpu.memory_space<vmem>>) attributes {dimension_semantics = [], scalar_prefetch = 0 : i64, scratch_operands = 0 : i64, tpu.core_type = #tpu.core_type<tc>} {
    %c0 = arith.constant 0 : index
    %c0_0 = arith.constant 0 : index
    %c0_1 = arith.constant 0 : index
    %c0_2 = arith.constant 0 : index
    %0 = vector.load %arg0[%c0, %c0_0, %c0_1, %c0_2] : memref<2x10x10x64xf32, #tpu.memory_space<vmem>>, vector<2x10x10x64xf32>
    %c0_3 = arith.constant 0 : index
    %c0_4 = arith.constant 0 : index
    %c0_5 = arith.constant 0 : index
    %1 = vector.load %arg1[%c0_3, %c0_4, %c0_5] : memref<3x3x64xf32, #tpu.memory_space<vmem>>, vector<3x3x64xf32>
    %2 = vector.extract_strided_slice %0 {offsets = [0, 1, 1, 0], sizes = [2, 8, 8, 64], strides = [1, 1, 1, 1]} : vector<2x10x10x64xf32> to vector<2x8x8x64xf32>
    %3 = vector.extract_strided_slice %0 {offsets = [0, 0, 0, 0], sizes = [2, 8, 8, 64], strides = [1, 1, 1, 1]} : vector<2x10x10x64xf32> to vector<2x8x8x64xf32>
    %4 = vector.extract_strided_slice %1 {offsets = [0, 0, 0], sizes = [1, 1, 64], strides = [1, 1, 1]} : vector<3x3x64xf32> to vector<1x1x64xf32>
    %5 = vector.shape_cast %4 : vector<1x1x64xf32> to vector<64xf32>
    %6 = vector.shape_cast %5 : vector<64xf32> to vector<1x1x1x64xf32>
    %7 = vector.broadcast %6 : vector<1x1x1x64xf32> to vector<2x8x8x64xf32>
    %8 = arith.mulf %3, %7 : vector<2x8x8x64xf32>
    %9 = arith.addf %2, %8 : vector<2x8x8x64xf32>
    %10 = vector.extract_strided_slice %0 {offsets = [0, 0, 1, 0], sizes = [2, 8, 8, 64], strides = [1, 1, 1, 1]} : vector<2x10x10x64xf32> to vector<2x8x8x64xf32>
    %11 = vector.extract_strided_slice %1 {offsets = [0, 1, 0], sizes = [1, 1, 64], strides = [1, 1, 1]} : vector<3x3x64xf32> to vector<1x1x64xf32>
    %12 = vector.shape_cast %11 : vector<1x1x64xf32> to vector<64xf32>
    %13 = vector.shape_cast %12 : vector<64xf32> to vector<1x1x1x64xf32>
    %14 = vector.broadcast %13 : vector<1x1x1x64xf32> to vector<2x8x8x64xf32>
    %15 = arith.mulf %10, %14 : vector<2x8x8x64xf32>
    %16 = arith.addf %9, %15 : vector<2x8x8x64xf32>
    %17 = vector.extract_strided_slice %0 {offsets = [0, 0, 2, 0], sizes = [2, 8, 8, 64], strides = [1, 1, 1, 1]} : vector<2x10x10x64xf32> to vector<2x8x8x64xf32>
    %18 = vector.extract_strided_slice %1 {offsets = [0, 2, 0], sizes = [1, 1, 64], strides = [1, 1, 1]} : vector<3x3x64xf32> to vector<1x1x64xf32>
    %19 = vector.shape_cast %18 : vector<1x1x64xf32> to vector<64xf32>
    %20 = vector.shape_cast %19 : vector<64xf32> to vector<1x1x1x64xf32>
    %21 = vector.broadcast %20 : vector<1x1x1x64xf32> to vector<2x8x8x64xf32>
    %22 = arith.mulf %17, %21 : vector<2x8x8x64xf32>
    %23 = arith.addf %16, %22 : vector<2x8x8x64xf32>
    %24 = vector.extract_strided_slice %0 {offsets = [0, 1, 0, 0], sizes = [2, 8, 8, 64], strides = [1, 1, 1, 1]} : vector<2x10x10x64xf32> to vector<2x8x8x64xf32>
    %25 = vector.extract_strided_slice %1 {offsets = [1, 0, 0], sizes = [1, 1, 64], strides = [1, 1, 1]} : vector<3x3x64xf32> to vector<1x1x64xf32>
    %26 = vector.shape_cast %25 : vector<1x1x64xf32> to vector<64xf32>
    %27 = vector.shape_cast %26 : vector<64xf32> to vector<1x1x1x64xf32>
    %28 = vector.broadcast %27 : vector<1x1x1x64xf32> to vector<2x8x8x64xf32>
    %29 = arith.mulf %24, %28 : vector<2x8x8x64xf32>
    %30 = arith.addf %23, %29 : vector<2x8x8x64xf32>
    %31 = vector.extract_strided_slice %0 {offsets = [0, 1, 1, 0], sizes = [2, 8, 8, 64], strides = [1, 1, 1, 1]} : vector<2x10x10x64xf32> to vector<2x8x8x64xf32>
    %32 = vector.extract_strided_slice %1 {offsets = [1, 1, 0], sizes = [1, 1, 64], strides = [1, 1, 1]} : vector<3x3x64xf32> to vector<1x1x64xf32>
    %33 = vector.shape_cast %32 : vector<1x1x64xf32> to vector<64xf32>
    %34 = vector.shape_cast %33 : vector<64xf32> to vector<1x1x1x64xf32>
    %35 = vector.broadcast %34 : vector<1x1x1x64xf32> to vector<2x8x8x64xf32>
    %36 = arith.mulf %31, %35 : vector<2x8x8x64xf32>
    %37 = arith.addf %30, %36 : vector<2x8x8x64xf32>
    %38 = vector.extract_strided_slice %0 {offsets = [0, 1, 2, 0], sizes = [2, 8, 8, 64], strides = [1, 1, 1, 1]} : vector<2x10x10x64xf32> to vector<2x8x8x64xf32>
    %39 = vector.extract_strided_slice %1 {offsets = [1, 2, 0], sizes = [1, 1, 64], strides = [1, 1, 1]} : vector<3x3x64xf32> to vector<1x1x64xf32>
    %40 = vector.shape_cast %39 : vector<1x1x64xf32> to vector<64xf32>
    %41 = vector.shape_cast %40 : vector<64xf32> to vector<1x1x1x64xf32>
    %42 = vector.broadcast %41 : vector<1x1x1x64xf32> to vector<2x8x8x64xf32>
    %43 = arith.mulf %38, %42 : vector<2x8x8x64xf32>
    %44 = arith.addf %37, %43 : vector<2x8x8x64xf32>
    %45 = vector.extract_strided_slice %0 {offsets = [0, 2, 0, 0], sizes = [2, 8, 8, 64], strides = [1, 1, 1, 1]} : vector<2x10x10x64xf32> to vector<2x8x8x64xf32>
    %46 = vector.extract_strided_slice %1 {offsets = [2, 0, 0], sizes = [1, 1, 64], strides = [1, 1, 1]} : vector<3x3x64xf32> to vector<1x1x64xf32>
    %47 = vector.shape_cast %46 : vector<1x1x64xf32> to vector<64xf32>
    %48 = vector.shape_cast %47 : vector<64xf32> to vector<1x1x1x64xf32>
    %49 = vector.broadcast %48 : vector<1x1x1x64xf32> to vector<2x8x8x64xf32>
    %50 = arith.mulf %45, %49 : vector<2x8x8x64xf32>
    %51 = arith.addf %44, %50 : vector<2x8x8x64xf32>
    %52 = vector.extract_strided_slice %0 {offsets = [0, 2, 1, 0], sizes = [2, 8, 8, 64], strides = [1, 1, 1, 1]} : vector<2x10x10x64xf32> to vector<2x8x8x64xf32>
    %53 = vector.extract_strided_slice %1 {offsets = [2, 1, 0], sizes = [1, 1, 64], strides = [1, 1, 1]} : vector<3x3x64xf32> to vector<1x1x64xf32>
    %54 = vector.shape_cast %53 : vector<1x1x64xf32> to vector<64xf32>
    %55 = vector.shape_cast %54 : vector<64xf32> to vector<1x1x1x64xf32>
    %56 = vector.broadcast %55 : vector<1x1x1x64xf32> to vector<2x8x8x64xf32>
    %57 = arith.mulf %52, %56 : vector<2x8x8x64xf32>
    %58 = arith.addf %51, %57 : vector<2x8x8x64xf32>
    %59 = vector.extract_strided_slice %0 {offsets = [0, 2, 2, 0], sizes = [2, 8, 8, 64], strides = [1, 1, 1, 1]} : vector<2x10x10x64xf32> to vector<2x8x8x64xf32>
    %60 = vector.extract_strided_slice %1 {offsets = [2, 2, 0], sizes = [1, 1, 64], strides = [1, 1, 1]} : vector<3x3x64xf32> to vector<1x1x64xf32>
    %61 = vector.shape_cast %60 : vector<1x1x64xf32> to vector<64xf32>
    %62 = vector.shape_cast %61 : vector<64xf32> to vector<1x1x1x64xf32>
    %63 = vector.broadcast %62 : vector<1x1x1x64xf32> to vector<2x8x8x64xf32>
    %64 = arith.mulf %59, %63 : vector<2x8x8x64xf32>
    %65 = arith.addf %58, %64 : vector<2x8x8x64xf32>
    %c0_6 = arith.constant 0 : index
    %c0_7 = arith.constant 0 : index
    %c0_8 = arith.constant 0 : index
    %c0_9 = arith.constant 0 : index
    %66 = vector.load %arg2[%c0_6, %c0_7, %c0_8, %c0_9] : memref<2x8x8x64xf32, #tpu.memory_space<vmem>>, vector<2x8x8x64xf32>
    tpu.vector_store %arg2[%c0_6, %c0_7, %c0_8, %c0_9], %65 {strides = array<i32>} : memref<2x8x8x64xf32, #tpu.memory_space<vmem>>, vector<2x8x8x64xf32>,
    return
  }
}

module attributes {stable_mosaic.version = 11 : i64} {
  func.func @_mm_epilogue_kernel(%arg0: i32, %arg1: memref<128x64xf32, #tpu.memory_space<vmem>>, %arg2: memref<64x128xbf16, #tpu.memory_space<vmem>>, %arg3: memref<1x128xf32, #tpu.memory_space<vmem>>, %arg4: memref<1x128xf32, #tpu.memory_space<vmem>>, %arg5: memref<1x128xf32, #tpu.memory_space<vmem>>, %arg6: memref<128x128xf32, #tpu.memory_space<vmem>>) attributes {dimension_semantics = [#tpu.dimension_semantics<parallel>], iteration_bounds = array<i64: 1>, scalar_prefetch = 0 : i64, scratch_operands = 0 : i64, tpu.core_type = #tpu.core_type<tc>, window_params = [{transform_indices = @transform_0, window_bounds = array<i64: 128, 64>}, {pipeline_mode = #tpu.pipeline_mode<synchronous>, transform_indices = @transform_1, window_bounds = array<i64: 64, 128>}, {pipeline_mode = #tpu.pipeline_mode<synchronous>, transform_indices = @transform_2, window_bounds = array<i64: 1, 128>}, {pipeline_mode = #tpu.pipeline_mode<synchronous>, transform_indices = @transform_3, window_bounds = array<i64: 1, 128>}, {pipeline_mode = #tpu.pipeline_mode<synchronous>, transform_indices = @transform_4, window_bounds = array<i64: 1, 128>}, {transform_indices = @transform_5, window_bounds = array<i64: 128, 128>}]} {
    %c0 = arith.constant 0 : index
    %c0_0 = arith.constant 0 : index
    %0 = vector.load %arg1[%c0, %c0_0] : memref<128x64xf32, #tpu.memory_space<vmem>>, vector<128x64xf32>
    %1 = arith.truncf %0 : vector<128x64xf32> to vector<128x64xbf16>
    %c0_1 = arith.constant 0 : index
    %c0_2 = arith.constant 0 : index
    %2 = vector.load %arg2[%c0_1, %c0_2] : memref<64x128xbf16, #tpu.memory_space<vmem>>, vector<64x128xbf16>
    %cst = arith.constant dense<0.000000e+00> : vector<128x128xf32>
    %3 = tpu.matmul %1, %2, %cst {dimension_numbers = #tpu.dot_dimension_numbers<[1], [0], [0], [1], [0, 0, 1, 1], [], []>} : vector<128x64xbf16>, vector<64x128xbf16>, vector<128x128xf32> -> vector<128x128xf32>
    %c0_3 = arith.constant 0 : index
    %c0_4 = arith.constant 0 : index
    %4 = vector.load %arg3[%c0_3, %c0_4] : memref<1x128xf32, #tpu.memory_space<vmem>>, vector<1x128xf32>
    %5 = vector.broadcast %4 : vector<1x128xf32> to vector<128x128xf32>
    %6 = arith.mulf %3, %5 : vector<128x128xf32>
    %c0_5 = arith.constant 0 : index
    %c0_6 = arith.constant 0 : index
    %7 = vector.load %arg4[%c0_5, %c0_6] : memref<1x128xf32, #tpu.memory_space<vmem>>, vector<1x128xf32>
    %8 = vector.broadcast %7 : vector<1x128xf32> to vector<128x128xf32>
    %9 = arith.addf %6, %8 : vector<128x128xf32>
    %cst_7 = arith.constant 5.000000e-01 : f32
    %10 = vector.broadcast %cst_7 : f32 to vector<128x128xf32>
    %11 = arith.mulf %10, %9 : vector<128x128xf32>
    %cst_8 = arith.constant 4.471500e-02 : f32
    %12 = vector.broadcast %cst_8 : f32 to vector<128x128xf32>
    %13 = arith.mulf %12, %9 : vector<128x128xf32>
    %14 = arith.mulf %13, %9 : vector<128x128xf32>
    %15 = arith.mulf %14, %9 : vector<128x128xf32>
    %16 = arith.addf %9, %15 : vector<128x128xf32>
    %cst_9 = arith.constant 0.797884583 : f32
    %17 = vector.broadcast %cst_9 : f32 to vector<128x128xf32>
    %18 = arith.mulf %17, %16 : vector<128x128xf32>
    %19 = math.tanh %18 : vector<128x128xf32>
    %cst_10 = arith.constant 1.000000e+00 : f32
    %20 = vector.broadcast %cst_10 : f32 to vector<128x128xf32>
    %21 = arith.addf %20, %19 : vector<128x128xf32>
    %22 = arith.mulf %11, %21 : vector<128x128xf32>
    %c0_11 = arith.constant 0 : index
    %c0_12 = arith.constant 0 : index
    %23 = vector.load %arg6[%c0_11, %c0_12] : memref<128x128xf32, #tpu.memory_space<vmem>>, vector<128x128xf32>
    tpu.vector_store %arg6[%c0_11, %c0_12], %22 {strides = array<i32>} : memref<128x128xf32, #tpu.memory_space<vmem>>, vector<128x128xf32>,
    return
  }
  func.func @transform_0(%arg0: i32) -> (i32, i32) {
    %c0_i32 = arith.constant 0 : i32
    %c0_i32_0 = arith.constant 0 : i32
    return %arg0, %c0_i32 : i32, i32
  }
  func.func @transform_1(%arg0: i32) -> (i32, i32) {
    %c0_i32 = arith.constant 0 : i32
    %c0_i32_0 = arith.constant 0 : i32
    %c0_i32_1 = arith.constant 0 : i32
    return %c0_i32, %c0_i32_0 : i32, i32
  }
  func.func @transform_2(%arg0: i32) -> (i32, i32) {
    %c0_i32 = arith.constant 0 : i32
    %c0_i32_0 = arith.constant 0 : i32
    %c0_i32_1 = arith.constant 0 : i32
    return %c0_i32, %c0_i32_0 : i32, i32
  }
  func.func @transform_3(%arg0: i32) -> (i32, i32) {
    %c0_i32 = arith.constant 0 : i32
    %c0_i32_0 = arith.constant 0 : i32
    %c0_i32_1 = arith.constant 0 : i32
    return %c0_i32, %c0_i32_0 : i32, i32
  }
  func.func @transform_4(%arg0: i32) -> (i32, i32) {
    %c0_i32 = arith.constant 0 : i32
    %c0_i32_0 = arith.constant 0 : i32
    %c0_i32_1 = arith.constant 0 : i32
    return %c0_i32, %c0_i32_0 : i32, i32
  }
  func.func @transform_5(%arg0: i32) -> (i32, i32) {
    %c0_i32 = arith.constant 0 : i32
    %c0_i32_0 = arith.constant 0 : i32
    return %arg0, %c0_i32 : i32, i32
  }
}

module attributes {stable_mosaic.version = 11 : i64} {
  func.func @_mm_epilogue_kernel(%arg0: i32, %arg1: memref<128x128xf32, #tpu.memory_space<vmem>>, %arg2: memref<128x64xbf16, #tpu.memory_space<vmem>>, %arg3: memref<1x64xf32, #tpu.memory_space<vmem>>, %arg4: memref<1x64xf32, #tpu.memory_space<vmem>>, %arg5: memref<1x64xf32, #tpu.memory_space<vmem>>, %arg6: memref<128x64xf32, #tpu.memory_space<vmem>>) attributes {dimension_semantics = [#tpu.dimension_semantics<parallel>], iteration_bounds = array<i64: 1>, scalar_prefetch = 0 : i64, scratch_operands = 0 : i64, tpu.core_type = #tpu.core_type<tc>, window_params = [{transform_indices = @transform_0, window_bounds = array<i64: 128, 128>}, {pipeline_mode = #tpu.pipeline_mode<synchronous>, transform_indices = @transform_1, window_bounds = array<i64: 128, 64>}, {pipeline_mode = #tpu.pipeline_mode<synchronous>, transform_indices = @transform_2, window_bounds = array<i64: 1, 64>}, {pipeline_mode = #tpu.pipeline_mode<synchronous>, transform_indices = @transform_3, window_bounds = array<i64: 1, 64>}, {pipeline_mode = #tpu.pipeline_mode<synchronous>, transform_indices = @transform_4, window_bounds = array<i64: 1, 64>}, {transform_indices = @transform_5, window_bounds = array<i64: 128, 64>}]} {
    %c0 = arith.constant 0 : index
    %c0_0 = arith.constant 0 : index
    %0 = vector.load %arg1[%c0, %c0_0] : memref<128x128xf32, #tpu.memory_space<vmem>>, vector<128x128xf32>
    %1 = arith.truncf %0 : vector<128x128xf32> to vector<128x128xbf16>
    %c0_1 = arith.constant 0 : index
    %c0_2 = arith.constant 0 : index
    %2 = vector.load %arg2[%c0_1, %c0_2] : memref<128x64xbf16, #tpu.memory_space<vmem>>, vector<128x64xbf16>
    %cst = arith.constant dense<0.000000e+00> : vector<128x64xf32>
    %3 = tpu.matmul %1, %2, %cst {dimension_numbers = #tpu.dot_dimension_numbers<[1], [0], [0], [1], [0, 0, 1, 1], [], []>} : vector<128x128xbf16>, vector<128x64xbf16>, vector<128x64xf32> -> vector<128x64xf32>
    %c0_3 = arith.constant 0 : index
    %c0_4 = arith.constant 0 : index
    %4 = vector.load %arg3[%c0_3, %c0_4] : memref<1x64xf32, #tpu.memory_space<vmem>>, vector<1x64xf32>
    %5 = vector.broadcast %4 : vector<1x64xf32> to vector<128x64xf32>
    %6 = arith.mulf %3, %5 : vector<128x64xf32>
    %c0_5 = arith.constant 0 : index
    %c0_6 = arith.constant 0 : index
    %7 = vector.load %arg4[%c0_5, %c0_6] : memref<1x64xf32, #tpu.memory_space<vmem>>, vector<1x64xf32>
    %8 = vector.broadcast %7 : vector<1x64xf32> to vector<128x64xf32>
    %9 = arith.addf %6, %8 : vector<128x64xf32>
    %c0_7 = arith.constant 0 : index
    %c0_8 = arith.constant 0 : index
    %10 = vector.load %arg6[%c0_7, %c0_8] : memref<128x64xf32, #tpu.memory_space<vmem>>, vector<128x64xf32>
    tpu.vector_store %arg6[%c0_7, %c0_8], %9 {strides = array<i32>} : memref<128x64xf32, #tpu.memory_space<vmem>>, vector<128x64xf32>,
    return
  }
  func.func @transform_0(%arg0: i32) -> (i32, i32) {
    %c0_i32 = arith.constant 0 : i32
    %c0_i32_0 = arith.constant 0 : i32
    return %arg0, %c0_i32 : i32, i32
  }
  func.func @transform_1(%arg0: i32) -> (i32, i32) {
    %c0_i32 = arith.constant 0 : i32
    %c0_i32_0 = arith.constant 0 : i32
    %c0_i32_1 = arith.constant 0 : i32
    return %c0_i32, %c0_i32_0 : i32, i32
  }
  func.func @transform_2(%arg0: i32) -> (i32, i32) {
    %c0_i32 = arith.constant 0 : i32
    %c0_i32_0 = arith.constant 0 : i32
    %c0_i32_1 = arith.constant 0 : i32
    return %c0_i32, %c0_i32_0 : i32, i32
  }
  func.func @transform_3(%arg0: i32) -> (i32, i32) {
    %c0_i32 = arith.constant 0 : i32
    %c0_i32_0 = arith.constant 0 : i32
    %c0_i32_1 = arith.constant 0 : i32
    return %c0_i32, %c0_i32_0 : i32, i32
  }
  func.func @transform_4(%arg0: i32) -> (i32, i32) {
    %c0_i32 = arith.constant 0 : i32
    %c0_i32_0 = arith.constant 0 : i32
    %c0_i32_1 = arith.constant 0 : i32
    return %c0_i32, %c0_i32_0 : i32, i32
  }
  func.func @transform_5(%arg0: i32) -> (i32, i32) {
    %c0_i32 = arith.constant 0 : i32
    %c0_i32_0 = arith.constant 0 : i32
    return %arg0, %c0_i32 : i32, i32
  }
}

module attributes {stable_mosaic.version = 11 : i64} {
  func.func @_mm_epilogue_kernel(%arg0: i32, %arg1: memref<32x576xf32, #tpu.memory_space<vmem>>, %arg2: memref<576x128xbf16, #tpu.memory_space<vmem>>, %arg3: memref<1x128xf32, #tpu.memory_space<vmem>>, %arg4: memref<1x128xf32, #tpu.memory_space<vmem>>, %arg5: memref<1x128xf32, #tpu.memory_space<vmem>>, %arg6: memref<32x128xf32, #tpu.memory_space<vmem>>) attributes {dimension_semantics = [#tpu.dimension_semantics<parallel>], iteration_bounds = array<i64: 1>, scalar_prefetch = 0 : i64, scratch_operands = 0 : i64, tpu.core_type = #tpu.core_type<tc>, window_params = [{transform_indices = @transform_0, window_bounds = array<i64: 32, 576>}, {pipeline_mode = #tpu.pipeline_mode<synchronous>, transform_indices = @transform_1, window_bounds = array<i64: 576, 128>}, {pipeline_mode = #tpu.pipeline_mode<synchronous>, transform_indices = @transform_2, window_bounds = array<i64: 1, 128>}, {pipeline_mode = #tpu.pipeline_mode<synchronous>, transform_indices = @transform_3, window_bounds = array<i64: 1, 128>}, {pipeline_mode = #tpu.pipeline_mode<synchronous>, transform_indices = @transform_4, window_bounds = array<i64: 1, 128>}, {transform_indices = @transform_5, window_bounds = array<i64: 32, 128>}]} {
    %c0 = arith.constant 0 : index
    %c0_0 = arith.constant 0 : index
    %0 = vector.load %arg1[%c0, %c0_0] : memref<32x576xf32, #tpu.memory_space<vmem>>, vector<32x576xf32>
    %1 = arith.truncf %0 : vector<32x576xf32> to vector<32x576xbf16>
    %c0_1 = arith.constant 0 : index
    %c0_2 = arith.constant 0 : index
    %2 = vector.load %arg2[%c0_1, %c0_2] : memref<576x128xbf16, #tpu.memory_space<vmem>>, vector<576x128xbf16>
    %cst = arith.constant dense<0.000000e+00> : vector<32x128xf32>
    %3 = tpu.matmul %1, %2, %cst {dimension_numbers = #tpu.dot_dimension_numbers<[1], [0], [0], [1], [0, 0, 1, 1], [], []>} : vector<32x576xbf16>, vector<576x128xbf16>, vector<32x128xf32> -> vector<32x128xf32>
    %c0_3 = arith.constant 0 : index
    %c0_4 = arith.constant 0 : index
    %4 = vector.load %arg3[%c0_3, %c0_4] : memref<1x128xf32, #tpu.memory_space<vmem>>, vector<1x128xf32>
    %5 = vector.broadcast %4 : vector<1x128xf32> to vector<32x128xf32>
    %6 = arith.mulf %3, %5 : vector<32x128xf32>
    %c0_5 = arith.constant 0 : index
    %c0_6 = arith.constant 0 : index
    %7 = vector.load %arg4[%c0_5, %c0_6] : memref<1x128xf32, #tpu.memory_space<vmem>>, vector<1x128xf32>
    %8 = vector.broadcast %7 : vector<1x128xf32> to vector<32x128xf32>
    %9 = arith.addf %6, %8 : vector<32x128xf32>
    %cst_7 = arith.constant 5.000000e-01 : f32
    %10 = vector.broadcast %cst_7 : f32 to vector<32x128xf32>
    %11 = arith.mulf %10, %9 : vector<32x128xf32>
    %cst_8 = arith.constant 4.471500e-02 : f32
    %12 = vector.broadcast %cst_8 : f32 to vector<32x128xf32>
    %13 = arith.mulf %12, %9 : vector<32x128xf32>
    %14 = arith.mulf %13, %9 : vector<32x128xf32>
    %15 = arith.mulf %14, %9 : vector<32x128xf32>
    %16 = arith.addf %9, %15 : vector<32x128xf32>
    %cst_9 = arith.constant 0.797884583 : f32
    %17 = vector.broadcast %cst_9 : f32 to vector<32x128xf32>
    %18 = arith.mulf %17, %16 : vector<32x128xf32>
    %19 = math.tanh %18 : vector<32x128xf32>
    %cst_10 = arith.constant 1.000000e+00 : f32
    %20 = vector.broadcast %cst_10 : f32 to vector<32x128xf32>
    %21 = arith.addf %20, %19 : vector<32x128xf32>
    %22 = arith.mulf %11, %21 : vector<32x128xf32>
    %c0_11 = arith.constant 0 : index
    %c0_12 = arith.constant 0 : index
    %23 = vector.load %arg6[%c0_11, %c0_12] : memref<32x128xf32, #tpu.memory_space<vmem>>, vector<32x128xf32>
    tpu.vector_store %arg6[%c0_11, %c0_12], %22 {strides = array<i32>} : memref<32x128xf32, #tpu.memory_space<vmem>>, vector<32x128xf32>,
    return
  }
  func.func @transform_0(%arg0: i32) -> (i32, i32) {
    %c0_i32 = arith.constant 0 : i32
    %c0_i32_0 = arith.constant 0 : i32
    return %arg0, %c0_i32 : i32, i32
  }
  func.func @transform_1(%arg0: i32) -> (i32, i32) {
    %c0_i32 = arith.constant 0 : i32
    %c0_i32_0 = arith.constant 0 : i32
    %c0_i32_1 = arith.constant 0 : i32
    return %c0_i32, %c0_i32_0 : i32, i32
  }
  func.func @transform_2(%arg0: i32) -> (i32, i32) {
    %c0_i32 = arith.constant 0 : i32
    %c0_i32_0 = arith.constant 0 : i32
    %c0_i32_1 = arith.constant 0 : i32
    return %c0_i32, %c0_i32_0 : i32, i32
  }
  func.func @transform_3(%arg0: i32) -> (i32, i32) {
    %c0_i32 = arith.constant 0 : i32
    %c0_i32_0 = arith.constant 0 : i32
    %c0_i32_1 = arith.constant 0 : i32
    return %c0_i32, %c0_i32_0 : i32, i32
  }
  func.func @transform_4(%arg0: i32) -> (i32, i32) {
    %c0_i32 = arith.constant 0 : i32
    %c0_i32_0 = arith.constant 0 : i32
    %c0_i32_1 = arith.constant 0 : i32
    return %c0_i32, %c0_i32_0 : i32, i32
  }
  func.func @transform_5(%arg0: i32) -> (i32, i32) {
    %c0_i32 = arith.constant 0 : i32
    %c0_i32_0 = arith.constant 0 : i32
    return %arg0, %c0_i32 : i32, i32
  }
}

module attributes {stable_mosaic.version = 11 : i64} {
  func.func @_mm_epilogue_kernel(%arg0: i32, %arg1: memref<32x128xf32, #tpu.memory_space<vmem>>, %arg2: memref<128x256xbf16, #tpu.memory_space<vmem>>, %arg3: memref<1x256xf32, #tpu.memory_space<vmem>>, %arg4: memref<1x256xf32, #tpu.memory_space<vmem>>, %arg5: memref<1x256xf32, #tpu.memory_space<vmem>>, %arg6: memref<32x256xf32, #tpu.memory_space<vmem>>) attributes {dimension_semantics = [#tpu.dimension_semantics<parallel>], iteration_bounds = array<i64: 1>, scalar_prefetch = 0 : i64, scratch_operands = 0 : i64, tpu.core_type = #tpu.core_type<tc>, window_params = [{transform_indices = @transform_0, window_bounds = array<i64: 32, 128>}, {pipeline_mode = #tpu.pipeline_mode<synchronous>, transform_indices = @transform_1, window_bounds = array<i64: 128, 256>}, {pipeline_mode = #tpu.pipeline_mode<synchronous>, transform_indices = @transform_2, window_bounds = array<i64: 1, 256>}, {pipeline_mode = #tpu.pipeline_mode<synchronous>, transform_indices = @transform_3, window_bounds = array<i64: 1, 256>}, {pipeline_mode = #tpu.pipeline_mode<synchronous>, transform_indices = @transform_4, window_bounds = array<i64: 1, 256>}, {transform_indices = @transform_5, window_bounds = array<i64: 32, 256>}]} {
    %c0 = arith.constant 0 : index
    %c0_0 = arith.constant 0 : index
    %0 = vector.load %arg1[%c0, %c0_0] : memref<32x128xf32, #tpu.memory_space<vmem>>, vector<32x128xf32>
    %1 = arith.truncf %0 : vector<32x128xf32> to vector<32x128xbf16>
    %c0_1 = arith.constant 0 : index
    %c0_2 = arith.constant 0 : index
    %2 = vector.load %arg2[%c0_1, %c0_2] : memref<128x256xbf16, #tpu.memory_space<vmem>>, vector<128x256xbf16>
    %cst = arith.constant dense<0.000000e+00> : vector<32x256xf32>
    %3 = tpu.matmul %1, %2, %cst {dimension_numbers = #tpu.dot_dimension_numbers<[1], [0], [0], [1], [0, 0, 1, 1], [], []>} : vector<32x128xbf16>, vector<128x256xbf16>, vector<32x256xf32> -> vector<32x256xf32>
    %c0_3 = arith.constant 0 : index
    %c0_4 = arith.constant 0 : index
    %4 = vector.load %arg3[%c0_3, %c0_4] : memref<1x256xf32, #tpu.memory_space<vmem>>, vector<1x256xf32>
    %5 = vector.broadcast %4 : vector<1x256xf32> to vector<32x256xf32>
    %6 = arith.mulf %3, %5 : vector<32x256xf32>
    %c0_5 = arith.constant 0 : index
    %c0_6 = arith.constant 0 : index
    %7 = vector.load %arg4[%c0_5, %c0_6] : memref<1x256xf32, #tpu.memory_space<vmem>>, vector<1x256xf32>
    %8 = vector.broadcast %7 : vector<1x256xf32> to vector<32x256xf32>
    %9 = arith.addf %6, %8 : vector<32x256xf32>
    %cst_7 = arith.constant 5.000000e-01 : f32
    %10 = vector.broadcast %cst_7 : f32 to vector<32x256xf32>
    %11 = arith.mulf %10, %9 : vector<32x256xf32>
    %cst_8 = arith.constant 4.471500e-02 : f32
    %12 = vector.broadcast %cst_8 : f32 to vector<32x256xf32>
    %13 = arith.mulf %12, %9 : vector<32x256xf32>
    %14 = arith.mulf %13, %9 : vector<32x256xf32>
    %15 = arith.mulf %14, %9 : vector<32x256xf32>
    %16 = arith.addf %9, %15 : vector<32x256xf32>
    %cst_9 = arith.constant 0.797884583 : f32
    %17 = vector.broadcast %cst_9 : f32 to vector<32x256xf32>
    %18 = arith.mulf %17, %16 : vector<32x256xf32>
    %19 = math.tanh %18 : vector<32x256xf32>
    %cst_10 = arith.constant 1.000000e+00 : f32
    %20 = vector.broadcast %cst_10 : f32 to vector<32x256xf32>
    %21 = arith.addf %20, %19 : vector<32x256xf32>
    %22 = arith.mulf %11, %21 : vector<32x256xf32>
    %c0_11 = arith.constant 0 : index
    %c0_12 = arith.constant 0 : index
    %23 = vector.load %arg6[%c0_11, %c0_12] : memref<32x256xf32, #tpu.memory_space<vmem>>, vector<32x256xf32>
    tpu.vector_store %arg6[%c0_11, %c0_12], %22 {strides = array<i32>} : memref<32x256xf32, #tpu.memory_space<vmem>>, vector<32x256xf32>,
    return
  }
  func.func @transform_0(%arg0: i32) -> (i32, i32) {
    %c0_i32 = arith.constant 0 : i32
    %c0_i32_0 = arith.constant 0 : i32
    return %arg0, %c0_i32 : i32, i32
  }
  func.func @transform_1(%arg0: i32) -> (i32, i32) {
    %c0_i32 = arith.constant 0 : i32
    %c0_i32_0 = arith.constant 0 : i32
    %c0_i32_1 = arith.constant 0 : i32
    return %c0_i32, %c0_i32_0 : i32, i32
  }
  func.func @transform_2(%arg0: i32) -> (i32, i32) {
    %c0_i32 = arith.constant 0 : i32
    %c0_i32_0 = arith.constant 0 : i32
    %c0_i32_1 = arith.constant 0 : i32
    return %c0_i32, %c0_i32_0 : i32, i32
  }
  func.func @transform_3(%arg0: i32) -> (i32, i32) {
    %c0_i32 = arith.constant 0 : i32
    %c0_i32_0 = arith.constant 0 : i32
    %c0_i32_1 = arith.constant 0 : i32
    return %c0_i32, %c0_i32_0 : i32, i32
  }
  func.func @transform_4(%arg0: i32) -> (i32, i32) {
    %c0_i32 = arith.constant 0 : i32
    %c0_i32_0 = arith.constant 0 : i32
    %c0_i32_1 = arith.constant 0 : i32
    return %c0_i32, %c0_i32_0 : i32, i32
  }
  func.func @transform_5(%arg0: i32) -> (i32, i32) {
    %c0_i32 = arith.constant 0 : i32
    %c0_i32_0 = arith.constant 0 : i32
    return %arg0, %c0_i32 : i32, i32
  }
}

module attributes {stable_mosaic.version = 11 : i64} {
  func.func @_dw3x3_residual_kernel(%arg0: memref<2x6x6x128xf32, #tpu.memory_space<vmem>>, %arg1: memref<3x3x128xf32, #tpu.memory_space<vmem>>, %arg2: memref<2x4x4x128xf32, #tpu.memory_space<vmem>>) attributes {dimension_semantics = [], scalar_prefetch = 0 : i64, scratch_operands = 0 : i64, tpu.core_type = #tpu.core_type<tc>} {
    %c0 = arith.constant 0 : index
    %c0_0 = arith.constant 0 : index
    %c0_1 = arith.constant 0 : index
    %c0_2 = arith.constant 0 : index
    %0 = vector.load %arg0[%c0, %c0_0, %c0_1, %c0_2] : memref<2x6x6x128xf32, #tpu.memory_space<vmem>>, vector<2x6x6x128xf32>
    %c0_3 = arith.constant 0 : index
    %c0_4 = arith.constant 0 : index
    %c0_5 = arith.constant 0 : index
    %1 = vector.load %arg1[%c0_3, %c0_4, %c0_5] : memref<3x3x128xf32, #tpu.memory_space<vmem>>, vector<3x3x128xf32>
    %2 = vector.extract_strided_slice %0 {offsets = [0, 1, 1, 0], sizes = [2, 4, 4, 128], strides = [1, 1, 1, 1]} : vector<2x6x6x128xf32> to vector<2x4x4x128xf32>
    %3 = vector.extract_strided_slice %0 {offsets = [0, 0, 0, 0], sizes = [2, 4, 4, 128], strides = [1, 1, 1, 1]} : vector<2x6x6x128xf32> to vector<2x4x4x128xf32>
    %4 = vector.extract_strided_slice %1 {offsets = [0, 0, 0], sizes = [1, 1, 128], strides = [1, 1, 1]} : vector<3x3x128xf32> to vector<1x1x128xf32>
    %5 = vector.shape_cast %4 : vector<1x1x128xf32> to vector<128xf32>
    %6 = vector.shape_cast %5 : vector<128xf32> to vector<1x1x1x128xf32>
    %7 = vector.broadcast %6 : vector<1x1x1x128xf32> to vector<2x4x4x128xf32>
    %8 = arith.mulf %3, %7 : vector<2x4x4x128xf32>
    %9 = arith.addf %2, %8 : vector<2x4x4x128xf32>
    %10 = vector.extract_strided_slice %0 {offsets = [0, 0, 1, 0], sizes = [2, 4, 4, 128], strides = [1, 1, 1, 1]} : vector<2x6x6x128xf32> to vector<2x4x4x128xf32>
    %11 = vector.extract_strided_slice %1 {offsets = [0, 1, 0], sizes = [1, 1, 128], strides = [1, 1, 1]} : vector<3x3x128xf32> to vector<1x1x128xf32>
    %12 = vector.shape_cast %11 : vector<1x1x128xf32> to vector<128xf32>
    %13 = vector.shape_cast %12 : vector<128xf32> to vector<1x1x1x128xf32>
    %14 = vector.broadcast %13 : vector<1x1x1x128xf32> to vector<2x4x4x128xf32>
    %15 = arith.mulf %10, %14 : vector<2x4x4x128xf32>
    %16 = arith.addf %9, %15 : vector<2x4x4x128xf32>
    %17 = vector.extract_strided_slice %0 {offsets = [0, 0, 2, 0], sizes = [2, 4, 4, 128], strides = [1, 1, 1, 1]} : vector<2x6x6x128xf32> to vector<2x4x4x128xf32>
    %18 = vector.extract_strided_slice %1 {offsets = [0, 2, 0], sizes = [1, 1, 128], strides = [1, 1, 1]} : vector<3x3x128xf32> to vector<1x1x128xf32>
    %19 = vector.shape_cast %18 : vector<1x1x128xf32> to vector<128xf32>
    %20 = vector.shape_cast %19 : vector<128xf32> to vector<1x1x1x128xf32>
    %21 = vector.broadcast %20 : vector<1x1x1x128xf32> to vector<2x4x4x128xf32>
    %22 = arith.mulf %17, %21 : vector<2x4x4x128xf32>
    %23 = arith.addf %16, %22 : vector<2x4x4x128xf32>
    %24 = vector.extract_strided_slice %0 {offsets = [0, 1, 0, 0], sizes = [2, 4, 4, 128], strides = [1, 1, 1, 1]} : vector<2x6x6x128xf32> to vector<2x4x4x128xf32>
    %25 = vector.extract_strided_slice %1 {offsets = [1, 0, 0], sizes = [1, 1, 128], strides = [1, 1, 1]} : vector<3x3x128xf32> to vector<1x1x128xf32>
    %26 = vector.shape_cast %25 : vector<1x1x128xf32> to vector<128xf32>
    %27 = vector.shape_cast %26 : vector<128xf32> to vector<1x1x1x128xf32>
    %28 = vector.broadcast %27 : vector<1x1x1x128xf32> to vector<2x4x4x128xf32>
    %29 = arith.mulf %24, %28 : vector<2x4x4x128xf32>
    %30 = arith.addf %23, %29 : vector<2x4x4x128xf32>
    %31 = vector.extract_strided_slice %0 {offsets = [0, 1, 1, 0], sizes = [2, 4, 4, 128], strides = [1, 1, 1, 1]} : vector<2x6x6x128xf32> to vector<2x4x4x128xf32>
    %32 = vector.extract_strided_slice %1 {offsets = [1, 1, 0], sizes = [1, 1, 128], strides = [1, 1, 1]} : vector<3x3x128xf32> to vector<1x1x128xf32>
    %33 = vector.shape_cast %32 : vector<1x1x128xf32> to vector<128xf32>
    %34 = vector.shape_cast %33 : vector<128xf32> to vector<1x1x1x128xf32>
    %35 = vector.broadcast %34 : vector<1x1x1x128xf32> to vector<2x4x4x128xf32>
    %36 = arith.mulf %31, %35 : vector<2x4x4x128xf32>
    %37 = arith.addf %30, %36 : vector<2x4x4x128xf32>
    %38 = vector.extract_strided_slice %0 {offsets = [0, 1, 2, 0], sizes = [2, 4, 4, 128], strides = [1, 1, 1, 1]} : vector<2x6x6x128xf32> to vector<2x4x4x128xf32>
    %39 = vector.extract_strided_slice %1 {offsets = [1, 2, 0], sizes = [1, 1, 128], strides = [1, 1, 1]} : vector<3x3x128xf32> to vector<1x1x128xf32>
    %40 = vector.shape_cast %39 : vector<1x1x128xf32> to vector<128xf32>
    %41 = vector.shape_cast %40 : vector<128xf32> to vector<1x1x1x128xf32>
    %42 = vector.broadcast %41 : vector<1x1x1x128xf32> to vector<2x4x4x128xf32>
    %43 = arith.mulf %38, %42 : vector<2x4x4x128xf32>
    %44 = arith.addf %37, %43 : vector<2x4x4x128xf32>
    %45 = vector.extract_strided_slice %0 {offsets = [0, 2, 0, 0], sizes = [2, 4, 4, 128], strides = [1, 1, 1, 1]} : vector<2x6x6x128xf32> to vector<2x4x4x128xf32>
    %46 = vector.extract_strided_slice %1 {offsets = [2, 0, 0], sizes = [1, 1, 128], strides = [1, 1, 1]} : vector<3x3x128xf32> to vector<1x1x128xf32>
    %47 = vector.shape_cast %46 : vector<1x1x128xf32> to vector<128xf32>
    %48 = vector.shape_cast %47 : vector<128xf32> to vector<1x1x1x128xf32>
    %49 = vector.broadcast %48 : vector<1x1x1x128xf32> to vector<2x4x4x128xf32>
    %50 = arith.mulf %45, %49 : vector<2x4x4x128xf32>
    %51 = arith.addf %44, %50 : vector<2x4x4x128xf32>
    %52 = vector.extract_strided_slice %0 {offsets = [0, 2, 1, 0], sizes = [2, 4, 4, 128], strides = [1, 1, 1, 1]} : vector<2x6x6x128xf32> to vector<2x4x4x128xf32>
    %53 = vector.extract_strided_slice %1 {offsets = [2, 1, 0], sizes = [1, 1, 128], strides = [1, 1, 1]} : vector<3x3x128xf32> to vector<1x1x128xf32>
    %54 = vector.shape_cast %53 : vector<1x1x128xf32> to vector<128xf32>
    %55 = vector.shape_cast %54 : vector<128xf32> to vector<1x1x1x128xf32>
    %56 = vector.broadcast %55 : vector<1x1x1x128xf32> to vector<2x4x4x128xf32>
    %57 = arith.mulf %52, %56 : vector<2x4x4x128xf32>
    %58 = arith.addf %51, %57 : vector<2x4x4x128xf32>
    %59 = vector.extract_strided_slice %0 {offsets = [0, 2, 2, 0], sizes = [2, 4, 4, 128], strides = [1, 1, 1, 1]} : vector<2x6x6x128xf32> to vector<2x4x4x128xf32>
    %60 = vector.extract_strided_slice %1 {offsets = [2, 2, 0], sizes = [1, 1, 128], strides = [1, 1, 1]} : vector<3x3x128xf32> to vector<1x1x128xf32>
    %61 = vector.shape_cast %60 : vector<1x1x128xf32> to vector<128xf32>
    %62 = vector.shape_cast %61 : vector<128xf32> to vector<1x1x1x128xf32>
    %63 = vector.broadcast %62 : vector<1x1x1x128xf32> to vector<2x4x4x128xf32>
    %64 = arith.mulf %59, %63 : vector<2x4x4x128xf32>
    %65 = arith.addf %58, %64 : vector<2x4x4x128xf32>
    %c0_6 = arith.constant 0 : index
    %c0_7 = arith.constant 0 : index
    %c0_8 = arith.constant 0 : index
    %c0_9 = arith.constant 0 : index
    %66 = vector.load %arg2[%c0_6, %c0_7, %c0_8, %c0_9] : memref<2x4x4x128xf32, #tpu.memory_space<vmem>>, vector<2x4x4x128xf32>
    tpu.vector_store %arg2[%c0_6, %c0_7, %c0_8, %c0_9], %65 {strides = array<i32>} : memref<2x4x4x128xf32, #tpu.memory_space<vmem>>, vector<2x4x4x128xf32>,
    return
  }
}

module attributes {stable_mosaic.version = 11 : i64} {
  func.func @_mm_epilogue_kernel(%arg0: i32, %arg1: memref<32x256xf32, #tpu.memory_space<vmem>>, %arg2: memref<256x128xbf16, #tpu.memory_space<vmem>>, %arg3: memref<1x128xf32, #tpu.memory_space<vmem>>, %arg4: memref<1x128xf32, #tpu.memory_space<vmem>>, %arg5: memref<1x128xf32, #tpu.memory_space<vmem>>, %arg6: memref<32x128xf32, #tpu.memory_space<vmem>>) attributes {dimension_semantics = [#tpu.dimension_semantics<parallel>], iteration_bounds = array<i64: 1>, scalar_prefetch = 0 : i64, scratch_operands = 0 : i64, tpu.core_type = #tpu.core_type<tc>, window_params = [{transform_indices = @transform_0, window_bounds = array<i64: 32, 256>}, {pipeline_mode = #tpu.pipeline_mode<synchronous>, transform_indices = @transform_1, window_bounds = array<i64: 256, 128>}, {pipeline_mode = #tpu.pipeline_mode<synchronous>, transform_indices = @transform_2, window_bounds = array<i64: 1, 128>}, {pipeline_mode = #tpu.pipeline_mode<synchronous>, transform_indices = @transform_3, window_bounds = array<i64: 1, 128>}, {pipeline_mode = #tpu.pipeline_mode<synchronous>, transform_indices = @transform_4, window_bounds = array<i64: 1, 128>}, {transform_indices = @transform_5, window_bounds = array<i64: 32, 128>}]} {
    %c0 = arith.constant 0 : index
    %c0_0 = arith.constant 0 : index
    %0 = vector.load %arg1[%c0, %c0_0] : memref<32x256xf32, #tpu.memory_space<vmem>>, vector<32x256xf32>
    %1 = arith.truncf %0 : vector<32x256xf32> to vector<32x256xbf16>
    %c0_1 = arith.constant 0 : index
    %c0_2 = arith.constant 0 : index
    %2 = vector.load %arg2[%c0_1, %c0_2] : memref<256x128xbf16, #tpu.memory_space<vmem>>, vector<256x128xbf16>
    %cst = arith.constant dense<0.000000e+00> : vector<32x128xf32>
    %3 = tpu.matmul %1, %2, %cst {dimension_numbers = #tpu.dot_dimension_numbers<[1], [0], [0], [1], [0, 0, 1, 1], [], []>} : vector<32x256xbf16>, vector<256x128xbf16>, vector<32x128xf32> -> vector<32x128xf32>
    %c0_3 = arith.constant 0 : index
    %c0_4 = arith.constant 0 : index
    %4 = vector.load %arg3[%c0_3, %c0_4] : memref<1x128xf32, #tpu.memory_space<vmem>>, vector<1x128xf32>
    %5 = vector.broadcast %4 : vector<1x128xf32> to vector<32x128xf32>
    %6 = arith.mulf %3, %5 : vector<32x128xf32>
    %c0_5 = arith.constant 0 : index
    %c0_6 = arith.constant 0 : index
    %7 = vector.load %arg4[%c0_5, %c0_6] : memref<1x128xf32, #tpu.memory_space<vmem>>, vector<1x128xf32>
    %8 = vector.broadcast %7 : vector<1x128xf32> to vector<32x128xf32>
    %9 = arith.addf %6, %8 : vector<32x128xf32>
    %c0_7 = arith.constant 0 : index
    %c0_8 = arith.constant 0 : index
    %10 = vector.load %arg6[%c0_7, %c0_8] : memref<32x128xf32, #tpu.memory_space<vmem>>, vector<32x128xf32>
    tpu.vector_store %arg6[%c0_7, %c0_8], %9 {strides = array<i32>} : memref<32x128xf32, #tpu.memory_space<vmem>>, vector<32x128xf32>,
    return
  }
  func.func @transform_0(%arg0: i32) -> (i32, i32) {
    %c0_i32 = arith.constant 0 : i32
    %c0_i32_0 = arith.constant 0 : i32
    return %arg0, %c0_i32 : i32, i32
  }
  func.func @transform_1(%arg0: i32) -> (i32, i32) {
    %c0_i32 = arith.constant 0 : i32
    %c0_i32_0 = arith.constant 0 : i32
    %c0_i32_1 = arith.constant 0 : i32
    return %c0_i32, %c0_i32_0 : i32, i32
  }
  func.func @transform_2(%arg0: i32) -> (i32, i32) {
    %c0_i32 = arith.constant 0 : i32
    %c0_i32_0 = arith.constant 0 : i32
    %c0_i32_1 = arith.constant 0 : i32
    return %c0_i32, %c0_i32_0 : i32, i32
  }
  func.func @transform_3(%arg0: i32) -> (i32, i32) {
    %c0_i32 = arith.constant 0 : i32
    %c0_i32_0 = arith.constant 0 : i32
    %c0_i32_1 = arith.constant 0 : i32
    return %c0_i32, %c0_i32_0 : i32, i32
  }
  func.func @transform_4(%arg0: i32) -> (i32, i32) {
    %c0_i32 = arith.constant 0 : i32
    %c0_i32_0 = arith.constant 0 : i32
    %c0_i32_1 = arith.constant 0 : i32
    return %c0_i32, %c0_i32_0 : i32, i32
  }
  func.func @transform_5(%arg0: i32) -> (i32, i32) {
    %c0_i32 = arith.constant 0 : i32
    %c0_i32_0 = arith.constant 0 : i32
    return %arg0, %c0_i32 : i32, i32
  }
}

module attributes {stable_mosaic.version = 11 : i64} {
  func.func @_mm_epilogue_kernel(%arg0: i32, %arg1: memref<32x1152xf32, #tpu.memory_space<vmem>>, %arg2: memref<1152x256xbf16, #tpu.memory_space<vmem>>, %arg3: memref<1x256xf32, #tpu.memory_space<vmem>>, %arg4: memref<1x256xf32, #tpu.memory_space<vmem>>, %arg5: memref<1x256xf32, #tpu.memory_space<vmem>>, %arg6: memref<32x256xf32, #tpu.memory_space<vmem>>) attributes {dimension_semantics = [#tpu.dimension_semantics<parallel>], iteration_bounds = array<i64: 1>, scalar_prefetch = 0 : i64, scratch_operands = 0 : i64, tpu.core_type = #tpu.core_type<tc>, window_params = [{transform_indices = @transform_0, window_bounds = array<i64: 32, 1152>}, {pipeline_mode = #tpu.pipeline_mode<synchronous>, transform_indices = @transform_1, window_bounds = array<i64: 1152, 256>}, {pipeline_mode = #tpu.pipeline_mode<synchronous>, transform_indices = @transform_2, window_bounds = array<i64: 1, 256>}, {pipeline_mode = #tpu.pipeline_mode<synchronous>, transform_indices = @transform_3, window_bounds = array<i64: 1, 256>}, {pipeline_mode = #tpu.pipeline_mode<synchronous>, transform_indices = @transform_4, window_bounds = array<i64: 1, 256>}, {transform_indices = @transform_5, window_bounds = array<i64: 32, 256>}]} {
    %c0 = arith.constant 0 : index
    %c0_0 = arith.constant 0 : index
    %0 = vector.load %arg1[%c0, %c0_0] : memref<32x1152xf32, #tpu.memory_space<vmem>>, vector<32x1152xf32>
    %1 = arith.truncf %0 : vector<32x1152xf32> to vector<32x1152xbf16>
    %c0_1 = arith.constant 0 : index
    %c0_2 = arith.constant 0 : index
    %2 = vector.load %arg2[%c0_1, %c0_2] : memref<1152x256xbf16, #tpu.memory_space<vmem>>, vector<1152x256xbf16>
    %cst = arith.constant dense<0.000000e+00> : vector<32x256xf32>
    %3 = tpu.matmul %1, %2, %cst {dimension_numbers = #tpu.dot_dimension_numbers<[1], [0], [0], [1], [0, 0, 1, 1], [], []>} : vector<32x1152xbf16>, vector<1152x256xbf16>, vector<32x256xf32> -> vector<32x256xf32>
    %c0_3 = arith.constant 0 : index
    %c0_4 = arith.constant 0 : index
    %4 = vector.load %arg3[%c0_3, %c0_4] : memref<1x256xf32, #tpu.memory_space<vmem>>, vector<1x256xf32>
    %5 = vector.broadcast %4 : vector<1x256xf32> to vector<32x256xf32>
    %6 = arith.mulf %3, %5 : vector<32x256xf32>
    %c0_5 = arith.constant 0 : index
    %c0_6 = arith.constant 0 : index
    %7 = vector.load %arg4[%c0_5, %c0_6] : memref<1x256xf32, #tpu.memory_space<vmem>>, vector<1x256xf32>
    %8 = vector.broadcast %7 : vector<1x256xf32> to vector<32x256xf32>
    %9 = arith.addf %6, %8 : vector<32x256xf32>
    %cst_7 = arith.constant 5.000000e-01 : f32
    %10 = vector.broadcast %cst_7 : f32 to vector<32x256xf32>
    %11 = arith.mulf %10, %9 : vector<32x256xf32>
    %cst_8 = arith.constant 4.471500e-02 : f32
    %12 = vector.broadcast %cst_8 : f32 to vector<32x256xf32>
    %13 = arith.mulf %12, %9 : vector<32x256xf32>
    %14 = arith.mulf %13, %9 : vector<32x256xf32>
    %15 = arith.mulf %14, %9 : vector<32x256xf32>
    %16 = arith.addf %9, %15 : vector<32x256xf32>
    %cst_9 = arith.constant 0.797884583 : f32
    %17 = vector.broadcast %cst_9 : f32 to vector<32x256xf32>
    %18 = arith.mulf %17, %16 : vector<32x256xf32>
    %19 = math.tanh %18 : vector<32x256xf32>
    %cst_10 = arith.constant 1.000000e+00 : f32
    %20 = vector.broadcast %cst_10 : f32 to vector<32x256xf32>
    %21 = arith.addf %20, %19 : vector<32x256xf32>
    %22 = arith.mulf %11, %21 : vector<32x256xf32>
    %c0_11 = arith.constant 0 : index
    %c0_12 = arith.constant 0 : index
    %23 = vector.load %arg6[%c0_11, %c0_12] : memref<32x256xf32, #tpu.memory_space<vmem>>, vector<32x256xf32>
    tpu.vector_store %arg6[%c0_11, %c0_12], %22 {strides = array<i32>} : memref<32x256xf32, #tpu.memory_space<vmem>>, vector<32x256xf32>,
    return
  }
  func.func @transform_0(%arg0: i32) -> (i32, i32) {
    %c0_i32 = arith.constant 0 : i32
    %c0_i32_0 = arith.constant 0 : i32
    return %arg0, %c0_i32 : i32, i32
  }
  func.func @transform_1(%arg0: i32) -> (i32, i32) {
    %c0_i32 = arith.constant 0 : i32
    %c0_i32_0 = arith.constant 0 : i32
    %c0_i32_1 = arith.constant 0 : i32
    return %c0_i32, %c0_i32_0 : i32, i32
  }
  func.func @transform_2(%arg0: i32) -> (i32, i32) {
    %c0_i32 = arith.constant 0 : i32
    %c0_i32_0 = arith.constant 0 : i32
    %c0_i32_1 = arith.constant 0 : i32
    return %c0_i32, %c0_i32_0 : i32, i32
  }
  func.func @transform_3(%arg0: i32) -> (i32, i32) {
    %c0_i32 = arith.constant 0 : i32
    %c0_i32_0 = arith.constant 0 : i32
    %c0_i32_1 = arith.constant 0 : i32
    return %c0_i32, %c0_i32_0 : i32, i32
  }
  func.func @transform_4(%arg0: i32) -> (i32, i32) {
    %c0_i32 = arith.constant 0 : i32
    %c0_i32_0 = arith.constant 0 : i32
    %c0_i32_1 = arith.constant 0 : i32
    return %c0_i32, %c0_i32_0 : i32, i32
  }
  func.func @transform_5(%arg0: i32) -> (i32, i32) {
    %c0_i32 = arith.constant 0 : i32
    %c0_i32_0 = arith.constant 0 : i32
    return %arg0, %c0_i32 : i32, i32
  }
}

</mosaic_0001>

<llo_original>
// kernel: srnet_forward.11
$region0: #{srnet_forward.11}
  #allocation0 [shape = 'u32[]', space=smem, size = 0x4, offset = 0x4, fixed_abs, tag = 'smem constant byte address 0x4 - core index']
  #allocation1 [shape = 'u32[144,128]{1,0:T(1,128)}', space=vmem, size = 0x12000, scoped, tag = 'internal scratch']
  %s0 = inlined_call_operand.vmem [shape: f32[512,32], index: 0, kind: input, shape index: {}]
  %s1 = inlined_call_operand.vmem [shape: f32[32,64], index: 1, kind: input, shape index: {}]
  %s2 = inlined_call_operand.vmem [shape: f32[1,64], index: 2, kind: input, shape index: {}]
  %s3 = inlined_call_operand.vmem [shape: f32[1,64], index: 3, kind: input, shape index: {}]
  %s4 = inlined_call_operand.vmem [shape: f32[1,64], index: 4, kind: input, shape index: {}]
  %s5 = inlined_call_operand.vmem [shape: f32[512,64], index: 5, kind: output, shape index: {}]
  %s6 = sld [smem:[#allocation0]]
  $region30: #{srnet_forward.11} parent=0
    _
  %s8 = ssub.s32 1, %s6
  %s9 = scalar_select 0, %s8, %s6
  // Predicated region
  $region2: #{srnet_forward.11} parent=0 // pred_check
    _
  $region3: #{srnet_forward.11} parent=0 // pred_check_branch
    %11 = sbr.rel (0) target = $region5
  $region4: #{srnet_forward.11} parent=0 // pred_region
    _
  $region5: #{srnet_forward.11} parent=0 // pred_fallthru
    _
  // Predicated region
  $region6: #{srnet_forward.11} parent=0 // pred_check
    _
  $region7: #{srnet_forward.11} parent=0 // pred_check_branch
    %13 = sbr.rel (0) target = $region9
  $region8: #{srnet_forward.11} parent=0 // pred_region
    _
  $region9: #{srnet_forward.11} parent=0 // pred_fallthru
    _
  // Predicated region
  $region10: #{srnet_forward.11} parent=0 // pred_check
    _
  $region11: #{srnet_forward.11} parent=0 // pred_check_branch
    %15 = sbr.rel (0) target = $region13
  $region12: #{srnet_forward.11} parent=0 // pred_region
    _
  $region13: #{srnet_forward.11} parent=0 // pred_fallthru
    _
  // Predicated region
  $region14: #{srnet_forward.11} parent=0 // pred_check
    _
  $region15: #{srnet_forward.11} parent=0 // pred_check_branch
    %17 = sbr.rel (0) target = $region17
  $region16: #{srnet_forward.11} parent=0 // pred_region
    _
  $region17: #{srnet_forward.11} parent=0 // pred_fallthru
    _
  // Predicated region
  $region18: #{srnet_forward.11} parent=0 // pred_check
    _
  $region19: #{srnet_forward.11} parent=0 // pred_check_branch
    %19 = sbr.rel (0) target = $region21
  $region20: #{srnet_forward.11} parent=0 // pred_region
    _
  $region21: #{srnet_forward.11} parent=0 // pred_fallthru
    _
  %v20 = vld [vmem:[%s0] sm:$0xff]
  %v21 = vld [vmem:[%s0 + $0x8] sm:$0xff]
  %v22 = vld [vmem:[%s0 + $0x10] sm:$0xff]
  %v23 = vld [vmem:[%s0 + $0x18] sm:$0xff]
  %v24 = vld [vmem:[%s0 + $0x20] sm:$0xff]
  %v25 = vld [vmem:[%s0 + $0x28] sm:$0xff]
  %v26 = vld [vmem:[%s0 + $0x30] sm:$0xff]
  %v27 = vld [vmem:[%s0 + $0x38] sm:$0xff]
  %v28 = vld [vmem:[%s0 + $0x40] sm:$0xff]
  %v29 = vld [vmem:[%s0 + $0x48] sm:$0xff]
  %v30 = vld [vmem:[%s0 + $0x50] sm:$0xff]
  %v31 = vld [vmem:[%s0 + $0x58] sm:$0xff]
  %v32 = vld [vmem:[%s0 + $0x60] sm:$0xff]
  %v33 = vld [vmem:[%s0 + $0x68] sm:$0xff]
  %v34 = vld [vmem:[%s0 + $0x70] sm:$0xff]
  %v35 = vld [vmem:[%s0 + $0x78] sm:$0xff]
  %v36 = vld [vmem:[%s0 + $0x80] sm:$0xff]
  %v37 = vld [vmem:[%s0 + $0x88] sm:$0xff]
  %v38 = vld [vmem:[%s0 + $0x90] sm:$0xff]
  %v39 = vld [vmem:[%s0 + $0x98] sm:$0xff]
  %v40 = vld [vmem:[%s0 + $0xa0] sm:$0xff]
  %v41 = vld [vmem:[%s0 + $0xa8] sm:$0xff]
  %v42 = vld [vmem:[%s0 + $0xb0] sm:$0xff]
  %v43 = vld [vmem:[%s0 + $0xb8] sm:$0xff]
  %v44 = vld [vmem:[%s0 + $0xc0] sm:$0xff]
  %v45 = vld [vmem:[%s0 + $0xc8] sm:$0xff]
  %v46 = vld [vmem:[%s0 + $0xd0] sm:$0xff]
  %v47 = vld [vmem:[%s0 + $0xd8] sm:$0xff]
  %v48 = vld [vmem:[%s0 + $0xe0] sm:$0xff]
  %v49 = vld [vmem:[%s0 + $0xe8] sm:$0xff]
  %v50 = vld [vmem:[%s0 + $0xf0] sm:$0xff]
  %v51 = vld [vmem:[%s0 + $0xf8] sm:$0xff]
  %v52 = vld [vmem:[%s0 + $0x100] sm:$0xff]
  %v53 = vld [vmem:[%s0 + $0x108] sm:$0xff]
  %v54 = vld [vmem:[%s0 + $0x110] sm:$0xff]
  %v55 = vld [vmem:[%s0 + $0x118] sm:$0xff]
  %v56 = vld [vmem:[%s0 + $0x120] sm:$0xff]
  %v57 = vld [vmem:[%s0 + $0x128] sm:$0xff]
  %v58 = vld [vmem:[%s0 + $0x130] sm:$0xff]
  %v59 = vld [vmem:[%s0 + $0x138] sm:$0xff]
  %v60 = vld [vmem:[%s0 + $0x140] sm:$0xff]
  %v61 = vld [vmem:[%s0 + $0x148] sm:$0xff]
  %v62 = vld [vmem:[%s0 + $0x150] sm:$0xff]
  %v63 = vld [vmem:[%s0 + $0x158] sm:$0xff]
  %v64 = vld [vmem:[%s0 + $0x160] sm:$0xff]
  %v65 = vld [vmem:[%s0 + $0x168] sm:$0xff]
  %v66 = vld [vmem:[%s0 + $0x170] sm:$0xff]
  %v67 = vld [vmem:[%s0 + $0x178] sm:$0xff]
  %v68 = vld [vmem:[%s0 + $0x180] sm:$0xff]
  %v69 = vld [vmem:[%s0 + $0x188] sm:$0xff]
  %v70 = vld [vmem:[%s0 + $0x190] sm:$0xff]
  %v71 = vld [vmem:[%s0 + $0x198] sm:$0xff]
  %v72 = vld [vmem:[%s0 + $0x1a0] sm:$0xff]
  %v73 = vld [vmem:[%s0 + $0x1a8] sm:$0xff]
  %v74 = vld [vmem:[%s0 + $0x1b0] sm:$0xff]
  %v75 = vld [vmem:[%s0 + $0x1b8] sm:$0xff]
  %v76 = vld [vmem:[%s0 + $0x1c0] sm:$0xff]
  %v77 = vld [vmem:[%s0 + $0x1c8] sm:$0xff]
  %v78 = vld [vmem:[%s0 + $0x1d0] sm:$0xff]
  %v79 = vld [vmem:[%s0 + $0x1d8] sm:$0xff]
  %v80 = vld [vmem:[%s0 + $0x1e0] sm:$0xff]
  %v81 = vld [vmem:[%s0 + $0x1e8] sm:$0xff]
  %v82 = vld [vmem:[%s0 + $0x1f0] sm:$0xff]
  %v83 = vld [vmem:[%s0 + $0x1f8] sm:$0xff]
  %v84 = vld [vmem:[%s1] sm:$0xff]
  %v85 = vld [vmem:[%s1 + $0x8] sm:$0xff]
  %v86 = vld [vmem:[%s1 + $0x10] sm:$0xff]
  %v87 = vld [vmem:[%s1 + $0x18] sm:$0xff]
  %vm88 = vcmask 261120
  %v90 = vsel %vm88, %v20, 0
  %v93 = vsel %vm88, %v21, 0
  %v96 = vsel %vm88, %v22, 0
  %v99 = vsel %vm88, %v23, 0
  %v102 = vsel %vm88, %v24, 0
  %v105 = vsel %vm88, %v25, 0
  %v108 = vsel %vm88, %v26, 0
  %v111 = vsel %vm88, %v27, 0
  %v114 = vsel %vm88, %v28, 0
  %v117 = vsel %vm88, %v29, 0
  %v120 = vsel %vm88, %v30, 0
  %v123 = vsel %vm88, %v31, 0
  %v126 = vsel %vm88, %v32, 0
  %v129 = vsel %vm88, %v33, 0
  %v132 = vsel %vm88, %v34, 0
  %v135 = vsel %vm88, %v35, 0
  %v138 = vsel %vm88, %v36, 0
  %v141 = vsel %vm88, %v37, 0
  %v144 = vsel %vm88, %v38, 0
  %v147 = vsel %vm88, %v39, 0
  %v150 = vsel %vm88, %v40, 0
  %v153 = vsel %vm88, %v41, 0
  %v156 = vsel %vm88, %v42, 0
  %v159 = vsel %vm88, %v43, 0
  %v162 = vsel %vm88, %v44, 0
  %v165 = vsel %vm88, %v45, 0
  %v168 = vsel %vm88, %v46, 0
  %v171 = vsel %vm88, %v47, 0
  %v174 = vsel %vm88, %v48, 0
  %v177 = vsel %vm88, %v49, 0
  %v180 = vsel %vm88, %v50, 0
  %v183 = vsel %vm88, %v51, 0
  %v186 = vsel %vm88, %v52, 0
  %v189 = vsel %vm88, %v53, 0
  %v192 = vsel %vm88, %v54, 0
  %v195 = vsel %vm88, %v55, 0
  %v198 = vsel %vm88, %v56, 0
  %v201 = vsel %vm88, %v57, 0
  %v204 = vsel %vm88, %v58, 0
  %v207 = vsel %vm88, %v59, 0
  %v210 = vsel %vm88, %v60, 0
  %v213 = vsel %vm88, %v61, 0
  %v216 = vsel %vm88, %v62, 0
  %v219 = vsel %vm88, %v63, 0
  %v222 = vsel %vm88, %v64, 0
  %v225 = vsel %vm88, %v65, 0
  %v228 = vsel %vm88, %v66, 0
  %v231 = vsel %vm88, %v67, 0
  %v234 = vsel %vm88, %v68, 0
  %v237 = vsel %vm88, %v69, 0
  %v240 = vsel %vm88, %v70, 0
  %v243 = vsel %vm88, %v71, 0
  %v246 = vsel %vm88, %v72, 0
  %v249 = vsel %vm88, %v73, 0
  %v252 = vsel %vm88, %v74, 0
  %v255 = vsel %vm88, %v75, 0
  %v258 = vsel %vm88, %v76, 0
  %v261 = vsel %vm88, %v77, 0
  %v264 = vsel %vm88, %v78, 0
  %v267 = vsel %vm88, %v79, 0
  %v270 = vsel %vm88, %v80, 0
  %v273 = vsel %vm88, %v81, 0
  %v276 = vsel %vm88, %v82, 0
  %v279 = vsel %vm88, %v83, 0
  %281 = vmatprep.subr.mxu0 0.0
  %282 = vmatpush1.msra.mxu0 0.0
  %283 = vmatprep.subr.mxu0 0.0
  %284 = vmatpush1.msra.mxu0 0.0
  %285 = vmatprep.subr.mxu0 0.0
  %286 = vmatpush1.msra.mxu0 0.0
  %287 = vmatprep.subr.mxu0 0.0
  %288 = vmatpush1.msra.mxu0 0.0
  %289 = vmatprep.subr.mxu0 0.0
  %290 = vmatpush1.msra.mxu0 0.0
  %291 = vmatprep.subr.mxu0 0.0
  %292 = vmatpush1.msra.mxu0 0.0
  %293 = vmatprep.subr.mxu0 0.0
  %294 = vmatpush1.msra.mxu0 0.0
  %295 = vmatprep.subr.mxu0 0.0
  %296 = vmatpush1.msra.mxu0 0.0
  %297 = vmatprep.subr.mxu0 0.0
  %298 = vmatpush1.msra.mxu0 0.0
  %299 = vmatprep.subr.mxu0 0.0
  %300 = vmatpush1.msra.mxu0 0.0
  %301 = vmatprep.subr.mxu0 0.0
  %302 = vmatpush1.msra.mxu0 0.0
  %303 = vmatprep.subr.mxu0 0.0
  %304 = vmatpush1.msra.mxu0 0.0
  %305 = vmatprep.subr.mxu0 0.0
  %306 = vmatpush1.msra.mxu0 %v87
  %307 = vmatprep.subr.mxu0 0.0
  %308 = vmatpush1.msra.mxu0 %v86
  %309 = vmatprep.subr.mxu0 0.0
  %310 = vmatpush1.msra.mxu0 %v85
  %311 = vmatprep.subr.mxu0 0.0
  %312 = vmatpush1.msra.mxu0 %v84
  %313 = vmatprep.subr.mxu0 0.0
  %314 = vmatpush2.msra.mxu0 0.0
  %315 = vmatprep.subr.mxu0 0.0
  %316 = vmatpush2.msra.mxu0 0.0
  %317 = vmatprep.subr.mxu0 0.0
  %318 = vmatpush2.msra.mxu0 0.0
  %319 = vmatprep.subr.mxu0 0.0
  %320 = vmatpush2.msra.mxu0 0.0
  %321 = vmatprep.subr.mxu0 0.0
  %322 = vmatpush2.msra.mxu0 0.0
  %323 = vmatprep.subr.mxu0 0.0
  %324 = vmatpush2.msra.mxu0 0.0
  %325 = vmatprep.subr.mxu0 0.0
  %326 = vmatpush2.msra.mxu0 0.0
  %327 = vmatprep.subr.mxu0 0.0
  %328 = vmatpush2.msra.mxu0 0.0
  %329 = vmatprep.subr.mxu0 0.0
  %330 = vmatpush2.msra.mxu0 0.0
  %331 = vmatprep.subr.mxu0 0.0
  %332 = vmatpush2.msra.mxu0 0.0
  %333 = vmatprep.subr.mxu0 0.0
  %334 = vmatpush2.msra.mxu0 0.0
  %335 = vmatprep.subr.mxu0 0.0
  %336 = vmatpush2.msra.mxu0 0.0
  %337 = vmatprep.subr.mxu0 0.0
  %338 = vmatpush2.msra.mxu0 0.0
  %339 = vmatprep.subr.mxu0 0.0
  %340 = vmatpush2.msra.mxu0 0.0
  %341 = vmatprep.subr.mxu0 0.0
  %342 = vmatpush2.msra.mxu0 0.0
  %343 = vmatprep.subr.mxu0 0.0
  %344 = vmatpush2.msra.mxu0 0.0
  %345 = vmatprep.mubr.f32.mxu0 0.0
  %346 = vmatmul.mubr.f32.gmra.mxu0 %v90
  %v347 = vpop.f32.mrf.mxu0
  %v348 = vadd.f32 0.0, %v347
  %v349 = vpop.f32.mrf.mxu0
  %350 = vmatprep.mubr.f32.mxu0 0.0
  %351 = vmatmul.mubr.f32.gmra.mxu0 %v93
  %v352 = vpop.f32.mrf.mxu0
  %v353 = vadd.f32 0.0, %v352
  %v354 = vpop.f32.mrf.mxu0
  %355 = vmatprep.mubr.f32.mxu0 0.0
  %356 = vmatmul.mubr.f32.gmra.mxu0 %v96
  %v357 = vpop.f32.mrf.mxu0
  %v358 = vadd.f32 0.0, %v357
  %v359 = vpop.f32.mrf.mxu0
  %360 = vmatprep.mubr.f32.mxu0 0.0
  %361 = vmatmul.mubr.f32.gmra.mxu0 %v99
  %v362 = vpop.f32.mrf.mxu0
  %v363 = vadd.f32 0.0, %v362
  %v364 = vpop.f32.mrf.mxu0
  %365 = vmatprep.mubr.f32.mxu0 0.0
  %366 = vmatmul.mubr.f32.gmra.mxu0 %v102
  %v367 = vpop.f32.mrf.mxu0
  %v368 = vadd.f32 0.0, %v367
  %v369 = vpop.f32.mrf.mxu0
  %370 = vmatprep.mubr.f32.mxu0 0.0
  %371 = vmatmul.mubr.f32.gmra.mxu0 %v105
  %v372 = vpop.f32.mrf.mxu0
  %v373 = vadd.f32 0.0, %v372
  %v374 = vpop.f32.mrf.mxu0
  %375 = vmatprep.mubr.f32.mxu0 0.0
  %376 = vmatmul.mubr.f32.gmra.mxu0 %v108
  %v377 = vpop.f32.mrf.mxu0
  %v378 = vadd.f32 0.0, %v377
  %v379 = vpop.f32.mrf.mxu0
  %380 = vmatprep.mubr.f32.mxu0 0.0
  %381 = vmatmul.mubr.f32.gmra.mxu0 %v111
  %v382 = vpop.f32.mrf.mxu0
  %v383 = vadd.f32 0.0, %v382
  %v384 = vpop.f32.mrf.mxu0
  %385 = vmatprep.mubr.f32.mxu0 0.0
  %386 = vmatmul.mubr.f32.gmra.mxu0 %v114
  %v387 = vpop.f32.mrf.mxu0
  %v388 = vadd.f32 0.0, %v387
  %v389 = vpop.f32.mrf.mxu0
  %390 = vmatprep.mubr.f32.mxu0 0.0
  %391 = vmatmul.mubr.f32.gmra.mxu0 %v117
  %v392 = vpop.f32.mrf.mxu0
  %v393 = vadd.f32 0.0, %v392
  %v394 = vpop.f32.mrf.mxu0
  %395 = vmatprep.mubr.f32.mxu0 0.0
  %396 = vmatmul.mubr.f32.gmra.mxu0 %v120
  %v397 = vpop.f32.mrf.mxu0
  %v398 = vadd.f32 0.0, %v397
  %v399 = vpop.f32.mrf.mxu0
  %400 = vmatprep.mubr.f32.mxu0 0.0
  %401 = vmatmul.mubr.f32.gmra.mxu0 %v123
  %v402 = vpop.f32.mrf.mxu0
  %v403 = vadd.f32 0.0, %v402
  %v404 = vpop.f32.mrf.mxu0
  %405 = vmatprep.mubr.f32.mxu0 0.0
  %406 = vmatmul.mubr.f32.gmra.mxu0 %v126
  %v407 = vpop.f32.mrf.mxu0
  %v408 = vadd.f32 0.0, %v407
  %v409 = vpop.f32.mrf.mxu0
  %410 = vmatprep.mubr.f32.mxu0 0.0
  %411 = vmatmul.mubr.f32.gmra.mxu0 %v129
  %v412 = vpop.f32.mrf.mxu0
  %v413 = vadd.f32 0.0, %v412
  %v414 = vpop.f32.mrf.mxu0
  %415 = vmatprep.mubr.f32.mxu0 0.0
  %416 = vmatmul.mubr.f32.gmra.mxu0 %v132
  %v417 = vpop.f32.mrf.mxu0
  %v418 = vadd.f32 0.0, %v417
  %v419 = vpop.f32.mrf.mxu0
  %420 = vmatprep.mubr.f32.mxu0 0.0
  %421 = vmatmul.mubr.f32.gmra.mxu0 %v135
  %v422 = vpop.f32.mrf.mxu0
  %v423 = vadd.f32 0.0, %v422
  %v424 = vpop.f32.mrf.mxu0
  %425 = vmatprep.mubr.f32.mxu0 0.0
  %426 = vmatmul.mubr.f32.gmra.mxu0 %v138
  %v427 = vpop.f32.mrf.mxu0
  %v428 = vadd.f32 0.0, %v427
  %v429 = vpop.f32.mrf.mxu0
  %430 = vmatprep.mubr.f32.mxu0 0.0
  %431 = vmatmul.mubr.f32.gmra.mxu0 %v141
  %v432 = vpop.f32.mrf.mxu0
  %v433 = vadd.f32 0.0, %v432
  %v434 = vpop.f32.mrf.mxu0
  %435 = vmatprep.mubr.f32.mxu0 0.0
  %436 = vmatmul.mubr.f32.gmra.mxu0 %v144
  %v437 = vpop.f32.mrf.mxu0
  %v438 = vadd.f32 0.0, %v437
  %v439 = vpop.f32.mrf.mxu0
  %440 = vmatprep.mubr.f32.mxu0 0.0
  %441 = vmatmul.mubr.f32.gmra.mxu0 %v147
  %v442 = vpop.f32.mrf.mxu0
  %v443 = vadd.f32 0.0, %v442
  %v444 = vpop.f32.mrf.mxu0
  %445 = vmatprep.mubr.f32.mxu0 0.0
  %446 = vmatmul.mubr.f32.gmra.mxu0 %v150
  %v447 = vpop.f32.mrf.mxu0
  %v448 = vadd.f32 0.0, %v447
  %v449 = vpop.f32.mrf.mxu0
  %450 = vmatprep.mubr.f32.mxu0 0.0
  %451 = vmatmul.mubr.f32.gmra.mxu0 %v153
  %v452 = vpop.f32.mrf.mxu0
  %v453 = vadd.f32 0.0, %v452
  %v454 = vpop.f32.mrf.mxu0
  %455 = vmatprep.mubr.f32.mxu0 0.0
  %456 = vmatmul.mubr.f32.gmra.mxu0 %v156
  %v457 = vpop.f32.mrf.mxu0
  %v458 = vadd.f32 0.0, %v457
  %v459 = vpop.f32.mrf.mxu0
  %460 = vmatprep.mubr.f32.mxu0 0.0
  %461 = vmatmul.mubr.f32.gmra.mxu0 %v159
  %v462 = vpop.f32.mrf.mxu0
  %v463 = vadd.f32 0.0, %v462
  %v464 = vpop.f32.mrf.mxu0
  %465 = vmatprep.mubr.f32.mxu0 0.0
  %466 = vmatmul.mubr.f32.gmra.mxu0 %v162
  %v467 = vpop.f32.mrf.mxu0
  %v468 = vadd.f32 0.0, %v467
  %v469 = vpop.f32.mrf.mxu0
  %470 = vmatprep.mubr.f32.mxu0 0.0
  %471 = vmatmul.mubr.f32.gmra.mxu0 %v165
  %v472 = vpop.f32.mrf.mxu0
  %v473 = vadd.f32 0.0, %v472
  %v474 = vpop.f32.mrf.mxu0
  %475 = vmatprep.mubr.f32.mxu0 0.0
  %476 = vmatmul.mubr.f32.gmra.mxu0 %v168
  %v477 = vpop.f32.mrf.mxu0
  %v478 = vadd.f32 0.0, %v477
  %v479 = vpop.f32.mrf.mxu0
  %480 = vmatprep.mubr.f32.mxu0 0.0
  %481 = vmatmul.mubr.f32.gmra.mxu0 %v171
  %v482 = vpop.f32.mrf.mxu0
  %v483 = vadd.f32 0.0, %v482
  %v484 = vpop.f32.mrf.mxu0
  %485 = vmatprep.mubr.f32.mxu0 0.0
  %486 = vmatmul.mubr.f32.gmra.mxu0 %v174
  %v487 = vpop.f32.mrf.mxu0
  %v488 = vadd.f32 0.0, %v487
  %v489 = vpop.f32.mrf.mxu0
  %490 = vmatprep.mubr.f32.mxu0 0.0
  %491 = vmatmul.mubr.f32.gmra.mxu0 %v177
  %v492 = vpop.f32.mrf.mxu0
  %v493 = vadd.f32 0.0, %v492
  %v494 = vpop.f32.mrf.mxu0
  %495 = vmatprep.mubr.f32.mxu0 0.0
  %496 = vmatmul.mubr.f32.gmra.mxu0 %v180
  %v497 = vpop.f32.mrf.mxu0
  %v498 = vadd.f32 0.0, %v497
  %v499 = vpop.f32.mrf.mxu0
  %500 = vmatprep.mubr.f32.mxu0 0.0
  %501 = vmatmul.mubr.f32.gmra.mxu0 %v183
  %v502 = vpop.f32.mrf.mxu0
  %v503 = vadd.f32 0.0, %v502
  %v504 = vpop.f32.mrf.mxu0
  %505 = vmatprep.mubr.f32.mxu0 0.0
  %506 = vmatmul.mubr.f32.gmra.mxu0 %v186
  %v507 = vpop.f32.mrf.mxu0
  %v508 = vadd.f32 0.0, %v507
  %v509 = vpop.f32.mrf.mxu0
  %510 = vmatprep.mubr.f32.mxu0 0.0
  %511 = vmatmul.mubr.f32.gmra.mxu0 %v189
  %v512 = vpop.f32.mrf.mxu0
  %v513 = vadd.f32 0.0, %v512
  %v514 = vpop.f32.mrf.mxu0
  %515 = vmatprep.mubr.f32.mxu0 0.0
  %516 = vmatmul.mubr.f32.gmra.mxu0 %v192
  %v517 = vpop.f32.mrf.mxu0
  %v518 = vadd.f32 0.0, %v517
  %v519 = vpop.f32.mrf.mxu0
  %520 = vmatprep.mubr.f32.mxu0 0.0
  %521 = vmatmul.mubr.f32.gmra.mxu0 %v195
  %v522 = vpop.f32.mrf.mxu0
  %v523 = vadd.f32 0.0, %v522
  %v524 = vpop.f32.mrf.mxu0
  %525 = vmatprep.mubr.f32.mxu0 0.0
  %526 = vmatmul.mubr.f32.gmra.mxu0 %v198
  %v527 = vpop.f32.mrf.mxu0
  %v528 = vadd.f32 0.0, %v527
  %v529 = vpop.f32.mrf.mxu0
  %530 = vmatprep.mubr.f32.mxu0 0.0
  %531 = vmatmul.mubr.f32.gmra.mxu0 %v201
  %v532 = vpop.f32.mrf.mxu0
  %v533 = vadd.f32 0.0, %v532
  %v534 = vpop.f32.mrf.mxu0
  %535 = vmatprep.mubr.f32.mxu0 0.0
  %536 = vmatmul.mubr.f32.gmra.mxu0 %v204
  %v537 = vpop.f32.mrf.mxu0
  %v538 = vadd.f32 0.0, %v537
  %v539 = vpop.f32.mrf.mxu0
  %540 = vmatprep.mubr.f32.mxu0 0.0
  %541 = vmatmul.mubr.f32.gmra.mxu0 %v207
  %v542 = vpop.f32.mrf.mxu0
  %v543 = vadd.f32 0.0, %v542
  %v544 = vpop.f32.mrf.mxu0
  %545 = vmatprep.mubr.f32.mxu0 0.0
  %546 = vmatmul.mubr.f32.gmra.mxu0 %v210
  %v547 = vpop.f32.mrf.mxu0
  %v548 = vadd.f32 0.0, %v547
  %v549 = vpop.f32.mrf.mxu0
  %550 = vmatprep.mubr.f32.mxu0 0.0
  %551 = vmatmul.mubr.f32.gmra.mxu0 %v213
  %v552 = vpop.f32.mrf.mxu0
  %v553 = vadd.f32 0.0, %v552
  %v554 = vpop.f32.mrf.mxu0
  %555 = vmatprep.mubr.f32.mxu0 0.0
  %556 = vmatmul.mubr.f32.gmra.mxu0 %v216
  %v557 = vpop.f32.mrf.mxu0
  %v558 = vadd.f32 0.0, %v557
  %v559 = vpop.f32.mrf.mxu0
  %560 = vmatprep.mubr.f32.mxu0 0.0
  %561 = vmatmul.mubr.f32.gmra.mxu0 %v219
  %v562 = vpop.f32.mrf.mxu0
  %v563 = vadd.f32 0.0, %v562
  %v564 = vpop.f32.mrf.mxu0
  %565 = vmatprep.mubr.f32.mxu0 0.0
  %566 = vmatmul.mubr.f32.gmra.mxu0 %v222
  %v567 = vpop.f32.mrf.mxu0
  %v568 = vadd.f32 0.0, %v567
  %v569 = vpop.f32.mrf.mxu0
  %570 = vmatprep.mubr.f32.mxu0 0.0
  %571 = vmatmul.mubr.f32.gmra.mxu0 %v225
  %v572 = vpop.f32.mrf.mxu0
  %v573 = vadd.f32 0.0, %v572
  %v574 = vpop.f32.mrf.mxu0
  %575 = vmatprep.mubr.f32.mxu0 0.0
  %576 = vmatmul.mubr.f32.gmra.mxu0 %v228
  %v577 = vpop.f32.mrf.mxu0
  %v578 = vadd.f32 0.0, %v577
  %v579 = vpop.f32.mrf.mxu0
  %580 = vmatprep.mubr.f32.mxu0 0.0
  %581 = vmatmul.mubr.f32.gmra.mxu0 %v231
  %v582 = vpop.f32.mrf.mxu0
  %v583 = vadd.f32 0.0, %v582
  %v584 = vpop.f32.mrf.mxu0
  %585 = vmatprep.mubr.f32.mxu0 0.0
  %586 = vmatmul.mubr.f32.gmra.mxu0 %v234
  %v587 = vpop.f32.mrf.mxu0
  %v588 = vadd.f32 0.0, %v587
  %v589 = vpop.f32.mrf.mxu0
  %590 = vmatprep.mubr.f32.mxu0 0.0
  %591 = vmatmul.mubr.f32.gmra.mxu0 %v237
  %v592 = vpop.f32.mrf.mxu0
  %v593 = vadd.f32 0.0, %v592
  %v594 = vpop.f32.mrf.mxu0
  %595 = vmatprep.mubr.f32.mxu0 0.0
  %596 = vmatmul.mubr.f32.gmra.mxu0 %v240
  %v597 = vpop.f32.mrf.mxu0
  %v598 = vadd.f32 0.0, %v597
  %v599 = vpop.f32.mrf.mxu0
  %600 = vmatprep.mubr.f32.mxu0 0.0
  %601 = vmatmul.mubr.f32.gmra.mxu0 %v243
  %v602 = vpop.f32.mrf.mxu0
  %v603 = vadd.f32 0.0, %v602
  %v604 = vpop.f32.mrf.mxu0
  %605 = vmatprep.mubr.f32.mxu0 0.0
  %606 = vmatmul.mubr.f32.gmra.mxu0 %v246
  %v607 = vpop.f32.mrf.mxu0
  %v608 = vadd.f32 0.0, %v607
  %v609 = vpop.f32.mrf.mxu0
  %610 = vmatprep.mubr.f32.mxu0 0.0
  %611 = vmatmul.mubr.f32.gmra.mxu0 %v249
  %v612 = vpop.f32.mrf.mxu0
  %v613 = vadd.f32 0.0, %v612
  %v614 = vpop.f32.mrf.mxu0
  %615 = vmatprep.mubr.f32.mxu0 0.0
  %616 = vmatmul.mubr.f32.gmra.mxu0 %v252
  %v617 = vpop.f32.mrf.mxu0
  %v618 = vadd.f32 0.0, %v617
  %v619 = vpop.f32.mrf.mxu0
  %620 = vmatprep.mubr.f32.mxu0 0.0
  %621 = vmatmul.mubr.f32.gmra.mxu0 %v255
  %v622 = vpop.f32.mrf.mxu0
  %v623 = vadd.f32 0.0, %v622
  %v624 = vpop.f32.mrf.mxu0
  %625 = vmatprep.mubr.f32.mxu0 0.0
  %626 = vmatmul.mubr.f32.gmra.mxu0 %v258
  %v627 = vpop.f32.mrf.mxu0
  %v628 = vadd.f32 0.0, %v627
  %v629 = vpop.f32.mrf.mxu0
  %630 = vmatprep.mubr.f32.mxu0 0.0
  %631 = vmatmul.mubr.f32.gmra.mxu0 %v261
  %v632 = vpop.f32.mrf.mxu0
  %v633 = vadd.f32 0.0, %v632
  %v634 = vpop.f32.mrf.mxu0
  %635 = vmatprep.mubr.f32.mxu0 0.0
  %636 = vmatmul.mubr.f32.gmra.mxu0 %v264
  %v637 = vpop.f32.mrf.mxu0
  %v638 = vadd.f32 0.0, %v637
  %v639 = vpop.f32.mrf.mxu0
  %640 = vmatprep.mubr.f32.mxu0 0.0
  %641 = vmatmul.mubr.f32.gmra.mxu0 %v267
  %v642 = vpop.f32.mrf.mxu0
  %v643 = vadd.f32 0.0, %v642
  %v644 = vpop.f32.mrf.mxu0
  %645 = vmatprep.mubr.f32.mxu0 0.0
  %646 = vmatmul.mubr.f32.gmra.mxu0 %v270
  %v647 = vpop.f32.mrf.mxu0
  %v648 = vadd.f32 0.0, %v647
  %v649 = vpop.f32.mrf.mxu0
  %650 = vmatprep.mubr.f32.mxu0 0.0
  %651 = vmatmul.mubr.f32.gmra.mxu0 %v273
  %v652 = vpop.f32.mrf.mxu0
  %v653 = vadd.f32 0.0, %v652
  %v654 = vpop.f32.mrf.mxu0
  %655 = vmatprep.mubr.f32.mxu0 0.0
  %656 = vmatmul.mubr.f32.gmra.mxu0 %v276
  %v657 = vpop.f32.mrf.mxu0
  %v658 = vadd.f32 0.0, %v657
  %v659 = vpop.f32.mrf.mxu0
  %660 = vmatprep.mubr.f32.mxu0 0.0
  %661 = vmatmul.mubr.f32.gmra.mxu0 %v279
  %v662 = vpop.f32.mrf.mxu0
  %v663 = vadd.f32 0.0, %v662
  %v664 = vpop.f32.mrf.mxu0
  %665 = vdwg.mxu0
  %v666 = vld [vmem:[%s2] sm:$0x1]
  %v668 = vlaneseq
  %v669 = vshrl.u32 %v668, 7
  %v670 = vsub.s32 0, %v669
  %v671 = vrot.slane %v666, %v670
  %v673 = vmul.f32 %v348, %v671
  %v674 = vmul.f32 %v353, %v671
  %v675 = vmul.f32 %v358, %v671
  %v676 = vmul.f32 %v363, %v671
  %v677 = vmul.f32 %v368, %v671
  %v678 = vmul.f32 %v373, %v671
  %v679 = vmul.f32 %v378, %v671
  %v680 = vmul.f32 %v383, %v671
  %v681 = vmul.f32 %v388, %v671
  %v682 = vmul.f32 %v393, %v671
  %v683 = vmul.f32 %v398, %v671
  %v684 = vmul.f32 %v403, %v671
  %v685 = vmul.f32 %v408, %v671
  %v686 = vmul.f32 %v413, %v671
  %v687 = vmul.f32 %v418, %v671
  %v688 = vmul.f32 %v423, %v671
  %v689 = vmul.f32 %v428, %v671
  %v690 = vmul.f32 %v433, %v671
  %v691 = vmul.f32 %v438, %v671
  %v692 = vmul.f32 %v443, %v671
  %v693 = vmul.f32 %v448, %v671
  %v694 = vmul.f32 %v453, %v671
  %v695 = vmul.f32 %v458, %v671
  %v696 = vmul.f32 %v463, %v671
  %v697 = vmul.f32 %v468, %v671
  %v698 = vmul.f32 %v473, %v671
  %v699 = vmul.f32 %v478, %v671
  %v700 = vmul.f32 %v483, %v671
  %v701 = vmul.f32 %v488, %v671
  %v702 = vmul.f32 %v493, %v671
  %v703 = vmul.f32 %v498, %v671
  %v704 = vmul.f32 %v503, %v671
  %v705 = vmul.f32 %v508, %v671
  %v706 = vmul.f32 %v513, %v671
  %v707 = vmul.f32 %v518, %v671
  %v708 = vmul.f32 %v523, %v671
  %v709 = vmul.f32 %v528, %v671
  %v710 = vmul.f32 %v533, %v671
  %v711 = vmul.f32 %v538, %v671
  %v712 = vmul.f32 %v543, %v671
  %v713 = vmul.f32 %v548, %v671
  %v714 = vmul.f32 %v553, %v671
  %v715 = vmul.f32 %v558, %v671
  %v716 = vmul.f32 %v563, %v671
  %v717 = vmul.f32 %v568, %v671
  %v718 = vmul.f32 %v573, %v671
  %v719 = vmul.f32 %v578, %v671
  %v720 = vmul.f32 %v583, %v671
  %v721 = vmul.f32 %v588, %v671
  %v722 = vmul.f32 %v593, %v671
  %v723 = vmul.f32 %v598, %v671
  %v724 = vmul.f32 %v603, %v671
  %v725 = vmul.f32 %v608, %v671
  %v726 = vmul.f32 %v613, %v671
  %v727 = vmul.f32 %v618, %v671
  %v728 = vmul.f32 %v623, %v671
  %v729 = vmul.f32 %v628, %v671
  %v730 = vmul.f32 %v633, %v671
  %v731 = vmul.f32 %v638, %v671
  %v732 = vmul.f32 %v643, %v671
  %v733 = vmul.f32 %v648, %v671
  %v734 = vmul.f32 %v653, %v671
  %v735 = vmul.f32 %v658, %v671
  %v736 = vmul.f32 %v663, %v671
  %v737 = vld [vmem:[%s3] sm:$0x1]
  %v739 = vlaneseq
  %v740 = vshrl.u32 %v739, 7
  %v741 = vsub.s32 0, %v740
  %v742 = vrot.slane %v737, %v741
  %v744 = vadd.f32 %v673, %v742
  %v745 = vadd.f32 %v674, %v742
  %v746 = vadd.f32 %v675, %v742
  %v747 = vadd.f32 %v676, %v742
  %v748 = vadd.f32 %v677, %v742
  %v749 = vadd.f32 %v678, %v742
  %v750 = vadd.f32 %v679, %v742
  %v751 = vadd.f32 %v680, %v742
  %v752 = vadd.f32 %v681, %v742
  %v753 = vadd.f32 %v682, %v742
  %v754 = vadd.f32 %v683, %v742
  %v755 = vadd.f32 %v684, %v742
  %v756 = vadd.f32 %v685, %v742
  %v757 = vadd.f32 %v686, %v742
  %v758 = vadd.f32 %v687, %v742
  %v759 = vadd.f32 %v688, %v742
  %v760 = vadd.f32 %v689, %v742
  %v761 = vadd.f32 %v690, %v742
  %v762 = vadd.f32 %v691, %v742
  %v763 = vadd.f32 %v692, %v742
  %v764 = vadd.f32 %v693, %v742
  %v765 = vadd.f32 %v694, %v742
  %v766 = vadd.f32 %v695, %v742
  %v767 = vadd.f32 %v696, %v742
  %v768 = vadd.f32 %v697, %v742
  %v769 = vadd.f32 %v698, %v742
  %v770 = vadd.f32 %v699, %v742
  %v771 = vadd.f32 %v700, %v742
  %v772 = vadd.f32 %v701, %v742
  %v773 = vadd.f32 %v702, %v742
  %v774 = vadd.f32 %v703, %v742
  %v775 = vadd.f32 %v704, %v742
  %v776 = vadd.f32 %v705, %v742
  %v777 = vadd.f32 %v706, %v742
  %v778 = vadd.f32 %v707, %v742
  %v779 = vadd.f32 %v708, %v742
  %v780 = vadd.f32 %v709, %v742
  %v781 = vadd.f32 %v710, %v742
  %v782 = vadd.f32 %v711, %v742
  %v783 = vadd.f32 %v712, %v742
  %v784 = vadd.f32 %v713, %v742
  %v785 = vadd.f32 %v714, %v742
  %v786 = vadd.f32 %v715, %v742
  %v787 = vadd.f32 %v716, %v742
  %v788 = vadd.f32 %v717, %v742
  %v789 = vadd.f32 %v718, %v742
  %v790 = vadd.f32 %v719, %v742
  %v791 = vadd.f32 %v720, %v742
  %v792 = vadd.f32 %v721, %v742
  %v793 = vadd.f32 %v722, %v742
  %v794 = vadd.f32 %v723, %v742
  %v795 = vadd.f32 %v724, %v742
  %v796 = vadd.f32 %v725, %v742
  %v797 = vadd.f32 %v726, %v742
  %v798 = vadd.f32 %v727, %v742
  %v799 = vadd.f32 %v728, %v742
  %v800 = vadd.f32 %v729, %v742
  %v801 = vadd.f32 %v730, %v742
  %v802 = vadd.f32 %v731, %v742
  %v803 = vadd.f32 %v732, %v742
  %v804 = vadd.f32 %v733, %v742
  %v805 = vadd.f32 %v734, %v742
  %v806 = vadd.f32 %v735, %v742
  %v807 = vadd.f32 %v736, %v742
  %vm808 = vcmask 523264
  %809 = vst.msk [vmem:[%s5] sm:$0xff] %vm808, %v744
  %810 = vst.msk [vmem:[%s5 + $0x8] sm:$0xff] %vm808, %v745
  %811 = vst.msk [vmem:[%s5 + $0x10] sm:$0xff] %vm808, %v746
  %812 = vst.msk [vmem:[%s5 + $0x18] sm:$0xff] %vm808, %v747
  %813 = vst.msk [vmem:[%s5 + $0x20] sm:$0xff] %vm808, %v748
  %814 = vst.msk [vmem:[%s5 + $0x28] sm:$0xff] %vm808, %v749
  %815 = vst.msk [vmem:[%s5 + $0x30] sm:$0xff] %vm808, %v750
  %816 = vst.msk [vmem:[%s5 + $0x38] sm:$0xff] %vm808, %v751
  %817 = vst.msk [vmem:[%s5 + $0x40] sm:$0xff] %vm808, %v752
  %818 = vst.msk [vmem:[%s5 + $0x48] sm:$0xff] %vm808, %v753
  %819 = vst.msk [vmem:[%s5 + $0x50] sm:$0xff] %vm808, %v754
  %820 = vst.msk [vmem:[%s5 + $0x58] sm:$0xff] %vm808, %v755
  %821 = vst.msk [vmem:[%s5 + $0x60] sm:$0xff] %vm808, %v756
  %822 = vst.msk [vmem:[%s5 + $0x68] sm:$0xff] %vm808, %v757
  %823 = vst.msk [vmem:[%s5 + $0x70] sm:$0xff] %vm808, %v758
  %824 = vst.msk [vmem:[%s5 + $0x78] sm:$0xff] %vm808, %v759
  %825 = vst.msk [vmem:[%s5 + $0x80] sm:$0xff] %vm808, %v760
  %826 = vst.msk [vmem:[%s5 + $0x88] sm:$0xff] %vm808, %v761
  %827 = vst.msk [vmem:[%s5 + $0x90] sm:$0xff] %vm808, %v762
  %828 = vst.msk [vmem:[%s5 + $0x98] sm:$0xff] %vm808, %v763
  %829 = vst.msk [vmem:[%s5 + $0xa0] sm:$0xff] %vm808, %v764
  %830 = vst.msk [vmem:[%s5 + $0xa8] sm:$0xff] %vm808, %v765
  %831 = vst.msk [vmem:[%s5 + $0xb0] sm:$0xff] %vm808, %v766
  %832 = vst.msk [vmem:[%s5 + $0xb8] sm:$0xff] %vm808, %v767
  %833 = vst.msk [vmem:[%s5 + $0xc0] sm:$0xff] %vm808, %v768
  %834 = vst.msk [vmem:[%s5 + $0xc8] sm:$0xff] %vm808, %v769
  %835 = vst.msk [vmem:[%s5 + $0xd0] sm:$0xff] %vm808, %v770
  %836 = vst.msk [vmem:[%s5 + $0xd8] sm:$0xff] %vm808, %v771
  %837 = vst.msk [vmem:[%s5 + $0xe0] sm:$0xff] %vm808, %v772
  %838 = vst.msk [vmem:[%s5 + $0xe8] sm:$0xff] %vm808, %v773
  %839 = vst.msk [vmem:[%s5 + $0xf0] sm:$0xff] %vm808, %v774
  %840 = vst.msk [vmem:[%s5 + $0xf8] sm:$0xff] %vm808, %v775
  %841 = vst.msk [vmem:[%s5 + $0x100] sm:$0xff] %vm808, %v776
  %842 = vst.msk [vmem:[%s5 + $0x108] sm:$0xff] %vm808, %v777
  %843 = vst.msk [vmem:[%s5 + $0x110] sm:$0xff] %vm808, %v778
  %844 = vst.msk [vmem:[%s5 + $0x118] sm:$0xff] %vm808, %v779
  %845 = vst.msk [vmem:[%s5 + $0x120] sm:$0xff] %vm808, %v780
  %846 = vst.msk [vmem:[%s5 + $0x128] sm:$0xff] %vm808, %v781
  %847 = vst.msk [vmem:[%s5 + $0x130] sm:$0xff] %vm808, %v782
  %848 = vst.msk [vmem:[%s5 + $0x138] sm:$0xff] %vm808, %v783
  %849 = vst.msk [vmem:[%s5 + $0x140] sm:$0xff] %vm808, %v784
  %850 = vst.msk [vmem:[%s5 + $0x148] sm:$0xff] %vm808, %v785
  %851 = vst.msk [vmem:[%s5 + $0x150] sm:$0xff] %vm808, %v786
  %852 = vst.msk [vmem:[%s5 + $0x158] sm:$0xff] %vm808, %v787
  %853 = vst.msk [vmem:[%s5 + $0x160] sm:$0xff] %vm808, %v788
  %854 = vst.msk [vmem:[%s5 + $0x168] sm:$0xff] %vm808, %v789
  %855 = vst.msk [vmem:[%s5 + $0x170] sm:$0xff] %vm808, %v790
  %856 = vst.msk [vmem:[%s5 + $0x178] sm:$0xff] %vm808, %v791
  %857 = vst.msk [vmem:[%s5 + $0x180] sm:$0xff] %vm808, %v792
  %858 = vst.msk [vmem:[%s5 + $0x188] sm:$0xff] %vm808, %v793
  %859 = vst.msk [vmem:[%s5 + $0x190] sm:$0xff] %vm808, %v794
  %860 = vst.msk [vmem:[%s5 + $0x198] sm:$0xff] %vm808, %v795
  %861 = vst.msk [vmem:[%s5 + $0x1a0] sm:$0xff] %vm808, %v796
  %862 = vst.msk [vmem:[%s5 + $0x1a8] sm:$0xff] %vm808, %v797
  %863 = vst.msk [vmem:[%s5 + $0x1b0] sm:$0xff] %vm808, %v798
  %864 = vst.msk [vmem:[%s5 + $0x1b8] sm:$0xff] %vm808, %v799
  %865 = vst.msk [vmem:[%s5 + $0x1c0] sm:$0xff] %vm808, %v800
  %866 = vst.msk [vmem:[%s5 + $0x1c8] sm:$0xff] %vm808, %v801
  %867 = vst.msk [vmem:[%s5 + $0x1d0] sm:$0xff] %vm808, %v802
  %868 = vst.msk [vmem:[%s5 + $0x1d8] sm:$0xff] %vm808, %v803
  %869 = vst.msk [vmem:[%s5 + $0x1e0] sm:$0xff] %vm808, %v804
  %870 = vst.msk [vmem:[%s5 + $0x1e8] sm:$0xff] %vm808, %v805
  %871 = vst.msk [vmem:[%s5 + $0x1f0] sm:$0xff] %vm808, %v806
  %872 = vst.msk [vmem:[%s5 + $0x1f8] sm:$0xff] %vm808, %v807
  // Predicated region
  $region22: #{srnet_forward.11} parent=0 // pred_check
    _
  $region23: #{srnet_forward.11} parent=0 // pred_check_branch
    %874 = sbr.rel (0) target = $region25
  $region24: #{srnet_forward.11} parent=0 // pred_region
    _
  $region25: #{srnet_forward.11} parent=0 // pred_fallthru
    _
  // Predicated region
  $region26: #{srnet_forward.11} parent=0 // pred_check
    _
  $region27: #{srnet_forward.11} parent=0 // pred_check_branch
    %876 = sbr.rel (0) target = $region29
  $region28: #{srnet_forward.11} parent=0 // pred_region
    _
  $region29: #{srnet_forward.11} parent=0 // pred_fallthru
    _

// kernel: srnet_forward.12
$region0: #{srnet_forward.12}
  #allocation0 [shape = 'u32[]', space=smem, size = 0x4, offset = 0x4, fixed_abs, tag = 'smem constant byte address 0x4 - core index']
  #allocation1 [shape = 'u32[144,128]{1,0:T(1,128)}', space=vmem, size = 0x12000, scoped, tag = 'internal scratch']
  %s0 = inlined_call_operand.vmem [shape: f32[512,576], index: 0, kind: input, shape index: {}]
  %s1 = inlined_call_operand.vmem [shape: bf16[576,32], index: 1, kind: input, shape index: {}]
  %s2 = inlined_call_operand.vmem [shape: f32[1,32], index: 2, kind: input, shape index: {}]
  %s3 = inlined_call_operand.vmem [shape: f32[1,32], index: 3, kind: input, shape index: {}]
  %s4 = inlined_call_operand.vmem [shape: f32[1,32], index: 4, kind: input, shape index: {}]
  %s5 = inlined_call_operand.vmem [shape: f32[512,32], index: 5, kind: output, shape index: {}]
  %s6 = sld [smem:[#allocation0]]
  $region30: #{srnet_forward.12} parent=0
    _
  %s8 = ssub.s32 1, %s6
  %s9 = scalar_select 0, %s8, %s6
  // Predicated region
  $region2: #{srnet_forward.12} parent=0 // pred_check
    _
  $region3: #{srnet_forward.12} parent=0 // pred_check_branch
    %11 = sbr.rel (0) target = $region5
  $region4: #{srnet_forward.12} parent=0 // pred_region
    _
  $region5: #{srnet_forward.12} parent=0 // pred_fallthru
    _
  // Predicated region
  $region6: #{srnet_forward.12} parent=0 // pred_check
    _
  $region7: #{srnet_forward.12} parent=0 // pred_check_branch
    %13 = sbr.rel (0) target = $region9
  $region8: #{srnet_forward.12} parent=0 // pred_region
    _
  $region9: #{srnet_forward.12} parent=0 // pred_fallthru
    _
  // Predicated region
  $region10: #{srnet_forward.12} parent=0 // pred_check
    _
  $region11: #{srnet_forward.12} parent=0 // pred_check_branch
    %15 = sbr.rel (0) target = $region13
  $region12: #{srnet_forward.12} parent=0 // pred_region
    _
  $region13: #{srnet_forward.12} parent=0 // pred_fallthru
    _
  // Predicated region
  $region14: #{srnet_forward.12} parent=0 // pred_check
    _
  $region15: #{srnet_forward.12} parent=0 // pred_check_branch
    %17 = sbr.rel (0) target = $region17
  $region16: #{srnet_forward.12} parent=0 // pred_region
    _
  $region17: #{srnet_forward.12} parent=0 // pred_fallthru
    _
  // Predicated region
  $region18: #{srnet_forward.12} parent=0 // pred_check
    _
  $region19: #{srnet_forward.12} parent=0 // pred_check_branch
    %19 = sbr.rel (0) target = $region21
  $region20: #{srnet_forward.12} parent=0 // pred_region
    _
  $region21: #{srnet_forward.12} parent=0 // pred_fallthru
    _
  %v21 = vld [vmem:[%s0] sm:$0xff]
  %v22 = vld [vmem:[%s0 + $0x8] sm:$0xff]
  %v23 = vld [vmem:[%s0 + $0x10] sm:$0xff]
  %v24 = vld [vmem:[%s0 + $0x18] sm:$0xff]
  %v25 = vld [vmem:[%s0 + $0x20] sm:$0xff]
  %v26 = vld [vmem:[%s0 + $0x28] sm:$0xff]
  %v27 = vld [vmem:[%s0 + $0x30] sm:$0xff]
  %v28 = vld [vmem:[%s0 + $0x38] sm:$0xff]
  %v29 = vld [vmem:[%s0 + $0x40] sm:$0xff]
  %v30 = vld [vmem:[%s0 + $0x48] sm:$0xff]
  %v31 = vld [vmem:[%s0 + $0x50] sm:$0xff]
  %v32 = vld [vmem:[%s0 + $0x58] sm:$0xff]
  %v33 = vld [vmem:[%s0 + $0x60] sm:$0xff]
  %v34 = vld [vmem:[%s0 + $0x68] sm:$0xff]
  %v35 = vld [vmem:[%s0 + $0x70] sm:$0xff]
  %v36 = vld [vmem:[%s0 + $0x78] sm:$0xff]
  %v37 = vld [vmem:[%s0 + $0x80] sm:$0xff]
  %v38 = vld [vmem:[%s0 + $0x88] sm:$0xff]
  %v39 = vld [vmem:[%s0 + $0x90] sm:$0xff]
  %v40 = vld [vmem:[%s0 + $0x98] sm:$0xff]
  %v41 = vld [vmem:[%s0 + $0xa0] sm:$0xff]
  %v42 = vld [vmem:[%s0 + $0xa8] sm:$0xff]
  %v43 = vld [vmem:[%s0 + $0xb0] sm:$0xff]
  %v44 = vld [vmem:[%s0 + $0xb8] sm:$0xff]
  %v45 = vld [vmem:[%s0 + $0xc0] sm:$0xff]
  %v46 = vld [vmem:[%s0 + $0xc8] sm:$0xff]
  %v47 = vld [vmem:[%s0 + $0xd0] sm:$0xff]
  %v48 = vld [vmem:[%s0 + $0xd8] sm:$0xff]
  %v49 = vld [vmem:[%s0 + $0xe0] sm:$0xff]
  %v50 = vld [vmem:[%s0 + $0xe8] sm:$0xff]
  %v51 = vld [vmem:[%s0 + $0xf0] sm:$0xff]
  %v52 = vld [vmem:[%s0 + $0xf8] sm:$0xff]
  %v53 = vld [vmem:[%s0 + $0x100] sm:$0xff]
  %v54 = vld [vmem:[%s0 + $0x108] sm:$0xff]
  %v55 = vld [vmem:[%s0 + $0x110] sm:$0xff]
  %v56 = vld [vmem:[%s0 + $0x118] sm:$0xff]
  %v57 = vld [vmem:[%s0 + $0x120] sm:$0xff]
  %v58 = vld [vmem:[%s0 + $0x128] sm:$0xff]
  %v59 = vld [vmem:[%s0 + $0x130] sm:$0xff]
  %v60 = vld [vmem:[%s0 + $0x138] sm:$0xff]
  %v61 = vld [vmem:[%s0 + $0x140] sm:$0xff]
  %v62 = vld [vmem:[%s0 + $0x148] sm:$0xff]
  %v63 = vld [vmem:[%s0 + $0x150] sm:$0xff]
  %v64 = vld [vmem:[%s0 + $0x158] sm:$0xff]
  %v65 = vld [vmem:[%s0 + $0x160] sm:$0xff]
  %v66 = vld [vmem:[%s0 + $0x168] sm:$0xff]
  %v67 = vld [vmem:[%s0 + $0x170] sm:$0xff]
  %v68 = vld [vmem:[%s0 + $0x178] sm:$0xff]
  %v69 = vld [vmem:[%s0 + $0x180] sm:$0xff]
  %v70 = vld [vmem:[%s0 + $0x188] sm:$0xff]
  %v71 = vld [vmem:[%s0 + $0x190] sm:$0xff]
  %v72 = vld [vmem:[%s0 + $0x198] sm:$0xff]
  %v73 = vld [vmem:[%s0 + $0x1a0] sm:$0xff]
  %v74 = vld [vmem:[%s0 + $0x1a8] sm:$0xff]
  %v75 = vld [vmem:[%s0 + $0x1b0] sm:$0xff]
  %v76 = vld [vmem:[%s0 + $0x1b8] sm:$0xff]
  %v77 = vld [vmem:[%s0 + $0x1c0] sm:$0xff]
  %v78 = vld [vmem:[%s0 + $0x1c8] sm:$0xff]
  %v79 = vld [vmem:[%s0 + $0x1d0] sm:$0xff]
  %v80 = vld [vmem:[%s0 + $0x1d8] sm:$0xff]
  %v81 = vld [vmem:[%s0 + $0x1e0] sm:$0xff]
  %v82 = vld [vmem:[%s0 + $0x1e8] sm:$0xff]
  %v83 = vld [vmem:[%s0 + $0x1f0] sm:$0xff]
  %v84 = vld [vmem:[%s0 + $0x1f8] sm:$0xff]
  %v85 = vld [vmem:[%s0 + $0x200] sm:$0xff]
  %v86 = vld [vmem:[%s0 + $0x208] sm:$0xff]
  %v87 = vld [vmem:[%s0 + $0x210] sm:$0xff]
  %v88 = vld [vmem:[%s0 + $0x218] sm:$0xff]
  %v89 = vld [vmem:[%s0 + $0x220] sm:$0xff]
  %v90 = vld [vmem:[%s0 + $0x228] sm:$0xff]
  %v91 = vld [vmem:[%s0 + $0x230] sm:$0xff]
  %v92 = vld [vmem:[%s0 + $0x238] sm:$0xff]
  %v93 = vld [vmem:[%s0 + $0x240] sm:$0xff]
  %v94 = vld [vmem:[%s0 + $0x248] sm:$0xff]
  %v95 = vld [vmem:[%s0 + $0x250] sm:$0xff]
  %v96 = vld [vmem:[%s0 + $0x258] sm:$0xff]
  %v97 = vld [vmem:[%s0 + $0x260] sm:$0xff]
  %v98 = vld [vmem:[%s0 + $0x268] sm:$0xff]
  %v99 = vld [vmem:[%s0 + $0x270] sm:$0xff]
  %v100 = vld [vmem:[%s0 + $0x278] sm:$0xff]
  %v101 = vld [vmem:[%s0 + $0x280] sm:$0xff]
  %v102 = vld [vmem:[%s0 + $0x288] sm:$0xff]
  %v103 = vld [vmem:[%s0 + $0x290] sm:$0xff]
  %v104 = vld [vmem:[%s0 + $0x298] sm:$0xff]
  %v105 = vld [vmem:[%s0 + $0x2a0] sm:$0xff]
  %v106 = vld [vmem:[%s0 + $0x2a8] sm:$0xff]
  %v107 = vld [vmem:[%s0 + $0x2b0] sm:$0xff]
  %v108 = vld [vmem:[%s0 + $0x2b8] sm:$0xff]
  %v109 = vld [vmem:[%s0 + $0x2c0] sm:$0xff]
  %v110 = vld [vmem:[%s0 + $0x2c8] sm:$0xff]
  %v111 = vld [vmem:[%s0 + $0x2d0] sm:$0xff]
  %v112 = vld [vmem:[%s0 + $0x2d8] sm:$0xff]
  %v113 = vld [vmem:[%s0 + $0x2e0] sm:$0xff]
  %v114 = vld [vmem:[%s0 + $0x2e8] sm:$0xff]
  %v115 = vld [vmem:[%s0 + $0x2f0] sm:$0xff]
  %v116 = vld [vmem:[%s0 + $0x2f8] sm:$0xff]
  %v117 = vld [vmem:[%s0 + $0x300] sm:$0xff]
  %v118 = vld [vmem:[%s0 + $0x308] sm:$0xff]
  %v119 = vld [vmem:[%s0 + $0x310] sm:$0xff]
  %v120 = vld [vmem:[%s0 + $0x318] sm:$0xff]
  %v121 = vld [vmem:[%s0 + $0x320] sm:$0xff]
  %v122 = vld [vmem:[%s0 + $0x328] sm:$0xff]
  %v123 = vld [vmem:[%s0 + $0x330] sm:$0xff]
  %v124 = vld [vmem:[%s0 + $0x338] sm:$0xff]
  %v125 = vld [vmem:[%s0 + $0x340] sm:$0xff]
  %v126 = vld [vmem:[%s0 + $0x348] sm:$0xff]
  %v127 = vld [vmem:[%s0 + $0x350] sm:$0xff]
  %v128 = vld [vmem:[%s0 + $0x358] sm:$0xff]
  %v129 = vld [vmem:[%s0 + $0x360] sm:$0xff]
  %v130 = vld [vmem:[%s0 + $0x368] sm:$0xff]
  %v131 = vld [vmem:[%s0 + $0x370] sm:$0xff]
  %v132 = vld [vmem:[%s0 + $0x378] sm:$0xff]
  %v133 = vld [vmem:[%s0 + $0x380] sm:$0xff]
  %v134 = vld [vmem:[%s0 + $0x388] sm:$0xff]
  %v135 = vld [vmem:[%s0 + $0x390] sm:$0xff]
  %v136 = vld [vmem:[%s0 + $0x398] sm:$0xff]
  %v137 = vld [vmem:[%s0 + $0x3a0] sm:$0xff]
  %v138 = vld [vmem:[%s0 + $0x3a8] sm:$0xff]
  %v139 = vld [vmem:[%s0 + $0x3b0] sm:$0xff]
  %v140 = vld [vmem:[%s0 + $0x3b8] sm:$0xff]
  %v141 = vld [vmem:[%s0 + $0x3c0] sm:$0xff]
  %v142 = vld [vmem:[%s0 + $0x3c8] sm:$0xff]
  %v143 = vld [vmem:[%s0 + $0x3d0] sm:$0xff]
  %v144 = vld [vmem:[%s0 + $0x3d8] sm:$0xff]
  %v145 = vld [vmem:[%s0 + $0x3e0] sm:$0xff]
  %v146 = vld [vmem:[%s0 + $0x3e8] sm:$0xff]
  %v147 = vld [vmem:[%s0 + $0x3f0] sm:$0xff]
  %v148 = vld [vmem:[%s0 + $0x3f8] sm:$0xff]
  %v149 = vld [vmem:[%s0 + $0x400] sm:$0xff]
  %v150 = vld [vmem:[%s0 + $0x408] sm:$0xff]
  %v151 = vld [vmem:[%s0 + $0x410] sm:$0xff]
  %v152 = vld [vmem:[%s0 + $0x418] sm:$0xff]
  %v153 = vld [vmem:[%s0 + $0x420] sm:$0xff]
  %v154 = vld [vmem:[%s0 + $0x428] sm:$0xff]
  %v155 = vld [vmem:[%s0 + $0x430] sm:$0xff]
  %v156 = vld [vmem:[%s0 + $0x438] sm:$0xff]
  %v157 = vld [vmem:[%s0 + $0x440] sm:$0xff]
  %v158 = vld [vmem:[%s0 + $0x448] sm:$0xff]
  %v159 = vld [vmem:[%s0 + $0x450] sm:$0xff]
  %v160 = vld [vmem:[%s0 + $0x458] sm:$0xff]
  %v161 = vld [vmem:[%s0 + $0x460] sm:$0xff]
  %v162 = vld [vmem:[%s0 + $0x468] sm:$0xff]
  %v163 = vld [vmem:[%s0 + $0x470] sm:$0xff]
  %v164 = vld [vmem:[%s0 + $0x478] sm:$0xff]
  %v165 = vld [vmem:[%s0 + $0x480] sm:$0xff]
  %v166 = vld [vmem:[%s0 + $0x488] sm:$0xff]
  %v167 = vld [vmem:[%s0 + $0x490] sm:$0xff]
  %v168 = vld [vmem:[%s0 + $0x498] sm:$0xff]
  %v169 = vld [vmem:[%s0 + $0x4a0] sm:$0xff]
  %v170 = vld [vmem:[%s0 + $0x4a8] sm:$0xff]
  %v171 = vld [vmem:[%s0 + $0x4b0] sm:$0xff]
  %v172 = vld [vmem:[%s0 + $0x4b8] sm:$0xff]
  %v173 = vld [vmem:[%s0 + $0x4c0] sm:$0xff]
  %v174 = vld [vmem:[%s0 + $0x4c8] sm:$0xff]
  %v175 = vld [vmem:[%s0 + $0x4d0] sm:$0xff]
  %v176 = vld [vmem:[%s0 + $0x4d8] sm:$0xff]
  %v177 = vld [vmem:[%s0 + $0x4e0] sm:$0xff]
  %v178 = vld [vmem:[%s0 + $0x4e8] sm:$0xff]
  %v179 = vld [vmem:[%s0 + $0x4f0] sm:$0xff]
  %v180 = vld [vmem:[%s0 + $0x4f8] sm:$0xff]
  %v181 = vld [vmem:[%s0 + $0x500] sm:$0xff]
  %v182 = vld [vmem:[%s0 + $0x508] sm:$0xff]
  %v183 = vld [vmem:[%s0 + $0x510] sm:$0xff]
  %v184 = vld [vmem:[%s0 + $0x518] sm:$0xff]
  %v185 = vld [vmem:[%s0 + $0x520] sm:$0xff]
  %v186 = vld [vmem:[%s0 + $0x528] sm:$0xff]
  %v187 = vld [vmem:[%s0 + $0x530] sm:$0xff]
  %v188 = vld [vmem:[%s0 + $0x538] sm:$0xff]
  %v189 = vld [vmem:[%s0 + $0x540] sm:$0xff]
  %v190 = vld [vmem:[%s0 + $0x548] sm:$0xff]
  %v191 = vld [vmem:[%s0 + $0x550] sm:$0xff]
  %v192 = vld [vmem:[%s0 + $0x558] sm:$0xff]
  %v193 = vld [vmem:[%s0 + $0x560] sm:$0xff]
  %v194 = vld [vmem:[%s0 + $0x568] sm:$0xff]
  %v195 = vld [vmem:[%s0 + $0x570] sm:$0xff]
  %v196 = vld [vmem:[%s0 + $0x578] sm:$0xff]
  %v197 = vld [vmem:[%s0 + $0x580] sm:$0xff]
  %v198 = vld [vmem:[%s0 + $0x588] sm:$0xff]
  %v199 = vld [vmem:[%s0 + $0x590] sm:$0xff]
  %v200 = vld [vmem:[%s0 + $0x598] sm:$0xff]
  %v201 = vld [vmem:[%s0 + $0x5a0] sm:$0xff]
  %v202 = vld [vmem:[%s0 + $0x5a8] sm:$0xff]
  %v203 = vld [vmem:[%s0 + $0x5b0] sm:$0xff]
  %v204 = vld [vmem:[%s0 + $0x5b8] sm:$0xff]
  %v205 = vld [vmem:[%s0 + $0x5c0] sm:$0xff]
  %v206 = vld [vmem:[%s0 + $0x5c8] sm:$0xff]
  %v207 = vld [vmem:[%s0 + $0x5d0] sm:$0xff]
  %v208 = vld [vmem:[%s0 + $0x5d8] sm:$0xff]
  %v209 = vld [vmem:[%s0 + $0x5e0] sm:$0xff]
  %v210 = vld [vmem:[%s0 + $0x5e8] sm:$0xff]
  %v211 = vld [vmem:[%s0 + $0x5f0] sm:$0xff]
  %v212 = vld [vmem:[%s0 + $0x5f8] sm:$0xff]
  %v213 = vld [vmem:[%s0 + $0x600] sm:$0xff]
  %v214 = vld [vmem:[%s0 + $0x608] sm:$0xff]
  %v215 = vld [vmem:[%s0 + $0x610] sm:$0xff]
  %v216 = vld [vmem:[%s0 + $0x618] sm:$0xff]
  %v217 = vld [vmem:[%s0 + $0x620] sm:$0xff]
  %v218 = vld [vmem:[%s0 + $0x628] sm:$0xff]
  %v219 = vld [vmem:[%s0 + $0x630] sm:$0xff]
  %v220 = vld [vmem:[%s0 + $0x638] sm:$0xff]
  %v221 = vld [vmem:[%s0 + $0x640] sm:$0xff]
  %v222 = vld [vmem:[%s0 + $0x648] sm:$0xff]
  %v223 = vld [vmem:[%s0 + $0x650] sm:$0xff]
  %v224 = vld [vmem:[%s0 + $0x658] sm:$0xff]
  %v225 = vld [vmem:[%s0 + $0x660] sm:$0xff]
  %v226 = vld [vmem:[%s0 + $0x668] sm:$0xff]
  %v227 = vld [vmem:[%s0 + $0x670] sm:$0xff]
  %v228 = vld [vmem:[%s0 + $0x678] sm:$0xff]
  %v229 = vld [vmem:[%s0 + $0x680] sm:$0xff]
  %v230 = vld [vmem:[%s0 + $0x688] sm:$0xff]
  %v231 = vld [vmem:[%s0 + $0x690] sm:$0xff]
  %v232 = vld [vmem:[%s0 + $0x698] sm:$0xff]
  %v233 = vld [vmem:[%s0 + $0x6a0] sm:$0xff]
  %v234 = vld [vmem:[%s0 + $0x6a8] sm:$0xff]
  %v235 = vld [vmem:[%s0 + $0x6b0] sm:$0xff]
  %v236 = vld [vmem:[%s0 + $0x6b8] sm:$0xff]
  %v237 = vld [vmem:[%s0 + $0x6c0] sm:$0xff]
  %v238 = vld [vmem:[%s0 + $0x6c8] sm:$0xff]
  %v239 = vld [vmem:[%s0 + $0x6d0] sm:$0xff]
  %v240 = vld [vmem:[%s0 + $0x6d8] sm:$0xff]
  %v241 = vld [vmem:[%s0 + $0x6e0] sm:$0xff]
  %v242 = vld [vmem:[%s0 + $0x6e8] sm:$0xff]
  %v243 = vld [vmem:[%s0 + $0x6f0] sm:$0xff]
  %v244 = vld [vmem:[%s0 + $0x6f8] sm:$0xff]
  %v245 = vld [vmem:[%s0 + $0x700] sm:$0xff]
  %v246 = vld [vmem:[%s0 + $0x708] sm:$0xff]
  %v247 = vld [vmem:[%s0 + $0x710] sm:$0xff]
  %v248 = vld [vmem:[%s0 + $0x718] sm:$0xff]
  %v249 = vld [vmem:[%s0 + $0x720] sm:$0xff]
  %v250 = vld [vmem:[%s0 + $0x728] sm:$0xff]
  %v251 = vld [vmem:[%s0 + $0x730] sm:$0xff]
  %v252 = vld [vmem:[%s0 + $0x738] sm:$0xff]
  %v253 = vld [vmem:[%s0 + $0x740] sm:$0xff]
  %v254 = vld [vmem:[%s0 + $0x748] sm:$0xff]
  %v255 = vld [vmem:[%s0 + $0x750] sm:$0xff]
  %v256 = vld [vmem:[%s0 + $0x758] sm:$0xff]
  %v257 = vld [vmem:[%s0 + $0x760] sm:$0xff]
  %v258 = vld [vmem:[%s0 + $0x768] sm:$0xff]
  %v259 = vld [vmem:[%s0 + $0x770] sm:$0xff]
  %v260 = vld [vmem:[%s0 + $0x778] sm:$0xff]
  %v261 = vld [vmem:[%s0 + $0x780] sm:$0xff]
  %v262 = vld [vmem:[%s0 + $0x788] sm:$0xff]
  %v263 = vld [vmem:[%s0 + $0x790] sm:$0xff]
  %v264 = vld [vmem:[%s0 + $0x798] sm:$0xff]
  %v265 = vld [vmem:[%s0 + $0x7a0] sm:$0xff]
  %v266 = vld [vmem:[%s0 + $0x7a8] sm:$0xff]
  %v267 = vld [vmem:[%s0 + $0x7b0] sm:$0xff]
  %v268 = vld [vmem:[%s0 + $0x7b8] sm:$0xff]
  %v269 = vld [vmem:[%s0 + $0x7c0] sm:$0xff]
  %v270 = vld [vmem:[%s0 + $0x7c8] sm:$0xff]
  %v271 = vld [vmem:[%s0 + $0x7d0] sm:$0xff]
  %v272 = vld [vmem:[%s0 + $0x7d8] sm:$0xff]
  %v273 = vld [vmem:[%s0 + $0x7e0] sm:$0xff]
  %v274 = vld [vmem:[%s0 + $0x7e8] sm:$0xff]
  %v275 = vld [vmem:[%s0 + $0x7f0] sm:$0xff]
  %v276 = vld [vmem:[%s0 + $0x7f8] sm:$0xff]
  %v277 = vld [vmem:[%s0 + $0x800] sm:$0xff]
  %v278 = vld [vmem:[%s0 + $0x808] sm:$0xff]
  %v279 = vld [vmem:[%s0 + $0x810] sm:$0xff]
  %v280 = vld [vmem:[%s0 + $0x818] sm:$0xff]
  %v281 = vld [vmem:[%s0 + $0x820] sm:$0xff]
  %v282 = vld [vmem:[%s0 + $0x828] sm:$0xff]
  %v283 = vld [vmem:[%s0 + $0x830] sm:$0xff]
  %v284 = vld [vmem:[%s0 + $0x838] sm:$0xff]
  %v285 = vld [vmem:[%s0 + $0x840] sm:$0xff]
  %v286 = vld [vmem:[%s0 + $0x848] sm:$0xff]
  %v287 = vld [vmem:[%s0 + $0x850] sm:$0xff]
  %v288 = vld [vmem:[%s0 + $0x858] sm:$0xff]
  %v289 = vld [vmem:[%s0 + $0x860] sm:$0xff]
  %v290 = vld [vmem:[%s0 + $0x868] sm:$0xff]
  %v291 = vld [vmem:[%s0 + $0x870] sm:$0xff]
  %v292 = vld [vmem:[%s0 + $0x878] sm:$0xff]
  %v293 = vld [vmem:[%s0 + $0x880] sm:$0xff]
  %v294 = vld [vmem:[%s0 + $0x888] sm:$0xff]
  %v295 = vld [vmem:[%s0 + $0x890] sm:$0xff]
  %v296 = vld [vmem:[%s0 + $0x898] sm:$0xff]
  %v297 = vld [vmem:[%s0 + $0x8a0] sm:$0xff]
  %v298 = vld [vmem:[%s0 + $0x8a8] sm:$0xff]
  %v299 = vld [vmem:[%s0 + $0x8b0] sm:$0xff]
  %v300 = vld [vmem:[%s0 + $0x8b8] sm:$0xff]
  %v301 = vld [vmem:[%s0 + $0x8c0] sm:$0xff]
  %v302 = vld [vmem:[%s0 + $0x8c8] sm:$0xff]
  %v303 = vld [vmem:[%s0 + $0x8d0] sm:$0xff]
  %v304 = vld [vmem:[%s0 + $0x8d8] sm:$0xff]
  %v305 = vld [vmem:[%s0 + $0x8e0] sm:$0xff]
  %v306 = vld [vmem:[%s0 + $0x8e8] sm:$0xff]
  %v307 = vld [vmem:[%s0 + $0x8f0] sm:$0xff]
  %v308 = vld [vmem:[%s0 + $0x8f8] sm:$0xff]
  %v309 = vld [vmem:[%s0 + $0x900] sm:$0xff]
  %v310 = vld [vmem:[%s0 + $0x908] sm:$0xff]
  %v311 = vld [vmem:[%s0 + $0x910] sm:$0xff]
  %v312 = vld [vmem:[%s0 + $0x918] sm:$0xff]
  %v313 = vld [vmem:[%s0 + $0x920] sm:$0xff]
  %v314 = vld [vmem:[%s0 + $0x928] sm:$0xff]
  %v315 = vld [vmem:[%s0 + $0x930] sm:$0xff]
  %v316 = vld [vmem:[%s0 + $0x938] sm:$0xff]
  %v317 = vld [vmem:[%s0 + $0x940] sm:$0xff]
  %v318 = vld [vmem:[%s0 + $0x948] sm:$0xff]
  %v319 = vld [vmem:[%s0 + $0x950] sm:$0xff]
  %v320 = vld [vmem:[%s0 + $0x958] sm:$0xff]
  %v321 = vld [vmem:[%s0 + $0x960] sm:$0xff]
  %v322 = vld [vmem:[%s0 + $0x968] sm:$0xff]
  %v323 = vld [vmem:[%s0 + $0x970] sm:$0xff]
  %v324 = vld [vmem:[%s0 + $0x978] sm:$0xff]
  %v325 = vld [vmem:[%s0 + $0x980] sm:$0xff]
  %v326 = vld [vmem:[%s0 + $0x988] sm:$0xff]
  %v327 = vld [vmem:[%s0 + $0x990] sm:$0xff]
  %v328 = vld [vmem:[%s0 + $0x998] sm:$0xff]
  %v329 = vld [vmem:[%s0 + $0x9a0] sm:$0xff]
  %v330 = vld [vmem:[%s0 + $0x9a8] sm:$0xff]
  %v331 = vld [vmem:[%s0 + $0x9b0] sm:$0xff]
  %v332 = vld [vmem:[%s0 + $0x9b8] sm:$0xff]
  %v333 = vld [vmem:[%s0 + $0x9c0] sm:$0xff]
  %v334 = vld [vmem:[%s0 + $0x9c8] sm:$0xff]
  %v335 = vld [vmem:[%s0 + $0x9d0] sm:$0xff]
  %v336 = vld [vmem:[%s0 + $0x9d8] sm:$0xff]
  %v337 = vld [vmem:[%s0 + $0x9e0] sm:$0xff]
  %v338 = vld [vmem:[%s0 + $0x9e8] sm:$0xff]
  %v339 = vld [vmem:[%s0 + $0x9f0] sm:$0xff]
  %v340 = vld [vmem:[%s0 + $0x9f8] sm:$0xff]
  %v341 = vpack.c.bf16 %v26, %v21
  %v342 = vpack.c.bf16 %v27, %v22
  %v343 = vpack.c.bf16 %v28, %v23
  %v344 = vpack.c.bf16 %v29, %v24
  %v345 = vpack.c.bf16 %v30, %v25
  %v346 = vpack.c.bf16 %v36, %v31
  %v347 = vpack.c.bf16 %v37, %v32
  %v348 = vpack.c.bf16 %v38, %v33
  %v349 = vpack.c.bf16 %v39, %v34
  %v350 = vpack.c.bf16 %v40, %v35
  %v351 = vpack.c.bf16 %v46, %v41
  %v352 = vpack.c.bf16 %v47, %v42
  %v353 = vpack.c.bf16 %v48, %v43
  %v354 = vpack.c.bf16 %v49, %v44
  %v355 = vpack.c.bf16 %v50, %v45
  %v356 = vpack.c.bf16 %v56, %v51
  %v357 = vpack.c.bf16 %v57, %v52
  %v358 = vpack.c.bf16 %v58, %v53
  %v359 = vpack.c.bf16 %v59, %v54
  %v360 = vpack.c.bf16 %v60, %v55
  %v361 = vpack.c.bf16 %v66, %v61
  %v362 = vpack.c.bf16 %v67, %v62
  %v363 = vpack.c.bf16 %v68, %v63
  %v364 = vpack.c.bf16 %v69, %v64
  %v365 = vpack.c.bf16 %v70, %v65
  %v366 = vpack.c.bf16 %v76, %v71
  %v367 = vpack.c.bf16 %v77, %v72
  %v368 = vpack.c.bf16 %v78, %v73
  %v369 = vpack.c.bf16 %v79, %v74
  %v370 = vpack.c.bf16 %v80, %v75
  %v371 = vpack.c.bf16 %v86, %v81
  %v372 = vpack.c.bf16 %v87, %v82
  %v373 = vpack.c.bf16 %v88, %v83
  %v374 = vpack.c.bf16 %v89, %v84
  %v375 = vpack.c.bf16 %v90, %v85
  %v376 = vpack.c.bf16 %v96, %v91
  %v377 = vpack.c.bf16 %v97, %v92
  %v378 = vpack.c.bf16 %v98, %v93
  %v379 = vpack.c.bf16 %v99, %v94
  %v380 = vpack.c.bf16 %v100, %v95
  %v381 = vpack.c.bf16 %v106, %v101
  %v382 = vpack.c.bf16 %v107, %v102
  %v383 = vpack.c.bf16 %v108, %v103
  %v384 = vpack.c.bf16 %v109, %v104
  %v385 = vpack.c.bf16 %v110, %v105
  %v386 = vpack.c.bf16 %v116, %v111
  %v387 = vpack.c.bf16 %v117, %v112
  %v388 = vpack.c.bf16 %v118, %v113
  %v389 = vpack.c.bf16 %v119, %v114
  %v390 = vpack.c.bf16 %v120, %v115
  %v391 = vpack.c.bf16 %v126, %v121
  %v392 = vpack.c.bf16 %v127, %v122
  %v393 = vpack.c.bf16 %v128, %v123
  %v394 = vpack.c.bf16 %v129, %v124
  %v395 = vpack.c.bf16 %v130, %v125
  %v396 = vpack.c.bf16 %v136, %v131
  %v397 = vpack.c.bf16 %v137, %v132
  %v398 = vpack.c.bf16 %v138, %v133
  %v399 = vpack.c.bf16 %v139, %v134
  %v400 = vpack.c.bf16 %v140, %v135
  %v401 = vpack.c.bf16 %v146, %v141
  %v402 = vpack.c.bf16 %v147, %v142
  %v403 = vpack.c.bf16 %v148, %v143
  %v404 = vpack.c.bf16 %v149, %v144
  %v405 = vpack.c.bf16 %v150, %v145
  %v406 = vpack.c.bf16 %v156, %v151
  %v407 = vpack.c.bf16 %v157, %v152
  %v408 = vpack.c.bf16 %v158, %v153
  %v409 = vpack.c.bf16 %v159, %v154
  %v410 = vpack.c.bf16 %v160, %v155
  %v411 = vpack.c.bf16 %v166, %v161
  %v412 = vpack.c.bf16 %v167, %v162
  %v413 = vpack.c.bf16 %v168, %v163
  %v414 = vpack.c.bf16 %v169, %v164
  %v415 = vpack.c.bf16 %v170, %v165
  %v416 = vpack.c.bf16 %v176, %v171
  %v417 = vpack.c.bf16 %v177, %v172
  %v418 = vpack.c.bf16 %v178, %v173
  %v419 = vpack.c.bf16 %v179, %v174
  %v420 = vpack.c.bf16 %v180, %v175
  %v421 = vpack.c.bf16 %v186, %v181
  %v422 = vpack.c.bf16 %v187, %v182
  %v423 = vpack.c.bf16 %v188, %v183
  %v424 = vpack.c.bf16 %v189, %v184
  %v425 = vpack.c.bf16 %v190, %v185
  %v426 = vpack.c.bf16 %v196, %v191
  %v427 = vpack.c.bf16 %v197, %v192
  %v428 = vpack.c.bf16 %v198, %v193
  %v429 = vpack.c.bf16 %v199, %v194
  %v430 = vpack.c.bf16 %v200, %v195
  %v431 = vpack.c.bf16 %v206, %v201
  %v432 = vpack.c.bf16 %v207, %v202
  %v433 = vpack.c.bf16 %v208, %v203
  %v434 = vpack.c.bf16 %v209, %v204
  %v435 = vpack.c.bf16 %v210, %v205
  %v436 = vpack.c.bf16 %v216, %v211
  %v437 = vpack.c.bf16 %v217, %v212
  %v438 = vpack.c.bf16 %v218, %v213
  %v439 = vpack.c.bf16 %v219, %v214
  %v440 = vpack.c.bf16 %v220, %v215
  %v441 = vpack.c.bf16 %v226, %v221
  %v442 = vpack.c.bf16 %v227, %v222
  %v443 = vpack.c.bf16 %v228, %v223
  %v444 = vpack.c.bf16 %v229, %v224
  %v445 = vpack.c.bf16 %v230, %v225
  %v446 = vpack.c.bf16 %v236, %v231
  %v447 = vpack.c.bf16 %v237, %v232
  %v448 = vpack.c.bf16 %v238, %v233
  %v449 = vpack.c.bf16 %v239, %v234
  %v450 = vpack.c.bf16 %v240, %v235
  %v451 = vpack.c.bf16 %v246, %v241
  %v452 = vpack.c.bf16 %v247, %v242
  %v453 = vpack.c.bf16 %v248, %v243
  %v454 = vpack.c.bf16 %v249, %v244
  %v455 = vpack.c.bf16 %v250, %v245
  %v456 = vpack.c.bf16 %v256, %v251
  %v457 = vpack.c.bf16 %v257, %v252
  %v458 = vpack.c.bf16 %v258, %v253
  %v459 = vpack.c.bf16 %v259, %v254
  %v460 = vpack.c.bf16 %v260, %v255
  %v461 = vpack.c.bf16 %v266, %v261
  %v462 = vpack.c.bf16 %v267, %v262
  %v463 = vpack.c.bf16 %v268, %v263
  %v464 = vpack.c.bf16 %v269, %v264
  %v465 = vpack.c.bf16 %v270, %v265
  %v466 = vpack.c.bf16 %v276, %v271
  %v467 = vpack.c.bf16 %v277, %v272
  %v468 = vpack.c.bf16 %v278, %v273
  %v469 = vpack.c.bf16 %v279, %v274
  %v470 = vpack.c.bf16 %v280, %v275
  %v471 = vpack.c.bf16 %v286, %v281
  %v472 = vpack.c.bf16 %v287, %v282
  %v473 = vpack.c.bf16 %v288, %v283
  %v474 = vpack.c.bf16 %v289, %v284
  %v475 = vpack.c.bf16 %v290, %v285
  %v476 = vpack.c.bf16 %v296, %v291
  %v477 = vpack.c.bf16 %v297, %v292
  %v478 = vpack.c.bf16 %v298, %v293
  %v479 = vpack.c.bf16 %v299, %v294
  %v480 = vpack.c.bf16 %v300, %v295
  %v481 = vpack.c.bf16 %v306, %v301
  %v482 = vpack.c.bf16 %v307, %v302
  %v483 = vpack.c.bf16 %v308, %v303
  %v484 = vpack.c.bf16 %v309, %v304
  %v485 = vpack.c.bf16 %v310, %v305
  %v486 = vpack.c.bf16 %v316, %v311
  %v487 = vpack.c.bf16 %v317, %v312
  %v488 = vpack.c.bf16 %v318, %v313
  %v489 = vpack.c.bf16 %v319, %v314
  %v490 = vpack.c.bf16 %v320, %v315
  %v491 = vpack.c.bf16 %v326, %v321
  %v492 = vpack.c.bf16 %v327, %v322
  %v493 = vpack.c.bf16 %v328, %v323
  %v494 = vpack.c.bf16 %v329, %v324
  %v495 = vpack.c.bf16 %v330, %v325
  %v496 = vpack.c.bf16 %v336, %v331
  %v497 = vpack.c.bf16 %v337, %v332
  %v498 = vpack.c.bf16 %v338, %v333
  %v499 = vpack.c.bf16 %v339, %v334
  %v500 = vpack.c.bf16 %v340, %v335
  %v501 = vld [vmem:[%s1] sm:$0xf]
  %v502 = vld [vmem:[%s1 + $0x4] sm:$0xf]
  %v503 = vld [vmem:[%s1 + $0x8] sm:$0xf]
  %v504 = vld [vmem:[%s1 + $0xc] sm:$0xf]
  %v505 = vld [vmem:[%s1 + $0x10] sm:$0xf]
  %v506 = vld [vmem:[%s1 + $0x14] sm:$0xf]
  %v507 = vld [vmem:[%s1 + $0x18] sm:$0xf]
  %v508 = vld [vmem:[%s1 + $0x1c] sm:$0xf]
  %v509 = vld [vmem:[%s1 + $0x20] sm:$0xf]
  %v510 = vld [vmem:[%s1 + $0x24] sm:$0xf]
  %v511 = vld [vmem:[%s1 + $0x28] sm:$0xf]
  %v512 = vld [vmem:[%s1 + $0x2c] sm:$0xf]
  %v513 = vld [vmem:[%s1 + $0x30] sm:$0xf]
  %v514 = vld [vmem:[%s1 + $0x34] sm:$0xf]
  %v515 = vld [vmem:[%s1 + $0x38] sm:$0xf]
  %v516 = vld [vmem:[%s1 + $0x3c] sm:$0xf]
  %v517 = vld [vmem:[%s1 + $0x40] sm:$0xf]
  %v518 = vld [vmem:[%s1 + $0x44] sm:$0xf]
  %v519 = vld [vmem:[%s1 + $0x48] sm:$0xf]
  %v520 = vld [vmem:[%s1 + $0x4c] sm:$0xf]
  %v521 = vld [vmem:[%s1 + $0x50] sm:$0xf]
  %v522 = vld [vmem:[%s1 + $0x54] sm:$0xf]
  %v523 = vld [vmem:[%s1 + $0x58] sm:$0xf]
  %v524 = vld [vmem:[%s1 + $0x5c] sm:$0xf]
  %v525 = vld [vmem:[%s1 + $0x60] sm:$0xf]
  %v526 = vld [vmem:[%s1 + $0x64] sm:$0xf]
  %v527 = vld [vmem:[%s1 + $0x68] sm:$0xf]
  %v528 = vld [vmem:[%s1 + $0x6c] sm:$0xf]
  %v529 = vld [vmem:[%s1 + $0x70] sm:$0xf]
  %v530 = vld [vmem:[%s1 + $0x74] sm:$0xf]
  %v531 = vld [vmem:[%s1 + $0x78] sm:$0xf]
  %v532 = vld [vmem:[%s1 + $0x7c] sm:$0xf]
  %v533 = vld [vmem:[%s1 + $0x80] sm:$0xf]
  %v534 = vld [vmem:[%s1 + $0x84] sm:$0xf]
  %v535 = vld [vmem:[%s1 + $0x88] sm:$0xf]
  %v536 = vld [vmem:[%s1 + $0x8c] sm:$0xf]
  %v537 = vld [vmem:[%s1 + $0x90] sm:$0xf]
  %v538 = vld [vmem:[%s1 + $0x94] sm:$0xf]
  %v539 = vld [vmem:[%s1 + $0x98] sm:$0xf]
  %v540 = vld [vmem:[%s1 + $0x9c] sm:$0xf]
  %v541 = vld [vmem:[%s1 + $0xa0] sm:$0xf]
  %v542 = vld [vmem:[%s1 + $0xa4] sm:$0xf]
  %v543 = vld [vmem:[%s1 + $0xa8] sm:$0xf]
  %v544 = vld [vmem:[%s1 + $0xac] sm:$0xf]
  %v545 = vld [vmem:[%s1 + $0xb0] sm:$0xf]
  %v546 = vld [vmem:[%s1 + $0xb4] sm:$0xf]
  %v547 = vld [vmem:[%s1 + $0xb8] sm:$0xf]
  %v548 = vld [vmem:[%s1 + $0xbc] sm:$0xf]
  %v549 = vld [vmem:[%s1 + $0xc0] sm:$0xf]
  %v550 = vld [vmem:[%s1 + $0xc4] sm:$0xf]
  %v551 = vld [vmem:[%s1 + $0xc8] sm:$0xf]
  %v552 = vld [vmem:[%s1 + $0xcc] sm:$0xf]
  %v553 = vld [vmem:[%s1 + $0xd0] sm:$0xf]
  %v554 = vld [vmem:[%s1 + $0xd4] sm:$0xf]
  %v555 = vld [vmem:[%s1 + $0xd8] sm:$0xf]
  %v556 = vld [vmem:[%s1 + $0xdc] sm:$0xf]
  %v557 = vld [vmem:[%s1 + $0xe0] sm:$0xf]
  %v558 = vld [vmem:[%s1 + $0xe4] sm:$0xf]
  %v559 = vld [vmem:[%s1 + $0xe8] sm:$0xf]
  %v560 = vld [vmem:[%s1 + $0xec] sm:$0xf]
  %v561 = vld [vmem:[%s1 + $0xf0] sm:$0xf]
  %v562 = vld [vmem:[%s1 + $0xf4] sm:$0xf]
  %v563 = vld [vmem:[%s1 + $0xf8] sm:$0xf]
  %v564 = vld [vmem:[%s1 + $0xfc] sm:$0xf]
  %v565 = vld [vmem:[%s1 + $0x100] sm:$0xf]
  %v566 = vld [vmem:[%s1 + $0x104] sm:$0xf]
  %v567 = vld [vmem:[%s1 + $0x108] sm:$0xf]
  %v568 = vld [vmem:[%s1 + $0x10c] sm:$0xf]
  %v569 = vld [vmem:[%s1 + $0x110] sm:$0xf]
  %v570 = vld [vmem:[%s1 + $0x114] sm:$0xf]
  %v571 = vld [vmem:[%s1 + $0x118] sm:$0xf]
  %v572 = vld [vmem:[%s1 + $0x11c] sm:$0xf]
  %v645 = vunpack.c.l.b16 %v501
  %v646 = vunpack.c.l.b16 %v502
  %v647 = vunpack.c.l.b16 %v503
  %v648 = vunpack.c.l.b16 %v504
  %v649 = vunpack.c.l.b16 %v505
  %v650 = vunpack.c.l.b16 %v506
  %v651 = vunpack.c.l.b16 %v507
  %v652 = vunpack.c.l.b16 %v508
  %v653 = vunpack.c.l.b16 %v509
  %v654 = vunpack.c.l.b16 %v510
  %v655 = vunpack.c.l.b16 %v511
  %v656 = vunpack.c.l.b16 %v512
  %v657 = vunpack.c.l.b16 %v513
  %v658 = vunpack.c.l.b16 %v514
  %v659 = vunpack.c.l.b16 %v515
  %v660 = vunpack.c.l.b16 %v516
  %v661 = vunpack.c.l.b16 %v517
  %v662 = vunpack.c.l.b16 %v518
  %v663 = vunpack.c.l.b16 %v519
  %v664 = vunpack.c.l.b16 %v520
  %v665 = vunpack.c.l.b16 %v521
  %v666 = vunpack.c.l.b16 %v522
  %v667 = vunpack.c.l.b16 %v523
  %v668 = vunpack.c.l.b16 %v524
  %v669 = vunpack.c.l.b16 %v525
  %v670 = vunpack.c.l.b16 %v526
  %v671 = vunpack.c.l.b16 %v527
  %v672 = vunpack.c.l.b16 %v528
  %v673 = vunpack.c.l.b16 %v529
  %v674 = vunpack.c.l.b16 %v530
  %v675 = vunpack.c.l.b16 %v531
  %v676 = vunpack.c.l.b16 %v532
  %v677 = vunpack.c.l.b16 %v533
  %v678 = vunpack.c.l.b16 %v534
  %v679 = vunpack.c.l.b16 %v535
  %v680 = vunpack.c.l.b16 %v536
  %v681 = vunpack.c.l.b16 %v537
  %v682 = vunpack.c.l.b16 %v538
  %v683 = vunpack.c.l.b16 %v539
  %v684 = vunpack.c.l.b16 %v540
  %v685 = vunpack.c.l.b16 %v541
  %v686 = vunpack.c.l.b16 %v542
  %v687 = vunpack.c.l.b16 %v543
  %v688 = vunpack.c.l.b16 %v544
  %v689 = vunpack.c.l.b16 %v545
  %v690 = vunpack.c.l.b16 %v546
  %v691 = vunpack.c.l.b16 %v547
  %v692 = vunpack.c.l.b16 %v548
  %v693 = vunpack.c.l.b16 %v549
  %v694 = vunpack.c.l.b16 %v550
  %v695 = vunpack.c.l.b16 %v551
  %v696 = vunpack.c.l.b16 %v552
  %v697 = vunpack.c.l.b16 %v553
  %v698 = vunpack.c.l.b16 %v554
  %v699 = vunpack.c.l.b16 %v555
  %v700 = vunpack.c.l.b16 %v556
  %v701 = vunpack.c.l.b16 %v557
  %v702 = vunpack.c.l.b16 %v558
  %v703 = vunpack.c.l.b16 %v559
  %v704 = vunpack.c.l.b16 %v560
  %v705 = vunpack.c.l.b16 %v561
  %v706 = vunpack.c.l.b16 %v562
  %v707 = vunpack.c.l.b16 %v563
  %v708 = vunpack.c.l.b16 %v564
  %v709 = vunpack.c.l.b16 %v565
  %v710 = vunpack.c.l.b16 %v566
  %v711 = vunpack.c.l.b16 %v567
  %v712 = vunpack.c.l.b16 %v568
  %v713 = vunpack.c.l.b16 %v569
  %v714 = vunpack.c.l.b16 %v570
  %v715 = vunpack.c.l.b16 %v571
  %v716 = vunpack.c.l.b16 %v572
  %v717 = vpack.c.b16 %v646, %v645
  %v718 = vpack.c.b16 %v648, %v647
  %v719 = vpack.c.b16 %v650, %v649
  %v720 = vpack.c.b16 %v652, %v651
  %v721 = vpack.c.b16 %v654, %v653
  %v722 = vpack.c.b16 %v656, %v655
  %v723 = vpack.c.b16 %v658, %v657
  %v724 = vpack.c.b16 %v660, %v659
  %v725 = vpack.c.b16 %v662, %v661
  %v726 = vpack.c.b16 %v664, %v663
  %v727 = vpack.c.b16 %v666, %v665
  %v728 = vpack.c.b16 %v668, %v667
  %v729 = vpack.c.b16 %v670, %v669
  %v730 = vpack.c.b16 %v672, %v671
  %v731 = vpack.c.b16 %v674, %v673
  %v732 = vpack.c.b16 %v676, %v675
  %v733 = vpack.c.b16 %v678, %v677
  %v734 = vpack.c.b16 %v680, %v679
  %v735 = vpack.c.b16 %v682, %v681
  %v736 = vpack.c.b16 %v684, %v683
  %v737 = vpack.c.b16 %v686, %v685
  %v738 = vpack.c.b16 %v688, %v687
  %v739 = vpack.c.b16 %v690, %v689
  %v740 = vpack.c.b16 %v692, %v691
  %v741 = vpack.c.b16 %v694, %v693
  %v742 = vpack.c.b16 %v696, %v695
  %v743 = vpack.c.b16 %v698, %v697
  %v744 = vpack.c.b16 %v700, %v699
  %v745 = vpack.c.b16 %v702, %v701
  %v746 = vpack.c.b16 %v704, %v703
  %v747 = vpack.c.b16 %v706, %v705
  %v748 = vpack.c.b16 %v708, %v707
  %v749 = vpack.c.b16 %v710, %v709
  %v750 = vpack.c.b16 %v712, %v711
  %v751 = vpack.c.b16 %v714, %v713
  %v752 = vpack.c.b16 %v716, %v715
  %vm789 = vcmask 523264
  %v791 = vsel %vm789, %v345, 0
  %v794 = vsel %vm789, %v350, 0
  %v797 = vsel %vm789, %v355, 0
  %v800 = vsel %vm789, %v360, 0
  %v803 = vsel %vm789, %v365, 0
  %v806 = vsel %vm789, %v370, 0
  %v809 = vsel %vm789, %v375, 0
  %v812 = vsel %vm789, %v380, 0
  %v815 = vsel %vm789, %v385, 0
  %v818 = vsel %vm789, %v390, 0
  %v821 = vsel %vm789, %v395, 0
  %v824 = vsel %vm789, %v400, 0
  %v827 = vsel %vm789, %v405, 0
  %v830 = vsel %vm789, %v410, 0
  %v833 = vsel %vm789, %v415, 0
  %v836 = vsel %vm789, %v420, 0
  %v839 = vsel %vm789, %v425, 0
  %v842 = vsel %vm789, %v430, 0
  %v845 = vsel %vm789, %v435, 0
  %v848 = vsel %vm789, %v440, 0
  %v851 = vsel %vm789, %v445, 0
  %v854 = vsel %vm789, %v450, 0
  %v857 = vsel %vm789, %v455, 0
  %v860 = vsel %vm789, %v460, 0
  %v863 = vsel %vm789, %v465, 0
  %v866 = vsel %vm789, %v470, 0
  %v869 = vsel %vm789, %v475, 0
  %v872 = vsel %vm789, %v480, 0
  %v875 = vsel %vm789, %v485, 0
  %v878 = vsel %vm789, %v490, 0
  %v881 = vsel %vm789, %v495, 0
  %v884 = vsel %vm789, %v500, 0
  %886 = vmatprep.subr.bf16.mxu0 0
  %887 = vmatpush1.bf16.msra.mxu0 %v724
  %888 = vmatprep.subr.bf16.mxu0 0
  %889 = vmatpush1.bf16.msra.mxu0 %v723
  %890 = vmatprep.subr.bf16.mxu0 0
  %891 = vmatpush1.bf16.msra.mxu0 %v722
  %892 = vmatprep.subr.bf16.mxu0 0
  %893 = vmatpush1.bf16.msra.mxu0 %v721
  %894 = vmatprep.subr.bf16.mxu0 0
  %895 = vmatpush1.bf16.msra.mxu0 %v720
  %896 = vmatprep.subr.bf16.mxu0 0
  %897 = vmatpush1.bf16.msra.mxu0 %v719
  %898 = vmatprep.subr.bf16.mxu0 0
  %899 = vmatpush1.bf16.msra.mxu0 %v718
  %900 = vmatprep.subr.bf16.mxu0 0
  %901 = vmatpush1.bf16.msra.mxu0 %v717
  %902 = vmatprep.subr.bf16.mxu0 0
  %903 = vmatpush2.bf16.msra.mxu0 %v732
  %904 = vmatprep.subr.bf16.mxu0 0
  %905 = vmatpush2.bf16.msra.mxu0 %v731
  %906 = vmatprep.subr.bf16.mxu0 0
  %907 = vmatpush2.bf16.msra.mxu0 %v730
  %908 = vmatprep.subr.bf16.mxu0 0
  %909 = vmatpush2.bf16.msra.mxu0 %v729
  %910 = vmatprep.subr.bf16.mxu0 0
  %911 = vmatpush2.bf16.msra.mxu0 %v728
  %912 = vmatprep.subr.bf16.mxu0 0
  %913 = vmatpush2.bf16.msra.mxu0 %v727
  %914 = vmatprep.subr.bf16.mxu0 0
  %915 = vmatpush2.bf16.msra.mxu0 %v726
  %916 = vmatprep.subr.bf16.mxu0 0
  %917 = vmatpush2.bf16.msra.mxu0 %v725
  %918 = vmatprep.mubr.bf16.mxu0 %v342
  %919 = vmatmul.mubr.bf16.gmra.mxu0 %v341
  %v920 = vpop.f32.mrf.mxu0
  %v921 = vadd.f32 0.0, %v920
  %v922 = vpop.f32.mrf.mxu0
  %v923 = vpop.f32.mrf.mxu0
  %v924 = vadd.f32 0.0, %v923
  %v925 = vpop.f32.mrf.mxu0
  %926 = vmatprep.mubr.bf16.mxu0 %v347
  %927 = vmatmul.mubr.bf16.gmra.mxu0 %v346
  %v928 = vpop.f32.mrf.mxu0
  %v929 = vadd.f32 0.0, %v928
  %v930 = vpop.f32.mrf.mxu0
  %v931 = vpop.f32.mrf.mxu0
  %v932 = vadd.f32 0.0, %v931
  %v933 = vpop.f32.mrf.mxu0
  %934 = vmatprep.mubr.bf16.mxu0 %v352
  %935 = vmatmul.mubr.bf16.gmra.mxu0 %v351
  %v936 = vpop.f32.mrf.mxu0
  %v937 = vadd.f32 0.0, %v936
  %v938 = vpop.f32.mrf.mxu0
  %v939 = vpop.f32.mrf.mxu0
  %v940 = vadd.f32 0.0, %v939
  %v941 = vpop.f32.mrf.mxu0
  %942 = vmatprep.mubr.bf16.mxu0 %v357
  %943 = vmatmul.mubr.bf16.gmra.mxu0 %v356
  %v944 = vpop.f32.mrf.mxu0
  %v945 = vadd.f32 0.0, %v944
  %v946 = vpop.f32.mrf.mxu0
  %v947 = vpop.f32.mrf.mxu0
  %v948 = vadd.f32 0.0, %v947
  %v949 = vpop.f32.mrf.mxu0
  %950 = vmatprep.mubr.bf16.mxu0 %v362
  %951 = vmatmul.mubr.bf16.gmra.mxu0 %v361
  %v952 = vpop.f32.mrf.mxu0
  %v953 = vadd.f32 0.0, %v952
  %v954 = vpop.f32.mrf.mxu0
  %v955 = vpop.f32.mrf.mxu0
  %v956 = vadd.f32 0.0, %v955
  %v957 = vpop.f32.mrf.mxu0
  %958 = vmatprep.mubr.bf16.mxu0 %v367
  %959 = vmatmul.mubr.bf16.gmra.mxu0 %v366
  %v960 = vpop.f32.mrf.mxu0
  %v961 = vadd.f32 0.0, %v960
  %v962 = vpop.f32.mrf.mxu0
  %v963 = vpop.f32.mrf.mxu0
  %v964 = vadd.f32 0.0, %v963
  %v965 = vpop.f32.mrf.mxu0
  %966 = vmatprep.mubr.bf16.mxu0 %v372
  %967 = vmatmul.mubr.bf16.gmra.mxu0 %v371
  %v968 = vpop.f32.mrf.mxu0
  %v969 = vadd.f32 0.0, %v968
  %v970 = vpop.f32.mrf.mxu0
  %v971 = vpop.f32.mrf.mxu0
  %v972 = vadd.f32 0.0, %v971
  %v973 = vpop.f32.mrf.mxu0
  %974 = vmatprep.mubr.bf16.mxu0 %v377
  %975 = vmatmul.mubr.bf16.gmra.mxu0 %v376
  %v976 = vpop.f32.mrf.mxu0
  %v977 = vadd.f32 0.0, %v976
  %v978 = vpop.f32.mrf.mxu0
  %v979 = vpop.f32.mrf.mxu0
  %v980 = vadd.f32 0.0, %v979
  %v981 = vpop.f32.mrf.mxu0
  %982 = vmatprep.mubr.bf16.mxu0 %v382
  %983 = vmatmul.mubr.bf16.gmra.mxu0 %v381
  %v984 = vpop.f32.mrf.mxu0
  %v985 = vadd.f32 0.0, %v984
  %v986 = vpop.f32.mrf.mxu0
  %v987 = vpop.f32.mrf.mxu0
  %v988 = vadd.f32 0.0, %v987
  %v989 = vpop.f32.mrf.mxu0
  %990 = vmatprep.mubr.bf16.mxu0 %v387
  %991 = vmatmul.mubr.bf16.gmra.mxu0 %v386
  %v992 = vpop.f32.mrf.mxu0
  %v993 = vadd.f32 0.0, %v992
  %v994 = vpop.f32.mrf.mxu0
  %v995 = vpop.f32.mrf.mxu0
  %v996 = vadd.f32 0.0, %v995
  %v997 = vpop.f32.mrf.mxu0
  %998 = vmatprep.mubr.bf16.mxu0 %v392
  %999 = vmatmul.mubr.bf16.gmra.mxu0 %v391
  %v1000 = vpop.f32.mrf.mxu0
  %v1001 = vadd.f32 0.0, %v1000
  %v1002 = vpop.f32.mrf.mxu0
  %v1003 = vpop.f32.mrf.mxu0
  %v1004 = vadd.f32 0.0, %v1003
  %v1005 = vpop.f32.mrf.mxu0
  %1006 = vmatprep.mubr.bf16.mxu0 %v397
  %1007 = vmatmul.mubr.bf16.gmra.mxu0 %v396
  %v1008 = vpop.f32.mrf.mxu0
  %v1009 = vadd.f32 0.0, %v1008
  %v1010 = vpop.f32.mrf.mxu0
  %v1011 = vpop.f32.mrf.mxu0
  %v1012 = vadd.f32 0.0, %v1011
  %v1013 = vpop.f32.mrf.mxu0
  %1014 = vmatprep.mubr.bf16.mxu0 %v402
  %1015 = vmatmul.mubr.bf16.gmra.mxu0 %v401
  %v1016 = vpop.f32.mrf.mxu0
  %v1017 = vadd.f32 0.0, %v1016
  %v1018 = vpop.f32.mrf.mxu0
  %v1019 = vpop.f32.mrf.mxu0
  %v1020 = vadd.f32 0.0, %v1019
  %v1021 = vpop.f32.mrf.mxu0
  %1022 = vmatprep.mubr.bf16.mxu0 %v407
  %1023 = vmatmul.mubr.bf16.gmra.mxu0 %v406
  %v1024 = vpop.f32.mrf.mxu0
  %v1025 = vadd.f32 0.0, %v1024
  %v1026 = vpop.f32.mrf.mxu0
  %v1027 = vpop.f32.mrf.mxu0
  %v1028 = vadd.f32 0.0, %v1027
  %v1029 = vpop.f32.mrf.mxu0
  %1030 = vmatprep.mubr.bf16.mxu0 %v412
  %1031 = vmatmul.mubr.bf16.gmra.mxu0 %v411
  %v1032 = vpop.f32.mrf.mxu0
  %v1033 = vadd.f32 0.0, %v1032
  %v1034 = vpop.f32.mrf.mxu0
  %v1035 = vpop.f32.mrf.mxu0
  %v1036 = vadd.f32 0.0, %v1035
  %v1037 = vpop.f32.mrf.mxu0
  %1038 = vmatprep.mubr.bf16.mxu0 %v417
  %1039 = vmatmul.mubr.bf16.gmra.mxu0 %v416
  %v1040 = vpop.f32.mrf.mxu0
  %v1041 = vadd.f32 0.0, %v1040
  %v1042 = vpop.f32.mrf.mxu0
  %v1043 = vpop.f32.mrf.mxu0
  %v1044 = vadd.f32 0.0, %v1043
  %v1045 = vpop.f32.mrf.mxu0
  %1046 = vmatprep.mubr.bf16.mxu0 %v422
  %1047 = vmatmul.mubr.bf16.gmra.mxu0 %v421
  %v1048 = vpop.f32.mrf.mxu0
  %v1049 = vadd.f32 0.0, %v1048
  %v1050 = vpop.f32.mrf.mxu0
  %v1051 = vpop.f32.mrf.mxu0
  %v1052 = vadd.f32 0.0, %v1051
  %v1053 = vpop.f32.mrf.mxu0
  %1054 = vmatprep.mubr.bf16.mxu0 %v427
  %1055 = vmatmul.mubr.bf16.gmra.mxu0 %v426
  %v1056 = vpop.f32.mrf.mxu0
  %v1057 = vadd.f32 0.0, %v1056
  %v1058 = vpop.f32.mrf.mxu0
  %v1059 = vpop.f32.mrf.mxu0
  %v1060 = vadd.f32 0.0, %v1059
  %v1061 = vpop.f32.mrf.mxu0
  %1062 = vmatprep.mubr.bf16.mxu0 %v432
  %1063 = vmatmul.mubr.bf16.gmra.mxu0 %v431
  %v1064 = vpop.f32.mrf.mxu0
  %v1065 = vadd.f32 0.0, %v1064
  %v1066 = vpop.f32.mrf.mxu0
  %v1067 = vpop.f32.mrf.mxu0
  %v1068 = vadd.f32 0.0, %v1067
  %v1069 = vpop.f32.mrf.mxu0
  %1070 = vmatprep.mubr.bf16.mxu0 %v437
  %1071 = vmatmul.mubr.bf16.gmra.mxu0 %v436
  %v1072 = vpop.f32.mrf.mxu0
  %v1073 = vadd.f32 0.0, %v1072
  %v1074 = vpop.f32.mrf.mxu0
  %v1075 = vpop.f32.mrf.mxu0
  %v1076 = vadd.f32 0.0, %v1075
  %v1077 = vpop.f32.mrf.mxu0
  %1078 = vmatprep.mubr.bf16.mxu0 %v442
  %1079 = vmatmul.mubr.bf16.gmra.mxu0 %v441
  %v1080 = vpop.f32.mrf.mxu0
  %v1081 = vadd.f32 0.0, %v1080
  %v1082 = vpop.f32.mrf.mxu0
  %v1083 = vpop.f32.mrf.mxu0
  %v1084 = vadd.f32 0.0, %v1083
  %v1085 = vpop.f32.mrf.mxu0
  %1086 = vmatprep.mubr.bf16.mxu0 %v447
  %1087 = vmatmul.mubr.bf16.gmra.mxu0 %v446
  %v1088 = vpop.f32.mrf.mxu0
  %v1089 = vadd.f32 0.0, %v1088
  %v1090 = vpop.f32.mrf.mxu0
  %v1091 = vpop.f32.mrf.mxu0
  %v1092 = vadd.f32 0.0, %v1091
  %v1093 = vpop.f32.mrf.mxu0
  %1094 = vmatprep.mubr.bf16.mxu0 %v452
  %1095 = vmatmul.mubr.bf16.gmra.mxu0 %v451
  %v1096 = vpop.f32.mrf.mxu0
  %v1097 = vadd.f32 0.0, %v1096
  %v1098 = vpop.f32.mrf.mxu0
  %v1099 = vpop.f32.mrf.mxu0
  %v1100 = vadd.f32 0.0, %v1099
  %v1101 = vpop.f32.mrf.mxu0
  %1102 = vmatprep.mubr.bf16.mxu0 %v457
  %1103 = vmatmul.mubr.bf16.gmra.mxu0 %v456
  %v1104 = vpop.f32.mrf.mxu0
  %v1105 = vadd.f32 0.0, %v1104
  %v1106 = vpop.f32.mrf.mxu0
  %v1107 = vpop.f32.mrf.mxu0
  %v1108 = vadd.f32 0.0, %v1107
  %v1109 = vpop.f32.mrf.mxu0
  %1110 = vmatprep.mubr.bf16.mxu0 %v462
  %1111 = vmatmul.mubr.bf16.gmra.mxu0 %v461
  %v1112 = vpop.f32.mrf.mxu0
  %v1113 = vadd.f32 0.0, %v1112
  %v1114 = vpop.f32.mrf.mxu0
  %v1115 = vpop.f32.mrf.mxu0
  %v1116 = vadd.f32 0.0, %v1115
  %v1117 = vpop.f32.mrf.mxu0
  %1118 = vmatprep.mubr.bf16.mxu0 %v467
  %1119 = vmatmul.mubr.bf16.gmra.mxu0 %v466
  %v1120 = vpop.f32.mrf.mxu0
  %v1121 = vadd.f32 0.0, %v1120
  %v1122 = vpop.f32.mrf.mxu0
  %v1123 = vpop.f32.mrf.mxu0
  %v1124 = vadd.f32 0.0, %v1123
  %v1125 = vpop.f32.mrf.mxu0
  %1126 = vmatprep.mubr.bf16.mxu0 %v472
  %1127 = vmatmul.mubr.bf16.gmra.mxu0 %v471
  %v1128 = vpop.f32.mrf.mxu0
  %v1129 = vadd.f32 0.0, %v1128
  %v1130 = vpop.f32.mrf.mxu0
  %v1131 = vpop.f32.mrf.mxu0
  %v1132 = vadd.f32 0.0, %v1131
  %v1133 = vpop.f32.mrf.mxu0
  %1134 = vmatprep.mubr.bf16.mxu0 %v477
  %1135 = vmatmul.mubr.bf16.gmra.mxu0 %v476
  %v1136 = vpop.f32.mrf.mxu0
  %v1137 = vadd.f32 0.0, %v1136
  %v1138 = vpop.f32.mrf.mxu0
  %v1139 = vpop.f32.mrf.mxu0
  %v1140 = vadd.f32 0.0, %v1139
  %v1141 = vpop.f32.mrf.mxu0
  %1142 = vmatprep.mubr.bf16.mxu0 %v482
  %1143 = vmatmul.mubr.bf16.gmra.mxu0 %v481
  %v1144 = vpop.f32.mrf.mxu0
  %v1145 = vadd.f32 0.0, %v1144
  %v1146 = vpop.f32.mrf.mxu0
  %v1147 = vpop.f32.mrf.mxu0
  %v1148 = vadd.f32 0.0, %v1147
  %v1149 = vpop.f32.mrf.mxu0
  %1150 = vmatprep.mubr.bf16.mxu0 %v487
  %1151 = vmatmul.mubr.bf16.gmra.mxu0 %v486
  %v1152 = vpop.f32.mrf.mxu0
  %v1153 = vadd.f32 0.0, %v1152
  %v1154 = vpop.f32.mrf.mxu0
  %v1155 = vpop.f32.mrf.mxu0
  %v1156 = vadd.f32 0.0, %v1155
  %v1157 = vpop.f32.mrf.mxu0
  %1158 = vmatprep.mubr.bf16.mxu0 %v492
  %1159 = vmatmul.mubr.bf16.gmra.mxu0 %v491
  %v1160 = vpop.f32.mrf.mxu0
  %v1161 = vadd.f32 0.0, %v1160
  %v1162 = vpop.f32.mrf.mxu0
  %v1163 = vpop.f32.mrf.mxu0
  %v1164 = vadd.f32 0.0, %v1163
  %v1165 = vpop.f32.mrf.mxu0
  %1166 = vmatprep.mubr.bf16.mxu0 %v497
  %1167 = vmatmul.mubr.bf16.gmra.mxu0 %v496
  %v1168 = vpop.f32.mrf.mxu0
  %v1169 = vadd.f32 0.0, %v1168
  %v1170 = vpop.f32.mrf.mxu0
  %v1171 = vpop.f32.mrf.mxu0
  %v1172 = vadd.f32 0.0, %v1171
  %v1173 = vpop.f32.mrf.mxu0
  %1174 = vdwg.mxu0
  %1175 = vmatprep.subr.bf16.mxu0 0
  %1176 = vmatpush1.bf16.msra.mxu0 %v740
  %1177 = vmatprep.subr.bf16.mxu0 0
  %1178 = vmatpush1.bf16.msra.mxu0 %v739
  %1179 = vmatprep.subr.bf16.mxu0 0
  %1180 = vmatpush1.bf16.msra.mxu0 %v738
  %1181 = vmatprep.subr.bf16.mxu0 0
  %1182 = vmatpush1.bf16.msra.mxu0 %v737
  %1183 = vmatprep.subr.bf16.mxu0 0
  %1184 = vmatpush1.bf16.msra.mxu0 %v736
  %1185 = vmatprep.subr.bf16.mxu0 0
  %1186 = vmatpush1.bf16.msra.mxu0 %v735
  %1187 = vmatprep.subr.bf16.mxu0 0
  %1188 = vmatpush1.bf16.msra.mxu0 %v734
  %1189 = vmatprep.subr.bf16.mxu0 0
  %1190 = vmatpush1.bf16.msra.mxu0 %v733
  %1191 = vmatprep.subr.bf16.mxu0 0
  %1192 = vmatpush2.bf16.msra.mxu0 %v748
  %1193 = vmatprep.subr.bf16.mxu0 0
  %1194 = vmatpush2.bf16.msra.mxu0 %v747
  %1195 = vmatprep.subr.bf16.mxu0 0
  %1196 = vmatpush2.bf16.msra.mxu0 %v746
  %1197 = vmatprep.subr.bf16.mxu0 0
  %1198 = vmatpush2.bf16.msra.mxu0 %v745
  %1199 = vmatprep.subr.bf16.mxu0 0
  %1200 = vmatpush2.bf16.msra.mxu0 %v744
  %1201 = vmatprep.subr.bf16.mxu0 0
  %1202 = vmatpush2.bf16.msra.mxu0 %v743
  %1203 = vmatprep.subr.bf16.mxu0 0
  %1204 = vmatpush2.bf16.msra.mxu0 %v742
  %1205 = vmatprep.subr.bf16.mxu0 0
  %1206 = vmatpush2.bf16.msra.mxu0 %v741
  %1207 = vmatprep.mubr.bf16.mxu0 %v344
  %1208 = vmatmul.mubr.bf16.gmra.mxu0 %v343
  %v1209 = vpop.f32.mrf.mxu0
  %v1210 = vadd.f32 %v921, %v1209
  %v1211 = vpop.f32.mrf.mxu0
  %v1212 = vpop.f32.mrf.mxu0
  %v1213 = vadd.f32 %v924, %v1212
  %v1214 = vpop.f32.mrf.mxu0
  %1215 = vmatprep.mubr.bf16.mxu0 %v349
  %1216 = vmatmul.mubr.bf16.gmra.mxu0 %v348
  %v1217 = vpop.f32.mrf.mxu0
  %v1218 = vadd.f32 %v929, %v1217
  %v1219 = vpop.f32.mrf.mxu0
  %v1220 = vpop.f32.mrf.mxu0
  %v1221 = vadd.f32 %v932, %v1220
  %v1222 = vpop.f32.mrf.mxu0
  %1223 = vmatprep.mubr.bf16.mxu0 %v354
  %1224 = vmatmul.mubr.bf16.gmra.mxu0 %v353
  %v1225 = vpop.f32.mrf.mxu0
  %v1226 = vadd.f32 %v937, %v1225
  %v1227 = vpop.f32.mrf.mxu0
  %v1228 = vpop.f32.mrf.mxu0
  %v1229 = vadd.f32 %v940, %v1228
  %v1230 = vpop.f32.mrf.mxu0
  %1231 = vmatprep.mubr.bf16.mxu0 %v359
  %1232 = vmatmul.mubr.bf16.gmra.mxu0 %v358
  %v1233 = vpop.f32.mrf.mxu0
  %v1234 = vadd.f32 %v945, %v1233
  %v1235 = vpop.f32.mrf.mxu0
  %v1236 = vpop.f32.mrf.mxu0
  %v1237 = vadd.f32 %v948, %v1236
  %v1238 = vpop.f32.mrf.mxu0
  %1239 = vmatprep.mubr.bf16.mxu0 %v364
  %1240 = vmatmul.mubr.bf16.gmra.mxu0 %v363
  %v1241 = vpop.f32.mrf.mxu0
  %v1242 = vadd.f32 %v953, %v1241
  %v1243 = vpop.f32.mrf.mxu0
  %v1244 = vpop.f32.mrf.mxu0
  %v1245 = vadd.f32 %v956, %v1244
  %v1246 = vpop.f32.mrf.mxu0
  %1247 = vmatprep.mubr.bf16.mxu0 %v369
  %1248 = vmatmul.mubr.bf16.gmra.mxu0 %v368
  %v1249 = vpop.f32.mrf.mxu0
  %v1250 = vadd.f32 %v961, %v1249
  %v1251 = vpop.f32.mrf.mxu0
  %v1252 = vpop.f32.mrf.mxu0
  %v1253 = vadd.f32 %v964, %v1252
  %v1254 = vpop.f32.mrf.mxu0
  %1255 = vmatprep.mubr.bf16.mxu0 %v374
  %1256 = vmatmul.mubr.bf16.gmra.mxu0 %v373
  %v1257 = vpop.f32.mrf.mxu0
  %v1258 = vadd.f32 %v969, %v1257
  %v1259 = vpop.f32.mrf.mxu0
  %v1260 = vpop.f32.mrf.mxu0
  %v1261 = vadd.f32 %v972, %v1260
  %v1262 = vpop.f32.mrf.mxu0
  %1263 = vmatprep.mubr.bf16.mxu0 %v379
  %1264 = vmatmul.mubr.bf16.gmra.mxu0 %v378
  %v1265 = vpop.f32.mrf.mxu0
  %v1266 = vadd.f32 %v977, %v1265
  %v1267 = vpop.f32.mrf.mxu0
  %v1268 = vpop.f32.mrf.mxu0
  %v1269 = vadd.f32 %v980, %v1268
  %v1270 = vpop.f32.mrf.mxu0
  %1271 = vmatprep.mubr.bf16.mxu0 %v384
  %1272 = vmatmul.mubr.bf16.gmra.mxu0 %v383
  %v1273 = vpop.f32.mrf.mxu0
  %v1274 = vadd.f32 %v985, %v1273
  %v1275 = vpop.f32.mrf.mxu0
  %v1276 = vpop.f32.mrf.mxu0
  %v1277 = vadd.f32 %v988, %v1276
  %v1278 = vpop.f32.mrf.mxu0
  %1279 = vmatprep.mubr.bf16.mxu0 %v389
  %1280 = vmatmul.mubr.bf16.gmra.mxu0 %v388
  %v1281 = vpop.f32.mrf.mxu0
  %v1282 = vadd.f32 %v993, %v1281
  %v1283 = vpop.f32.mrf.mxu0
  %v1284 = vpop.f32.mrf.mxu0
  %v1285 = vadd.f32 %v996, %v1284
  %v1286 = vpop.f32.mrf.mxu0
  %1287 = vmatprep.mubr.bf16.mxu0 %v394
  %1288 = vmatmul.mubr.bf16.gmra.mxu0 %v393
  %v1289 = vpop.f32.mrf.mxu0
  %v1290 = vadd.f32 %v1001, %v1289
  %v1291 = vpop.f32.mrf.mxu0
  %v1292 = vpop.f32.mrf.mxu0
  %v1293 = vadd.f32 %v1004, %v1292
  %v1294 = vpop.f32.mrf.mxu0
  %1295 = vmatprep.mubr.bf16.mxu0 %v399
  %1296 = vmatmul.mubr.bf16.gmra.mxu0 %v398
  %v1297 = vpop.f32.mrf.mxu0
  %v1298 = vadd.f32 %v1009, %v1297
  %v1299 = vpop.f32.mrf.mxu0
  %v1300 = vpop.f32.mrf.mxu0
  %v1301 = vadd.f32 %v1012, %v1300
  %v1302 = vpop.f32.mrf.mxu0
  %1303 = vmatprep.mubr.bf16.mxu0 %v404
  %1304 = vmatmul.mubr.bf16.gmra.mxu0 %v403
  %v1305 = vpop.f32.mrf.mxu0
  %v1306 = vadd.f32 %v1017, %v1305
  %v1307 = vpop.f32.mrf.mxu0
  %v1308 = vpop.f32.mrf.mxu0
  %v1309 = vadd.f32 %v1020, %v1308
  %v1310 = vpop.f32.mrf.mxu0
  %1311 = vmatprep.mubr.bf16.mxu0 %v409
  %1312 = vmatmul.mubr.bf16.gmra.mxu0 %v408
  %v1313 = vpop.f32.mrf.mxu0
  %v1314 = vadd.f32 %v1025, %v1313
  %v1315 = vpop.f32.mrf.mxu0
  %v1316 = vpop.f32.mrf.mxu0
  %v1317 = vadd.f32 %v1028, %v1316
  %v1318 = vpop.f32.mrf.mxu0
  %1319 = vmatprep.mubr.bf16.mxu0 %v414
  %1320 = vmatmul.mubr.bf16.gmra.mxu0 %v413
  %v1321 = vpop.f32.mrf.mxu0
  %v1322 = vadd.f32 %v1033, %v1321
  %v1323 = vpop.f32.mrf.mxu0
  %v1324 = vpop.f32.mrf.mxu0
  %v1325 = vadd.f32 %v1036, %v1324
  %v1326 = vpop.f32.mrf.mxu0
  %1327 = vmatprep.mubr.bf16.mxu0 %v419
  %1328 = vmatmul.mubr.bf16.gmra.mxu0 %v418
  %v1329 = vpop.f32.mrf.mxu0
  %v1330 = vadd.f32 %v1041, %v1329
  %v1331 = vpop.f32.mrf.mxu0
  %v1332 = vpop.f32.mrf.mxu0
  %v1333 = vadd.f32 %v1044, %v1332
  %v1334 = vpop.f32.mrf.mxu0
  %1335 = vmatprep.mubr.bf16.mxu0 %v424
  %1336 = vmatmul.mubr.bf16.gmra.mxu0 %v423
  %v1337 = vpop.f32.mrf.mxu0
  %v1338 = vadd.f32 %v1049, %v1337
  %v1339 = vpop.f32.mrf.mxu0
  %v1340 = vpop.f32.mrf.mxu0
  %v1341 = vadd.f32 %v1052, %v1340
  %v1342 = vpop.f32.mrf.mxu0
  %1343 = vmatprep.mubr.bf16.mxu0 %v429
  %1344 = vmatmul.mubr.bf16.gmra.mxu0 %v428
  %v1345 = vpop.f32.mrf.mxu0
  %v1346 = vadd.f32 %v1057, %v1345
  %v1347 = vpop.f32.mrf.mxu0
  %v1348 = vpop.f32.mrf.mxu0
  %v1349 = vadd.f32 %v1060, %v1348
  %v1350 = vpop.f32.mrf.mxu0
  %1351 = vmatprep.mubr.bf16.mxu0 %v434
  %1352 = vmatmul.mubr.bf16.gmra.mxu0 %v433
  %v1353 = vpop.f32.mrf.mxu0
  %v1354 = vadd.f32 %v1065, %v1353
  %v1355 = vpop.f32.mrf.mxu0
  %v1356 = vpop.f32.mrf.mxu0
  %v1357 = vadd.f32 %v1068, %v1356
  %v1358 = vpop.f32.mrf.mxu0
  %1359 = vmatprep.mubr.bf16.mxu0 %v439
  %1360 = vmatmul.mubr.bf16.gmra.mxu0 %v438
  %v1361 = vpop.f32.mrf.mxu0
  %v1362 = vadd.f32 %v1073, %v1361
  %v1363 = vpop.f32.mrf.mxu0
  %v1364 = vpop.f32.mrf.mxu0
  %v1365 = vadd.f32 %v1076, %v1364
  %v1366 = vpop.f32.mrf.mxu0
  %1367 = vmatprep.mubr.bf16.mxu0 %v444
  %1368 = vmatmul.mubr.bf16.gmra.mxu0 %v443
  %v1369 = vpop.f32.mrf.mxu0
  %v1370 = vadd.f32 %v1081, %v1369
  %v1371 = vpop.f32.mrf.mxu0
  %v1372 = vpop.f32.mrf.mxu0
  %v1373 = vadd.f32 %v1084, %v1372
  %v1374 = vpop.f32.mrf.mxu0
  %1375 = vmatprep.mubr.bf16.mxu0 %v449
  %1376 = vmatmul.mubr.bf16.gmra.mxu0 %v448
  %v1377 = vpop.f32.mrf.mxu0
  %v1378 = vadd.f32 %v1089, %v1377
  %v1379 = vpop.f32.mrf.mxu0
  %v1380 = vpop.f32.mrf.mxu0
  %v1381 = vadd.f32 %v1092, %v1380
  %v1382 = vpop.f32.mrf.mxu0
  %1383 = vmatprep.mubr.bf16.mxu0 %v454
  %1384 = vmatmul.mubr.bf16.gmra.mxu0 %v453
  %v1385 = vpop.f32.mrf.mxu0
  %v1386 = vadd.f32 %v1097, %v1385
  %v1387 = vpop.f32.mrf.mxu0
  %v1388 = vpop.f32.mrf.mxu0
  %v1389 = vadd.f32 %v1100, %v1388
  %v1390 = vpop.f32.mrf.mxu0
  %1391 = vmatprep.mubr.bf16.mxu0 %v459
  %1392 = vmatmul.mubr.bf16.gmra.mxu0 %v458
  %v1393 = vpop.f32.mrf.mxu0
  %v1394 = vadd.f32 %v1105, %v1393
  %v1395 = vpop.f32.mrf.mxu0
  %v1396 = vpop.f32.mrf.mxu0
  %v1397 = vadd.f32 %v1108, %v1396
  %v1398 = vpop.f32.mrf.mxu0
  %1399 = vmatprep.mubr.bf16.mxu0 %v464
  %1400 = vmatmul.mubr.bf16.gmra.mxu0 %v463
  %v1401 = vpop.f32.mrf.mxu0
  %v1402 = vadd.f32 %v1113, %v1401
  %v1403 = vpop.f32.mrf.mxu0
  %v1404 = vpop.f32.mrf.mxu0
  %v1405 = vadd.f32 %v1116, %v1404
  %v1406 = vpop.f32.mrf.mxu0
  %1407 = vmatprep.mubr.bf16.mxu0 %v469
  %1408 = vmatmul.mubr.bf16.gmra.mxu0 %v468
  %v1409 = vpop.f32.mrf.mxu0
  %v1410 = vadd.f32 %v1121, %v1409
  %v1411 = vpop.f32.mrf.mxu0
  %v1412 = vpop.f32.mrf.mxu0
  %v1413 = vadd.f32 %v1124, %v1412
  %v1414 = vpop.f32.mrf.mxu0
  %1415 = vmatprep.mubr.bf16.mxu0 %v474
  %1416 = vmatmul.mubr.bf16.gmra.mxu0 %v473
  %v1417 = vpop.f32.mrf.mxu0
  %v1418 = vadd.f32 %v1129, %v1417
  %v1419 = vpop.f32.mrf.mxu0
  %v1420 = vpop.f32.mrf.mxu0
  %v1421 = vadd.f32 %v1132, %v1420
  %v1422 = vpop.f32.mrf.mxu0
  %1423 = vmatprep.mubr.bf16.mxu0 %v479
  %1424 = vmatmul.mubr.bf16.gmra.mxu0 %v478
  %v1425 = vpop.f32.mrf.mxu0
  %v1426 = vadd.f32 %v1137, %v1425
  %v1427 = vpop.f32.mrf.mxu0
  %v1428 = vpop.f32.mrf.mxu0
  %v1429 = vadd.f32 %v1140, %v1428
  %v1430 = vpop.f32.mrf.mxu0
  %1431 = vmatprep.mubr.bf16.mxu0 %v484
  %1432 = vmatmul.mubr.bf16.gmra.mxu0 %v483
  %v1433 = vpop.f32.mrf.mxu0
  %v1434 = vadd.f32 %v1145, %v1433
  %v1435 = vpop.f32.mrf.mxu0
  %v1436 = vpop.f32.mrf.mxu0
  %v1437 = vadd.f32 %v1148, %v1436
  %v1438 = vpop.f32.mrf.mxu0
  %1439 = vmatprep.mubr.bf16.mxu0 %v489
  %1440 = vmatmul.mubr.bf16.gmra.mxu0 %v488
  %v1441 = vpop.f32.mrf.mxu0
  %v1442 = vadd.f32 %v1153, %v1441
  %v1443 = vpop.f32.mrf.mxu0
  %v1444 = vpop.f32.mrf.mxu0
  %v1445 = vadd.f32 %v1156, %v1444
  %v1446 = vpop.f32.mrf.mxu0
  %1447 = vmatprep.mubr.bf16.mxu0 %v494
  %1448 = vmatmul.mubr.bf16.gmra.mxu0 %v493
  %v1449 = vpop.f32.mrf.mxu0
  %v1450 = vadd.f32 %v1161, %v1449
  %v1451 = vpop.f32.mrf.mxu0
  %v1452 = vpop.f32.mrf.mxu0
  %v1453 = vadd.f32 %v1164, %v1452
  %v1454 = vpop.f32.mrf.mxu0
  %1455 = vmatprep.mubr.bf16.mxu0 %v499
  %1456 = vmatmul.mubr.bf16.gmra.mxu0 %v498
  %v1457 = vpop.f32.mrf.mxu0
  %v1458 = vadd.f32 %v1169, %v1457
  %v1459 = vpop.f32.mrf.mxu0
  %v1460 = vpop.f32.mrf.mxu0
  %v1461 = vadd.f32 %v1172, %v1460
  %v1462 = vpop.f32.mrf.mxu0
  %1463 = vdwg.mxu0
  %1464 = vmatprep.subr.bf16.mxu0 0
  %1465 = vmatpush1.bf16.msra.mxu0 0
  %1466 = vmatprep.subr.bf16.mxu0 0
  %1467 = vmatpush1.bf16.msra.mxu0 0
  %1468 = vmatprep.subr.bf16.mxu0 0
  %1469 = vmatpush1.bf16.msra.mxu0 0
  %1470 = vmatprep.subr.bf16.mxu0 0
  %1471 = vmatpush1.bf16.msra.mxu0 0
  %1472 = vmatprep.subr.bf16.mxu0 0
  %1473 = vmatpush1.bf16.msra.mxu0 %v752
  %1474 = vmatprep.subr.bf16.mxu0 0
  %1475 = vmatpush1.bf16.msra.mxu0 %v751
  %1476 = vmatprep.subr.bf16.mxu0 0
  %1477 = vmatpush1.bf16.msra.mxu0 %v750
  %1478 = vmatprep.subr.bf16.mxu0 0
  %1479 = vmatpush1.bf16.msra.mxu0 %v749
  %1480 = vmatprep.subr.bf16.mxu0 0
  %1481 = vmatpush2.bf16.msra.mxu0 0
  %1482 = vmatprep.subr.bf16.mxu0 0
  %1483 = vmatpush2.bf16.msra.mxu0 0
  %1484 = vmatprep.subr.bf16.mxu0 0
  %1485 = vmatpush2.bf16.msra.mxu0 0
  %1486 = vmatprep.subr.bf16.mxu0 0
  %1487 = vmatpush2.bf16.msra.mxu0 0
  %1488 = vmatprep.subr.bf16.mxu0 0
  %1489 = vmatpush2.bf16.msra.mxu0 0
  %1490 = vmatprep.subr.bf16.mxu0 0
  %1491 = vmatpush2.bf16.msra.mxu0 0
  %1492 = vmatprep.subr.bf16.mxu0 0
  %1493 = vmatpush2.bf16.msra.mxu0 0
  %1494 = vmatprep.subr.bf16.mxu0 0
  %1495 = vmatpush2.bf16.msra.mxu0 0
  %1496 = vmatprep.mubr.bf16.mxu0 0
  %1497 = vmatmul.mubr.bf16.gmra.mxu0 %v791
  %v1498 = vpop.f32.mrf.mxu0
  %v1499 = vadd.f32 %v1210, %v1498
  %v1500 = vpop.f32.mrf.mxu0
  %v1501 = vpop.f32.mrf.mxu0
  %v1502 = vadd.f32 %v1213, %v1501
  %v1503 = vpop.f32.mrf.mxu0
  %1504 = vmatprep.mubr.bf16.mxu0 0
  %1505 = vmatmul.mubr.bf16.gmra.mxu0 %v794
  %v1506 = vpop.f32.mrf.mxu0
  %v1507 = vadd.f32 %v1218, %v1506
  %v1508 = vpop.f32.mrf.mxu0
  %v1509 = vpop.f32.mrf.mxu0
  %v1510 = vadd.f32 %v1221, %v1509
  %v1511 = vpop.f32.mrf.mxu0
  %1512 = vmatprep.mubr.bf16.mxu0 0
  %1513 = vmatmul.mubr.bf16.gmra.mxu0 %v797
  %v1514 = vpop.f32.mrf.mxu0
  %v1515 = vadd.f32 %v1226, %v1514
  %v1516 = vpop.f32.mrf.mxu0
  %v1517 = vpop.f32.mrf.mxu0
  %v1518 = vadd.f32 %v1229, %v1517
  %v1519 = vpop.f32.mrf.mxu0
  %1520 = vmatprep.mubr.bf16.mxu0 0
  %1521 = vmatmul.mubr.bf16.gmra.mxu0 %v800
  %v1522 = vpop.f32.mrf.mxu0
  %v1523 = vadd.f32 %v1234, %v1522
  %v1524 = vpop.f32.mrf.mxu0
  %v1525 = vpop.f32.mrf.mxu0
  %v1526 = vadd.f32 %v1237, %v1525
  %v1527 = vpop.f32.mrf.mxu0
  %1528 = vmatprep.mubr.bf16.mxu0 0
  %1529 = vmatmul.mubr.bf16.gmra.mxu0 %v803
  %v1530 = vpop.f32.mrf.mxu0
  %v1531 = vadd.f32 %v1242, %v1530
  %v1532 = vpop.f32.mrf.mxu0
  %v1533 = vpop.f32.mrf.mxu0
  %v1534 = vadd.f32 %v1245, %v1533
  %v1535 = vpop.f32.mrf.mxu0
  %1536 = vmatprep.mubr.bf16.mxu0 0
  %1537 = vmatmul.mubr.bf16.gmra.mxu0 %v806
  %v1538 = vpop.f32.mrf.mxu0
  %v1539 = vadd.f32 %v1250, %v1538
  %v1540 = vpop.f32.mrf.mxu0
  %v1541 = vpop.f32.mrf.mxu0
  %v1542 = vadd.f32 %v1253, %v1541
  %v1543 = vpop.f32.mrf.mxu0
  %1544 = vmatprep.mubr.bf16.mxu0 0
  %1545 = vmatmul.mubr.bf16.gmra.mxu0 %v809
  %v1546 = vpop.f32.mrf.mxu0
  %v1547 = vadd.f32 %v1258, %v1546
  %v1548 = vpop.f32.mrf.mxu0
  %v1549 = vpop.f32.mrf.mxu0
  %v1550 = vadd.f32 %v1261, %v1549
  %v1551 = vpop.f32.mrf.mxu0
  %1552 = vmatprep.mubr.bf16.mxu0 0
  %1553 = vmatmul.mubr.bf16.gmra.mxu0 %v812
  %v1554 = vpop.f32.mrf.mxu0
  %v1555 = vadd.f32 %v1266, %v1554
  %v1556 = vpop.f32.mrf.mxu0
  %v1557 = vpop.f32.mrf.mxu0
  %v1558 = vadd.f32 %v1269, %v1557
  %v1559 = vpop.f32.mrf.mxu0
  %1560 = vmatprep.mubr.bf16.mxu0 0
  %1561 = vmatmul.mubr.bf16.gmra.mxu0 %v815
  %v1562 = vpop.f32.mrf.mxu0
  %v1563 = vadd.f32 %v1274, %v1562
  %v1564 = vpop.f32.mrf.mxu0
  %v1565 = vpop.f32.mrf.mxu0
  %v1566 = vadd.f32 %v1277, %v1565
  %v1567 = vpop.f32.mrf.mxu0
  %1568 = vmatprep.mubr.bf16.mxu0 0
  %1569 = vmatmul.mubr.bf16.gmra.mxu0 %v818
  %v1570 = vpop.f32.mrf.mxu0
  %v1571 = vadd.f32 %v1282, %v1570
  %v1572 = vpop.f32.mrf.mxu0
  %v1573 = vpop.f32.mrf.mxu0
  %v1574 = vadd.f32 %v1285, %v1573
  %v1575 = vpop.f32.mrf.mxu0
  %1576 = vmatprep.mubr.bf16.mxu0 0
  %1577 = vmatmul.mubr.bf16.gmra.mxu0 %v821
  %v1578 = vpop.f32.mrf.mxu0
  %v1579 = vadd.f32 %v1290, %v1578
  %v1580 = vpop.f32.mrf.mxu0
  %v1581 = vpop.f32.mrf.mxu0
  %v1582 = vadd.f32 %v1293, %v1581
  %v1583 = vpop.f32.mrf.mxu0
  %1584 = vmatprep.mubr.bf16.mxu0 0
  %1585 = vmatmul.mubr.bf16.gmra.mxu0 %v824
  %v1586 = vpop.f32.mrf.mxu0
  %v1587 = vadd.f32 %v1298, %v1586
  %v1588 = vpop.f32.mrf.mxu0
  %v1589 = vpop.f32.mrf.mxu0
  %v1590 = vadd.f32 %v1301, %v1589
  %v1591 = vpop.f32.mrf.mxu0
  %1592 = vmatprep.mubr.bf16.mxu0 0
  %1593 = vmatmul.mubr.bf16.gmra.mxu0 %v827
  %v1594 = vpop.f32.mrf.mxu0
  %v1595 = vadd.f32 %v1306, %v1594
  %v1596 = vpop.f32.mrf.mxu0
  %v1597 = vpop.f32.mrf.mxu0
  %v1598 = vadd.f32 %v1309, %v1597
  %v1599 = vpop.f32.mrf.mxu0
  %1600 = vmatprep.mubr.bf16.mxu0 0
  %1601 = vmatmul.mubr.bf16.gmra.mxu0 %v830
  %v1602 = vpop.f32.mrf.mxu0
  %v1603 = vadd.f32 %v1314, %v1602
  %v1604 = vpop.f32.mrf.mxu0
  %v1605 = vpop.f32.mrf.mxu0
  %v1606 = vadd.f32 %v1317, %v1605
  %v1607 = vpop.f32.mrf.mxu0
  %1608 = vmatprep.mubr.bf16.mxu0 0
  %1609 = vmatmul.mubr.bf16.gmra.mxu0 %v833
  %v1610 = vpop.f32.mrf.mxu0
  %v1611 = vadd.f32 %v1322, %v1610
  %v1612 = vpop.f32.mrf.mxu0
  %v1613 = vpop.f32.mrf.mxu0
  %v1614 = vadd.f32 %v1325, %v1613
  %v1615 = vpop.f32.mrf.mxu0
  %1616 = vmatprep.mubr.bf16.mxu0 0
  %1617 = vmatmul.mubr.bf16.gmra.mxu0 %v836
  %v1618 = vpop.f32.mrf.mxu0
  %v1619 = vadd.f32 %v1330, %v1618
  %v1620 = vpop.f32.mrf.mxu0
  %v1621 = vpop.f32.mrf.mxu0
  %v1622 = vadd.f32 %v1333, %v1621
  %v1623 = vpop.f32.mrf.mxu0
  %1624 = vmatprep.mubr.bf16.mxu0 0
  %1625 = vmatmul.mubr.bf16.gmra.mxu0 %v839
  %v1626 = vpop.f32.mrf.mxu0
  %v1627 = vadd.f32 %v1338, %v1626
  %v1628 = vpop.f32.mrf.mxu0
  %v1629 = vpop.f32.mrf.mxu0
  %v1630 = vadd.f32 %v1341, %v1629
  %v1631 = vpop.f32.mrf.mxu0
  %1632 = vmatprep.mubr.bf16.mxu0 0
  %1633 = vmatmul.mubr.bf16.gmra.mxu0 %v842
  %v1634 = vpop.f32.mrf.mxu0
  %v1635 = vadd.f32 %v1346, %v1634
  %v1636 = vpop.f32.mrf.mxu0
  %v1637 = vpop.f32.mrf.mxu0
  %v1638 = vadd.f32 %v1349, %v1637
  %v1639 = vpop.f32.mrf.mxu0
  %1640 = vmatprep.mubr.bf16.mxu0 0
  %1641 = vmatmul.mubr.bf16.gmra.mxu0 %v845
  %v1642 = vpop.f32.mrf.mxu0
  %v1643 = vadd.f32 %v1354, %v1642
  %v1644 = vpop.f32.mrf.mxu0
  %v1645 = vpop.f32.mrf.mxu0
  %v1646 = vadd.f32 %v1357, %v1645
  %v1647 = vpop.f32.mrf.mxu0
  %1648 = vmatprep.mubr.bf16.mxu0 0
  %1649 = vmatmul.mubr.bf16.gmra.mxu0 %v848
  %v1650 = vpop.f32.mrf.mxu0
  %v1651 = vadd.f32 %v1362, %v1650
  %v1652 = vpop.f32.mrf.mxu0
  %v1653 = vpop.f32.mrf.mxu0
  %v1654 = vadd.f32 %v1365, %v1653
  %v1655 = vpop.f32.mrf.mxu0
  %1656 = vmatprep.mubr.bf16.mxu0 0
  %1657 = vmatmul.mubr.bf16.gmra.mxu0 %v851
  %v1658 = vpop.f32.mrf.mxu0
  %v1659 = vadd.f32 %v1370, %v1658
  %v1660 = vpop.f32.mrf.mxu0
  %v1661 = vpop.f32.mrf.mxu0
  %v1662 = vadd.f32 %v1373, %v1661
  %v1663 = vpop.f32.mrf.mxu0
  %1664 = vmatprep.mubr.bf16.mxu0 0
  %1665 = vmatmul.mubr.bf16.gmra.mxu0 %v854
  %v1666 = vpop.f32.mrf.mxu0
  %v1667 = vadd.f32 %v1378, %v1666
  %v1668 = vpop.f32.mrf.mxu0
  %v1669 = vpop.f32.mrf.mxu0
  %v1670 = vadd.f32 %v1381, %v1669
  %v1671 = vpop.f32.mrf.mxu0
  %1672 = vmatprep.mubr.bf16.mxu0 0
  %1673 = vmatmul.mubr.bf16.gmra.mxu0 %v857
  %v1674 = vpop.f32.mrf.mxu0
  %v1675 = vadd.f32 %v1386, %v1674
  %v1676 = vpop.f32.mrf.mxu0
  %v1677 = vpop.f32.mrf.mxu0
  %v1678 = vadd.f32 %v1389, %v1677
  %v1679 = vpop.f32.mrf.mxu0
  %1680 = vmatprep.mubr.bf16.mxu0 0
  %1681 = vmatmul.mubr.bf16.gmra.mxu0 %v860
  %v1682 = vpop.f32.mrf.mxu0
  %v1683 = vadd.f32 %v1394, %v1682
  %v1684 = vpop.f32.mrf.mxu0
  %v1685 = vpop.f32.mrf.mxu0
  %v1686 = vadd.f32 %v1397, %v1685
  %v1687 = vpop.f32.mrf.mxu0
  %1688 = vmatprep.mubr.bf16.mxu0 0
  %1689 = vmatmul.mubr.bf16.gmra.mxu0 %v863
  %v1690 = vpop.f32.mrf.mxu0
  %v1691 = vadd.f32 %v1402, %v1690
  %v1692 = vpop.f32.mrf.mxu0
  %v1693 = vpop.f32.mrf.mxu0
  %v1694 = vadd.f32 %v1405, %v1693
  %v1695 = vpop.f32.mrf.mxu0
  %1696 = vmatprep.mubr.bf16.mxu0 0
  %1697 = vmatmul.mubr.bf16.gmra.mxu0 %v866
  %v1698 = vpop.f32.mrf.mxu0
  %v1699 = vadd.f32 %v1410, %v1698
  %v1700 = vpop.f32.mrf.mxu0
  %v1701 = vpop.f32.mrf.mxu0
  %v1702 = vadd.f32 %v1413, %v1701
  %v1703 = vpop.f32.mrf.mxu0
  %1704 = vmatprep.mubr.bf16.mxu0 0
  %1705 = vmatmul.mubr.bf16.gmra.mxu0 %v869
  %v1706 = vpop.f32.mrf.mxu0
  %v1707 = vadd.f32 %v1418, %v1706
  %v1708 = vpop.f32.mrf.mxu0
  %v1709 = vpop.f32.mrf.mxu0
  %v1710 = vadd.f32 %v1421, %v1709
  %v1711 = vpop.f32.mrf.mxu0
  %1712 = vmatprep.mubr.bf16.mxu0 0
  %1713 = vmatmul.mubr.bf16.gmra.mxu0 %v872
  %v1714 = vpop.f32.mrf.mxu0
  %v1715 = vadd.f32 %v1426, %v1714
  %v1716 = vpop.f32.mrf.mxu0
  %v1717 = vpop.f32.mrf.mxu0
  %v1718 = vadd.f32 %v1429, %v1717
  %v1719 = vpop.f32.mrf.mxu0
  %1720 = vmatprep.mubr.bf16.mxu0 0
  %1721 = vmatmul.mubr.bf16.gmra.mxu0 %v875
  %v1722 = vpop.f32.mrf.mxu0
  %v1723 = vadd.f32 %v1434, %v1722
  %v1724 = vpop.f32.mrf.mxu0
  %v1725 = vpop.f32.mrf.mxu0
  %v1726 = vadd.f32 %v1437, %v1725
  %v1727 = vpop.f32.mrf.mxu0
  %1728 = vmatprep.mubr.bf16.mxu0 0
  %1729 = vmatmul.mubr.bf16.gmra.mxu0 %v878
  %v1730 = vpop.f32.mrf.mxu0
  %v1731 = vadd.f32 %v1442, %v1730
  %v1732 = vpop.f32.mrf.mxu0
  %v1733 = vpop.f32.mrf.mxu0
  %v1734 = vadd.f32 %v1445, %v1733
  %v1735 = vpop.f32.mrf.mxu0
  %1736 = vmatprep.mubr.bf16.mxu0 0
  %1737 = vmatmul.mubr.bf16.gmra.mxu0 %v881
  %v1738 = vpop.f32.mrf.mxu0
  %v1739 = vadd.f32 %v1450, %v1738
  %v1740 = vpop.f32.mrf.mxu0
  %v1741 = vpop.f32.mrf.mxu0
  %v1742 = vadd.f32 %v1453, %v1741
  %v1743 = vpop.f32.mrf.mxu0
  %1744 = vmatprep.mubr.bf16.mxu0 0
  %1745 = vmatmul.mubr.bf16.gmra.mxu0 %v884
  %v1746 = vpop.f32.mrf.mxu0
  %v1747 = vadd.f32 %v1458, %v1746
  %v1748 = vpop.f32.mrf.mxu0
  %v1749 = vpop.f32.mrf.mxu0
  %v1750 = vadd.f32 %v1461, %v1749
  %v1751 = vpop.f32.mrf.mxu0
  %1752 = vdwg.mxu0
  %v1753 = vld [vmem:[%s2] sm:$0x1]
  %v1755 = vlaneseq
  %v1756 = vshrl.u32 %v1755, 7
  %v1757 = vsub.s32 0, %v1756
  %v1758 = vrot.slane %v1753, %v1757
  %v1760 = vmul.f32 %v1499, %v1758
  %v1761 = vmul.f32 %v1502, %v1758
  %v1762 = vmul.f32 %v1507, %v1758
  %v1763 = vmul.f32 %v1510, %v1758
  %v1764 = vmul.f32 %v1515, %v1758
  %v1765 = vmul.f32 %v1518, %v1758
  %v1766 = vmul.f32 %v1523, %v1758
  %v1767 = vmul.f32 %v1526, %v1758
  %v1768 = vmul.f32 %v1531, %v1758
  %v1769 = vmul.f32 %v1534, %v1758
  %v1770 = vmul.f32 %v1539, %v1758
  %v1771 = vmul.f32 %v1542, %v1758
  %v1772 = vmul.f32 %v1547, %v1758
  %v1773 = vmul.f32 %v1550, %v1758
  %v1774 = vmul.f32 %v1555, %v1758
  %v1775 = vmul.f32 %v1558, %v1758
  %v1776 = vmul.f32 %v1563, %v1758
  %v1777 = vmul.f32 %v1566, %v1758
  %v1778 = vmul.f32 %v1571, %v1758
  %v1779 = vmul.f32 %v1574, %v1758
  %v1780 = vmul.f32 %v1579, %v1758
  %v1781 = vmul.f32 %v1582, %v1758
  %v1782 = vmul.f32 %v1587, %v1758
  %v1783 = vmul.f32 %v1590, %v1758
  %v1784 = vmul.f32 %v1595, %v1758
  %v1785 = vmul.f32 %v1598, %v1758
  %v1786 = vmul.f32 %v1603, %v1758
  %v1787 = vmul.f32 %v1606, %v1758
  %v1788 = vmul.f32 %v1611, %v1758
  %v1789 = vmul.f32 %v1614, %v1758
  %v1790 = vmul.f32 %v1619, %v1758
  %v1791 = vmul.f32 %v1622, %v1758
  %v1792 = vmul.f32 %v1627, %v1758
  %v1793 = vmul.f32 %v1630, %v1758
  %v1794 = vmul.f32 %v1635, %v1758
  %v1795 = vmul.f32 %v1638, %v1758
  %v1796 = vmul.f32 %v1643, %v1758
  %v1797 = vmul.f32 %v1646, %v1758
  %v1798 = vmul.f32 %v1651, %v1758
  %v1799 = vmul.f32 %v1654, %v1758
  %v1800 = vmul.f32 %v1659, %v1758
  %v1801 = vmul.f32 %v1662, %v1758
  %v1802 = vmul.f32 %v1667, %v1758
  %v1803 = vmul.f32 %v1670, %v1758
  %v1804 = vmul.f32 %v1675, %v1758
  %v1805 = vmul.f32 %v1678, %v1758
  %v1806 = vmul.f32 %v1683, %v1758
  %v1807 = vmul.f32 %v1686, %v1758
  %v1808 = vmul.f32 %v1691, %v1758
  %v1809 = vmul.f32 %v1694, %v1758
  %v1810 = vmul.f32 %v1699, %v1758
  %v1811 = vmul.f32 %v1702, %v1758
  %v1812 = vmul.f32 %v1707, %v1758
  %v1813 = vmul.f32 %v1710, %v1758
  %v1814 = vmul.f32 %v1715, %v1758
  %v1815 = vmul.f32 %v1718, %v1758
  %v1816 = vmul.f32 %v1723, %v1758
  %v1817 = vmul.f32 %v1726, %v1758
  %v1818 = vmul.f32 %v1731, %v1758
  %v1819 = vmul.f32 %v1734, %v1758
  %v1820 = vmul.f32 %v1739, %v1758
  %v1821 = vmul.f32 %v1742, %v1758
  %v1822 = vmul.f32 %v1747, %v1758
  %v1823 = vmul.f32 %v1750, %v1758
  %v1824 = vld [vmem:[%s3] sm:$0x1]
  %v1826 = vlaneseq
  %v1827 = vshrl.u32 %v1826, 7
  %v1828 = vsub.s32 0, %v1827
  %v1829 = vrot.slane %v1824, %v1828
  %v1831 = vadd.f32 %v1760, %v1829
  %v1832 = vadd.f32 %v1761, %v1829
  %v1833 = vadd.f32 %v1762, %v1829
  %v1834 = vadd.f32 %v1763, %v1829
  %v1835 = vadd.f32 %v1764, %v1829
  %v1836 = vadd.f32 %v1765, %v1829
  %v1837 = vadd.f32 %v1766, %v1829
  %v1838 = vadd.f32 %v1767, %v1829
  %v1839 = vadd.f32 %v1768, %v1829
  %v1840 = vadd.f32 %v1769, %v1829
  %v1841 = vadd.f32 %v1770, %v1829
  %v1842 = vadd.f32 %v1771, %v1829
  %v1843 = vadd.f32 %v1772, %v1829
  %v1844 = vadd.f32 %v1773, %v1829
  %v1845 = vadd.f32 %v1774, %v1829
  %v1846 = vadd.f32 %v1775, %v1829
  %v1847 = vadd.f32 %v1776, %v1829
  %v1848 = vadd.f32 %v1777, %v1829
  %v1849 = vadd.f32 %v1778, %v1829
  %v1850 = vadd.f32 %v1779, %v1829
  %v1851 = vadd.f32 %v1780, %v1829
  %v1852 = vadd.f32 %v1781, %v1829
  %v1853 = vadd.f32 %v1782, %v1829
  %v1854 = vadd.f32 %v1783, %v1829
  %v1855 = vadd.f32 %v1784, %v1829
  %v1856 = vadd.f32 %v1785, %v1829
  %v1857 = vadd.f32 %v1786, %v1829
  %v1858 = vadd.f32 %v1787, %v1829
  %v1859 = vadd.f32 %v1788, %v1829
  %v1860 = vadd.f32 %v1789, %v1829
  %v1861 = vadd.f32 %v1790, %v1829
  %v1862 = vadd.f32 %v1791, %v1829
  %v1863 = vadd.f32 %v1792, %v1829
  %v1864 = vadd.f32 %v1793, %v1829
  %v1865 = vadd.f32 %v1794, %v1829
  %v1866 = vadd.f32 %v1795, %v1829
  %v1867 = vadd.f32 %v1796, %v1829
  %v1868 = vadd.f32 %v1797, %v1829
  %v1869 = vadd.f32 %v1798, %v1829
  %v1870 = vadd.f32 %v1799, %v1829
  %v1871 = vadd.f32 %v1800, %v1829
  %v1872 = vadd.f32 %v1801, %v1829
  %v1873 = vadd.f32 %v1802, %v1829
  %v1874 = vadd.f32 %v1803, %v1829
  %v1875 = vadd.f32 %v1804, %v1829
  %v1876 = vadd.f32 %v1805, %v1829
  %v1877 = vadd.f32 %v1806, %v1829
  %v1878 = vadd.f32 %v1807, %v1829
  %v1879 = vadd.f32 %v1808, %v1829
  %v1880 = vadd.f32 %v1809, %v1829
  %v1881 = vadd.f32 %v1810, %v1829
  %v1882 = vadd.f32 %v1811, %v1829
  %v1883 = vadd.f32 %v1812, %v1829
  %v1884 = vadd.f32 %v1813, %v1829
  %v1885 = vadd.f32 %v1814, %v1829
  %v1886 = vadd.f32 %v1815, %v1829
  %v1887 = vadd.f32 %v1816, %v1829
  %v1888 = vadd.f32 %v1817, %v1829
  %v1889 = vadd.f32 %v1818, %v1829
  %v1890 = vadd.f32 %v1819, %v1829
  %v1891 = vadd.f32 %v1820, %v1829
  %v1892 = vadd.f32 %v1821, %v1829
  %v1893 = vadd.f32 %v1822, %v1829
  %v1894 = vadd.f32 %v1823, %v1829
  %vm1895 = vcmp.ge.f32.partialorder %v1831, 0.0
  %vm1896 = vcmp.ge.f32.partialorder %v1832, 0.0
  %vm1897 = vcmp.ge.f32.partialorder %v1833, 0.0
  %vm1898 = vcmp.ge.f32.partialorder %v1834, 0.0
  %vm1899 = vcmp.ge.f32.partialorder %v1835, 0.0
  %vm1900 = vcmp.ge.f32.partialorder %v1836, 0.0
  %vm1901 = vcmp.ge.f32.partialorder %v1837, 0.0
  %vm1902 = vcmp.ge.f32.partialorder %v1838, 0.0
  %vm1903 = vcmp.ge.f32.partialorder %v1839, 0.0
  %vm1904 = vcmp.ge.f32.partialorder %v1840, 0.0
  %vm1905 = vcmp.ge.f32.partialorder %v1841, 0.0
  %vm1906 = vcmp.ge.f32.partialorder %v1842, 0.0
  %vm1907 = vcmp.ge.f32.partialorder %v1843, 0.0
  %vm1908 = vcmp.ge.f32.partialorder %v1844, 0.0
  %vm1909 = vcmp.ge.f32.partialorder %v1845, 0.0
  %vm1910 = vcmp.ge.f32.partialorder %v1846, 0.0
  %vm1911 = vcmp.ge.f32.partialorder %v1847, 0.0
  %vm1912 = vcmp.ge.f32.partialorder %v1848, 0.0
  %vm1913 = vcmp.ge.f32.partialorder %v1849, 0.0
  %vm1914 = vcmp.ge.f32.partialorder %v1850, 0.0
  %vm1915 = vcmp.ge.f32.partialorder %v1851, 0.0
  %vm1916 = vcmp.ge.f32.partialorder %v1852, 0.0
  %vm1917 = vcmp.ge.f32.partialorder %v1853, 0.0
  %vm1918 = vcmp.ge.f32.partialorder %v1854, 0.0
  %vm1919 = vcmp.ge.f32.partialorder %v1855, 0.0
  %vm1920 = vcmp.ge.f32.partialorder %v1856, 0.0
  %vm1921 = vcmp.ge.f32.partialorder %v1857, 0.0
  %vm1922 = vcmp.ge.f32.partialorder %v1858, 0.0
  %vm1923 = vcmp.ge.f32.partialorder %v1859, 0.0
  %vm1924 = vcmp.ge.f32.partialorder %v1860, 0.0
  %vm1925 = vcmp.ge.f32.partialorder %v1861, 0.0
  %vm1926 = vcmp.ge.f32.partialorder %v1862, 0.0
  %vm1927 = vcmp.ge.f32.partialorder %v1863, 0.0
  %vm1928 = vcmp.ge.f32.partialorder %v1864, 0.0
  %vm1929 = vcmp.ge.f32.partialorder %v1865, 0.0
  %vm1930 = vcmp.ge.f32.partialorder %v1866, 0.0
  %vm1931 = vcmp.ge.f32.partialorder %v1867, 0.0
  %vm1932 = vcmp.ge.f32.partialorder %v1868, 0.0
  %vm1933 = vcmp.ge.f32.partialorder %v1869, 0.0
  %vm1934 = vcmp.ge.f32.partialorder %v1870, 0.0
  %vm1935 = vcmp.ge.f32.partialorder %v1871, 0.0
  %vm1936 = vcmp.ge.f32.partialorder %v1872, 0.0
  %vm1937 = vcmp.ge.f32.partialorder %v1873, 0.0
  %vm1938 = vcmp.ge.f32.partialorder %v1874, 0.0
  %vm1939 = vcmp.ge.f32.partialorder %v1875, 0.0
  %vm1940 = vcmp.ge.f32.partialorder %v1876, 0.0
  %vm1941 = vcmp.ge.f32.partialorder %v1877, 0.0
  %vm1942 = vcmp.ge.f32.partialorder %v1878, 0.0
  %vm1943 = vcmp.ge.f32.partialorder %v1879, 0.0
  %vm1944 = vcmp.ge.f32.partialorder %v1880, 0.0
  %vm1945 = vcmp.ge.f32.partialorder %v1881, 0.0
  %vm1946 = vcmp.ge.f32.partialorder %v1882, 0.0
  %vm1947 = vcmp.ge.f32.partialorder %v1883, 0.0
  %vm1948 = vcmp.ge.f32.partialorder %v1884, 0.0
  %vm1949 = vcmp.ge.f32.partialorder %v1885, 0.0
  %vm1950 = vcmp.ge.f32.partialorder %v1886, 0.0
  %vm1951 = vcmp.ge.f32.partialorder %v1887, 0.0
  %vm1952 = vcmp.ge.f32.partialorder %v1888, 0.0
  %vm1953 = vcmp.ge.f32.partialorder %v1889, 0.0
  %vm1954 = vcmp.ge.f32.partialorder %v1890, 0.0
  %vm1955 = vcmp.ge.f32.partialorder %v1891, 0.0
  %vm1956 = vcmp.ge.f32.partialorder %v1892, 0.0
  %vm1957 = vcmp.ge.f32.partialorder %v1893, 0.0
  %vm1958 = vcmp.ge.f32.partialorder %v1894, 0.0
  %v1959 = vld [vmem:[%s4] sm:$0x1]
  %v1961 = vlaneseq
  %v1962 = vshrl.u32 %v1961, 7
  %v1963 = vsub.s32 0, %v1962
  %v1964 = vrot.slane %v1959, %v1963
  %v1966 = vmul.f32 %v1964, %v1831
  %v1967 = vmul.f32 %v1964, %v1832
  %v1968 = vmul.f32 %v1964, %v1833
  %v1969 = vmul.f32 %v1964, %v1834
  %v1970 = vmul.f32 %v1964, %v1835
  %v1971 = vmul.f32 %v1964, %v1836
  %v1972 = vmul.f32 %v1964, %v1837
  %v1973 = vmul.f32 %v1964, %v1838
  %v1974 = vmul.f32 %v1964, %v1839
  %v1975 = vmul.f32 %v1964, %v1840
  %v1976 = vmul.f32 %v1964, %v1841
  %v1977 = vmul.f32 %v1964, %v1842
  %v1978 = vmul.f32 %v1964, %v1843
  %v1979 = vmul.f32 %v1964, %v1844
  %v1980 = vmul.f32 %v1964, %v1845
  %v1981 = vmul.f32 %v1964, %v1846
  %v1982 = vmul.f32 %v1964, %v1847
  %v1983 = vmul.f32 %v1964, %v1848
  %v1984 = vmul.f32 %v1964, %v1849
  %v1985 = vmul.f32 %v1964, %v1850
  %v1986 = vmul.f32 %v1964, %v1851
  %v1987 = vmul.f32 %v1964, %v1852
  %v1988 = vmul.f32 %v1964, %v1853
  %v1989 = vmul.f32 %v1964, %v1854
  %v1990 = vmul.f32 %v1964, %v1855
  %v1991 = vmul.f32 %v1964, %v1856
  %v1992 = vmul.f32 %v1964, %v1857
  %v1993 = vmul.f32 %v1964, %v1858
  %v1994 = vmul.f32 %v1964, %v1859
  %v1995 = vmul.f32 %v1964, %v1860
  %v1996 = vmul.f32 %v1964, %v1861
  %v1997 = vmul.f32 %v1964, %v1862
  %v1998 = vmul.f32 %v1964, %v1863
  %v1999 = vmul.f32 %v1964, %v1864
  %v2000 = vmul.f32 %v1964, %v1865
  %v2001 = vmul.f32 %v1964, %v1866
  %v2002 = vmul.f32 %v1964, %v1867
  %v2003 = vmul.f32 %v1964, %v1868
  %v2004 = vmul.f32 %v1964, %v1869
  %v2005 = vmul.f32 %v1964, %v1870
  %v2006 = vmul.f32 %v1964, %v1871
  %v2007 = vmul.f32 %v1964, %v1872
  %v2008 = vmul.f32 %v1964, %v1873
  %v2009 = vmul.f32 %v1964, %v1874
  %v2010 = vmul.f32 %v1964, %v1875
  %v2011 = vmul.f32 %v1964, %v1876
  %v2012 = vmul.f32 %v1964, %v1877
  %v2013 = vmul.f32 %v1964, %v1878
  %v2014 = vmul.f32 %v1964, %v1879
  %v2015 = vmul.f32 %v1964, %v1880
  %v2016 = vmul.f32 %v1964, %v1881
  %v2017 = vmul.f32 %v1964, %v1882
  %v2018 = vmul.f32 %v1964, %v1883
  %v2019 = vmul.f32 %v1964, %v1884
  %v2020 = vmul.f32 %v1964, %v1885
  %v2021 = vmul.f32 %v1964, %v1886
  %v2022 = vmul.f32 %v1964, %v1887
  %v2023 = vmul.f32 %v1964, %v1888
  %v2024 = vmul.f32 %v1964, %v1889
  %v2025 = vmul.f32 %v1964, %v1890
  %v2026 = vmul.f32 %v1964, %v1891
  %v2027 = vmul.f32 %v1964, %v1892
  %v2028 = vmul.f32 %v1964, %v1893
  %v2029 = vmul.f32 %v1964, %v1894
  %v2030 = vsel %vm1895, %v1831, %v1966
  %v2031 = vsel %vm1896, %v1832, %v1967
  %v2032 = vsel %vm1897, %v1833, %v1968
  %v2033 = vsel %vm1898, %v1834, %v1969
  %v2034 = vsel %vm1899, %v1835, %v1970
  %v2035 = vsel %vm1900, %v1836, %v1971
  %v2036 = vsel %vm1901, %v1837, %v1972
  %v2037 = vsel %vm1902, %v1838, %v1973
  %v2038 = vsel %vm1903, %v1839, %v1974
  %v2039 = vsel %vm1904, %v1840, %v1975
  %v2040 = vsel %vm1905, %v1841, %v1976
  %v2041 = vsel %vm1906, %v1842, %v1977
  %v2042 = vsel %vm1907, %v1843, %v1978
  %v2043 = vsel %vm1908, %v1844, %v1979
  %v2044 = vsel %vm1909, %v1845, %v1980
  %v2045 = vsel %vm1910, %v1846, %v1981
  %v2046 = vsel %vm1911, %v1847, %v1982
  %v2047 = vsel %vm1912, %v1848, %v1983
  %v2048 = vsel %vm1913, %v1849, %v1984
  %v2049 = vsel %vm1914, %v1850, %v1985
  %v2050 = vsel %vm1915, %v1851, %v1986
  %v2051 = vsel %vm1916, %v1852, %v1987
  %v2052 = vsel %vm1917, %v1853, %v1988
  %v2053 = vsel %vm1918, %v1854, %v1989
  %v2054 = vsel %vm1919, %v1855, %v1990
  %v2055 = vsel %vm1920, %v1856, %v1991
  %v2056 = vsel %vm1921, %v1857, %v1992
  %v2057 = vsel %vm1922, %v1858, %v1993
  %v2058 = vsel %vm1923, %v1859, %v1994
  %v2059 = vsel %vm1924, %v1860, %v1995
  %v2060 = vsel %vm1925, %v1861, %v1996
  %v2061 = vsel %vm1926, %v1862, %v1997
  %v2062 = vsel %vm1927, %v1863, %v1998
  %v2063 = vsel %vm1928, %v1864, %v1999
  %v2064 = vsel %vm1929, %v1865, %v2000
  %v2065 = vsel %vm1930, %v1866, %v2001
  %v2066 = vsel %vm1931, %v1867, %v2002
  %v2067 = vsel %vm1932, %v1868, %v2003
  %v2068 = vsel %vm1933, %v1869, %v2004
  %v2069 = vsel %vm1934, %v1870, %v2005
  %v2070 = vsel %vm1935, %v1871, %v2006
  %v2071 = vsel %vm1936, %v1872, %v2007
  %v2072 = vsel %vm1937, %v1873, %v2008
  %v2073 = vsel %vm1938, %v1874, %v2009
  %v2074 = vsel %vm1939, %v1875, %v2010
  %v2075 = vsel %vm1940, %v1876, %v2011
  %v2076 = vsel %vm1941, %v1877, %v2012
  %v2077 = vsel %vm1942, %v1878, %v2013
  %v2078 = vsel %vm1943, %v1879, %v2014
  %v2079 = vsel %vm1944, %v1880, %v2015
  %v2080 = vsel %vm1945, %v1881, %v2016
  %v2081 = vsel %vm1946, %v1882, %v2017
  %v2082 = vsel %vm1947, %v1883, %v2018
  %v2083 = vsel %vm1948, %v1884, %v2019
  %v2084 = vsel %vm1949, %v1885, %v2020
  %v2085 = vsel %vm1950, %v1886, %v2021
  %v2086 = vsel %vm1951, %v1887, %v2022
  %v2087 = vsel %vm1952, %v1888, %v2023
  %v2088 = vsel %vm1953, %v1889, %v2024
  %v2089 = vsel %vm1954, %v1890, %v2025
  %v2090 = vsel %vm1955, %v1891, %v2026
  %v2091 = vsel %vm1956, %v1892, %v2027
  %v2092 = vsel %vm1957, %v1893, %v2028
  %v2093 = vsel %vm1958, %v1894, %v2029
  %vm2094 = vcmask 261120
  %2095 = vst.msk [vmem:[%s5] sm:$0xff] %vm2094, %v2030
  %2096 = vst.msk [vmem:[%s5 + $0x8] sm:$0xff] %vm2094, %v2031
  %2097 = vst.msk [vmem:[%s5 + $0x10] sm:$0xff] %vm2094, %v2032
  %2098 = vst.msk [vmem:[%s5 + $0x18] sm:$0xff] %vm2094, %v2033
  %2099 = vst.msk [vmem:[%s5 + $0x20] sm:$0xff] %vm2094, %v2034
  %2100 = vst.msk [vmem:[%s5 + $0x28] sm:$0xff] %vm2094, %v2035
  %2101 = vst.msk [vmem:[%s5 + $0x30] sm:$0xff] %vm2094, %v2036
  %2102 = vst.msk [vmem:[%s5 + $0x38] sm:$0xff] %vm2094, %v2037
  %2103 = vst.msk [vmem:[%s5 + $0x40] sm:$0xff] %vm2094, %v2038
  %2104 = vst.msk [vmem:[%s5 + $0x48] sm:$0xff] %vm2094, %v2039
  %2105 = vst.msk [vmem:[%s5 + $0x50] sm:$0xff] %vm2094, %v2040
  %2106 = vst.msk [vmem:[%s5 + $0x58] sm:$0xff] %vm2094, %v2041
  %2107 = vst.msk [vmem:[%s5 + $0x60] sm:$0xff] %vm2094, %v2042
  %2108 = vst.msk [vmem:[%s5 + $0x68] sm:$0xff] %vm2094, %v2043
  %2109 = vst.msk [vmem:[%s5 + $0x70] sm:$0xff] %vm2094, %v2044
  %2110 = vst.msk [vmem:[%s5 + $0x78] sm:$0xff] %vm2094, %v2045
  %2111 = vst.msk [vmem:[%s5 + $0x80] sm:$0xff] %vm2094, %v2046
  %2112 = vst.msk [vmem:[%s5 + $0x88] sm:$0xff] %vm2094, %v2047
  %2113 = vst.msk [vmem:[%s5 + $0x90] sm:$0xff] %vm2094, %v2048
  %2114 = vst.msk [vmem:[%s5 + $0x98] sm:$0xff] %vm2094, %v2049
  %2115 = vst.msk [vmem:[%s5 + $0xa0] sm:$0xff] %vm2094, %v2050
  %2116 = vst.msk [vmem:[%s5 + $0xa8] sm:$0xff] %vm2094, %v2051
  %2117 = vst.msk [vmem:[%s5 + $0xb0] sm:$0xff] %vm2094, %v2052
  %2118 = vst.msk [vmem:[%s5 + $0xb8] sm:$0xff] %vm2094, %v2053
  %2119 = vst.msk [vmem:[%s5 + $0xc0] sm:$0xff] %vm2094, %v2054
  %2120 = vst.msk [vmem:[%s5 + $0xc8] sm:$0xff] %vm2094, %v2055
  %2121 = vst.msk [vmem:[%s5 + $0xd0] sm:$0xff] %vm2094, %v2056
  %2122 = vst.msk [vmem:[%s5 + $0xd8] sm:$0xff] %vm2094, %v2057
  %2123 = vst.msk [vmem:[%s5 + $0xe0] sm:$0xff] %vm2094, %v2058
  %2124 = vst.msk [vmem:[%s5 + $0xe8] sm:$0xff] %vm2094, %v2059
  %2125 = vst.msk [vmem:[%s5 + $0xf0] sm:$0xff] %vm2094, %v2060
  %2126 = vst.msk [vmem:[%s5 + $0xf8] sm:$0xff] %vm2094, %v2061
  %2127 = vst.msk [vmem:[%s5 + $0x100] sm:$0xff] %vm2094, %v2062
  %2128 = vst.msk [vmem:[%s5 + $0x108] sm:$0xff] %vm2094, %v2063
  %2129 = vst.msk [vmem:[%s5 + $0x110] sm:$0xff] %vm2094, %v2064
  %2130 = vst.msk [vmem:[%s5 + $0x118] sm:$0xff] %vm2094, %v2065
  %2131 = vst.msk [vmem:[%s5 + $0x120] sm:$0xff] %vm2094, %v2066
  %2132 = vst.msk [vmem:[%s5 + $0x128] sm:$0xff] %vm2094, %v2067
  %2133 = vst.msk [vmem:[%s5 + $0x130] sm:$0xff] %vm2094, %v2068
  %2134 = vst.msk [vmem:[%s5 + $0x138] sm:$0xff] %vm2094, %v2069
  %2135 = vst.msk [vmem:[%s5 + $0x140] sm:$0xff] %vm2094, %v2070
  %2136 = vst.msk [vmem:[%s5 + $0x148] sm:$0xff] %vm2094, %v2071
  %2137 = vst.msk [vmem:[%s5 + $0x150] sm:$0xff] %vm2094, %v2072
  %2138 = vst.msk [vmem:[%s5 + $0x158] sm:$0xff] %vm2094, %v2073
  %2139 = vst.msk [vmem:[%s5 + $0x160] sm:$0xff] %vm2094, %v2074
  %2140 = vst.msk [vmem:[%s5 + $0x168] sm:$0xff] %vm2094, %v2075
  %2141 = vst.msk [vmem:[%s5 + $0x170] sm:$0xff] %vm2094, %v2076
  %2142 = vst.msk [vmem:[%s5 + $0x178] sm:$0xff] %vm2094, %v2077
  %2143 = vst.msk [vmem:[%s5 + $0x180] sm:$0xff] %vm2094, %v2078
  %2144 = vst.msk [vmem:[%s5 + $0x188] sm:$0xff] %vm2094, %v2079
  %2145 = vst.msk [vmem:[%s5 + $0x190] sm:$0xff] %vm2094, %v2080
  %2146 = vst.msk [vmem:[%s5 + $0x198] sm:$0xff] %vm2094, %v2081
  %2147 = vst.msk [vmem:[%s5 + $0x1a0] sm:$0xff] %vm2094, %v2082
  %2148 = vst.msk [vmem:[%s5 + $0x1a8] sm:$0xff] %vm2094, %v2083
  %2149 = vst.msk [vmem:[%s5 + $0x1b0] sm:$0xff] %vm2094, %v2084
  %2150 = vst.msk [vmem:[%s5 + $0x1b8] sm:$0xff] %vm2094, %v2085
  %2151 = vst.msk [vmem:[%s5 + $0x1c0] sm:$0xff] %vm2094, %v2086
  %2152 = vst.msk [vmem:[%s5 + $0x1c8] sm:$0xff] %vm2094, %v2087
  %2153 = vst.msk [vmem:[%s5 + $0x1d0] sm:$0xff] %vm2094, %v2088
  %2154 = vst.msk [vmem:[%s5 + $0x1d8] sm:$0xff] %vm2094, %v2089
  %2155 = vst.msk [vmem:[%s5 + $0x1e0] sm:$0xff] %vm2094, %v2090
  %2156 = vst.msk [vmem:[%s5 + $0x1e8] sm:$0xff] %vm2094, %v2091
  %2157 = vst.msk [vmem:[%s5 + $0x1f0] sm:$0xff] %vm2094, %v2092
  %2158 = vst.msk [vmem:[%s5 + $0x1f8] sm:$0xff] %vm2094, %v2093
  // Predicated region
  $region22: #{srnet_forward.12} parent=0 // pred_check
    _
  $region23: #{srnet_forward.12} parent=0 // pred_check_branch
    %2160 = sbr.rel (0) target = $region25
  $region24: #{srnet_forward.12} parent=0 // pred_region
    _
  $region25: #{srnet_forward.12} parent=0 // pred_fallthru
    _
  // Predicated region
  $region26: #{srnet_forward.12} parent=0 // pred_check
    _
  $region27: #{srnet_forward.12} parent=0 // pred_check_branch
    %2162 = sbr.rel (0) target = $region29
  $region28: #{srnet_forward.12} parent=0 // pred_region
    _
  $region29: #{srnet_forward.12} parent=0 // pred_fallthru
    _

// kernel: srnet_forward.13
$region0: #{srnet_forward.13}
  #allocation0 [shape = 'u32[]', space=smem, size = 0x4, offset = 0x4, fixed_abs, tag = 'smem constant byte address 0x4 - core index']
  #allocation1 [shape = 'u32[144,128]{1,0:T(1,128)}', space=vmem, size = 0x12000, scoped, tag = 'internal scratch']
  %s0 = inlined_call_operand.vmem [shape: f32[128,288], index: 0, kind: input, shape index: {}]
  %s1 = inlined_call_operand.vmem [shape: bf16[288,64], index: 1, kind: input, shape index: {}]
  %s2 = inlined_call_operand.vmem [shape: f32[1,64], index: 2, kind: input, shape index: {}]
  %s3 = inlined_call_operand.vmem [shape: f32[1,64], index: 3, kind: input, shape index: {}]
  %s4 = inlined_call_operand.vmem [shape: f32[1,64], index: 4, kind: input, shape index: {}]
  %s5 = inlined_call_operand.vmem [shape: f32[128,64], index: 5, kind: output, shape index: {}]
  %s6 = sld [smem:[#allocation0]]
  $region30: #{srnet_forward.13} parent=0
    _
  %s8 = ssub.s32 1, %s6
  %s9 = scalar_select 0, %s8, %s6
  // Predicated region
  $region2: #{srnet_forward.13} parent=0 // pred_check
    _
  $region3: #{srnet_forward.13} parent=0 // pred_check_branch
    %11 = sbr.rel (0) target = $region5
  $region4: #{srnet_forward.13} parent=0 // pred_region
    _
  $region5: #{srnet_forward.13} parent=0 // pred_fallthru
    _
  // Predicated region
  $region6: #{srnet_forward.13} parent=0 // pred_check
    _
  $region7: #{srnet_forward.13} parent=0 // pred_check_branch
    %13 = sbr.rel (0) target = $region9
  $region8: #{srnet_forward.13} parent=0 // pred_region
    _
  $region9: #{srnet_forward.13} parent=0 // pred_fallthru
    _
  // Predicated region
  $region10: #{srnet_forward.13} parent=0 // pred_check
    _
  $region11: #{srnet_forward.13} parent=0 // pred_check_branch
    %15 = sbr.rel (0) target = $region13
  $region12: #{srnet_forward.13} parent=0 // pred_region
    _
  $region13: #{srnet_forward.13} parent=0 // pred_fallthru
    _
  // Predicated region
  $region14: #{srnet_forward.13} parent=0 // pred_check
    _
  $region15: #{srnet_forward.13} parent=0 // pred_check_branch
    %17 = sbr.rel (0) target = $region17
  $region16: #{srnet_forward.13} parent=0 // pred_region
    _
  $region17: #{srnet_forward.13} parent=0 // pred_fallthru
    _
  // Predicated region
  $region18: #{srnet_forward.13} parent=0 // pred_check
    _
  $region19: #{srnet_forward.13} parent=0 // pred_check_branch
    %19 = sbr.rel (0) target = $region21
  $region20: #{srnet_forward.13} parent=0 // pred_region
    _
  $region21: #{srnet_forward.13} parent=0 // pred_fallthru
    _
  %v21 = vld [vmem:[%s0] sm:$0xff]
  %v22 = vld [vmem:[%s0 + $0x8] sm:$0xff]
  %v23 = vld [vmem:[%s0 + $0x10] sm:$0xff]
  %v24 = vld [vmem:[%s0 + $0x18] sm:$0xff]
  %v25 = vld [vmem:[%s0 + $0x20] sm:$0xff]
  %v26 = vld [vmem:[%s0 + $0x28] sm:$0xff]
  %v27 = vld [vmem:[%s0 + $0x30] sm:$0xff]
  %v28 = vld [vmem:[%s0 + $0x38] sm:$0xff]
  %v29 = vld [vmem:[%s0 + $0x40] sm:$0xff]
  %v30 = vld [vmem:[%s0 + $0x48] sm:$0xff]
  %v31 = vld [vmem:[%s0 + $0x50] sm:$0xff]
  %v32 = vld [vmem:[%s0 + $0x58] sm:$0xff]
  %v33 = vld [vmem:[%s0 + $0x60] sm:$0xff]
  %v34 = vld [vmem:[%s0 + $0x68] sm:$0xff]
  %v35 = vld [vmem:[%s0 + $0x70] sm:$0xff]
  %v36 = vld [vmem:[%s0 + $0x78] sm:$0xff]
  %v37 = vld [vmem:[%s0 + $0x80] sm:$0xff]
  %v38 = vld [vmem:[%s0 + $0x88] sm:$0xff]
  %v39 = vld [vmem:[%s0 + $0x90] sm:$0xff]
  %v40 = vld [vmem:[%s0 + $0x98] sm:$0xff]
  %v41 = vld [vmem:[%s0 + $0xa0] sm:$0xff]
  %v42 = vld [vmem:[%s0 + $0xa8] sm:$0xff]
  %v43 = vld [vmem:[%s0 + $0xb0] sm:$0xff]
  %v44 = vld [vmem:[%s0 + $0xb8] sm:$0xff]
  %v45 = vld [vmem:[%s0 + $0xc0] sm:$0xff]
  %v46 = vld [vmem:[%s0 + $0xc8] sm:$0xff]
  %v47 = vld [vmem:[%s0 + $0xd0] sm:$0xff]
  %v48 = vld [vmem:[%s0 + $0xd8] sm:$0xff]
  %v49 = vld [vmem:[%s0 + $0xe0] sm:$0xff]
  %v50 = vld [vmem:[%s0 + $0xe8] sm:$0xff]
  %v51 = vld [vmem:[%s0 + $0xf0] sm:$0xff]
  %v52 = vld [vmem:[%s0 + $0xf8] sm:$0xff]
  %v53 = vld [vmem:[%s0 + $0x100] sm:$0xff]
  %v54 = vld [vmem:[%s0 + $0x108] sm:$0xff]
  %v55 = vld [vmem:[%s0 + $0x110] sm:$0xff]
  %v56 = vld [vmem:[%s0 + $0x118] sm:$0xff]
  %v57 = vld [vmem:[%s0 + $0x120] sm:$0xff]
  %v58 = vld [vmem:[%s0 + $0x128] sm:$0xff]
  %v59 = vld [vmem:[%s0 + $0x130] sm:$0xff]
  %v60 = vld [vmem:[%s0 + $0x138] sm:$0xff]
  %v61 = vld [vmem:[%s0 + $0x140] sm:$0xff]
  %v62 = vld [vmem:[%s0 + $0x148] sm:$0xff]
  %v63 = vld [vmem:[%s0 + $0x150] sm:$0xff]
  %v64 = vld [vmem:[%s0 + $0x158] sm:$0xff]
  %v65 = vld [vmem:[%s0 + $0x160] sm:$0xff]
  %v66 = vld [vmem:[%s0 + $0x168] sm:$0xff]
  %v67 = vld [vmem:[%s0 + $0x170] sm:$0xff]
  %v68 = vld [vmem:[%s0 + $0x178] sm:$0xff]
  %v69 = vpack.c.bf16 %v24, %v21
  %v70 = vpack.c.bf16 %v25, %v22
  %v71 = vpack.c.bf16 %v26, %v23
  %v72 = vpack.c.bf16 %v30, %v27
  %v73 = vpack.c.bf16 %v31, %v28
  %v74 = vpack.c.bf16 %v32, %v29
  %v75 = vpack.c.bf16 %v36, %v33
  %v76 = vpack.c.bf16 %v37, %v34
  %v77 = vpack.c.bf16 %v38, %v35
  %v78 = vpack.c.bf16 %v42, %v39
  %v79 = vpack.c.bf16 %v43, %v40
  %v80 = vpack.c.bf16 %v44, %v41
  %v81 = vpack.c.bf16 %v48, %v45
  %v82 = vpack.c.bf16 %v49, %v46
  %v83 = vpack.c.bf16 %v50, %v47
  %v84 = vpack.c.bf16 %v54, %v51
  %v85 = vpack.c.bf16 %v55, %v52
  %v86 = vpack.c.bf16 %v56, %v53
  %v87 = vpack.c.bf16 %v60, %v57
  %v88 = vpack.c.bf16 %v61, %v58
  %v89 = vpack.c.bf16 %v62, %v59
  %v90 = vpack.c.bf16 %v66, %v63
  %v91 = vpack.c.bf16 %v67, %v64
  %v92 = vpack.c.bf16 %v68, %v65
  %v93 = vld [vmem:[%s1] sm:$0xf]
  %v94 = vld [vmem:[%s1 + $0x4] sm:$0xf]
  %v95 = vld [vmem:[%s1 + $0x8] sm:$0xf]
  %v96 = vld [vmem:[%s1 + $0xc] sm:$0xf]
  %v97 = vld [vmem:[%s1 + $0x10] sm:$0xf]
  %v98 = vld [vmem:[%s1 + $0x14] sm:$0xf]
  %v99 = vld [vmem:[%s1 + $0x18] sm:$0xf]
  %v100 = vld [vmem:[%s1 + $0x1c] sm:$0xf]
  %v101 = vld [vmem:[%s1 + $0x20] sm:$0xf]
  %v102 = vld [vmem:[%s1 + $0x24] sm:$0xf]
  %v103 = vld [vmem:[%s1 + $0x28] sm:$0xf]
  %v104 = vld [vmem:[%s1 + $0x2c] sm:$0xf]
  %v105 = vld [vmem:[%s1 + $0x30] sm:$0xf]
  %v106 = vld [vmem:[%s1 + $0x34] sm:$0xf]
  %v107 = vld [vmem:[%s1 + $0x38] sm:$0xf]
  %v108 = vld [vmem:[%s1 + $0x3c] sm:$0xf]
  %v109 = vld [vmem:[%s1 + $0x40] sm:$0xf]
  %v110 = vld [vmem:[%s1 + $0x44] sm:$0xf]
  %v111 = vld [vmem:[%s1 + $0x48] sm:$0xf]
  %v112 = vld [vmem:[%s1 + $0x4c] sm:$0xf]
  %v113 = vld [vmem:[%s1 + $0x50] sm:$0xf]
  %v114 = vld [vmem:[%s1 + $0x54] sm:$0xf]
  %v115 = vld [vmem:[%s1 + $0x58] sm:$0xf]
  %v116 = vld [vmem:[%s1 + $0x5c] sm:$0xf]
  %v117 = vld [vmem:[%s1 + $0x60] sm:$0xf]
  %v118 = vld [vmem:[%s1 + $0x64] sm:$0xf]
  %v119 = vld [vmem:[%s1 + $0x68] sm:$0xf]
  %v120 = vld [vmem:[%s1 + $0x6c] sm:$0xf]
  %v121 = vld [vmem:[%s1 + $0x70] sm:$0xf]
  %v122 = vld [vmem:[%s1 + $0x74] sm:$0xf]
  %v123 = vld [vmem:[%s1 + $0x78] sm:$0xf]
  %v124 = vld [vmem:[%s1 + $0x7c] sm:$0xf]
  %v125 = vld [vmem:[%s1 + $0x80] sm:$0xf]
  %v126 = vld [vmem:[%s1 + $0x84] sm:$0xf]
  %v127 = vld [vmem:[%s1 + $0x88] sm:$0xf]
  %v128 = vld [vmem:[%s1 + $0x8c] sm:$0xf]
  %v165 = vunpack.c.l.b16 %v93
  %v166 = vunpack.c.l.b16 %v94
  %v167 = vunpack.c.l.b16 %v95
  %v168 = vunpack.c.l.b16 %v96
  %v169 = vunpack.c.l.b16 %v97
  %v170 = vunpack.c.l.b16 %v98
  %v171 = vunpack.c.l.b16 %v99
  %v172 = vunpack.c.l.b16 %v100
  %v173 = vunpack.c.l.b16 %v101
  %v174 = vunpack.c.l.b16 %v102
  %v175 = vunpack.c.l.b16 %v103
  %v176 = vunpack.c.l.b16 %v104
  %v177 = vunpack.c.l.b16 %v105
  %v178 = vunpack.c.l.b16 %v106
  %v179 = vunpack.c.l.b16 %v107
  %v180 = vunpack.c.l.b16 %v108
  %v181 = vunpack.c.l.b16 %v109
  %v182 = vunpack.c.l.b16 %v110
  %v183 = vunpack.c.l.b16 %v111
  %v184 = vunpack.c.l.b16 %v112
  %v185 = vunpack.c.l.b16 %v113
  %v186 = vunpack.c.l.b16 %v114
  %v187 = vunpack.c.l.b16 %v115
  %v188 = vunpack.c.l.b16 %v116
  %v189 = vunpack.c.l.b16 %v117
  %v190 = vunpack.c.l.b16 %v118
  %v191 = vunpack.c.l.b16 %v119
  %v192 = vunpack.c.l.b16 %v120
  %v193 = vunpack.c.l.b16 %v121
  %v194 = vunpack.c.l.b16 %v122
  %v195 = vunpack.c.l.b16 %v123
  %v196 = vunpack.c.l.b16 %v124
  %v197 = vunpack.c.l.b16 %v125
  %v198 = vunpack.c.l.b16 %v126
  %v199 = vunpack.c.l.b16 %v127
  %v200 = vunpack.c.l.b16 %v128
  %v201 = vpack.c.b16 %v166, %v165
  %v202 = vpack.c.b16 %v168, %v167
  %v203 = vpack.c.b16 %v170, %v169
  %v204 = vpack.c.b16 %v172, %v171
  %v205 = vpack.c.b16 %v174, %v173
  %v206 = vpack.c.b16 %v176, %v175
  %v207 = vpack.c.b16 %v178, %v177
  %v208 = vpack.c.b16 %v180, %v179
  %v209 = vpack.c.b16 %v182, %v181
  %v210 = vpack.c.b16 %v184, %v183
  %v211 = vpack.c.b16 %v186, %v185
  %v212 = vpack.c.b16 %v188, %v187
  %v213 = vpack.c.b16 %v190, %v189
  %v214 = vpack.c.b16 %v192, %v191
  %v215 = vpack.c.b16 %v194, %v193
  %v216 = vpack.c.b16 %v196, %v195
  %v217 = vpack.c.b16 %v198, %v197
  %v218 = vpack.c.b16 %v200, %v199
  %vm237 = vcmask 261120
  %v239 = vsel %vm237, %v71, 0
  %v242 = vsel %vm237, %v74, 0
  %v245 = vsel %vm237, %v77, 0
  %v248 = vsel %vm237, %v80, 0
  %v251 = vsel %vm237, %v83, 0
  %v254 = vsel %vm237, %v86, 0
  %v257 = vsel %vm237, %v89, 0
  %v260 = vsel %vm237, %v92, 0
  %262 = vmatprep.subr.bf16.mxu0 0
  %263 = vmatpush1.bf16.msra.mxu0 %v208
  %264 = vmatprep.subr.bf16.mxu0 0
  %265 = vmatpush1.bf16.msra.mxu0 %v207
  %266 = vmatprep.subr.bf16.mxu0 0
  %267 = vmatpush1.bf16.msra.mxu0 %v206
  %268 = vmatprep.subr.bf16.mxu0 0
  %269 = vmatpush1.bf16.msra.mxu0 %v205
  %270 = vmatprep.subr.bf16.mxu0 0
  %271 = vmatpush1.bf16.msra.mxu0 %v204
  %272 = vmatprep.subr.bf16.mxu0 0
  %273 = vmatpush1.bf16.msra.mxu0 %v203
  %274 = vmatprep.subr.bf16.mxu0 0
  %275 = vmatpush1.bf16.msra.mxu0 %v202
  %276 = vmatprep.subr.bf16.mxu0 0
  %277 = vmatpush1.bf16.msra.mxu0 %v201
  %278 = vmatprep.subr.bf16.mxu0 0
  %279 = vmatpush2.bf16.msra.mxu0 %v216
  %280 = vmatprep.subr.bf16.mxu0 0
  %281 = vmatpush2.bf16.msra.mxu0 %v215
  %282 = vmatprep.subr.bf16.mxu0 0
  %283 = vmatpush2.bf16.msra.mxu0 %v214
  %284 = vmatprep.subr.bf16.mxu0 0
  %285 = vmatpush2.bf16.msra.mxu0 %v213
  %286 = vmatprep.subr.bf16.mxu0 0
  %287 = vmatpush2.bf16.msra.mxu0 %v212
  %288 = vmatprep.subr.bf16.mxu0 0
  %289 = vmatpush2.bf16.msra.mxu0 %v211
  %290 = vmatprep.subr.bf16.mxu0 0
  %291 = vmatpush2.bf16.msra.mxu0 %v210
  %292 = vmatprep.subr.bf16.mxu0 0
  %293 = vmatpush2.bf16.msra.mxu0 %v209
  %294 = vmatprep.mubr.bf16.mxu0 %v70
  %295 = vmatmul.mubr.bf16.gmra.mxu0 %v69
  %v296 = vpop.f32.mrf.mxu0
  %v297 = vadd.f32 0.0, %v296
  %v298 = vpop.f32.mrf.mxu0
  %v299 = vpop.f32.mrf.mxu0
  %v300 = vadd.f32 0.0, %v299
  %v301 = vpop.f32.mrf.mxu0
  %302 = vmatprep.mubr.bf16.mxu0 %v73
  %303 = vmatmul.mubr.bf16.gmra.mxu0 %v72
  %v304 = vpop.f32.mrf.mxu0
  %v305 = vadd.f32 0.0, %v304
  %v306 = vpop.f32.mrf.mxu0
  %v307 = vpop.f32.mrf.mxu0
  %v308 = vadd.f32 0.0, %v307
  %v309 = vpop.f32.mrf.mxu0
  %310 = vmatprep.mubr.bf16.mxu0 %v76
  %311 = vmatmul.mubr.bf16.gmra.mxu0 %v75
  %v312 = vpop.f32.mrf.mxu0
  %v313 = vadd.f32 0.0, %v312
  %v314 = vpop.f32.mrf.mxu0
  %v315 = vpop.f32.mrf.mxu0
  %v316 = vadd.f32 0.0, %v315
  %v317 = vpop.f32.mrf.mxu0
  %318 = vmatprep.mubr.bf16.mxu0 %v79
  %319 = vmatmul.mubr.bf16.gmra.mxu0 %v78
  %v320 = vpop.f32.mrf.mxu0
  %v321 = vadd.f32 0.0, %v320
  %v322 = vpop.f32.mrf.mxu0
  %v323 = vpop.f32.mrf.mxu0
  %v324 = vadd.f32 0.0, %v323
  %v325 = vpop.f32.mrf.mxu0
  %326 = vmatprep.mubr.bf16.mxu0 %v82
  %327 = vmatmul.mubr.bf16.gmra.mxu0 %v81
  %v328 = vpop.f32.mrf.mxu0
  %v329 = vadd.f32 0.0, %v328
  %v330 = vpop.f32.mrf.mxu0
  %v331 = vpop.f32.mrf.mxu0
  %v332 = vadd.f32 0.0, %v331
  %v333 = vpop.f32.mrf.mxu0
  %334 = vmatprep.mubr.bf16.mxu0 %v85
  %335 = vmatmul.mubr.bf16.gmra.mxu0 %v84
  %v336 = vpop.f32.mrf.mxu0
  %v337 = vadd.f32 0.0, %v336
  %v338 = vpop.f32.mrf.mxu0
  %v339 = vpop.f32.mrf.mxu0
  %v340 = vadd.f32 0.0, %v339
  %v341 = vpop.f32.mrf.mxu0
  %342 = vmatprep.mubr.bf16.mxu0 %v88
  %343 = vmatmul.mubr.bf16.gmra.mxu0 %v87
  %v344 = vpop.f32.mrf.mxu0
  %v345 = vadd.f32 0.0, %v344
  %v346 = vpop.f32.mrf.mxu0
  %v347 = vpop.f32.mrf.mxu0
  %v348 = vadd.f32 0.0, %v347
  %v349 = vpop.f32.mrf.mxu0
  %350 = vmatprep.mubr.bf16.mxu0 %v91
  %351 = vmatmul.mubr.bf16.gmra.mxu0 %v90
  %v352 = vpop.f32.mrf.mxu0
  %v353 = vadd.f32 0.0, %v352
  %v354 = vpop.f32.mrf.mxu0
  %v355 = vpop.f32.mrf.mxu0
  %v356 = vadd.f32 0.0, %v355
  %v357 = vpop.f32.mrf.mxu0
  %358 = vdwg.mxu0
  %359 = vmatprep.subr.bf16.mxu0 0
  %360 = vmatpush1.bf16.msra.mxu0 0
  %361 = vmatprep.subr.bf16.mxu0 0
  %362 = vmatpush1.bf16.msra.mxu0 0
  %363 = vmatprep.subr.bf16.mxu0 0
  %364 = vmatpush1.bf16.msra.mxu0 0
  %365 = vmatprep.subr.bf16.mxu0 0
  %366 = vmatpush1.bf16.msra.mxu0 0
  %367 = vmatprep.subr.bf16.mxu0 0
  %368 = vmatpush1.bf16.msra.mxu0 0
  %369 = vmatprep.subr.bf16.mxu0 0
  %370 = vmatpush1.bf16.msra.mxu0 0
  %371 = vmatprep.subr.bf16.mxu0 0
  %372 = vmatpush1.bf16.msra.mxu0 %v218
  %373 = vmatprep.subr.bf16.mxu0 0
  %374 = vmatpush1.bf16.msra.mxu0 %v217
  %375 = vmatprep.subr.bf16.mxu0 0
  %376 = vmatpush2.bf16.msra.mxu0 0
  %377 = vmatprep.subr.bf16.mxu0 0
  %378 = vmatpush2.bf16.msra.mxu0 0
  %379 = vmatprep.subr.bf16.mxu0 0
  %380 = vmatpush2.bf16.msra.mxu0 0
  %381 = vmatprep.subr.bf16.mxu0 0
  %382 = vmatpush2.bf16.msra.mxu0 0
  %383 = vmatprep.subr.bf16.mxu0 0
  %384 = vmatpush2.bf16.msra.mxu0 0
  %385 = vmatprep.subr.bf16.mxu0 0
  %386 = vmatpush2.bf16.msra.mxu0 0
  %387 = vmatprep.subr.bf16.mxu0 0
  %388 = vmatpush2.bf16.msra.mxu0 0
  %389 = vmatprep.subr.bf16.mxu0 0
  %390 = vmatpush2.bf16.msra.mxu0 0
  %391 = vmatprep.mubr.bf16.mxu0 0
  %392 = vmatmul.mubr.bf16.gmra.mxu0 %v239
  %v393 = vpop.f32.mrf.mxu0
  %v394 = vadd.f32 %v297, %v393
  %v395 = vpop.f32.mrf.mxu0
  %v396 = vpop.f32.mrf.mxu0
  %v397 = vadd.f32 %v300, %v396
  %v398 = vpop.f32.mrf.mxu0
  %399 = vmatprep.mubr.bf16.mxu0 0
  %400 = vmatmul.mubr.bf16.gmra.mxu0 %v242
  %v401 = vpop.f32.mrf.mxu0
  %v402 = vadd.f32 %v305, %v401
  %v403 = vpop.f32.mrf.mxu0
  %v404 = vpop.f32.mrf.mxu0
  %v405 = vadd.f32 %v308, %v404
  %v406 = vpop.f32.mrf.mxu0
  %407 = vmatprep.mubr.bf16.mxu0 0
  %408 = vmatmul.mubr.bf16.gmra.mxu0 %v245
  %v409 = vpop.f32.mrf.mxu0
  %v410 = vadd.f32 %v313, %v409
  %v411 = vpop.f32.mrf.mxu0
  %v412 = vpop.f32.mrf.mxu0
  %v413 = vadd.f32 %v316, %v412
  %v414 = vpop.f32.mrf.mxu0
  %415 = vmatprep.mubr.bf16.mxu0 0
  %416 = vmatmul.mubr.bf16.gmra.mxu0 %v248
  %v417 = vpop.f32.mrf.mxu0
  %v418 = vadd.f32 %v321, %v417
  %v419 = vpop.f32.mrf.mxu0
  %v420 = vpop.f32.mrf.mxu0
  %v421 = vadd.f32 %v324, %v420
  %v422 = vpop.f32.mrf.mxu0
  %423 = vmatprep.mubr.bf16.mxu0 0
  %424 = vmatmul.mubr.bf16.gmra.mxu0 %v251
  %v425 = vpop.f32.mrf.mxu0
  %v426 = vadd.f32 %v329, %v425
  %v427 = vpop.f32.mrf.mxu0
  %v428 = vpop.f32.mrf.mxu0
  %v429 = vadd.f32 %v332, %v428
  %v430 = vpop.f32.mrf.mxu0
  %431 = vmatprep.mubr.bf16.mxu0 0
  %432 = vmatmul.mubr.bf16.gmra.mxu0 %v254
  %v433 = vpop.f32.mrf.mxu0
  %v434 = vadd.f32 %v337, %v433
  %v435 = vpop.f32.mrf.mxu0
  %v436 = vpop.f32.mrf.mxu0
  %v437 = vadd.f32 %v340, %v436
  %v438 = vpop.f32.mrf.mxu0
  %439 = vmatprep.mubr.bf16.mxu0 0
  %440 = vmatmul.mubr.bf16.gmra.mxu0 %v257
  %v441 = vpop.f32.mrf.mxu0
  %v442 = vadd.f32 %v345, %v441
  %v443 = vpop.f32.mrf.mxu0
  %v444 = vpop.f32.mrf.mxu0
  %v445 = vadd.f32 %v348, %v444
  %v446 = vpop.f32.mrf.mxu0
  %447 = vmatprep.mubr.bf16.mxu0 0
  %448 = vmatmul.mubr.bf16.gmra.mxu0 %v260
  %v449 = vpop.f32.mrf.mxu0
  %v450 = vadd.f32 %v353, %v449
  %v451 = vpop.f32.mrf.mxu0
  %v452 = vpop.f32.mrf.mxu0
  %v453 = vadd.f32 %v356, %v452
  %v454 = vpop.f32.mrf.mxu0
  %455 = vdwg.mxu0
  %v456 = vld [vmem:[%s2] sm:$0x1]
  %v458 = vlaneseq
  %v459 = vshrl.u32 %v458, 7
  %v460 = vsub.s32 0, %v459
  %v461 = vrot.slane %v456, %v460
  %v463 = vmul.f32 %v394, %v461
  %v464 = vmul.f32 %v397, %v461
  %v465 = vmul.f32 %v402, %v461
  %v466 = vmul.f32 %v405, %v461
  %v467 = vmul.f32 %v410, %v461
  %v468 = vmul.f32 %v413, %v461
  %v469 = vmul.f32 %v418, %v461
  %v470 = vmul.f32 %v421, %v461
  %v471 = vmul.f32 %v426, %v461
  %v472 = vmul.f32 %v429, %v461
  %v473 = vmul.f32 %v434, %v461
  %v474 = vmul.f32 %v437, %v461
  %v475 = vmul.f32 %v442, %v461
  %v476 = vmul.f32 %v445, %v461
  %v477 = vmul.f32 %v450, %v461
  %v478 = vmul.f32 %v453, %v461
  %v479 = vld [vmem:[%s3] sm:$0x1]
  %v481 = vlaneseq
  %v482 = vshrl.u32 %v481, 7
  %v483 = vsub.s32 0, %v482
  %v484 = vrot.slane %v479, %v483
  %v486 = vadd.f32 %v463, %v484
  %v487 = vadd.f32 %v464, %v484
  %v488 = vadd.f32 %v465, %v484
  %v489 = vadd.f32 %v466, %v484
  %v490 = vadd.f32 %v467, %v484
  %v491 = vadd.f32 %v468, %v484
  %v492 = vadd.f32 %v469, %v484
  %v493 = vadd.f32 %v470, %v484
  %v494 = vadd.f32 %v471, %v484
  %v495 = vadd.f32 %v472, %v484
  %v496 = vadd.f32 %v473, %v484
  %v497 = vadd.f32 %v474, %v484
  %v498 = vadd.f32 %v475, %v484
  %v499 = vadd.f32 %v476, %v484
  %v500 = vadd.f32 %v477, %v484
  %v501 = vadd.f32 %v478, %v484
  %v502 = vmul.f32 %v486, 0.5
  %v503 = vmul.f32 %v487, 0.5
  %v504 = vmul.f32 %v488, 0.5
  %v505 = vmul.f32 %v489, 0.5
  %v506 = vmul.f32 %v490, 0.5
  %v507 = vmul.f32 %v491, 0.5
  %v508 = vmul.f32 %v492, 0.5
  %v509 = vmul.f32 %v493, 0.5
  %v510 = vmul.f32 %v494, 0.5
  %v511 = vmul.f32 %v495, 0.5
  %v512 = vmul.f32 %v496, 0.5
  %v513 = vmul.f32 %v497, 0.5
  %v514 = vmul.f32 %v498, 0.5
  %v515 = vmul.f32 %v499, 0.5
  %v516 = vmul.f32 %v500, 0.5
  %v517 = vmul.f32 %v501, 0.5
  %v518 = vmul.f32 %v486, 0.044715
  %v519 = vmul.f32 %v487, 0.044715
  %v520 = vmul.f32 %v488, 0.044715
  %v521 = vmul.f32 %v489, 0.044715
  %v522 = vmul.f32 %v490, 0.044715
  %v523 = vmul.f32 %v491, 0.044715
  %v524 = vmul.f32 %v492, 0.044715
  %v525 = vmul.f32 %v493, 0.044715
  %v526 = vmul.f32 %v494, 0.044715
  %v527 = vmul.f32 %v495, 0.044715
  %v528 = vmul.f32 %v496, 0.044715
  %v529 = vmul.f32 %v497, 0.044715
  %v530 = vmul.f32 %v498, 0.044715
  %v531 = vmul.f32 %v499, 0.044715
  %v532 = vmul.f32 %v500, 0.044715
  %v533 = vmul.f32 %v501, 0.044715
  %v534 = vmul.f32 %v518, %v486
  %v535 = vmul.f32 %v519, %v487
  %v536 = vmul.f32 %v520, %v488
  %v537 = vmul.f32 %v521, %v489
  %v538 = vmul.f32 %v522, %v490
  %v539 = vmul.f32 %v523, %v491
  %v540 = vmul.f32 %v524, %v492
  %v541 = vmul.f32 %v525, %v493
  %v542 = vmul.f32 %v526, %v494
  %v543 = vmul.f32 %v527, %v495
  %v544 = vmul.f32 %v528, %v496
  %v545 = vmul.f32 %v529, %v497
  %v546 = vmul.f32 %v530, %v498
  %v547 = vmul.f32 %v531, %v499
  %v548 = vmul.f32 %v532, %v500
  %v549 = vmul.f32 %v533, %v501
  %v550 = vmul.f32 %v534, %v486
  %v551 = vmul.f32 %v535, %v487
  %v552 = vmul.f32 %v536, %v488
  %v553 = vmul.f32 %v537, %v489
  %v554 = vmul.f32 %v538, %v490
  %v555 = vmul.f32 %v539, %v491
  %v556 = vmul.f32 %v540, %v492
  %v557 = vmul.f32 %v541, %v493
  %v558 = vmul.f32 %v542, %v494
  %v559 = vmul.f32 %v543, %v495
  %v560 = vmul.f32 %v544, %v496
  %v561 = vmul.f32 %v545, %v497
  %v562 = vmul.f32 %v546, %v498
  %v563 = vmul.f32 %v547, %v499
  %v564 = vmul.f32 %v548, %v500
  %v565 = vmul.f32 %v549, %v501
  %v566 = vadd.f32 %v486, %v550
  %v567 = vadd.f32 %v487, %v551
  %v568 = vadd.f32 %v488, %v552
  %v569 = vadd.f32 %v489, %v553
  %v570 = vadd.f32 %v490, %v554
  %v571 = vadd.f32 %v491, %v555
  %v572 = vadd.f32 %v492, %v556
  %v573 = vadd.f32 %v493, %v557
  %v574 = vadd.f32 %v494, %v558
  %v575 = vadd.f32 %v495, %v559
  %v576 = vadd.f32 %v496, %v560
  %v577 = vadd.f32 %v497, %v561
  %v578 = vadd.f32 %v498, %v562
  %v579 = vadd.f32 %v499, %v563
  %v580 = vadd.f32 %v500, %v564
  %v581 = vadd.f32 %v501, %v565
  %v582 = vmul.f32 %v566, 0.7978846
  %v583 = vmul.f32 %v567, 0.7978846
  %v584 = vmul.f32 %v568, 0.7978846
  %v585 = vmul.f32 %v569, 0.7978846
  %v586 = vmul.f32 %v570, 0.7978846
  %v587 = vmul.f32 %v571, 0.7978846
  %v588 = vmul.f32 %v572, 0.7978846
  %v589 = vmul.f32 %v573, 0.7978846
  %v590 = vmul.f32 %v574, 0.7978846
  %v591 = vmul.f32 %v575, 0.7978846
  %v592 = vmul.f32 %v576, 0.7978846
  %v593 = vmul.f32 %v577, 0.7978846
  %v594 = vmul.f32 %v578, 0.7978846
  %v595 = vmul.f32 %v579, 0.7978846
  %v596 = vmul.f32 %v580, 0.7978846
  %v597 = vmul.f32 %v581, 0.7978846
  %v598 = vtanh.pop %v582
  %v599 = vtanh.pop %v583
  %v600 = vtanh.pop %v584
  %v601 = vtanh.pop %v585
  %v602 = vtanh.pop %v586
  %v603 = vtanh.pop %v587
  %v604 = vtanh.pop %v588
  %v605 = vtanh.pop %v589
  %v606 = vtanh.pop %v590
  %v607 = vtanh.pop %v591
  %v608 = vtanh.pop %v592
  %v609 = vtanh.pop %v593
  %v610 = vtanh.pop %v594
  %v611 = vtanh.pop %v595
  %v612 = vtanh.pop %v596
  %v613 = vtanh.pop %v597
  %v614 = vadd.f32 %v598, 1.0
  %v615 = vadd.f32 %v599, 1.0
  %v616 = vadd.f32 %v600, 1.0
  %v617 = vadd.f32 %v601, 1.0
  %v618 = vadd.f32 %v602, 1.0
  %v619 = vadd.f32 %v603, 1.0
  %v620 = vadd.f32 %v604, 1.0
  %v621 = vadd.f32 %v605, 1.0
  %v622 = vadd.f32 %v606, 1.0
  %v623 = vadd.f32 %v607, 1.0
  %v624 = vadd.f32 %v608, 1.0
  %v625 = vadd.f32 %v609, 1.0
  %v626 = vadd.f32 %v610, 1.0
  %v627 = vadd.f32 %v611, 1.0
  %v628 = vadd.f32 %v612, 1.0
  %v629 = vadd.f32 %v613, 1.0
  %v630 = vmul.f32 %v502, %v614
  %v631 = vmul.f32 %v503, %v615
  %v632 = vmul.f32 %v504, %v616
  %v633 = vmul.f32 %v505, %v617
  %v634 = vmul.f32 %v506, %v618
  %v635 = vmul.f32 %v507, %v619
  %v636 = vmul.f32 %v508, %v620
  %v637 = vmul.f32 %v509, %v621
  %v638 = vmul.f32 %v510, %v622
  %v639 = vmul.f32 %v511, %v623
  %v640 = vmul.f32 %v512, %v624
  %v641 = vmul.f32 %v513, %v625
  %v642 = vmul.f32 %v514, %v626
  %v643 = vmul.f32 %v515, %v627
  %v644 = vmul.f32 %v516, %v628
  %v645 = vmul.f32 %v517, %v629
  %vm646 = vcmask 523264
  %647 = vst.msk [vmem:[%s5] sm:$0xff] %vm646, %v630
  %648 = vst.msk [vmem:[%s5 + $0x8] sm:$0xff] %vm646, %v631
  %649 = vst.msk [vmem:[%s5 + $0x10] sm:$0xff] %vm646, %v632
  %650 = vst.msk [vmem:[%s5 + $0x18] sm:$0xff] %vm646, %v633
  %651 = vst.msk [vmem:[%s5 + $0x20] sm:$0xff] %vm646, %v634
  %652 = vst.msk [vmem:[%s5 + $0x28] sm:$0xff] %vm646, %v635
  %653 = vst.msk [vmem:[%s5 + $0x30] sm:$0xff] %vm646, %v636
  %654 = vst.msk [vmem:[%s5 + $0x38] sm:$0xff] %vm646, %v637
  %655 = vst.msk [vmem:[%s5 + $0x40] sm:$0xff] %vm646, %v638
  %656 = vst.msk [vmem:[%s5 + $0x48] sm:$0xff] %vm646, %v639
  %657 = vst.msk [vmem:[%s5 + $0x50] sm:$0xff] %vm646, %v640
  %658 = vst.msk [vmem:[%s5 + $0x58] sm:$0xff] %vm646, %v641
  %659 = vst.msk [vmem:[%s5 + $0x60] sm:$0xff] %vm646, %v642
  %660 = vst.msk [vmem:[%s5 + $0x68] sm:$0xff] %vm646, %v643
  %661 = vst.msk [vmem:[%s5 + $0x70] sm:$0xff] %vm646, %v644
  %662 = vst.msk [vmem:[%s5 + $0x78] sm:$0xff] %vm646, %v645
  // Predicated region
  $region22: #{srnet_forward.13} parent=0 // pred_check
    _
  $region23: #{srnet_forward.13} parent=0 // pred_check_branch
    %664 = sbr.rel (0) target = $region25
  $region24: #{srnet_forward.13} parent=0 // pred_region
    _
  $region25: #{srnet_forward.13} parent=0 // pred_fallthru
    _
  // Predicated region
  $region26: #{srnet_forward.13} parent=0 // pred_check
    _
  $region27: #{srnet_forward.13} parent=0 // pred_check_branch
    %666 = sbr.rel (0) target = $region29
  $region28: #{srnet_forward.13} parent=0 // pred_region
    _
  $region29: #{srnet_forward.13} parent=0 // pred_fallthru
    _

// kernel: srnet_forward.15
$region0: #{srnet_forward.15}
  #allocation0 [shape = 'u32[]', space=smem, size = 0x4, offset = 0x4, fixed_abs, tag = 'smem constant byte address 0x4 - core index']
  #allocation1 [shape = 'u32[144,128]{1,0:T(1,128)}', space=vmem, size = 0x12000, scoped, tag = 'internal scratch']
  %s0 = inlined_call_operand.vmem [shape: f32[128,64], index: 0, kind: input, shape index: {}]
  %s1 = inlined_call_operand.vmem [shape: bf16[64,128], index: 1, kind: input, shape index: {}]
  %s2 = inlined_call_operand.vmem [shape: f32[1,128], index: 2, kind: input, shape index: {}]
  %s3 = inlined_call_operand.vmem [shape: f32[1,128], index: 3, kind: input, shape index: {}]
  %s4 = inlined_call_operand.vmem [shape: f32[1,128], index: 4, kind: input, shape index: {}]
  %s5 = inlined_call_operand.vmem [shape: f32[128,128], index: 5, kind: output, shape index: {}]
  %s6 = sld [smem:[#allocation0]]
  $region30: #{srnet_forward.15} parent=0
    _
  %s8 = ssub.s32 1, %s6
  %s9 = scalar_select 0, %s8, %s6
  // Predicated region
  $region2: #{srnet_forward.15} parent=0 // pred_check
    _
  $region3: #{srnet_forward.15} parent=0 // pred_check_branch
    %11 = sbr.rel (0) target = $region5
  $region4: #{srnet_forward.15} parent=0 // pred_region
    _
  $region5: #{srnet_forward.15} parent=0 // pred_fallthru
    _
  // Predicated region
  $region6: #{srnet_forward.15} parent=0 // pred_check
    _
  $region7: #{srnet_forward.15} parent=0 // pred_check_branch
    %13 = sbr.rel (0) target = $region9
  $region8: #{srnet_forward.15} parent=0 // pred_region
    _
  $region9: #{srnet_forward.15} parent=0 // pred_fallthru
    _
  // Predicated region
  $region10: #{srnet_forward.15} parent=0 // pred_check
    _
  $region11: #{srnet_forward.15} parent=0 // pred_check_branch
    %15 = sbr.rel (0) target = $region13
  $region12: #{srnet_forward.15} parent=0 // pred_region
    _
  $region13: #{srnet_forward.15} parent=0 // pred_fallthru
    _
  // Predicated region
  $region14: #{srnet_forward.15} parent=0 // pred_check
    _
  $region15: #{srnet_forward.15} parent=0 // pred_check_branch
    %17 = sbr.rel (0) target = $region17
  $region16: #{srnet_forward.15} parent=0 // pred_region
    _
  $region17: #{srnet_forward.15} parent=0 // pred_fallthru
    _
  // Predicated region
  $region18: #{srnet_forward.15} parent=0 // pred_check
    _
  $region19: #{srnet_forward.15} parent=0 // pred_check_branch
    %19 = sbr.rel (0) target = $region21
  $region20: #{srnet_forward.15} parent=0 // pred_region
    _
  $region21: #{srnet_forward.15} parent=0 // pred_fallthru
    _
  %v21 = vld [vmem:[%s0] sm:$0xff]
  %v22 = vld [vmem:[%s0 + $0x8] sm:$0xff]
  %v23 = vld [vmem:[%s0 + $0x10] sm:$0xff]
  %v24 = vld [vmem:[%s0 + $0x18] sm:$0xff]
  %v25 = vld [vmem:[%s0 + $0x20] sm:$0xff]
  %v26 = vld [vmem:[%s0 + $0x28] sm:$0xff]
  %v27 = vld [vmem:[%s0 + $0x30] sm:$0xff]
  %v28 = vld [vmem:[%s0 + $0x38] sm:$0xff]
  %v29 = vld [vmem:[%s0 + $0x40] sm:$0xff]
  %v30 = vld [vmem:[%s0 + $0x48] sm:$0xff]
  %v31 = vld [vmem:[%s0 + $0x50] sm:$0xff]
  %v32 = vld [vmem:[%s0 + $0x58] sm:$0xff]
  %v33 = vld [vmem:[%s0 + $0x60] sm:$0xff]
  %v34 = vld [vmem:[%s0 + $0x68] sm:$0xff]
  %v35 = vld [vmem:[%s0 + $0x70] sm:$0xff]
  %v36 = vld [vmem:[%s0 + $0x78] sm:$0xff]
  %v37 = vpack.c.bf16 %v22, %v21
  %v38 = vpack.c.bf16 %v24, %v23
  %v39 = vpack.c.bf16 %v26, %v25
  %v40 = vpack.c.bf16 %v28, %v27
  %v41 = vpack.c.bf16 %v30, %v29
  %v42 = vpack.c.bf16 %v32, %v31
  %v43 = vpack.c.bf16 %v34, %v33
  %v44 = vpack.c.bf16 %v36, %v35
  %v45 = vld [vmem:[%s1] sm:$0xf]
  %v46 = vld [vmem:[%s1 + $0x4] sm:$0xf]
  %v47 = vld [vmem:[%s1 + $0x8] sm:$0xf]
  %v48 = vld [vmem:[%s1 + $0xc] sm:$0xf]
  %v49 = vld [vmem:[%s1 + $0x10] sm:$0xf]
  %v50 = vld [vmem:[%s1 + $0x14] sm:$0xf]
  %v51 = vld [vmem:[%s1 + $0x18] sm:$0xf]
  %v52 = vld [vmem:[%s1 + $0x1c] sm:$0xf]
  %v61 = vunpack.c.l.b16 %v45
  %v62 = vunpack.c.l.b16 %v46
  %v63 = vunpack.c.l.b16 %v47
  %v64 = vunpack.c.l.b16 %v48
  %v65 = vunpack.c.l.b16 %v49
  %v66 = vunpack.c.l.b16 %v50
  %v67 = vunpack.c.l.b16 %v51
  %v68 = vunpack.c.l.b16 %v52
  %v69 = vpack.c.b16 %v62, %v61
  %v70 = vpack.c.b16 %v64, %v63
  %v71 = vpack.c.b16 %v66, %v65
  %v72 = vpack.c.b16 %v68, %v67
  %vm77 = vcmask 523264
  %v79 = vsel %vm77, %v37, 0
  %v82 = vsel %vm77, %v38, 0
  %v85 = vsel %vm77, %v39, 0
  %v88 = vsel %vm77, %v40, 0
  %v91 = vsel %vm77, %v41, 0
  %v94 = vsel %vm77, %v42, 0
  %v97 = vsel %vm77, %v43, 0
  %v100 = vsel %vm77, %v44, 0
  %102 = vmatprep.subr.bf16.mxu0 0
  %103 = vmatpush1.bf16.msra.mxu0 0
  %104 = vmatprep.subr.bf16.mxu0 0
  %105 = vmatpush1.bf16.msra.mxu0 0
  %106 = vmatprep.subr.bf16.mxu0 0
  %107 = vmatpush1.bf16.msra.mxu0 0
  %108 = vmatprep.subr.bf16.mxu0 0
  %109 = vmatpush1.bf16.msra.mxu0 0
  %110 = vmatprep.subr.bf16.mxu0 0
  %111 = vmatpush1.bf16.msra.mxu0 %v72
  %112 = vmatprep.subr.bf16.mxu0 0
  %113 = vmatpush1.bf16.msra.mxu0 %v71
  %114 = vmatprep.subr.bf16.mxu0 0
  %115 = vmatpush1.bf16.msra.mxu0 %v70
  %116 = vmatprep.subr.bf16.mxu0 0
  %117 = vmatpush1.bf16.msra.mxu0 %v69
  %118 = vmatprep.subr.bf16.mxu0 0
  %119 = vmatpush2.bf16.msra.mxu0 0
  %120 = vmatprep.subr.bf16.mxu0 0
  %121 = vmatpush2.bf16.msra.mxu0 0
  %122 = vmatprep.subr.bf16.mxu0 0
  %123 = vmatpush2.bf16.msra.mxu0 0
  %124 = vmatprep.subr.bf16.mxu0 0
  %125 = vmatpush2.bf16.msra.mxu0 0
  %126 = vmatprep.subr.bf16.mxu0 0
  %127 = vmatpush2.bf16.msra.mxu0 0
  %128 = vmatprep.subr.bf16.mxu0 0
  %129 = vmatpush2.bf16.msra.mxu0 0
  %130 = vmatprep.subr.bf16.mxu0 0
  %131 = vmatpush2.bf16.msra.mxu0 0
  %132 = vmatprep.subr.bf16.mxu0 0
  %133 = vmatpush2.bf16.msra.mxu0 0
  %134 = vmatprep.mubr.bf16.mxu0 0
  %135 = vmatmul.mubr.bf16.gmra.mxu0 %v79
  %v136 = vpop.f32.mrf.mxu0
  %v137 = vadd.f32 0.0, %v136
  %v138 = vpop.f32.mrf.mxu0
  %v139 = vpop.f32.mrf.mxu0
  %v140 = vadd.f32 0.0, %v139
  %v141 = vpop.f32.mrf.mxu0
  %142 = vmatprep.mubr.bf16.mxu0 0
  %143 = vmatmul.mubr.bf16.gmra.mxu0 %v82
  %v144 = vpop.f32.mrf.mxu0
  %v145 = vadd.f32 0.0, %v144
  %v146 = vpop.f32.mrf.mxu0
  %v147 = vpop.f32.mrf.mxu0
  %v148 = vadd.f32 0.0, %v147
  %v149 = vpop.f32.mrf.mxu0
  %150 = vmatprep.mubr.bf16.mxu0 0
  %151 = vmatmul.mubr.bf16.gmra.mxu0 %v85
  %v152 = vpop.f32.mrf.mxu0
  %v153 = vadd.f32 0.0, %v152
  %v154 = vpop.f32.mrf.mxu0
  %v155 = vpop.f32.mrf.mxu0
  %v156 = vadd.f32 0.0, %v155
  %v157 = vpop.f32.mrf.mxu0
  %158 = vmatprep.mubr.bf16.mxu0 0
  %159 = vmatmul.mubr.bf16.gmra.mxu0 %v88
  %v160 = vpop.f32.mrf.mxu0
  %v161 = vadd.f32 0.0, %v160
  %v162 = vpop.f32.mrf.mxu0
  %v163 = vpop.f32.mrf.mxu0
  %v164 = vadd.f32 0.0, %v163
  %v165 = vpop.f32.mrf.mxu0
  %166 = vmatprep.mubr.bf16.mxu0 0
  %167 = vmatmul.mubr.bf16.gmra.mxu0 %v91
  %v168 = vpop.f32.mrf.mxu0
  %v169 = vadd.f32 0.0, %v168
  %v170 = vpop.f32.mrf.mxu0
  %v171 = vpop.f32.mrf.mxu0
  %v172 = vadd.f32 0.0, %v171
  %v173 = vpop.f32.mrf.mxu0
  %174 = vmatprep.mubr.bf16.mxu0 0
  %175 = vmatmul.mubr.bf16.gmra.mxu0 %v94
  %v176 = vpop.f32.mrf.mxu0
  %v177 = vadd.f32 0.0, %v176
  %v178 = vpop.f32.mrf.mxu0
  %v179 = vpop.f32.mrf.mxu0
  %v180 = vadd.f32 0.0, %v179
  %v181 = vpop.f32.mrf.mxu0
  %182 = vmatprep.mubr.bf16.mxu0 0
  %183 = vmatmul.mubr.bf16.gmra.mxu0 %v97
  %v184 = vpop.f32.mrf.mxu0
  %v185 = vadd.f32 0.0, %v184
  %v186 = vpop.f32.mrf.mxu0
  %v187 = vpop.f32.mrf.mxu0
  %v188 = vadd.f32 0.0, %v187
  %v189 = vpop.f32.mrf.mxu0
  %190 = vmatprep.mubr.bf16.mxu0 0
  %191 = vmatmul.mubr.bf16.gmra.mxu0 %v100
  %v192 = vpop.f32.mrf.mxu0
  %v193 = vadd.f32 0.0, %v192
  %v194 = vpop.f32.mrf.mxu0
  %v195 = vpop.f32.mrf.mxu0
  %v196 = vadd.f32 0.0, %v195
  %v197 = vpop.f32.mrf.mxu0
  %198 = vdwg.mxu0
  %v199 = vld [vmem:[%s2] sm:$0x1]
  %v201 = vlaneseq
  %v202 = vshrl.u32 %v201, 7
  %v203 = vsub.s32 0, %v202
  %v204 = vrot.slane %v199, %v203
  %v206 = vmul.f32 %v137, %v204
  %v207 = vmul.f32 %v140, %v204
  %v208 = vmul.f32 %v145, %v204
  %v209 = vmul.f32 %v148, %v204
  %v210 = vmul.f32 %v153, %v204
  %v211 = vmul.f32 %v156, %v204
  %v212 = vmul.f32 %v161, %v204
  %v213 = vmul.f32 %v164, %v204
  %v214 = vmul.f32 %v169, %v204
  %v215 = vmul.f32 %v172, %v204
  %v216 = vmul.f32 %v177, %v204
  %v217 = vmul.f32 %v180, %v204
  %v218 = vmul.f32 %v185, %v204
  %v219 = vmul.f32 %v188, %v204
  %v220 = vmul.f32 %v193, %v204
  %v221 = vmul.f32 %v196, %v204
  %v222 = vld [vmem:[%s3] sm:$0x1]
  %v224 = vlaneseq
  %v225 = vshrl.u32 %v224, 7
  %v226 = vsub.s32 0, %v225
  %v227 = vrot.slane %v222, %v226
  %v229 = vadd.f32 %v206, %v227
  %v230 = vadd.f32 %v207, %v227
  %v231 = vadd.f32 %v208, %v227
  %v232 = vadd.f32 %v209, %v227
  %v233 = vadd.f32 %v210, %v227
  %v234 = vadd.f32 %v211, %v227
  %v235 = vadd.f32 %v212, %v227
  %v236 = vadd.f32 %v213, %v227
  %v237 = vadd.f32 %v214, %v227
  %v238 = vadd.f32 %v215, %v227
  %v239 = vadd.f32 %v216, %v227
  %v240 = vadd.f32 %v217, %v227
  %v241 = vadd.f32 %v218, %v227
  %v242 = vadd.f32 %v219, %v227
  %v243 = vadd.f32 %v220, %v227
  %v244 = vadd.f32 %v221, %v227
  %v245 = vmul.f32 %v229, 0.5
  %v246 = vmul.f32 %v230, 0.5
  %v247 = vmul.f32 %v231, 0.5
  %v248 = vmul.f32 %v232, 0.5
  %v249 = vmul.f32 %v233, 0.5
  %v250 = vmul.f32 %v234, 0.5
  %v251 = vmul.f32 %v235, 0.5
  %v252 = vmul.f32 %v236, 0.5
  %v253 = vmul.f32 %v237, 0.5
  %v254 = vmul.f32 %v238, 0.5
  %v255 = vmul.f32 %v239, 0.5
  %v256 = vmul.f32 %v240, 0.5
  %v257 = vmul.f32 %v241, 0.5
  %v258 = vmul.f32 %v242, 0.5
  %v259 = vmul.f32 %v243, 0.5
  %v260 = vmul.f32 %v244, 0.5
  %v261 = vmul.f32 %v229, 0.044715
  %v262 = vmul.f32 %v230, 0.044715
  %v263 = vmul.f32 %v231, 0.044715
  %v264 = vmul.f32 %v232, 0.044715
  %v265 = vmul.f32 %v233, 0.044715
  %v266 = vmul.f32 %v234, 0.044715
  %v267 = vmul.f32 %v235, 0.044715
  %v268 = vmul.f32 %v236, 0.044715
  %v269 = vmul.f32 %v237, 0.044715
  %v270 = vmul.f32 %v238, 0.044715
  %v271 = vmul.f32 %v239, 0.044715
  %v272 = vmul.f32 %v240, 0.044715
  %v273 = vmul.f32 %v241, 0.044715
  %v274 = vmul.f32 %v242, 0.044715
  %v275 = vmul.f32 %v243, 0.044715
  %v276 = vmul.f32 %v244, 0.044715
  %v277 = vmul.f32 %v261, %v229
  %v278 = vmul.f32 %v262, %v230
  %v279 = vmul.f32 %v263, %v231
  %v280 = vmul.f32 %v264, %v232
  %v281 = vmul.f32 %v265, %v233
  %v282 = vmul.f32 %v266, %v234
  %v283 = vmul.f32 %v267, %v235
  %v284 = vmul.f32 %v268, %v236
  %v285 = vmul.f32 %v269, %v237
  %v286 = vmul.f32 %v270, %v238
  %v287 = vmul.f32 %v271, %v239
  %v288 = vmul.f32 %v272, %v240
  %v289 = vmul.f32 %v273, %v241
  %v290 = vmul.f32 %v274, %v242
  %v291 = vmul.f32 %v275, %v243
  %v292 = vmul.f32 %v276, %v244
  %v293 = vmul.f32 %v277, %v229
  %v294 = vmul.f32 %v278, %v230
  %v295 = vmul.f32 %v279, %v231
  %v296 = vmul.f32 %v280, %v232
  %v297 = vmul.f32 %v281, %v233
  %v298 = vmul.f32 %v282, %v234
  %v299 = vmul.f32 %v283, %v235
  %v300 = vmul.f32 %v284, %v236
  %v301 = vmul.f32 %v285, %v237
  %v302 = vmul.f32 %v286, %v238
  %v303 = vmul.f32 %v287, %v239
  %v304 = vmul.f32 %v288, %v240
  %v305 = vmul.f32 %v289, %v241
  %v306 = vmul.f32 %v290, %v242
  %v307 = vmul.f32 %v291, %v243
  %v308 = vmul.f32 %v292, %v244
  %v309 = vadd.f32 %v229, %v293
  %v310 = vadd.f32 %v230, %v294
  %v311 = vadd.f32 %v231, %v295
  %v312 = vadd.f32 %v232, %v296
  %v313 = vadd.f32 %v233, %v297
  %v314 = vadd.f32 %v234, %v298
  %v315 = vadd.f32 %v235, %v299
  %v316 = vadd.f32 %v236, %v300
  %v317 = vadd.f32 %v237, %v301
  %v318 = vadd.f32 %v238, %v302
  %v319 = vadd.f32 %v239, %v303
  %v320 = vadd.f32 %v240, %v304
  %v321 = vadd.f32 %v241, %v305
  %v322 = vadd.f32 %v242, %v306
  %v323 = vadd.f32 %v243, %v307
  %v324 = vadd.f32 %v244, %v308
  %v325 = vmul.f32 %v309, 0.7978846
  %v326 = vmul.f32 %v310, 0.7978846
  %v327 = vmul.f32 %v311, 0.7978846
  %v328 = vmul.f32 %v312, 0.7978846
  %v329 = vmul.f32 %v313, 0.7978846
  %v330 = vmul.f32 %v314, 0.7978846
  %v331 = vmul.f32 %v315, 0.7978846
  %v332 = vmul.f32 %v316, 0.7978846
  %v333 = vmul.f32 %v317, 0.7978846
  %v334 = vmul.f32 %v318, 0.7978846
  %v335 = vmul.f32 %v319, 0.7978846
  %v336 = vmul.f32 %v320, 0.7978846
  %v337 = vmul.f32 %v321, 0.7978846
  %v338 = vmul.f32 %v322, 0.7978846
  %v339 = vmul.f32 %v323, 0.7978846
  %v340 = vmul.f32 %v324, 0.7978846
  %v341 = vtanh.pop %v325
  %v342 = vtanh.pop %v326
  %v343 = vtanh.pop %v327
  %v344 = vtanh.pop %v328
  %v345 = vtanh.pop %v329
  %v346 = vtanh.pop %v330
  %v347 = vtanh.pop %v331
  %v348 = vtanh.pop %v332
  %v349 = vtanh.pop %v333
  %v350 = vtanh.pop %v334
  %v351 = vtanh.pop %v335
  %v352 = vtanh.pop %v336
  %v353 = vtanh.pop %v337
  %v354 = vtanh.pop %v338
  %v355 = vtanh.pop %v339
  %v356 = vtanh.pop %v340
  %v357 = vadd.f32 %v341, 1.0
  %v358 = vadd.f32 %v342, 1.0
  %v359 = vadd.f32 %v343, 1.0
  %v360 = vadd.f32 %v344, 1.0
  %v361 = vadd.f32 %v345, 1.0
  %v362 = vadd.f32 %v346, 1.0
  %v363 = vadd.f32 %v347, 1.0
  %v364 = vadd.f32 %v348, 1.0
  %v365 = vadd.f32 %v349, 1.0
  %v366 = vadd.f32 %v350, 1.0
  %v367 = vadd.f32 %v351, 1.0
  %v368 = vadd.f32 %v352, 1.0
  %v369 = vadd.f32 %v353, 1.0
  %v370 = vadd.f32 %v354, 1.0
  %v371 = vadd.f32 %v355, 1.0
  %v372 = vadd.f32 %v356, 1.0
  %v373 = vmul.f32 %v245, %v357
  %v374 = vmul.f32 %v246, %v358
  %v375 = vmul.f32 %v247, %v359
  %v376 = vmul.f32 %v248, %v360
  %v377 = vmul.f32 %v249, %v361
  %v378 = vmul.f32 %v250, %v362
  %v379 = vmul.f32 %v251, %v363
  %v380 = vmul.f32 %v252, %v364
  %v381 = vmul.f32 %v253, %v365
  %v382 = vmul.f32 %v254, %v366
  %v383 = vmul.f32 %v255, %v367
  %v384 = vmul.f32 %v256, %v368
  %v385 = vmul.f32 %v257, %v369
  %v386 = vmul.f32 %v258, %v370
  %v387 = vmul.f32 %v259, %v371
  %v388 = vmul.f32 %v260, %v372
  %389 = vst [vmem:[%s5] sm:$0xff] %v373
  %390 = vst [vmem:[%s5 + $0x8] sm:$0xff] %v374
  %391 = vst [vmem:[%s5 + $0x10] sm:$0xff] %v375
  %392 = vst [vmem:[%s5 + $0x18] sm:$0xff] %v376
  %393 = vst [vmem:[%s5 + $0x20] sm:$0xff] %v377
  %394 = vst [vmem:[%s5 + $0x28] sm:$0xff] %v378
  %395 = vst [vmem:[%s5 + $0x30] sm:$0xff] %v379
  %396 = vst [vmem:[%s5 + $0x38] sm:$0xff] %v380
  %397 = vst [vmem:[%s5 + $0x40] sm:$0xff] %v381
  %398 = vst [vmem:[%s5 + $0x48] sm:$0xff] %v382
  %399 = vst [vmem:[%s5 + $0x50] sm:$0xff] %v383
  %400 = vst [vmem:[%s5 + $0x58] sm:$0xff] %v384
  %401 = vst [vmem:[%s5 + $0x60] sm:$0xff] %v385
  %402 = vst [vmem:[%s5 + $0x68] sm:$0xff] %v386
  %403 = vst [vmem:[%s5 + $0x70] sm:$0xff] %v387
  %404 = vst [vmem:[%s5 + $0x78] sm:$0xff] %v388
  // Predicated region
  $region22: #{srnet_forward.15} parent=0 // pred_check
    _
  $region23: #{srnet_forward.15} parent=0 // pred_check_branch
    %406 = sbr.rel (0) target = $region25
  $region24: #{srnet_forward.15} parent=0 // pred_region
    _
  $region25: #{srnet_forward.15} parent=0 // pred_fallthru
    _
  // Predicated region
  $region26: #{srnet_forward.15} parent=0 // pred_check
    _
  $region27: #{srnet_forward.15} parent=0 // pred_check_branch
    %408 = sbr.rel (0) target = $region29
  $region28: #{srnet_forward.15} parent=0 // pred_region
    _
  $region29: #{srnet_forward.15} parent=0 // pred_fallthru
    _

// kernel: srnet_forward.14
$region0: #{srnet_forward.14}
  #allocation0 [shape = 'u32[]', space=smem, size = 0x4, offset = 0x4, fixed_abs, tag = 'smem constant byte address 0x4 - core index']
  #allocation1 [shape = 'u32[144,128]{1,0:T(1,128)}', space=vmem, size = 0x12000, scoped, tag = 'internal scratch']
  %s0 = inlined_call_operand.vmem [shape: f32[2,10,10,64], index: 0, kind: input, shape index: {}]
  %s1 = inlined_call_operand.vmem [shape: f32[3,3,64], index: 1, kind: input, shape index: {}]
  %s2 = inlined_call_operand.vmem [shape: f32[2,8,8,64], index: 2, kind: output, shape index: {}]
  %s3 = sld [smem:[#allocation0]]
  $region18: #{srnet_forward.14} parent=0
    _
  %s5 = ssub.s32 1, %s3
  %s6 = scalar_select 0, %s5, %s3
  // Predicated region
  $region2: #{srnet_forward.14} parent=0 // pred_check
    _
  $region3: #{srnet_forward.14} parent=0 // pred_check_branch
    %8 = sbr.rel (0) target = $region5
  $region4: #{srnet_forward.14} parent=0 // pred_region
    _
  $region5: #{srnet_forward.14} parent=0 // pred_fallthru
    _
  // Predicated region
  $region6: #{srnet_forward.14} parent=0 // pred_check
    _
  $region7: #{srnet_forward.14} parent=0 // pred_check_branch
    %10 = sbr.rel (0) target = $region9
  $region8: #{srnet_forward.14} parent=0 // pred_region
    _
  $region9: #{srnet_forward.14} parent=0 // pred_fallthru
    _
  %v11 = vld [vmem:[%s0] sm:$0xff]
  %v12 = vld [vmem:[%s0 + $0x8] sm:$0x3]
  %v13 = vld [vmem:[%s0 + $0x10] sm:$0xff]
  %v14 = vld [vmem:[%s0 + $0x18] sm:$0x3]
  %v15 = vld [vmem:[%s0 + $0x20] sm:$0xff]
  %v16 = vld [vmem:[%s0 + $0x28] sm:$0x3]
  %v17 = vld [vmem:[%s0 + $0x30] sm:$0xff]
  %v18 = vld [vmem:[%s0 + $0x38] sm:$0x3]
  %v19 = vld [vmem:[%s0 + $0x40] sm:$0xff]
  %v20 = vld [vmem:[%s0 + $0x48] sm:$0x3]
  %v21 = vld [vmem:[%s0 + $0x50] sm:$0xff]
  %v22 = vld [vmem:[%s0 + $0x58] sm:$0x3]
  %v23 = vld [vmem:[%s0 + $0x60] sm:$0xff]
  %v24 = vld [vmem:[%s0 + $0x68] sm:$0x3]
  %v25 = vld [vmem:[%s0 + $0x70] sm:$0xff]
  %v26 = vld [vmem:[%s0 + $0x78] sm:$0x3]
  %v27 = vld [vmem:[%s0 + $0x80] sm:$0xff]
  %v28 = vld [vmem:[%s0 + $0x88] sm:$0x3]
  %v29 = vld [vmem:[%s0 + $0x90] sm:$0xff]
  %v30 = vld [vmem:[%s0 + $0x98] sm:$0x3]
  %v31 = vld [vmem:[%s0 + $0xa0] sm:$0xff]
  %v32 = vld [vmem:[%s0 + $0xa8] sm:$0x3]
  %v33 = vld [vmem:[%s0 + $0xb0] sm:$0xff]
  %v34 = vld [vmem:[%s0 + $0xb8] sm:$0x3]
  %v35 = vld [vmem:[%s0 + $0xc0] sm:$0xff]
  %v36 = vld [vmem:[%s0 + $0xc8] sm:$0x3]
  %v37 = vld [vmem:[%s0 + $0xd0] sm:$0xff]
  %v38 = vld [vmem:[%s0 + $0xd8] sm:$0x3]
  %v39 = vld [vmem:[%s0 + $0xe0] sm:$0xff]
  %v40 = vld [vmem:[%s0 + $0xe8] sm:$0x3]
  %v41 = vld [vmem:[%s0 + $0xf0] sm:$0xff]
  %v42 = vld [vmem:[%s0 + $0xf8] sm:$0x3]
  %v43 = vld [vmem:[%s0 + $0x100] sm:$0xff]
  %v44 = vld [vmem:[%s0 + $0x108] sm:$0x3]
  %v45 = vld [vmem:[%s0 + $0x110] sm:$0xff]
  %v46 = vld [vmem:[%s0 + $0x118] sm:$0x3]
  %v47 = vld [vmem:[%s0 + $0x120] sm:$0xff]
  %v48 = vld [vmem:[%s0 + $0x128] sm:$0x3]
  %v49 = vld [vmem:[%s0 + $0x130] sm:$0xff]
  %v50 = vld [vmem:[%s0 + $0x138] sm:$0x3]
  %v51 = vld [vmem:[%s1] sm:$0x7]
  %v52 = vld [vmem:[%s1 + $0x4] sm:$0x7]
  %v53 = vld [vmem:[%s1 + $0x8] sm:$0x7]
  %v54 = vlaneseq
  %v55 = vshrl.u32 %v54, 7
  %v56 = vsub.s32 0, %v55
  %v57 = vrot.slane %v51, %v56
  %v58 = vmul.f32 %v11, %v57
  %v59 = vmul.f32 %v13, %v57
  %v60 = vmul.f32 %v15, %v57
  %v61 = vmul.f32 %v17, %v57
  %v62 = vmul.f32 %v19, %v57
  %v63 = vmul.f32 %v21, %v57
  %v64 = vmul.f32 %v23, %v57
  %v65 = vmul.f32 %v25, %v57
  %v66 = vmul.f32 %v31, %v57
  %v67 = vmul.f32 %v33, %v57
  %v68 = vmul.f32 %v35, %v57
  %v69 = vmul.f32 %v37, %v57
  %v70 = vmul.f32 %v39, %v57
  %v71 = vmul.f32 %v41, %v57
  %v72 = vmul.f32 %v43, %v57
  %v73 = vmul.f32 %v45, %v57
  %v90 = vrot.slane %v58, 7
  %v91 = vrot.slane %v59, 7
  %v92 = vrot.slane %v60, 7
  %v93 = vrot.slane %v61, 7
  %v94 = vrot.slane %v62, 7
  %v95 = vrot.slane %v63, 7
  %v96 = vrot.slane %v64, 7
  %v97 = vrot.slane %v65, 7
  %v98 = vrot.slane %v66, 7
  %v99 = vrot.slane %v67, 7
  %v100 = vrot.slane %v68, 7
  %v101 = vrot.slane %v69, 7
  %v102 = vrot.slane %v70, 7
  %v103 = vrot.slane %v71, 7
  %v104 = vrot.slane %v72, 7
  %v105 = vrot.slane %v73, 7
  %v122 = vadd.f32 %v13, %v90
  %v123 = vadd.f32 %v14, %v90
  %v124 = vadd.f32 %v15, %v91
  %v125 = vadd.f32 %v16, %v91
  %v126 = vadd.f32 %v17, %v92
  %v127 = vadd.f32 %v18, %v92
  %v128 = vadd.f32 %v19, %v93
  %v129 = vadd.f32 %v20, %v93
  %v130 = vadd.f32 %v21, %v94
  %v131 = vadd.f32 %v22, %v94
  %v132 = vadd.f32 %v23, %v95
  %v133 = vadd.f32 %v24, %v95
  %v134 = vadd.f32 %v25, %v96
  %v135 = vadd.f32 %v26, %v96
  %v136 = vadd.f32 %v27, %v97
  %v137 = vadd.f32 %v28, %v97
  %v138 = vadd.f32 %v33, %v98
  %v139 = vadd.f32 %v34, %v98
  %v140 = vadd.f32 %v35, %v99
  %v141 = vadd.f32 %v36, %v99
  %v142 = vadd.f32 %v37, %v100
  %v143 = vadd.f32 %v38, %v100
  %v144 = vadd.f32 %v39, %v101
  %v145 = vadd.f32 %v40, %v101
  %v146 = vadd.f32 %v41, %v102
  %v147 = vadd.f32 %v42, %v102
  %v148 = vadd.f32 %v43, %v103
  %v149 = vadd.f32 %v44, %v103
  %v150 = vadd.f32 %v45, %v104
  %v151 = vadd.f32 %v46, %v104
  %v152 = vadd.f32 %v47, %v105
  %v153 = vadd.f32 %v48, %v105
  %v154 = vlaneseq
  %v155 = vshrl.u32 %v154, 7
  %v156 = vsub.s32 1, %v155
  %v157 = vrot.slane %v51, %v156
  %v158 = vmul.f32 %v11, %v157
  %v159 = vmul.f32 %v12, %v157
  %v160 = vmul.f32 %v13, %v157
  %v161 = vmul.f32 %v14, %v157
  %v162 = vmul.f32 %v15, %v157
  %v163 = vmul.f32 %v16, %v157
  %v164 = vmul.f32 %v17, %v157
  %v165 = vmul.f32 %v18, %v157
  %v166 = vmul.f32 %v19, %v157
  %v167 = vmul.f32 %v20, %v157
  %v168 = vmul.f32 %v21, %v157
  %v169 = vmul.f32 %v22, %v157
  %v170 = vmul.f32 %v23, %v157
  %v171 = vmul.f32 %v24, %v157
  %v172 = vmul.f32 %v25, %v157
  %v173 = vmul.f32 %v26, %v157
  %v174 = vmul.f32 %v31, %v157
  %v175 = vmul.f32 %v32, %v157
  %v176 = vmul.f32 %v33, %v157
  %v177 = vmul.f32 %v34, %v157
  %v178 = vmul.f32 %v35, %v157
  %v179 = vmul.f32 %v36, %v157
  %v180 = vmul.f32 %v37, %v157
  %v181 = vmul.f32 %v38, %v157
  %v182 = vmul.f32 %v39, %v157
  %v183 = vmul.f32 %v40, %v157
  %v184 = vmul.f32 %v41, %v157
  %v185 = vmul.f32 %v42, %v157
  %v186 = vmul.f32 %v43, %v157
  %v187 = vmul.f32 %v44, %v157
  %v188 = vmul.f32 %v45, %v157
  %v189 = vmul.f32 %v46, %v157
  %v190 = vadd.f32 %v122, %v158
  %v191 = vadd.f32 %v123, %v159
  %v192 = vadd.f32 %v124, %v160
  %v193 = vadd.f32 %v125, %v161
  %v194 = vadd.f32 %v126, %v162
  %v195 = vadd.f32 %v127, %v163
  %v196 = vadd.f32 %v128, %v164
  %v197 = vadd.f32 %v129, %v165
  %v198 = vadd.f32 %v130, %v166
  %v199 = vadd.f32 %v131, %v167
  %v200 = vadd.f32 %v132, %v168
  %v201 = vadd.f32 %v133, %v169
  %v202 = vadd.f32 %v134, %v170
  %v203 = vadd.f32 %v135, %v171
  %v204 = vadd.f32 %v136, %v172
  %v205 = vadd.f32 %v137, %v173
  %v206 = vadd.f32 %v138, %v174
  %v207 = vadd.f32 %v139, %v175
  %v208 = vadd.f32 %v140, %v176
  %v209 = vadd.f32 %v141, %v177
  %v210 = vadd.f32 %v142, %v178
  %v211 = vadd.f32 %v143, %v179
  %v212 = vadd.f32 %v144, %v180
  %v213 = vadd.f32 %v145, %v181
  %v214 = vadd.f32 %v146, %v182
  %v215 = vadd.f32 %v147, %v183
  %v216 = vadd.f32 %v148, %v184
  %v217 = vadd.f32 %v149, %v185
  %v218 = vadd.f32 %v150, %v186
  %v219 = vadd.f32 %v151, %v187
  %v220 = vadd.f32 %v152, %v188
  %v221 = vadd.f32 %v153, %v189
  %v222 = vlaneseq
  %v223 = vshrl.u32 %v222, 7
  %v224 = vsub.s32 2, %v223
  %v225 = vrot.slane %v51, %v224
  %v226 = vmul.f32 %v11, %v225
  %v227 = vmul.f32 %v12, %v225
  %v228 = vmul.f32 %v13, %v225
  %v229 = vmul.f32 %v14, %v225
  %v230 = vmul.f32 %v15, %v225
  %v231 = vmul.f32 %v16, %v225
  %v232 = vmul.f32 %v17, %v225
  %v233 = vmul.f32 %v18, %v225
  %v234 = vmul.f32 %v19, %v225
  %v235 = vmul.f32 %v20, %v225
  %v236 = vmul.f32 %v21, %v225
  %v237 = vmul.f32 %v22, %v225
  %v238 = vmul.f32 %v23, %v225
  %v239 = vmul.f32 %v24, %v225
  %v240 = vmul.f32 %v25, %v225
  %v241 = vmul.f32 %v26, %v225
  %v242 = vmul.f32 %v31, %v225
  %v243 = vmul.f32 %v32, %v225
  %v244 = vmul.f32 %v33, %v225
  %v245 = vmul.f32 %v34, %v225
  %v246 = vmul.f32 %v35, %v225
  %v247 = vmul.f32 %v36, %v225
  %v248 = vmul.f32 %v37, %v225
  %v249 = vmul.f32 %v38, %v225
  %v250 = vmul.f32 %v39, %v225
  %v251 = vmul.f32 %v40, %v225
  %v252 = vmul.f32 %v41, %v225
  %v253 = vmul.f32 %v42, %v225
  %v254 = vmul.f32 %v43, %v225
  %v255 = vmul.f32 %v44, %v225
  %v256 = vmul.f32 %v45, %v225
  %v257 = vmul.f32 %v46, %v225
  %vm290 = vcmask 1046528
  %v291 = vrot.slane %v226, 1
  %v292 = vrot.slane %v227, 1
  %v293 = vsel %vm290, %v291, %v292
  %v294 = vrot.slane %v228, 1
  %v295 = vrot.slane %v229, 1
  %v296 = vsel %vm290, %v294, %v295
  %v297 = vrot.slane %v230, 1
  %v298 = vrot.slane %v231, 1
  %v299 = vsel %vm290, %v297, %v298
  %v300 = vrot.slane %v232, 1
  %v301 = vrot.slane %v233, 1
  %v302 = vsel %vm290, %v300, %v301
  %v303 = vrot.slane %v234, 1
  %v304 = vrot.slane %v235, 1
  %v305 = vsel %vm290, %v303, %v304
  %v306 = vrot.slane %v236, 1
  %v307 = vrot.slane %v237, 1
  %v308 = vsel %vm290, %v306, %v307
  %v309 = vrot.slane %v238, 1
  %v310 = vrot.slane %v239, 1
  %v311 = vsel %vm290, %v309, %v310
  %v312 = vrot.slane %v240, 1
  %v313 = vrot.slane %v241, 1
  %v314 = vsel %vm290, %v312, %v313
  %v315 = vrot.slane %v242, 1
  %v316 = vrot.slane %v243, 1
  %v317 = vsel %vm290, %v315, %v316
  %v318 = vrot.slane %v244, 1
  %v319 = vrot.slane %v245, 1
  %v320 = vsel %vm290, %v318, %v319
  %v321 = vrot.slane %v246, 1
  %v322 = vrot.slane %v247, 1
  %v323 = vsel %vm290, %v321, %v322
  %v324 = vrot.slane %v248, 1
  %v325 = vrot.slane %v249, 1
  %v326 = vsel %vm290, %v324, %v325
  %v327 = vrot.slane %v250, 1
  %v328 = vrot.slane %v251, 1
  %v329 = vsel %vm290, %v327, %v328
  %v330 = vrot.slane %v252, 1
  %v331 = vrot.slane %v253, 1
  %v332 = vsel %vm290, %v330, %v331
  %v333 = vrot.slane %v254, 1
  %v334 = vrot.slane %v255, 1
  %v335 = vsel %vm290, %v333, %v334
  %v336 = vrot.slane %v256, 1
  %v337 = vrot.slane %v257, 1
  %v338 = vsel %vm290, %v336, %v337
  %v371 = vadd.f32 %v190, %v293
  %v372 = vadd.f32 %v191, %v292
  %v373 = vadd.f32 %v192, %v296
  %v374 = vadd.f32 %v193, %v295
  %v375 = vadd.f32 %v194, %v299
  %v376 = vadd.f32 %v195, %v298
  %v377 = vadd.f32 %v196, %v302
  %v378 = vadd.f32 %v197, %v301
  %v379 = vadd.f32 %v198, %v305
  %v380 = vadd.f32 %v199, %v304
  %v381 = vadd.f32 %v200, %v308
  %v382 = vadd.f32 %v201, %v307
  %v383 = vadd.f32 %v202, %v311
  %v384 = vadd.f32 %v203, %v310
  %v385 = vadd.f32 %v204, %v314
  %v386 = vadd.f32 %v205, %v313
  %v387 = vadd.f32 %v206, %v317
  %v388 = vadd.f32 %v207, %v316
  %v389 = vadd.f32 %v208, %v320
  %v390 = vadd.f32 %v209, %v319
  %v391 = vadd.f32 %v210, %v323
  %v392 = vadd.f32 %v211, %v322
  %v393 = vadd.f32 %v212, %v326
  %v394 = vadd.f32 %v213, %v325
  %v395 = vadd.f32 %v214, %v329
  %v396 = vadd.f32 %v215, %v328
  %v397 = vadd.f32 %v216, %v332
  %v398 = vadd.f32 %v217, %v331
  %v399 = vadd.f32 %v218, %v335
  %v400 = vadd.f32 %v219, %v334
  %v401 = vadd.f32 %v220, %v338
  %v402 = vadd.f32 %v221, %v337
  %v403 = vlaneseq
  %v404 = vshrl.u32 %v403, 7
  %v405 = vsub.s32 0, %v404
  %v406 = vrot.slane %v52, %v405
  %v407 = vmul.f32 %v13, %v406
  %v408 = vmul.f32 %v15, %v406
  %v409 = vmul.f32 %v17, %v406
  %v410 = vmul.f32 %v19, %v406
  %v411 = vmul.f32 %v21, %v406
  %v412 = vmul.f32 %v23, %v406
  %v413 = vmul.f32 %v25, %v406
  %v414 = vmul.f32 %v27, %v406
  %v415 = vmul.f32 %v33, %v406
  %v416 = vmul.f32 %v35, %v406
  %v417 = vmul.f32 %v37, %v406
  %v418 = vmul.f32 %v39, %v406
  %v419 = vmul.f32 %v41, %v406
  %v420 = vmul.f32 %v43, %v406
  %v421 = vmul.f32 %v45, %v406
  %v422 = vmul.f32 %v47, %v406
  %v439 = vrot.slane %v407, 7
  %v440 = vrot.slane %v408, 7
  %v441 = vrot.slane %v409, 7
  %v442 = vrot.slane %v410, 7
  %v443 = vrot.slane %v411, 7
  %v444 = vrot.slane %v412, 7
  %v445 = vrot.slane %v413, 7
  %v446 = vrot.slane %v414, 7
  %v447 = vrot.slane %v415, 7
  %v448 = vrot.slane %v416, 7
  %v449 = vrot.slane %v417, 7
  %v450 = vrot.slane %v418, 7
  %v451 = vrot.slane %v419, 7
  %v452 = vrot.slane %v420, 7
  %v453 = vrot.slane %v421, 7
  %v454 = vrot.slane %v422, 7
  %v471 = vadd.f32 %v371, %v439
  %v472 = vadd.f32 %v372, %v439
  %v473 = vadd.f32 %v373, %v440
  %v474 = vadd.f32 %v374, %v440
  %v475 = vadd.f32 %v375, %v441
  %v476 = vadd.f32 %v376, %v441
  %v477 = vadd.f32 %v377, %v442
  %v478 = vadd.f32 %v378, %v442
  %v479 = vadd.f32 %v379, %v443
  %v480 = vadd.f32 %v380, %v443
  %v481 = vadd.f32 %v381, %v444
  %v482 = vadd.f32 %v382, %v444
  %v483 = vadd.f32 %v383, %v445
  %v484 = vadd.f32 %v384, %v445
  %v485 = vadd.f32 %v385, %v446
  %v486 = vadd.f32 %v386, %v446
  %v487 = vadd.f32 %v387, %v447
  %v488 = vadd.f32 %v388, %v447
  %v489 = vadd.f32 %v389, %v448
  %v490 = vadd.f32 %v390, %v448
  %v491 = vadd.f32 %v391, %v449
  %v492 = vadd.f32 %v392, %v449
  %v493 = vadd.f32 %v393, %v450
  %v494 = vadd.f32 %v394, %v450
  %v495 = vadd.f32 %v395, %v451
  %v496 = vadd.f32 %v396, %v451
  %v497 = vadd.f32 %v397, %v452
  %v498 = vadd.f32 %v398, %v452
  %v499 = vadd.f32 %v399, %v453
  %v500 = vadd.f32 %v400, %v453
  %v501 = vadd.f32 %v401, %v454
  %v502 = vadd.f32 %v402, %v454
  %v503 = vlaneseq
  %v504 = vshrl.u32 %v503, 7
  %v505 = vsub.s32 1, %v504
  %v506 = vrot.slane %v52, %v505
  %v507 = vmul.f32 %v13, %v506
  %v508 = vmul.f32 %v14, %v506
  %v509 = vmul.f32 %v15, %v506
  %v510 = vmul.f32 %v16, %v506
  %v511 = vmul.f32 %v17, %v506
  %v512 = vmul.f32 %v18, %v506
  %v513 = vmul.f32 %v19, %v506
  %v514 = vmul.f32 %v20, %v506
  %v515 = vmul.f32 %v21, %v506
  %v516 = vmul.f32 %v22, %v506
  %v517 = vmul.f32 %v23, %v506
  %v518 = vmul.f32 %v24, %v506
  %v519 = vmul.f32 %v25, %v506
  %v520 = vmul.f32 %v26, %v506
  %v521 = vmul.f32 %v27, %v506
  %v522 = vmul.f32 %v28, %v506
  %v523 = vmul.f32 %v33, %v506
  %v524 = vmul.f32 %v34, %v506
  %v525 = vmul.f32 %v35, %v506
  %v526 = vmul.f32 %v36, %v506
  %v527 = vmul.f32 %v37, %v506
  %v528 = vmul.f32 %v38, %v506
  %v529 = vmul.f32 %v39, %v506
  %v530 = vmul.f32 %v40, %v506
  %v531 = vmul.f32 %v41, %v506
  %v532 = vmul.f32 %v42, %v506
  %v533 = vmul.f32 %v43, %v506
  %v534 = vmul.f32 %v44, %v506
  %v535 = vmul.f32 %v45, %v506
  %v536 = vmul.f32 %v46, %v506
  %v537 = vmul.f32 %v47, %v506
  %v538 = vmul.f32 %v48, %v506
  %v539 = vadd.f32 %v471, %v507
  %v540 = vadd.f32 %v472, %v508
  %v541 = vadd.f32 %v473, %v509
  %v542 = vadd.f32 %v474, %v510
  %v543 = vadd.f32 %v475, %v511
  %v544 = vadd.f32 %v476, %v512
  %v545 = vadd.f32 %v477, %v513
  %v546 = vadd.f32 %v478, %v514
  %v547 = vadd.f32 %v479, %v515
  %v548 = vadd.f32 %v480, %v516
  %v549 = vadd.f32 %v481, %v517
  %v550 = vadd.f32 %v482, %v518
  %v551 = vadd.f32 %v483, %v519
  %v552 = vadd.f32 %v484, %v520
  %v553 = vadd.f32 %v485, %v521
  %v554 = vadd.f32 %v486, %v522
  %v555 = vadd.f32 %v487, %v523
  %v556 = vadd.f32 %v488, %v524
  %v557 = vadd.f32 %v489, %v525
  %v558 = vadd.f32 %v490, %v526
  %v559 = vadd.f32 %v491, %v527
  %v560 = vadd.f32 %v492, %v528
  %v561 = vadd.f32 %v493, %v529
  %v562 = vadd.f32 %v494, %v530
  %v563 = vadd.f32 %v495, %v531
  %v564 = vadd.f32 %v496, %v532
  %v565 = vadd.f32 %v497, %v533
  %v566 = vadd.f32 %v498, %v534
  %v567 = vadd.f32 %v499, %v535
  %v568 = vadd.f32 %v500, %v536
  %v569 = vadd.f32 %v501, %v537
  %v570 = vadd.f32 %v502, %v538
  %v571 = vlaneseq
  %v572 = vshrl.u32 %v571, 7
  %v573 = vsub.s32 2, %v572
  %v574 = vrot.slane %v52, %v573
  %v575 = vmul.f32 %v13, %v574
  %v576 = vmul.f32 %v14, %v574
  %v577 = vmul.f32 %v15, %v574
  %v578 = vmul.f32 %v16, %v574
  %v579 = vmul.f32 %v17, %v574
  %v580 = vmul.f32 %v18, %v574
  %v581 = vmul.f32 %v19, %v574
  %v582 = vmul.f32 %v20, %v574
  %v583 = vmul.f32 %v21, %v574
  %v584 = vmul.f32 %v22, %v574
  %v585 = vmul.f32 %v23, %v574
  %v586 = vmul.f32 %v24, %v574
  %v587 = vmul.f32 %v25, %v574
  %v588 = vmul.f32 %v26, %v574
  %v589 = vmul.f32 %v27, %v574
  %v590 = vmul.f32 %v28, %v574
  %v591 = vmul.f32 %v33, %v574
  %v592 = vmul.f32 %v34, %v574
  %v593 = vmul.f32 %v35, %v574
  %v594 = vmul.f32 %v36, %v574
  %v595 = vmul.f32 %v37, %v574
  %v596 = vmul.f32 %v38, %v574
  %v597 = vmul.f32 %v39, %v574
  %v598 = vmul.f32 %v40, %v574
  %v599 = vmul.f32 %v41, %v574
  %v600 = vmul.f32 %v42, %v574
  %v601 = vmul.f32 %v43, %v574
  %v602 = vmul.f32 %v44, %v574
  %v603 = vmul.f32 %v45, %v574
  %v604 = vmul.f32 %v46, %v574
  %v605 = vmul.f32 %v47, %v574
  %v606 = vmul.f32 %v48, %v574
  %v639 = vrot.slane %v575, 1
  %v640 = vrot.slane %v576, 1
  %v641 = vsel %vm290, %v639, %v640
  %v642 = vrot.slane %v577, 1
  %v643 = vrot.slane %v578, 1
  %v644 = vsel %vm290, %v642, %v643
  %v645 = vrot.slane %v579, 1
  %v646 = vrot.slane %v580, 1
  %v647 = vsel %vm290, %v645, %v646
  %v648 = vrot.slane %v581, 1
  %v649 = vrot.slane %v582, 1
  %v650 = vsel %vm290, %v648, %v649
  %v651 = vrot.slane %v583, 1
  %v652 = vrot.slane %v584, 1
  %v653 = vsel %vm290, %v651, %v652
  %v654 = vrot.slane %v585, 1
  %v655 = vrot.slane %v586, 1
  %v656 = vsel %vm290, %v654, %v655
  %v657 = vrot.slane %v587, 1
  %v658 = vrot.slane %v588, 1
  %v659 = vsel %vm290, %v657, %v658
  %v660 = vrot.slane %v589, 1
  %v661 = vrot.slane %v590, 1
  %v662 = vsel %vm290, %v660, %v661
  %v663 = vrot.slane %v591, 1
  %v664 = vrot.slane %v592, 1
  %v665 = vsel %vm290, %v663, %v664
  %v666 = vrot.slane %v593, 1
  %v667 = vrot.slane %v594, 1
  %v668 = vsel %vm290, %v666, %v667
  %v669 = vrot.slane %v595, 1
  %v670 = vrot.slane %v596, 1
  %v671 = vsel %vm290, %v669, %v670
  %v672 = vrot.slane %v597, 1
  %v673 = vrot.slane %v598, 1
  %v674 = vsel %vm290, %v672, %v673
  %v675 = vrot.slane %v599, 1
  %v676 = vrot.slane %v600, 1
  %v677 = vsel %vm290, %v675, %v676
  %v678 = vrot.slane %v601, 1
  %v679 = vrot.slane %v602, 1
  %v680 = vsel %vm290, %v678, %v679
  %v681 = vrot.slane %v603, 1
  %v682 = vrot.slane %v604, 1
  %v683 = vsel %vm290, %v681, %v682
  %v684 = vrot.slane %v605, 1
  %v685 = vrot.slane %v606, 1
  %v686 = vsel %vm290, %v684, %v685
  %v719 = vadd.f32 %v539, %v641
  %v720 = vadd.f32 %v540, %v640
  %v721 = vadd.f32 %v541, %v644
  %v722 = vadd.f32 %v542, %v643
  %v723 = vadd.f32 %v543, %v647
  %v724 = vadd.f32 %v544, %v646
  %v725 = vadd.f32 %v545, %v650
  %v726 = vadd.f32 %v546, %v649
  %v727 = vadd.f32 %v547, %v653
  %v728 = vadd.f32 %v548, %v652
  %v729 = vadd.f32 %v549, %v656
  %v730 = vadd.f32 %v550, %v655
  %v731 = vadd.f32 %v551, %v659
  %v732 = vadd.f32 %v552, %v658
  %v733 = vadd.f32 %v553, %v662
  %v734 = vadd.f32 %v554, %v661
  %v735 = vadd.f32 %v555, %v665
  %v736 = vadd.f32 %v556, %v664
  %v737 = vadd.f32 %v557, %v668
  %v738 = vadd.f32 %v558, %v667
  %v739 = vadd.f32 %v559, %v671
  %v740 = vadd.f32 %v560, %v670
  %v741 = vadd.f32 %v561, %v674
  %v742 = vadd.f32 %v562, %v673
  %v743 = vadd.f32 %v563, %v677
  %v744 = vadd.f32 %v564, %v676
  %v745 = vadd.f32 %v565, %v680
  %v746 = vadd.f32 %v566, %v679
  %v747 = vadd.f32 %v567, %v683
  %v748 = vadd.f32 %v568, %v682
  %v749 = vadd.f32 %v569, %v686
  %v750 = vadd.f32 %v570, %v685
  %v751 = vlaneseq
  %v752 = vshrl.u32 %v751, 7
  %v753 = vsub.s32 0, %v752
  %v754 = vrot.slane %v53, %v753
  %v755 = vmul.f32 %v15, %v754
  %v756 = vmul.f32 %v17, %v754
  %v757 = vmul.f32 %v19, %v754
  %v758 = vmul.f32 %v21, %v754
  %v759 = vmul.f32 %v23, %v754
  %v760 = vmul.f32 %v25, %v754
  %v761 = vmul.f32 %v27, %v754
  %v762 = vmul.f32 %v29, %v754
  %v763 = vmul.f32 %v35, %v754
  %v764 = vmul.f32 %v37, %v754
  %v765 = vmul.f32 %v39, %v754
  %v766 = vmul.f32 %v41, %v754
  %v767 = vmul.f32 %v43, %v754
  %v768 = vmul.f32 %v45, %v754
  %v769 = vmul.f32 %v47, %v754
  %v770 = vmul.f32 %v49, %v754
  %v787 = vrot.slane %v755, 7
  %v788 = vrot.slane %v756, 7
  %v789 = vrot.slane %v757, 7
  %v790 = vrot.slane %v758, 7
  %v791 = vrot.slane %v759, 7
  %v792 = vrot.slane %v760, 7
  %v793 = vrot.slane %v761, 7
  %v794 = vrot.slane %v762, 7
  %v795 = vrot.slane %v763, 7
  %v796 = vrot.slane %v764, 7
  %v797 = vrot.slane %v765, 7
  %v798 = vrot.slane %v766, 7
  %v799 = vrot.slane %v767, 7
  %v800 = vrot.slane %v768, 7
  %v801 = vrot.slane %v769, 7
  %v802 = vrot.slane %v770, 7
  %v819 = vadd.f32 %v719, %v787
  %v820 = vadd.f32 %v720, %v787
  %v821 = vadd.f32 %v721, %v788
  %v822 = vadd.f32 %v722, %v788
  %v823 = vadd.f32 %v723, %v789
  %v824 = vadd.f32 %v724, %v789
  %v825 = vadd.f32 %v725, %v790
  %v826 = vadd.f32 %v726, %v790
  %v827 = vadd.f32 %v727, %v791
  %v828 = vadd.f32 %v728, %v791
  %v829 = vadd.f32 %v729, %v792
  %v830 = vadd.f32 %v730, %v792
  %v831 = vadd.f32 %v731, %v793
  %v832 = vadd.f32 %v732, %v793
  %v833 = vadd.f32 %v733, %v794
  %v834 = vadd.f32 %v734, %v794
  %v835 = vadd.f32 %v735, %v795
  %v836 = vadd.f32 %v736, %v795
  %v837 = vadd.f32 %v737, %v796
  %v838 = vadd.f32 %v738, %v796
  %v839 = vadd.f32 %v739, %v797
  %v840 = vadd.f32 %v740, %v797
  %v841 = vadd.f32 %v741, %v798
  %v842 = vadd.f32 %v742, %v798
  %v843 = vadd.f32 %v743, %v799
  %v844 = vadd.f32 %v744, %v799
  %v845 = vadd.f32 %v745, %v800
  %v846 = vadd.f32 %v746, %v800
  %v847 = vadd.f32 %v747, %v801
  %v848 = vadd.f32 %v748, %v801
  %v849 = vadd.f32 %v749, %v802
  %v850 = vadd.f32 %v750, %v802
  %v851 = vlaneseq
  %v852 = vshrl.u32 %v851, 7
  %v853 = vsub.s32 1, %v852
  %v854 = vrot.slane %v53, %v853
  %v855 = vmul.f32 %v15, %v854
  %v856 = vmul.f32 %v16, %v854
  %v857 = vmul.f32 %v17, %v854
  %v858 = vmul.f32 %v18, %v854
  %v859 = vmul.f32 %v19, %v854
  %v860 = vmul.f32 %v20, %v854
  %v861 = vmul.f32 %v21, %v854
  %v862 = vmul.f32 %v22, %v854
  %v863 = vmul.f32 %v23, %v854
  %v864 = vmul.f32 %v24, %v854
  %v865 = vmul.f32 %v25, %v854
  %v866 = vmul.f32 %v26, %v854
  %v867 = vmul.f32 %v27, %v854
  %v868 = vmul.f32 %v28, %v854
  %v869 = vmul.f32 %v29, %v854
  %v870 = vmul.f32 %v30, %v854
  %v871 = vmul.f32 %v35, %v854
  %v872 = vmul.f32 %v36, %v854
  %v873 = vmul.f32 %v37, %v854
  %v874 = vmul.f32 %v38, %v854
  %v875 = vmul.f32 %v39, %v854
  %v876 = vmul.f32 %v40, %v854
  %v877 = vmul.f32 %v41, %v854
  %v878 = vmul.f32 %v42, %v854
  %v879 = vmul.f32 %v43, %v854
  %v880 = vmul.f32 %v44, %v854
  %v881 = vmul.f32 %v45, %v854
  %v882 = vmul.f32 %v46, %v854
  %v883 = vmul.f32 %v47, %v854
  %v884 = vmul.f32 %v48, %v854
  %v885 = vmul.f32 %v49, %v854
  %v886 = vmul.f32 %v50, %v854
  %v887 = vadd.f32 %v819, %v855
  %v888 = vadd.f32 %v820, %v856
  %v889 = vadd.f32 %v821, %v857
  %v890 = vadd.f32 %v822, %v858
  %v891 = vadd.f32 %v823, %v859
  %v892 = vadd.f32 %v824, %v860
  %v893 = vadd.f32 %v825, %v861
  %v894 = vadd.f32 %v826, %v862
  %v895 = vadd.f32 %v827, %v863
  %v896 = vadd.f32 %v828, %v864
  %v897 = vadd.f32 %v829, %v865
  %v898 = vadd.f32 %v830, %v866
  %v899 = vadd.f32 %v831, %v867
  %v900 = vadd.f32 %v832, %v868
  %v901 = vadd.f32 %v833, %v869
  %v902 = vadd.f32 %v834, %v870
  %v903 = vadd.f32 %v835, %v871
  %v904 = vadd.f32 %v836, %v872
  %v905 = vadd.f32 %v837, %v873
  %v906 = vadd.f32 %v838, %v874
  %v907 = vadd.f32 %v839, %v875
  %v908 = vadd.f32 %v840, %v876
  %v909 = vadd.f32 %v841, %v877
  %v910 = vadd.f32 %v842, %v878
  %v911 = vadd.f32 %v843, %v879
  %v912 = vadd.f32 %v844, %v880
  %v913 = vadd.f32 %v845, %v881
  %v914 = vadd.f32 %v846, %v882
  %v915 = vadd.f32 %v847, %v883
  %v916 = vadd.f32 %v848, %v884
  %v917 = vadd.f32 %v849, %v885
  %v918 = vadd.f32 %v850, %v886
  %v919 = vlaneseq
  %v920 = vshrl.u32 %v919, 7
  %v921 = vsub.s32 2, %v920
  %v922 = vrot.slane %v53, %v921
  %v923 = vmul.f32 %v15, %v922
  %v924 = vmul.f32 %v16, %v922
  %v925 = vmul.f32 %v17, %v922
  %v926 = vmul.f32 %v18, %v922
  %v927 = vmul.f32 %v19, %v922
  %v928 = vmul.f32 %v20, %v922
  %v929 = vmul.f32 %v21, %v922
  %v930 = vmul.f32 %v22, %v922
  %v931 = vmul.f32 %v23, %v922
  %v932 = vmul.f32 %v24, %v922
  %v933 = vmul.f32 %v25, %v922
  %v934 = vmul.f32 %v26, %v922
  %v935 = vmul.f32 %v27, %v922
  %v936 = vmul.f32 %v28, %v922
  %v937 = vmul.f32 %v29, %v922
  %v938 = vmul.f32 %v30, %v922
  %v939 = vmul.f32 %v35, %v922
  %v940 = vmul.f32 %v36, %v922
  %v941 = vmul.f32 %v37, %v922
  %v942 = vmul.f32 %v38, %v922
  %v943 = vmul.f32 %v39, %v922
  %v944 = vmul.f32 %v40, %v922
  %v945 = vmul.f32 %v41, %v922
  %v946 = vmul.f32 %v42, %v922
  %v947 = vmul.f32 %v43, %v922
  %v948 = vmul.f32 %v44, %v922
  %v949 = vmul.f32 %v45, %v922
  %v950 = vmul.f32 %v46, %v922
  %v951 = vmul.f32 %v47, %v922
  %v952 = vmul.f32 %v48, %v922
  %v953 = vmul.f32 %v49, %v922
  %v954 = vmul.f32 %v50, %v922
  %v987 = vrot.slane %v923, 1
  %v988 = vrot.slane %v924, 1
  %v989 = vsel %vm290, %v987, %v988
  %v990 = vrot.slane %v925, 1
  %v991 = vrot.slane %v926, 1
  %v992 = vsel %vm290, %v990, %v991
  %v993 = vrot.slane %v927, 1
  %v994 = vrot.slane %v928, 1
  %v995 = vsel %vm290, %v993, %v994
  %v996 = vrot.slane %v929, 1
  %v997 = vrot.slane %v930, 1
  %v998 = vsel %vm290, %v996, %v997
  %v999 = vrot.slane %v931, 1
  %v1000 = vrot.slane %v932, 1
  %v1001 = vsel %vm290, %v999, %v1000
  %v1002 = vrot.slane %v933, 1
  %v1003 = vrot.slane %v934, 1
  %v1004 = vsel %vm290, %v1002, %v1003
  %v1005 = vrot.slane %v935, 1
  %v1006 = vrot.slane %v936, 1
  %v1007 = vsel %vm290, %v1005, %v1006
  %v1008 = vrot.slane %v937, 1
  %v1009 = vrot.slane %v938, 1
  %v1010 = vsel %vm290, %v1008, %v1009
  %v1011 = vrot.slane %v939, 1
  %v1012 = vrot.slane %v940, 1
  %v1013 = vsel %vm290, %v1011, %v1012
  %v1014 = vrot.slane %v941, 1
  %v1015 = vrot.slane %v942, 1
  %v1016 = vsel %vm290, %v1014, %v1015
  %v1017 = vrot.slane %v943, 1
  %v1018 = vrot.slane %v944, 1
  %v1019 = vsel %vm290, %v1017, %v1018
  %v1020 = vrot.slane %v945, 1
  %v1021 = vrot.slane %v946, 1
  %v1022 = vsel %vm290, %v1020, %v1021
  %v1023 = vrot.slane %v947, 1
  %v1024 = vrot.slane %v948, 1
  %v1025 = vsel %vm290, %v1023, %v1024
  %v1026 = vrot.slane %v949, 1
  %v1027 = vrot.slane %v950, 1
  %v1028 = vsel %vm290, %v1026, %v1027
  %v1029 = vrot.slane %v951, 1
  %v1030 = vrot.slane %v952, 1
  %v1031 = vsel %vm290, %v1029, %v1030
  %v1032 = vrot.slane %v953, 1
  %v1033 = vrot.slane %v954, 1
  %v1034 = vsel %vm290, %v1032, %v1033
  %v1067 = vadd.f32 %v887, %v989
  %v1068 = vadd.f32 %v888, %v988
  %v1069 = vadd.f32 %v889, %v992
  %v1070 = vadd.f32 %v890, %v991
  %v1071 = vadd.f32 %v891, %v995
  %v1072 = vadd.f32 %v892, %v994
  %v1073 = vadd.f32 %v893, %v998
  %v1074 = vadd.f32 %v894, %v997
  %v1075 = vadd.f32 %v895, %v1001
  %v1076 = vadd.f32 %v896, %v1000
  %v1077 = vadd.f32 %v897, %v1004
  %v1078 = vadd.f32 %v898, %v1003
  %v1079 = vadd.f32 %v899, %v1007
  %v1080 = vadd.f32 %v900, %v1006
  %v1081 = vadd.f32 %v901, %v1010
  %v1082 = vadd.f32 %v902, %v1009
  %v1083 = vadd.f32 %v903, %v1013
  %v1084 = vadd.f32 %v904, %v1012
  %v1085 = vadd.f32 %v905, %v1016
  %v1086 = vadd.f32 %v906, %v1015
  %v1087 = vadd.f32 %v907, %v1019
  %v1088 = vadd.f32 %v908, %v1018
  %v1089 = vadd.f32 %v909, %v1022
  %v1090 = vadd.f32 %v910, %v1021
  %v1091 = vadd.f32 %v911, %v1025
  %v1092 = vadd.f32 %v912, %v1024
  %v1093 = vadd.f32 %v913, %v1028
  %v1094 = vadd.f32 %v914, %v1027
  %v1095 = vadd.f32 %v915, %v1031
  %v1096 = vadd.f32 %v916, %v1030
  %v1097 = vadd.f32 %v917, %v1034
  %v1098 = vadd.f32 %v918, %v1033
  %vm1099 = vcmask 523265
  %1100 = vst.msk [vmem:[%s2 - $0x1] sm:$0xfe] %vm1099, %v1067
  %vm1101 = vcmask 516096
  %1102 = vst.msk [vmem:[%s2 + $0x7] sm:$0x1] %vm1101, %v1068
  %1103 = vst.msk [vmem:[%s2 + $0x7] sm:$0xfe] %vm1099, %v1069
  %1104 = vst.msk [vmem:[%s2 + $0xf] sm:$0x1] %vm1101, %v1070
  %1105 = vst.msk [vmem:[%s2 + $0xf] sm:$0xfe] %vm1099, %v1071
  %1106 = vst.msk [vmem:[%s2 + $0x17] sm:$0x1] %vm1101, %v1072
  %1107 = vst.msk [vmem:[%s2 + $0x17] sm:$0xfe] %vm1099, %v1073
  %1108 = vst.msk [vmem:[%s2 + $0x1f] sm:$0x1] %vm1101, %v1074
  %1109 = vst.msk [vmem:[%s2 + $0x1f] sm:$0xfe] %vm1099, %v1075
  %1110 = vst.msk [vmem:[%s2 + $0x27] sm:$0x1] %vm1101, %v1076
  %1111 = vst.msk [vmem:[%s2 + $0x27] sm:$0xfe] %vm1099, %v1077
  %1112 = vst.msk [vmem:[%s2 + $0x2f] sm:$0x1] %vm1101, %v1078
  %1113 = vst.msk [vmem:[%s2 + $0x2f] sm:$0xfe] %vm1099, %v1079
  %1114 = vst.msk [vmem:[%s2 + $0x37] sm:$0x1] %vm1101, %v1080
  %1115 = vst.msk [vmem:[%s2 + $0x37] sm:$0xfe] %vm1099, %v1081
  %1116 = vst.msk [vmem:[%s2 + $0x3f] sm:$0x1] %vm1101, %v1082
  %1117 = vst.msk [vmem:[%s2 + $0x3f] sm:$0xfe] %vm1099, %v1083
  %1118 = vst.msk [vmem:[%s2 + $0x47] sm:$0x1] %vm1101, %v1084
  %1119 = vst.msk [vmem:[%s2 + $0x47] sm:$0xfe] %vm1099, %v1085
  %1120 = vst.msk [vmem:[%s2 + $0x4f] sm:$0x1] %vm1101, %v1086
  %1121 = vst.msk [vmem:[%s2 + $0x4f] sm:$0xfe] %vm1099, %v1087
  %1122 = vst.msk [vmem:[%s2 + $0x57] sm:$0x1] %vm1101, %v1088
  %1123 = vst.msk [vmem:[%s2 + $0x57] sm:$0xfe] %vm1099, %v1089
  %1124 = vst.msk [vmem:[%s2 + $0x5f] sm:$0x1] %vm1101, %v1090
  %1125 = vst.msk [vmem:[%s2 + $0x5f] sm:$0xfe] %vm1099, %v1091
  %1126 = vst.msk [vmem:[%s2 + $0x67] sm:$0x1] %vm1101, %v1092
  %1127 = vst.msk [vmem:[%s2 + $0x67] sm:$0xfe] %vm1099, %v1093
  %1128 = vst.msk [vmem:[%s2 + $0x6f] sm:$0x1] %vm1101, %v1094
  %1129 = vst.msk [vmem:[%s2 + $0x6f] sm:$0xfe] %vm1099, %v1095
  %1130 = vst.msk [vmem:[%s2 + $0x77] sm:$0x1] %vm1101, %v1096
  %1131 = vst.msk [vmem:[%s2 + $0x77] sm:$0xfe] %vm1099, %v1097
  %1132 = vst.msk [vmem:[%s2 + $0x7f] sm:$0x1] %vm1101, %v1098
  // Predicated region
  $region10: #{srnet_forward.14} parent=0 // pred_check
    _
  $region11: #{srnet_forward.14} parent=0 // pred_check_branch
    %1134 = sbr.rel (0) target = $region13
  $region12: #{srnet_forward.14} parent=0 // pred_region
    _
  $region13: #{srnet_forward.14} parent=0 // pred_fallthru
    _
  // Predicated region
  $region14: #{srnet_forward.14} parent=0 // pred_check
    _
  $region15: #{srnet_forward.14} parent=0 // pred_check_branch
    %1136 = sbr.rel (0) target = $region17
  $region16: #{srnet_forward.14} parent=0 // pred_region
    _
  $region17: #{srnet_forward.14} parent=0 // pred_fallthru
    _

// kernel: srnet_forward.16
$region0: #{srnet_forward.16}
  #allocation0 [shape = 'u32[]', space=smem, size = 0x4, offset = 0x4, fixed_abs, tag = 'smem constant byte address 0x4 - core index']
  #allocation1 [shape = 'u32[144,128]{1,0:T(1,128)}', space=vmem, size = 0x12000, scoped, tag = 'internal scratch']
  %s0 = inlined_call_operand.vmem [shape: f32[128,128], index: 0, kind: input, shape index: {}]
  %s1 = inlined_call_operand.vmem [shape: bf16[128,64], index: 1, kind: input, shape index: {}]
  %s2 = inlined_call_operand.vmem [shape: f32[1,64], index: 2, kind: input, shape index: {}]
  %s3 = inlined_call_operand.vmem [shape: f32[1,64], index: 3, kind: input, shape index: {}]
  %s4 = inlined_call_operand.vmem [shape: f32[1,64], index: 4, kind: input, shape index: {}]
  %s5 = inlined_call_operand.vmem [shape: f32[128,64], index: 5, kind: output, shape index: {}]
  %s6 = sld [smem:[#allocation0]]
  $region30: #{srnet_forward.16} parent=0
    _
  %s8 = ssub.s32 1, %s6
  %s9 = scalar_select 0, %s8, %s6
  // Predicated region
  $region2: #{srnet_forward.16} parent=0 // pred_check
    _
  $region3: #{srnet_forward.16} parent=0 // pred_check_branch
    %11 = sbr.rel (0) target = $region5
  $region4: #{srnet_forward.16} parent=0 // pred_region
    _
  $region5: #{srnet_forward.16} parent=0 // pred_fallthru
    _
  // Predicated region
  $region6: #{srnet_forward.16} parent=0 // pred_check
    _
  $region7: #{srnet_forward.16} parent=0 // pred_check_branch
    %13 = sbr.rel (0) target = $region9
  $region8: #{srnet_forward.16} parent=0 // pred_region
    _
  $region9: #{srnet_forward.16} parent=0 // pred_fallthru
    _
  // Predicated region
  $region10: #{srnet_forward.16} parent=0 // pred_check
    _
  $region11: #{srnet_forward.16} parent=0 // pred_check_branch
    %15 = sbr.rel (0) target = $region13
  $region12: #{srnet_forward.16} parent=0 // pred_region
    _
  $region13: #{srnet_forward.16} parent=0 // pred_fallthru
    _
  // Predicated region
  $region14: #{srnet_forward.16} parent=0 // pred_check
    _
  $region15: #{srnet_forward.16} parent=0 // pred_check_branch
    %17 = sbr.rel (0) target = $region17
  $region16: #{srnet_forward.16} parent=0 // pred_region
    _
  $region17: #{srnet_forward.16} parent=0 // pred_fallthru
    _
  // Predicated region
  $region18: #{srnet_forward.16} parent=0 // pred_check
    _
  $region19: #{srnet_forward.16} parent=0 // pred_check_branch
    %19 = sbr.rel (0) target = $region21
  $region20: #{srnet_forward.16} parent=0 // pred_region
    _
  $region21: #{srnet_forward.16} parent=0 // pred_fallthru
    _
  %v21 = vld [vmem:[%s0] sm:$0xff]
  %v22 = vld [vmem:[%s0 + $0x8] sm:$0xff]
  %v23 = vld [vmem:[%s0 + $0x10] sm:$0xff]
  %v24 = vld [vmem:[%s0 + $0x18] sm:$0xff]
  %v25 = vld [vmem:[%s0 + $0x20] sm:$0xff]
  %v26 = vld [vmem:[%s0 + $0x28] sm:$0xff]
  %v27 = vld [vmem:[%s0 + $0x30] sm:$0xff]
  %v28 = vld [vmem:[%s0 + $0x38] sm:$0xff]
  %v29 = vld [vmem:[%s0 + $0x40] sm:$0xff]
  %v30 = vld [vmem:[%s0 + $0x48] sm:$0xff]
  %v31 = vld [vmem:[%s0 + $0x50] sm:$0xff]
  %v32 = vld [vmem:[%s0 + $0x58] sm:$0xff]
  %v33 = vld [vmem:[%s0 + $0x60] sm:$0xff]
  %v34 = vld [vmem:[%s0 + $0x68] sm:$0xff]
  %v35 = vld [vmem:[%s0 + $0x70] sm:$0xff]
  %v36 = vld [vmem:[%s0 + $0x78] sm:$0xff]
  %v37 = vpack.c.bf16 %v22, %v21
  %v38 = vpack.c.bf16 %v24, %v23
  %v39 = vpack.c.bf16 %v26, %v25
  %v40 = vpack.c.bf16 %v28, %v27
  %v41 = vpack.c.bf16 %v30, %v29
  %v42 = vpack.c.bf16 %v32, %v31
  %v43 = vpack.c.bf16 %v34, %v33
  %v44 = vpack.c.bf16 %v36, %v35
  %v45 = vld [vmem:[%s1] sm:$0xf]
  %v46 = vld [vmem:[%s1 + $0x4] sm:$0xf]
  %v47 = vld [vmem:[%s1 + $0x8] sm:$0xf]
  %v48 = vld [vmem:[%s1 + $0xc] sm:$0xf]
  %v49 = vld [vmem:[%s1 + $0x10] sm:$0xf]
  %v50 = vld [vmem:[%s1 + $0x14] sm:$0xf]
  %v51 = vld [vmem:[%s1 + $0x18] sm:$0xf]
  %v52 = vld [vmem:[%s1 + $0x1c] sm:$0xf]
  %v53 = vld [vmem:[%s1 + $0x20] sm:$0xf]
  %v54 = vld [vmem:[%s1 + $0x24] sm:$0xf]
  %v55 = vld [vmem:[%s1 + $0x28] sm:$0xf]
  %v56 = vld [vmem:[%s1 + $0x2c] sm:$0xf]
  %v57 = vld [vmem:[%s1 + $0x30] sm:$0xf]
  %v58 = vld [vmem:[%s1 + $0x34] sm:$0xf]
  %v59 = vld [vmem:[%s1 + $0x38] sm:$0xf]
  %v60 = vld [vmem:[%s1 + $0x3c] sm:$0xf]
  %v77 = vunpack.c.l.b16 %v45
  %v78 = vunpack.c.l.b16 %v46
  %v79 = vunpack.c.l.b16 %v47
  %v80 = vunpack.c.l.b16 %v48
  %v81 = vunpack.c.l.b16 %v49
  %v82 = vunpack.c.l.b16 %v50
  %v83 = vunpack.c.l.b16 %v51
  %v84 = vunpack.c.l.b16 %v52
  %v85 = vunpack.c.l.b16 %v53
  %v86 = vunpack.c.l.b16 %v54
  %v87 = vunpack.c.l.b16 %v55
  %v88 = vunpack.c.l.b16 %v56
  %v89 = vunpack.c.l.b16 %v57
  %v90 = vunpack.c.l.b16 %v58
  %v91 = vunpack.c.l.b16 %v59
  %v92 = vunpack.c.l.b16 %v60
  %v93 = vpack.c.b16 %v78, %v77
  %v94 = vpack.c.b16 %v80, %v79
  %v95 = vpack.c.b16 %v82, %v81
  %v96 = vpack.c.b16 %v84, %v83
  %v97 = vpack.c.b16 %v86, %v85
  %v98 = vpack.c.b16 %v88, %v87
  %v99 = vpack.c.b16 %v90, %v89
  %v100 = vpack.c.b16 %v92, %v91
  %109 = vmatprep.subr.bf16.mxu0 0
  %110 = vmatpush1.bf16.msra.mxu0 %v100
  %111 = vmatprep.subr.bf16.mxu0 0
  %112 = vmatpush1.bf16.msra.mxu0 %v99
  %113 = vmatprep.subr.bf16.mxu0 0
  %114 = vmatpush1.bf16.msra.mxu0 %v98
  %115 = vmatprep.subr.bf16.mxu0 0
  %116 = vmatpush1.bf16.msra.mxu0 %v97
  %117 = vmatprep.subr.bf16.mxu0 0
  %118 = vmatpush1.bf16.msra.mxu0 %v96
  %119 = vmatprep.subr.bf16.mxu0 0
  %120 = vmatpush1.bf16.msra.mxu0 %v95
  %121 = vmatprep.subr.bf16.mxu0 0
  %122 = vmatpush1.bf16.msra.mxu0 %v94
  %123 = vmatprep.subr.bf16.mxu0 0
  %124 = vmatpush1.bf16.msra.mxu0 %v93
  %125 = vmatprep.subr.bf16.mxu0 0
  %126 = vmatpush2.bf16.msra.mxu0 0
  %127 = vmatprep.subr.bf16.mxu0 0
  %128 = vmatpush2.bf16.msra.mxu0 0
  %129 = vmatprep.subr.bf16.mxu0 0
  %130 = vmatpush2.bf16.msra.mxu0 0
  %131 = vmatprep.subr.bf16.mxu0 0
  %132 = vmatpush2.bf16.msra.mxu0 0
  %133 = vmatprep.subr.bf16.mxu0 0
  %134 = vmatpush2.bf16.msra.mxu0 0
  %135 = vmatprep.subr.bf16.mxu0 0
  %136 = vmatpush2.bf16.msra.mxu0 0
  %137 = vmatprep.subr.bf16.mxu0 0
  %138 = vmatpush2.bf16.msra.mxu0 0
  %139 = vmatprep.subr.bf16.mxu0 0
  %140 = vmatpush2.bf16.msra.mxu0 0
  %141 = vmatprep.mubr.bf16.mxu0 0
  %142 = vmatmul.mubr.bf16.gmra.mxu0 %v37
  %v143 = vpop.f32.mrf.mxu0
  %v144 = vadd.f32 0.0, %v143
  %v145 = vpop.f32.mrf.mxu0
  %v146 = vpop.f32.mrf.mxu0
  %v147 = vadd.f32 0.0, %v146
  %v148 = vpop.f32.mrf.mxu0
  %149 = vmatprep.mubr.bf16.mxu0 0
  %150 = vmatmul.mubr.bf16.gmra.mxu0 %v38
  %v151 = vpop.f32.mrf.mxu0
  %v152 = vadd.f32 0.0, %v151
  %v153 = vpop.f32.mrf.mxu0
  %v154 = vpop.f32.mrf.mxu0
  %v155 = vadd.f32 0.0, %v154
  %v156 = vpop.f32.mrf.mxu0
  %157 = vmatprep.mubr.bf16.mxu0 0
  %158 = vmatmul.mubr.bf16.gmra.mxu0 %v39
  %v159 = vpop.f32.mrf.mxu0
  %v160 = vadd.f32 0.0, %v159
  %v161 = vpop.f32.mrf.mxu0
  %v162 = vpop.f32.mrf.mxu0
  %v163 = vadd.f32 0.0, %v162
  %v164 = vpop.f32.mrf.mxu0
  %165 = vmatprep.mubr.bf16.mxu0 0
  %166 = vmatmul.mubr.bf16.gmra.mxu0 %v40
  %v167 = vpop.f32.mrf.mxu0
  %v168 = vadd.f32 0.0, %v167
  %v169 = vpop.f32.mrf.mxu0
  %v170 = vpop.f32.mrf.mxu0
  %v171 = vadd.f32 0.0, %v170
  %v172 = vpop.f32.mrf.mxu0
  %173 = vmatprep.mubr.bf16.mxu0 0
  %174 = vmatmul.mubr.bf16.gmra.mxu0 %v41
  %v175 = vpop.f32.mrf.mxu0
  %v176 = vadd.f32 0.0, %v175
  %v177 = vpop.f32.mrf.mxu0
  %v178 = vpop.f32.mrf.mxu0
  %v179 = vadd.f32 0.0, %v178
  %v180 = vpop.f32.mrf.mxu0
  %181 = vmatprep.mubr.bf16.mxu0 0
  %182 = vmatmul.mubr.bf16.gmra.mxu0 %v42
  %v183 = vpop.f32.mrf.mxu0
  %v184 = vadd.f32 0.0, %v183
  %v185 = vpop.f32.mrf.mxu0
  %v186 = vpop.f32.mrf.mxu0
  %v187 = vadd.f32 0.0, %v186
  %v188 = vpop.f32.mrf.mxu0
  %189 = vmatprep.mubr.bf16.mxu0 0
  %190 = vmatmul.mubr.bf16.gmra.mxu0 %v43
  %v191 = vpop.f32.mrf.mxu0
  %v192 = vadd.f32 0.0, %v191
  %v193 = vpop.f32.mrf.mxu0
  %v194 = vpop.f32.mrf.mxu0
  %v195 = vadd.f32 0.0, %v194
  %v196 = vpop.f32.mrf.mxu0
  %197 = vmatprep.mubr.bf16.mxu0 0
  %198 = vmatmul.mubr.bf16.gmra.mxu0 %v44
  %v199 = vpop.f32.mrf.mxu0
  %v200 = vadd.f32 0.0, %v199
  %v201 = vpop.f32.mrf.mxu0
  %v202 = vpop.f32.mrf.mxu0
  %v203 = vadd.f32 0.0, %v202
  %v204 = vpop.f32.mrf.mxu0
  %205 = vdwg.mxu0
  %v206 = vld [vmem:[%s2] sm:$0x1]
  %v208 = vlaneseq
  %v209 = vshrl.u32 %v208, 7
  %v210 = vsub.s32 0, %v209
  %v211 = vrot.slane %v206, %v210
  %v213 = vmul.f32 %v144, %v211
  %v214 = vmul.f32 %v147, %v211
  %v215 = vmul.f32 %v152, %v211
  %v216 = vmul.f32 %v155, %v211
  %v217 = vmul.f32 %v160, %v211
  %v218 = vmul.f32 %v163, %v211
  %v219 = vmul.f32 %v168, %v211
  %v220 = vmul.f32 %v171, %v211
  %v221 = vmul.f32 %v176, %v211
  %v222 = vmul.f32 %v179, %v211
  %v223 = vmul.f32 %v184, %v211
  %v224 = vmul.f32 %v187, %v211
  %v225 = vmul.f32 %v192, %v211
  %v226 = vmul.f32 %v195, %v211
  %v227 = vmul.f32 %v200, %v211
  %v228 = vmul.f32 %v203, %v211
  %v229 = vld [vmem:[%s3] sm:$0x1]
  %v231 = vlaneseq
  %v232 = vshrl.u32 %v231, 7
  %v233 = vsub.s32 0, %v232
  %v234 = vrot.slane %v229, %v233
  %v236 = vadd.f32 %v213, %v234
  %v237 = vadd.f32 %v214, %v234
  %v238 = vadd.f32 %v215, %v234
  %v239 = vadd.f32 %v216, %v234
  %v240 = vadd.f32 %v217, %v234
  %v241 = vadd.f32 %v218, %v234
  %v242 = vadd.f32 %v219, %v234
  %v243 = vadd.f32 %v220, %v234
  %v244 = vadd.f32 %v221, %v234
  %v245 = vadd.f32 %v222, %v234
  %v246 = vadd.f32 %v223, %v234
  %v247 = vadd.f32 %v224, %v234
  %v248 = vadd.f32 %v225, %v234
  %v249 = vadd.f32 %v226, %v234
  %v250 = vadd.f32 %v227, %v234
  %v251 = vadd.f32 %v228, %v234
  %vm252 = vcmask 523264
  %253 = vst.msk [vmem:[%s5] sm:$0xff] %vm252, %v236
  %254 = vst.msk [vmem:[%s5 + $0x8] sm:$0xff] %vm252, %v237
  %255 = vst.msk [vmem:[%s5 + $0x10] sm:$0xff] %vm252, %v238
  %256 = vst.msk [vmem:[%s5 + $0x18] sm:$0xff] %vm252, %v239
  %257 = vst.msk [vmem:[%s5 + $0x20] sm:$0xff] %vm252, %v240
  %258 = vst.msk [vmem:[%s5 + $0x28] sm:$0xff] %vm252, %v241
  %259 = vst.msk [vmem:[%s5 + $0x30] sm:$0xff] %vm252, %v242
  %260 = vst.msk [vmem:[%s5 + $0x38] sm:$0xff] %vm252, %v243
  %261 = vst.msk [vmem:[%s5 + $0x40] sm:$0xff] %vm252, %v244
  %262 = vst.msk [vmem:[%s5 + $0x48] sm:$0xff] %vm252, %v245
  %263 = vst.msk [vmem:[%s5 + $0x50] sm:$0xff] %vm252, %v246
  %264 = vst.msk [vmem:[%s5 + $0x58] sm:$0xff] %vm252, %v247
  %265 = vst.msk [vmem:[%s5 + $0x60] sm:$0xff] %vm252, %v248
  %266 = vst.msk [vmem:[%s5 + $0x68] sm:$0xff] %vm252, %v249
  %267 = vst.msk [vmem:[%s5 + $0x70] sm:$0xff] %vm252, %v250
  %268 = vst.msk [vmem:[%s5 + $0x78] sm:$0xff] %vm252, %v251
  // Predicated region
  $region22: #{srnet_forward.16} parent=0 // pred_check
    _
  $region23: #{srnet_forward.16} parent=0 // pred_check_branch
    %270 = sbr.rel (0) target = $region25
  $region24: #{srnet_forward.16} parent=0 // pred_region
    _
  $region25: #{srnet_forward.16} parent=0 // pred_fallthru
    _
  // Predicated region
  $region26: #{srnet_forward.16} parent=0 // pred_check
    _
  $region27: #{srnet_forward.16} parent=0 // pred_check_branch
    %272 = sbr.rel (0) target = $region29
  $region28: #{srnet_forward.16} parent=0 // pred_region
    _
  $region29: #{srnet_forward.16} parent=0 // pred_fallthru
    _

// kernel: srnet_forward.17
$region0: #{srnet_forward.17}
  #allocation0 [shape = 'u32[]', space=smem, size = 0x4, offset = 0x4, fixed_abs, tag = 'smem constant byte address 0x4 - core index']
  #allocation1 [shape = 'u32[144,128]{1,0:T(1,128)}', space=vmem, size = 0x12000, scoped, tag = 'internal scratch']
  %s0 = inlined_call_operand.vmem [shape: f32[32,576], index: 0, kind: input, shape index: {}]
  %s1 = inlined_call_operand.vmem [shape: bf16[576,128], index: 1, kind: input, shape index: {}]
  %s2 = inlined_call_operand.vmem [shape: f32[1,128], index: 2, kind: input, shape index: {}]
  %s3 = inlined_call_operand.vmem [shape: f32[1,128], index: 3, kind: input, shape index: {}]
  %s4 = inlined_call_operand.vmem [shape: f32[1,128], index: 4, kind: input, shape index: {}]
  %s5 = inlined_call_operand.vmem [shape: f32[32,128], index: 5, kind: output, shape index: {}]
  %s6 = sld [smem:[#allocation0]]
  $region30: #{srnet_forward.17} parent=0
    _
  %s8 = ssub.s32 1, %s6
  %s9 = scalar_select 0, %s8, %s6
  // Predicated region
  $region2: #{srnet_forward.17} parent=0 // pred_check
    _
  $region3: #{srnet_forward.17} parent=0 // pred_check_branch
    %11 = sbr.rel (0) target = $region5
  $region4: #{srnet_forward.17} parent=0 // pred_region
    _
  $region5: #{srnet_forward.17} parent=0 // pred_fallthru
    _
  // Predicated region
  $region6: #{srnet_forward.17} parent=0 // pred_check
    _
  $region7: #{srnet_forward.17} parent=0 // pred_check_branch
    %13 = sbr.rel (0) target = $region9
  $region8: #{srnet_forward.17} parent=0 // pred_region
    _
  $region9: #{srnet_forward.17} parent=0 // pred_fallthru
    _
  // Predicated region
  $region10: #{srnet_forward.17} parent=0 // pred_check
    _
  $region11: #{srnet_forward.17} parent=0 // pred_check_branch
    %15 = sbr.rel (0) target = $region13
  $region12: #{srnet_forward.17} parent=0 // pred_region
    _
  $region13: #{srnet_forward.17} parent=0 // pred_fallthru
    _
  // Predicated region
  $region14: #{srnet_forward.17} parent=0 // pred_check
    _
  $region15: #{srnet_forward.17} parent=0 // pred_check_branch
    %17 = sbr.rel (0) target = $region17
  $region16: #{srnet_forward.17} parent=0 // pred_region
    _
  $region17: #{srnet_forward.17} parent=0 // pred_fallthru
    _
  // Predicated region
  $region18: #{srnet_forward.17} parent=0 // pred_check
    _
  $region19: #{srnet_forward.17} parent=0 // pred_check_branch
    %19 = sbr.rel (0) target = $region21
  $region20: #{srnet_forward.17} parent=0 // pred_region
    _
  $region21: #{srnet_forward.17} parent=0 // pred_fallthru
    _
  %v21 = vld [vmem:[%s0] sm:$0xff]
  %v22 = vld [vmem:[%s0 + $0x8] sm:$0xff]
  %v23 = vld [vmem:[%s0 + $0x10] sm:$0xff]
  %v24 = vld [vmem:[%s0 + $0x18] sm:$0xff]
  %v25 = vld [vmem:[%s0 + $0x20] sm:$0xff]
  %v26 = vld [vmem:[%s0 + $0x28] sm:$0xff]
  %v27 = vld [vmem:[%s0 + $0x30] sm:$0xff]
  %v28 = vld [vmem:[%s0 + $0x38] sm:$0xff]
  %v29 = vld [vmem:[%s0 + $0x40] sm:$0xff]
  %v30 = vld [vmem:[%s0 + $0x48] sm:$0xff]
  %v31 = vld [vmem:[%s0 + $0x50] sm:$0xff]
  %v32 = vld [vmem:[%s0 + $0x58] sm:$0xff]
  %v33 = vld [vmem:[%s0 + $0x60] sm:$0xff]
  %v34 = vld [vmem:[%s0 + $0x68] sm:$0xff]
  %v35 = vld [vmem:[%s0 + $0x70] sm:$0xff]
  %v36 = vld [vmem:[%s0 + $0x78] sm:$0xff]
  %v37 = vld [vmem:[%s0 + $0x80] sm:$0xff]
  %v38 = vld [vmem:[%s0 + $0x88] sm:$0xff]
  %v39 = vld [vmem:[%s0 + $0x90] sm:$0xff]
  %v40 = vld [vmem:[%s0 + $0x98] sm:$0xff]
  %v41 = vpack.c.bf16 %v26, %v21
  %v42 = vpack.c.bf16 %v27, %v22
  %v43 = vpack.c.bf16 %v28, %v23
  %v44 = vpack.c.bf16 %v29, %v24
  %v45 = vpack.c.bf16 %v30, %v25
  %v46 = vpack.c.bf16 %v36, %v31
  %v47 = vpack.c.bf16 %v37, %v32
  %v48 = vpack.c.bf16 %v38, %v33
  %v49 = vpack.c.bf16 %v39, %v34
  %v50 = vpack.c.bf16 %v40, %v35
  %v51 = vld [vmem:[%s1] sm:$0xf]
  %v52 = vld [vmem:[%s1 + $0x4] sm:$0xf]
  %v53 = vld [vmem:[%s1 + $0x8] sm:$0xf]
  %v54 = vld [vmem:[%s1 + $0xc] sm:$0xf]
  %v55 = vld [vmem:[%s1 + $0x10] sm:$0xf]
  %v56 = vld [vmem:[%s1 + $0x14] sm:$0xf]
  %v57 = vld [vmem:[%s1 + $0x18] sm:$0xf]
  %v58 = vld [vmem:[%s1 + $0x1c] sm:$0xf]
  %v59 = vld [vmem:[%s1 + $0x20] sm:$0xf]
  %v60 = vld [vmem:[%s1 + $0x24] sm:$0xf]
  %v61 = vld [vmem:[%s1 + $0x28] sm:$0xf]
  %v62 = vld [vmem:[%s1 + $0x2c] sm:$0xf]
  %v63 = vld [vmem:[%s1 + $0x30] sm:$0xf]
  %v64 = vld [vmem:[%s1 + $0x34] sm:$0xf]
  %v65 = vld [vmem:[%s1 + $0x38] sm:$0xf]
  %v66 = vld [vmem:[%s1 + $0x3c] sm:$0xf]
  %v67 = vld [vmem:[%s1 + $0x40] sm:$0xf]
  %v68 = vld [vmem:[%s1 + $0x44] sm:$0xf]
  %v69 = vld [vmem:[%s1 + $0x48] sm:$0xf]
  %v70 = vld [vmem:[%s1 + $0x4c] sm:$0xf]
  %v71 = vld [vmem:[%s1 + $0x50] sm:$0xf]
  %v72 = vld [vmem:[%s1 + $0x54] sm:$0xf]
  %v73 = vld [vmem:[%s1 + $0x58] sm:$0xf]
  %v74 = vld [vmem:[%s1 + $0x5c] sm:$0xf]
  %v75 = vld [vmem:[%s1 + $0x60] sm:$0xf]
  %v76 = vld [vmem:[%s1 + $0x64] sm:$0xf]
  %v77 = vld [vmem:[%s1 + $0x68] sm:$0xf]
  %v78 = vld [vmem:[%s1 + $0x6c] sm:$0xf]
  %v79 = vld [vmem:[%s1 + $0x70] sm:$0xf]
  %v80 = vld [vmem:[%s1 + $0x74] sm:$0xf]
  %v81 = vld [vmem:[%s1 + $0x78] sm:$0xf]
  %v82 = vld [vmem:[%s1 + $0x7c] sm:$0xf]
  %v83 = vld [vmem:[%s1 + $0x80] sm:$0xf]
  %v84 = vld [vmem:[%s1 + $0x84] sm:$0xf]
  %v85 = vld [vmem:[%s1 + $0x88] sm:$0xf]
  %v86 = vld [vmem:[%s1 + $0x8c] sm:$0xf]
  %v87 = vld [vmem:[%s1 + $0x90] sm:$0xf]
  %v88 = vld [vmem:[%s1 + $0x94] sm:$0xf]
  %v89 = vld [vmem:[%s1 + $0x98] sm:$0xf]
  %v90 = vld [vmem:[%s1 + $0x9c] sm:$0xf]
  %v91 = vld [vmem:[%s1 + $0xa0] sm:$0xf]
  %v92 = vld [vmem:[%s1 + $0xa4] sm:$0xf]
  %v93 = vld [vmem:[%s1 + $0xa8] sm:$0xf]
  %v94 = vld [vmem:[%s1 + $0xac] sm:$0xf]
  %v95 = vld [vmem:[%s1 + $0xb0] sm:$0xf]
  %v96 = vld [vmem:[%s1 + $0xb4] sm:$0xf]
  %v97 = vld [vmem:[%s1 + $0xb8] sm:$0xf]
  %v98 = vld [vmem:[%s1 + $0xbc] sm:$0xf]
  %v99 = vld [vmem:[%s1 + $0xc0] sm:$0xf]
  %v100 = vld [vmem:[%s1 + $0xc4] sm:$0xf]
  %v101 = vld [vmem:[%s1 + $0xc8] sm:$0xf]
  %v102 = vld [vmem:[%s1 + $0xcc] sm:$0xf]
  %v103 = vld [vmem:[%s1 + $0xd0] sm:$0xf]
  %v104 = vld [vmem:[%s1 + $0xd4] sm:$0xf]
  %v105 = vld [vmem:[%s1 + $0xd8] sm:$0xf]
  %v106 = vld [vmem:[%s1 + $0xdc] sm:$0xf]
  %v107 = vld [vmem:[%s1 + $0xe0] sm:$0xf]
  %v108 = vld [vmem:[%s1 + $0xe4] sm:$0xf]
  %v109 = vld [vmem:[%s1 + $0xe8] sm:$0xf]
  %v110 = vld [vmem:[%s1 + $0xec] sm:$0xf]
  %v111 = vld [vmem:[%s1 + $0xf0] sm:$0xf]
  %v112 = vld [vmem:[%s1 + $0xf4] sm:$0xf]
  %v113 = vld [vmem:[%s1 + $0xf8] sm:$0xf]
  %v114 = vld [vmem:[%s1 + $0xfc] sm:$0xf]
  %v115 = vld [vmem:[%s1 + $0x100] sm:$0xf]
  %v116 = vld [vmem:[%s1 + $0x104] sm:$0xf]
  %v117 = vld [vmem:[%s1 + $0x108] sm:$0xf]
  %v118 = vld [vmem:[%s1 + $0x10c] sm:$0xf]
  %v119 = vld [vmem:[%s1 + $0x110] sm:$0xf]
  %v120 = vld [vmem:[%s1 + $0x114] sm:$0xf]
  %v121 = vld [vmem:[%s1 + $0x118] sm:$0xf]
  %v122 = vld [vmem:[%s1 + $0x11c] sm:$0xf]
  %v195 = vunpack.c.l.b16 %v51
  %v196 = vunpack.c.l.b16 %v52
  %v197 = vunpack.c.l.b16 %v53
  %v198 = vunpack.c.l.b16 %v54
  %v199 = vunpack.c.l.b16 %v55
  %v200 = vunpack.c.l.b16 %v56
  %v201 = vunpack.c.l.b16 %v57
  %v202 = vunpack.c.l.b16 %v58
  %v203 = vunpack.c.l.b16 %v59
  %v204 = vunpack.c.l.b16 %v60
  %v205 = vunpack.c.l.b16 %v61
  %v206 = vunpack.c.l.b16 %v62
  %v207 = vunpack.c.l.b16 %v63
  %v208 = vunpack.c.l.b16 %v64
  %v209 = vunpack.c.l.b16 %v65
  %v210 = vunpack.c.l.b16 %v66
  %v211 = vunpack.c.l.b16 %v67
  %v212 = vunpack.c.l.b16 %v68
  %v213 = vunpack.c.l.b16 %v69
  %v214 = vunpack.c.l.b16 %v70
  %v215 = vunpack.c.l.b16 %v71
  %v216 = vunpack.c.l.b16 %v72
  %v217 = vunpack.c.l.b16 %v73
  %v218 = vunpack.c.l.b16 %v74
  %v219 = vunpack.c.l.b16 %v75
  %v220 = vunpack.c.l.b16 %v76
  %v221 = vunpack.c.l.b16 %v77
  %v222 = vunpack.c.l.b16 %v78
  %v223 = vunpack.c.l.b16 %v79
  %v224 = vunpack.c.l.b16 %v80
  %v225 = vunpack.c.l.b16 %v81
  %v226 = vunpack.c.l.b16 %v82
  %v227 = vunpack.c.l.b16 %v83
  %v228 = vunpack.c.l.b16 %v84
  %v229 = vunpack.c.l.b16 %v85
  %v230 = vunpack.c.l.b16 %v86
  %v231 = vunpack.c.l.b16 %v87
  %v232 = vunpack.c.l.b16 %v88
  %v233 = vunpack.c.l.b16 %v89
  %v234 = vunpack.c.l.b16 %v90
  %v235 = vunpack.c.l.b16 %v91
  %v236 = vunpack.c.l.b16 %v92
  %v237 = vunpack.c.l.b16 %v93
  %v238 = vunpack.c.l.b16 %v94
  %v239 = vunpack.c.l.b16 %v95
  %v240 = vunpack.c.l.b16 %v96
  %v241 = vunpack.c.l.b16 %v97
  %v242 = vunpack.c.l.b16 %v98
  %v243 = vunpack.c.l.b16 %v99
  %v244 = vunpack.c.l.b16 %v100
  %v245 = vunpack.c.l.b16 %v101
  %v246 = vunpack.c.l.b16 %v102
  %v247 = vunpack.c.l.b16 %v103
  %v248 = vunpack.c.l.b16 %v104
  %v249 = vunpack.c.l.b16 %v105
  %v250 = vunpack.c.l.b16 %v106
  %v251 = vunpack.c.l.b16 %v107
  %v252 = vunpack.c.l.b16 %v108
  %v253 = vunpack.c.l.b16 %v109
  %v254 = vunpack.c.l.b16 %v110
  %v255 = vunpack.c.l.b16 %v111
  %v256 = vunpack.c.l.b16 %v112
  %v257 = vunpack.c.l.b16 %v113
  %v258 = vunpack.c.l.b16 %v114
  %v259 = vunpack.c.l.b16 %v115
  %v260 = vunpack.c.l.b16 %v116
  %v261 = vunpack.c.l.b16 %v117
  %v262 = vunpack.c.l.b16 %v118
  %v263 = vunpack.c.l.b16 %v119
  %v264 = vunpack.c.l.b16 %v120
  %v265 = vunpack.c.l.b16 %v121
  %v266 = vunpack.c.l.b16 %v122
  %v267 = vpack.c.b16 %v196, %v195
  %v268 = vpack.c.b16 %v198, %v197
  %v269 = vpack.c.b16 %v200, %v199
  %v270 = vpack.c.b16 %v202, %v201
  %v271 = vpack.c.b16 %v204, %v203
  %v272 = vpack.c.b16 %v206, %v205
  %v273 = vpack.c.b16 %v208, %v207
  %v274 = vpack.c.b16 %v210, %v209
  %v275 = vpack.c.b16 %v212, %v211
  %v276 = vpack.c.b16 %v214, %v213
  %v277 = vpack.c.b16 %v216, %v215
  %v278 = vpack.c.b16 %v218, %v217
  %v279 = vpack.c.b16 %v220, %v219
  %v280 = vpack.c.b16 %v222, %v221
  %v281 = vpack.c.b16 %v224, %v223
  %v282 = vpack.c.b16 %v226, %v225
  %v283 = vpack.c.b16 %v228, %v227
  %v284 = vpack.c.b16 %v230, %v229
  %v285 = vpack.c.b16 %v232, %v231
  %v286 = vpack.c.b16 %v234, %v233
  %v287 = vpack.c.b16 %v236, %v235
  %v288 = vpack.c.b16 %v238, %v237
  %v289 = vpack.c.b16 %v240, %v239
  %v290 = vpack.c.b16 %v242, %v241
  %v291 = vpack.c.b16 %v244, %v243
  %v292 = vpack.c.b16 %v246, %v245
  %v293 = vpack.c.b16 %v248, %v247
  %v294 = vpack.c.b16 %v250, %v249
  %v295 = vpack.c.b16 %v252, %v251
  %v296 = vpack.c.b16 %v254, %v253
  %v297 = vpack.c.b16 %v256, %v255
  %v298 = vpack.c.b16 %v258, %v257
  %v299 = vpack.c.b16 %v260, %v259
  %v300 = vpack.c.b16 %v262, %v261
  %v301 = vpack.c.b16 %v264, %v263
  %v302 = vpack.c.b16 %v266, %v265
  %vm339 = vcmask 523264
  %v341 = vsel %vm339, %v45, 0
  %v344 = vsel %vm339, %v50, 0
  %346 = vmatprep.subr.bf16.mxu0 0
  %347 = vmatpush1.bf16.msra.mxu0 %v274
  %348 = vmatprep.subr.bf16.mxu0 0
  %349 = vmatpush1.bf16.msra.mxu0 %v273
  %350 = vmatprep.subr.bf16.mxu0 0
  %351 = vmatpush1.bf16.msra.mxu0 %v272
  %352 = vmatprep.subr.bf16.mxu0 0
  %353 = vmatpush1.bf16.msra.mxu0 %v271
  %354 = vmatprep.subr.bf16.mxu0 0
  %355 = vmatpush1.bf16.msra.mxu0 %v270
  %356 = vmatprep.subr.bf16.mxu0 0
  %357 = vmatpush1.bf16.msra.mxu0 %v269
  %358 = vmatprep.subr.bf16.mxu0 0
  %359 = vmatpush1.bf16.msra.mxu0 %v268
  %360 = vmatprep.subr.bf16.mxu0 0
  %361 = vmatpush1.bf16.msra.mxu0 %v267
  %362 = vmatprep.subr.bf16.mxu0 0
  %363 = vmatpush2.bf16.msra.mxu0 %v282
  %364 = vmatprep.subr.bf16.mxu0 0
  %365 = vmatpush2.bf16.msra.mxu0 %v281
  %366 = vmatprep.subr.bf16.mxu0 0
  %367 = vmatpush2.bf16.msra.mxu0 %v280
  %368 = vmatprep.subr.bf16.mxu0 0
  %369 = vmatpush2.bf16.msra.mxu0 %v279
  %370 = vmatprep.subr.bf16.mxu0 0
  %371 = vmatpush2.bf16.msra.mxu0 %v278
  %372 = vmatprep.subr.bf16.mxu0 0
  %373 = vmatpush2.bf16.msra.mxu0 %v277
  %374 = vmatprep.subr.bf16.mxu0 0
  %375 = vmatpush2.bf16.msra.mxu0 %v276
  %376 = vmatprep.subr.bf16.mxu0 0
  %377 = vmatpush2.bf16.msra.mxu0 %v275
  %378 = vmatprep.mubr.bf16.mxu0 %v42
  %379 = vmatmul.mubr.bf16.gmra.mxu0 %v41
  %v380 = vpop.f32.mrf.mxu0
  %v381 = vadd.f32 0.0, %v380
  %v382 = vpop.f32.mrf.mxu0
  %v383 = vpop.f32.mrf.mxu0
  %v384 = vadd.f32 0.0, %v383
  %v385 = vpop.f32.mrf.mxu0
  %386 = vmatprep.mubr.bf16.mxu0 %v47
  %387 = vmatmul.mubr.bf16.gmra.mxu0 %v46
  %v388 = vpop.f32.mrf.mxu0
  %v389 = vadd.f32 0.0, %v388
  %v390 = vpop.f32.mrf.mxu0
  %v391 = vpop.f32.mrf.mxu0
  %v392 = vadd.f32 0.0, %v391
  %v393 = vpop.f32.mrf.mxu0
  %394 = vdwg.mxu0
  %395 = vmatprep.subr.bf16.mxu0 0
  %396 = vmatpush1.bf16.msra.mxu0 %v290
  %397 = vmatprep.subr.bf16.mxu0 0
  %398 = vmatpush1.bf16.msra.mxu0 %v289
  %399 = vmatprep.subr.bf16.mxu0 0
  %400 = vmatpush1.bf16.msra.mxu0 %v288
  %401 = vmatprep.subr.bf16.mxu0 0
  %402 = vmatpush1.bf16.msra.mxu0 %v287
  %403 = vmatprep.subr.bf16.mxu0 0
  %404 = vmatpush1.bf16.msra.mxu0 %v286
  %405 = vmatprep.subr.bf16.mxu0 0
  %406 = vmatpush1.bf16.msra.mxu0 %v285
  %407 = vmatprep.subr.bf16.mxu0 0
  %408 = vmatpush1.bf16.msra.mxu0 %v284
  %409 = vmatprep.subr.bf16.mxu0 0
  %410 = vmatpush1.bf16.msra.mxu0 %v283
  %411 = vmatprep.subr.bf16.mxu0 0
  %412 = vmatpush2.bf16.msra.mxu0 %v298
  %413 = vmatprep.subr.bf16.mxu0 0
  %414 = vmatpush2.bf16.msra.mxu0 %v297
  %415 = vmatprep.subr.bf16.mxu0 0
  %416 = vmatpush2.bf16.msra.mxu0 %v296
  %417 = vmatprep.subr.bf16.mxu0 0
  %418 = vmatpush2.bf16.msra.mxu0 %v295
  %419 = vmatprep.subr.bf16.mxu0 0
  %420 = vmatpush2.bf16.msra.mxu0 %v294
  %421 = vmatprep.subr.bf16.mxu0 0
  %422 = vmatpush2.bf16.msra.mxu0 %v293
  %423 = vmatprep.subr.bf16.mxu0 0
  %424 = vmatpush2.bf16.msra.mxu0 %v292
  %425 = vmatprep.subr.bf16.mxu0 0
  %426 = vmatpush2.bf16.msra.mxu0 %v291
  %427 = vmatprep.mubr.bf16.mxu0 %v44
  %428 = vmatmul.mubr.bf16.gmra.mxu0 %v43
  %v429 = vpop.f32.mrf.mxu0
  %v430 = vadd.f32 %v381, %v429
  %v431 = vpop.f32.mrf.mxu0
  %v432 = vpop.f32.mrf.mxu0
  %v433 = vadd.f32 %v384, %v432
  %v434 = vpop.f32.mrf.mxu0
  %435 = vmatprep.mubr.bf16.mxu0 %v49
  %436 = vmatmul.mubr.bf16.gmra.mxu0 %v48
  %v437 = vpop.f32.mrf.mxu0
  %v438 = vadd.f32 %v389, %v437
  %v439 = vpop.f32.mrf.mxu0
  %v440 = vpop.f32.mrf.mxu0
  %v441 = vadd.f32 %v392, %v440
  %v442 = vpop.f32.mrf.mxu0
  %443 = vdwg.mxu0
  %444 = vmatprep.subr.bf16.mxu0 0
  %445 = vmatpush1.bf16.msra.mxu0 0
  %446 = vmatprep.subr.bf16.mxu0 0
  %447 = vmatpush1.bf16.msra.mxu0 0
  %448 = vmatprep.subr.bf16.mxu0 0
  %449 = vmatpush1.bf16.msra.mxu0 0
  %450 = vmatprep.subr.bf16.mxu0 0
  %451 = vmatpush1.bf16.msra.mxu0 0
  %452 = vmatprep.subr.bf16.mxu0 0
  %453 = vmatpush1.bf16.msra.mxu0 %v302
  %454 = vmatprep.subr.bf16.mxu0 0
  %455 = vmatpush1.bf16.msra.mxu0 %v301
  %456 = vmatprep.subr.bf16.mxu0 0
  %457 = vmatpush1.bf16.msra.mxu0 %v300
  %458 = vmatprep.subr.bf16.mxu0 0
  %459 = vmatpush1.bf16.msra.mxu0 %v299
  %460 = vmatprep.subr.bf16.mxu0 0
  %461 = vmatpush2.bf16.msra.mxu0 0
  %462 = vmatprep.subr.bf16.mxu0 0
  %463 = vmatpush2.bf16.msra.mxu0 0
  %464 = vmatprep.subr.bf16.mxu0 0
  %465 = vmatpush2.bf16.msra.mxu0 0
  %466 = vmatprep.subr.bf16.mxu0 0
  %467 = vmatpush2.bf16.msra.mxu0 0
  %468 = vmatprep.subr.bf16.mxu0 0
  %469 = vmatpush2.bf16.msra.mxu0 0
  %470 = vmatprep.subr.bf16.mxu0 0
  %471 = vmatpush2.bf16.msra.mxu0 0
  %472 = vmatprep.subr.bf16.mxu0 0
  %473 = vmatpush2.bf16.msra.mxu0 0
  %474 = vmatprep.subr.bf16.mxu0 0
  %475 = vmatpush2.bf16.msra.mxu0 0
  %476 = vmatprep.mubr.bf16.mxu0 0
  %477 = vmatmul.mubr.bf16.gmra.mxu0 %v341
  %v478 = vpop.f32.mrf.mxu0
  %v479 = vadd.f32 %v430, %v478
  %v480 = vpop.f32.mrf.mxu0
  %v481 = vpop.f32.mrf.mxu0
  %v482 = vadd.f32 %v433, %v481
  %v483 = vpop.f32.mrf.mxu0
  %484 = vmatprep.mubr.bf16.mxu0 0
  %485 = vmatmul.mubr.bf16.gmra.mxu0 %v344
  %v486 = vpop.f32.mrf.mxu0
  %v487 = vadd.f32 %v438, %v486
  %v488 = vpop.f32.mrf.mxu0
  %v489 = vpop.f32.mrf.mxu0
  %v490 = vadd.f32 %v441, %v489
  %v491 = vpop.f32.mrf.mxu0
  %492 = vdwg.mxu0
  %v493 = vld [vmem:[%s2] sm:$0x1]
  %v495 = vlaneseq
  %v496 = vshrl.u32 %v495, 7
  %v497 = vsub.s32 0, %v496
  %v498 = vrot.slane %v493, %v497
  %v500 = vmul.f32 %v479, %v498
  %v501 = vmul.f32 %v482, %v498
  %v502 = vmul.f32 %v487, %v498
  %v503 = vmul.f32 %v490, %v498
  %v504 = vld [vmem:[%s3] sm:$0x1]
  %v506 = vlaneseq
  %v507 = vshrl.u32 %v506, 7
  %v508 = vsub.s32 0, %v507
  %v509 = vrot.slane %v504, %v508
  %v511 = vadd.f32 %v500, %v509
  %v512 = vadd.f32 %v501, %v509
  %v513 = vadd.f32 %v502, %v509
  %v514 = vadd.f32 %v503, %v509
  %v515 = vmul.f32 %v511, 0.5
  %v516 = vmul.f32 %v512, 0.5
  %v517 = vmul.f32 %v513, 0.5
  %v518 = vmul.f32 %v514, 0.5
  %v519 = vmul.f32 %v511, 0.044715
  %v520 = vmul.f32 %v512, 0.044715
  %v521 = vmul.f32 %v513, 0.044715
  %v522 = vmul.f32 %v514, 0.044715
  %v523 = vmul.f32 %v519, %v511
  %v524 = vmul.f32 %v520, %v512
  %v525 = vmul.f32 %v521, %v513
  %v526 = vmul.f32 %v522, %v514
  %v527 = vmul.f32 %v523, %v511
  %v528 = vmul.f32 %v524, %v512
  %v529 = vmul.f32 %v525, %v513
  %v530 = vmul.f32 %v526, %v514
  %v531 = vadd.f32 %v511, %v527
  %v532 = vadd.f32 %v512, %v528
  %v533 = vadd.f32 %v513, %v529
  %v534 = vadd.f32 %v514, %v530
  %v535 = vmul.f32 %v531, 0.7978846
  %v536 = vmul.f32 %v532, 0.7978846
  %v537 = vmul.f32 %v533, 0.7978846
  %v538 = vmul.f32 %v534, 0.7978846
  %v539 = vtanh.pop %v535
  %v540 = vtanh.pop %v536
  %v541 = vtanh.pop %v537
  %v542 = vtanh.pop %v538
  %v543 = vadd.f32 %v539, 1.0
  %v544 = vadd.f32 %v540, 1.0
  %v545 = vadd.f32 %v541, 1.0
  %v546 = vadd.f32 %v542, 1.0
  %v547 = vmul.f32 %v515, %v543
  %v548 = vmul.f32 %v516, %v544
  %v549 = vmul.f32 %v517, %v545
  %v550 = vmul.f32 %v518, %v546
  %551 = vst [vmem:[%s5] sm:$0xff] %v547
  %552 = vst [vmem:[%s5 + $0x8] sm:$0xff] %v548
  %553 = vst [vmem:[%s5 + $0x10] sm:$0xff] %v549
  %554 = vst [vmem:[%s5 + $0x18] sm:$0xff] %v550
  // Predicated region
  $region22: #{srnet_forward.17} parent=0 // pred_check
    _
  $region23: #{srnet_forward.17} parent=0 // pred_check_branch
    %556 = sbr.rel (0) target = $region25
  $region24: #{srnet_forward.17} parent=0 // pred_region
    _
  $region25: #{srnet_forward.17} parent=0 // pred_fallthru
    _
  // Predicated region
  $region26: #{srnet_forward.17} parent=0 // pred_check
    _
  $region27: #{srnet_forward.17} parent=0 // pred_check_branch
    %558 = sbr.rel (0) target = $region29
  $region28: #{srnet_forward.17} parent=0 // pred_region
    _
  $region29: #{srnet_forward.17} parent=0 // pred_fallthru
    _

// kernel: srnet_forward.19
$region0: #{srnet_forward.19}
  #allocation0 [shape = 'u32[]', space=smem, size = 0x4, offset = 0x4, fixed_abs, tag = 'smem constant byte address 0x4 - core index']
  #allocation1 [shape = 'u32[144,128]{1,0:T(1,128)}', space=vmem, size = 0x12000, scoped, tag = 'internal scratch']
  %s0 = inlined_call_operand.vmem [shape: f32[32,128], index: 0, kind: input, shape index: {}]
  %s1 = inlined_call_operand.vmem [shape: bf16[128,256], index: 1, kind: input, shape index: {}]
  %s2 = inlined_call_operand.vmem [shape: f32[1,256], index: 2, kind: input, shape index: {}]
  %s3 = inlined_call_operand.vmem [shape: f32[1,256], index: 3, kind: input, shape index: {}]
  %s4 = inlined_call_operand.vmem [shape: f32[1,256], index: 4, kind: input, shape index: {}]
  %s5 = inlined_call_operand.vmem [shape: f32[32,256], index: 5, kind: output, shape index: {}]
  %s6 = sld [smem:[#allocation0]]
  $region30: #{srnet_forward.19} parent=0
    _
  %s8 = ssub.s32 1, %s6
  %s9 = scalar_select 0, %s8, %s6
  // Predicated region
  $region2: #{srnet_forward.19} parent=0 // pred_check
    _
  $region3: #{srnet_forward.19} parent=0 // pred_check_branch
    %11 = sbr.rel (0) target = $region5
  $region4: #{srnet_forward.19} parent=0 // pred_region
    _
  $region5: #{srnet_forward.19} parent=0 // pred_fallthru
    _
  // Predicated region
  $region6: #{srnet_forward.19} parent=0 // pred_check
    _
  $region7: #{srnet_forward.19} parent=0 // pred_check_branch
    %13 = sbr.rel (0) target = $region9
  $region8: #{srnet_forward.19} parent=0 // pred_region
    _
  $region9: #{srnet_forward.19} parent=0 // pred_fallthru
    _
  // Predicated region
  $region10: #{srnet_forward.19} parent=0 // pred_check
    _
  $region11: #{srnet_forward.19} parent=0 // pred_check_branch
    %15 = sbr.rel (0) target = $region13
  $region12: #{srnet_forward.19} parent=0 // pred_region
    _
  $region13: #{srnet_forward.19} parent=0 // pred_fallthru
    _
  // Predicated region
  $region14: #{srnet_forward.19} parent=0 // pred_check
    _
  $region15: #{srnet_forward.19} parent=0 // pred_check_branch
    %17 = sbr.rel (0) target = $region17
  $region16: #{srnet_forward.19} parent=0 // pred_region
    _
  $region17: #{srnet_forward.19} parent=0 // pred_fallthru
    _
  // Predicated region
  $region18: #{srnet_forward.19} parent=0 // pred_check
    _
  $region19: #{srnet_forward.19} parent=0 // pred_check_branch
    %19 = sbr.rel (0) target = $region21
  $region20: #{srnet_forward.19} parent=0 // pred_region
    _
  $region21: #{srnet_forward.19} parent=0 // pred_fallthru
    _
  %v21 = vld [vmem:[%s0] sm:$0xff]
  %v22 = vld [vmem:[%s0 + $0x8] sm:$0xff]
  %v23 = vld [vmem:[%s0 + $0x10] sm:$0xff]
  %v24 = vld [vmem:[%s0 + $0x18] sm:$0xff]
  %v25 = vpack.c.bf16 %v22, %v21
  %v26 = vpack.c.bf16 %v24, %v23
  %v27 = vld [vmem:[%s1] sm:$0xff]
  %v28 = vld [vmem:[%s1 + $0x8] sm:$0xff]
  %v29 = vld [vmem:[%s1 + $0x10] sm:$0xff]
  %v30 = vld [vmem:[%s1 + $0x18] sm:$0xff]
  %v31 = vld [vmem:[%s1 + $0x20] sm:$0xff]
  %v32 = vld [vmem:[%s1 + $0x28] sm:$0xff]
  %v33 = vld [vmem:[%s1 + $0x30] sm:$0xff]
  %v34 = vld [vmem:[%s1 + $0x38] sm:$0xff]
  %v35 = vld [vmem:[%s1 + $0x40] sm:$0xff]
  %v36 = vld [vmem:[%s1 + $0x48] sm:$0xff]
  %v37 = vld [vmem:[%s1 + $0x50] sm:$0xff]
  %v38 = vld [vmem:[%s1 + $0x58] sm:$0xff]
  %v39 = vld [vmem:[%s1 + $0x60] sm:$0xff]
  %v40 = vld [vmem:[%s1 + $0x68] sm:$0xff]
  %v41 = vld [vmem:[%s1 + $0x70] sm:$0xff]
  %v42 = vld [vmem:[%s1 + $0x78] sm:$0xff]
  %v59 = vunpack.c.l.b16 %v27
  %v60 = vunpack.c.h.b16 %v27
  %v61 = vunpack.c.l.b16 %v28
  %v62 = vunpack.c.h.b16 %v28
  %v63 = vunpack.c.l.b16 %v29
  %v64 = vunpack.c.h.b16 %v29
  %v65 = vunpack.c.l.b16 %v30
  %v66 = vunpack.c.h.b16 %v30
  %v67 = vunpack.c.l.b16 %v31
  %v68 = vunpack.c.h.b16 %v31
  %v69 = vunpack.c.l.b16 %v32
  %v70 = vunpack.c.h.b16 %v32
  %v71 = vunpack.c.l.b16 %v33
  %v72 = vunpack.c.h.b16 %v33
  %v73 = vunpack.c.l.b16 %v34
  %v74 = vunpack.c.h.b16 %v34
  %v75 = vunpack.c.l.b16 %v35
  %v76 = vunpack.c.h.b16 %v35
  %v77 = vunpack.c.l.b16 %v36
  %v78 = vunpack.c.h.b16 %v36
  %v79 = vunpack.c.l.b16 %v37
  %v80 = vunpack.c.h.b16 %v37
  %v81 = vunpack.c.l.b16 %v38
  %v82 = vunpack.c.h.b16 %v38
  %v83 = vunpack.c.l.b16 %v39
  %v84 = vunpack.c.h.b16 %v39
  %v85 = vunpack.c.l.b16 %v40
  %v86 = vunpack.c.h.b16 %v40
  %v87 = vunpack.c.l.b16 %v41
  %v88 = vunpack.c.h.b16 %v41
  %v89 = vunpack.c.l.b16 %v42
  %v90 = vunpack.c.h.b16 %v42
  %v91 = vpack.c.b16 %v61, %v59
  %v92 = vpack.c.b16 %v62, %v60
  %v93 = vpack.c.b16 %v65, %v63
  %v94 = vpack.c.b16 %v66, %v64
  %v95 = vpack.c.b16 %v69, %v67
  %v96 = vpack.c.b16 %v70, %v68
  %v97 = vpack.c.b16 %v73, %v71
  %v98 = vpack.c.b16 %v74, %v72
  %v99 = vpack.c.b16 %v77, %v75
  %v100 = vpack.c.b16 %v78, %v76
  %v101 = vpack.c.b16 %v81, %v79
  %v102 = vpack.c.b16 %v82, %v80
  %v103 = vpack.c.b16 %v85, %v83
  %v104 = vpack.c.b16 %v86, %v84
  %v105 = vpack.c.b16 %v89, %v87
  %v106 = vpack.c.b16 %v90, %v88
  %123 = vmatprep.subr.bf16.mxu0 %v106
  %124 = vmatpush1.bf16.msra.mxu0 %v105
  %125 = vmatprep.subr.bf16.mxu0 %v104
  %126 = vmatpush1.bf16.msra.mxu0 %v103
  %127 = vmatprep.subr.bf16.mxu0 %v102
  %128 = vmatpush1.bf16.msra.mxu0 %v101
  %129 = vmatprep.subr.bf16.mxu0 %v100
  %130 = vmatpush1.bf16.msra.mxu0 %v99
  %131 = vmatprep.subr.bf16.mxu0 %v98
  %132 = vmatpush1.bf16.msra.mxu0 %v97
  %133 = vmatprep.subr.bf16.mxu0 %v96
  %134 = vmatpush1.bf16.msra.mxu0 %v95
  %135 = vmatprep.subr.bf16.mxu0 %v94
  %136 = vmatpush1.bf16.msra.mxu0 %v93
  %137 = vmatprep.subr.bf16.mxu0 %v92
  %138 = vmatpush1.bf16.msra.mxu0 %v91
  %139 = vmatprep.subr.bf16.mxu0 0
  %140 = vmatpush2.bf16.msra.mxu0 0
  %141 = vmatprep.subr.bf16.mxu0 0
  %142 = vmatpush2.bf16.msra.mxu0 0
  %143 = vmatprep.subr.bf16.mxu0 0
  %144 = vmatpush2.bf16.msra.mxu0 0
  %145 = vmatprep.subr.bf16.mxu0 0
  %146 = vmatpush2.bf16.msra.mxu0 0
  %147 = vmatprep.subr.bf16.mxu0 0
  %148 = vmatpush2.bf16.msra.mxu0 0
  %149 = vmatprep.subr.bf16.mxu0 0
  %150 = vmatpush2.bf16.msra.mxu0 0
  %151 = vmatprep.subr.bf16.mxu0 0
  %152 = vmatpush2.bf16.msra.mxu0 0
  %153 = vmatprep.subr.bf16.mxu0 0
  %154 = vmatpush2.bf16.msra.mxu0 0
  %155 = vmatprep.mubr.bf16.mxu0 0
  %156 = vmatmul.mubr.bf16.gmra.mxu0 %v25
  %v157 = vpop.f32.mrf.mxu0
  %v158 = vadd.f32 0.0, %v157
  %v159 = vpop.f32.mrf.mxu0
  %v160 = vadd.f32 0.0, %v159
  %v161 = vpop.f32.mrf.mxu0
  %v162 = vadd.f32 0.0, %v161
  %v163 = vpop.f32.mrf.mxu0
  %v164 = vadd.f32 0.0, %v163
  %165 = vmatprep.mubr.bf16.mxu0 0
  %166 = vmatmul.mubr.bf16.gmra.mxu0 %v26
  %v167 = vpop.f32.mrf.mxu0
  %v168 = vadd.f32 0.0, %v167
  %v169 = vpop.f32.mrf.mxu0
  %v170 = vadd.f32 0.0, %v169
  %v171 = vpop.f32.mrf.mxu0
  %v172 = vadd.f32 0.0, %v171
  %v173 = vpop.f32.mrf.mxu0
  %v174 = vadd.f32 0.0, %v173
  %175 = vdwg.mxu0
  %v176 = vld [vmem:[%s2] sm:$0x3]
  %v178 = vlaneseq
  %v179 = vshrl.u32 %v178, 7
  %v180 = vsub.s32 0, %v179
  %v181 = vrot.slane %v176, %v180
  %v182 = vlaneseq
  %v183 = vshrl.u32 %v182, 7
  %v184 = vsub.s32 1, %v183
  %v185 = vrot.slane %v176, %v184
  %v188 = vmul.f32 %v158, %v181
  %v189 = vmul.f32 %v160, %v185
  %v190 = vmul.f32 %v162, %v181
  %v191 = vmul.f32 %v164, %v185
  %v192 = vmul.f32 %v168, %v181
  %v193 = vmul.f32 %v170, %v185
  %v194 = vmul.f32 %v172, %v181
  %v195 = vmul.f32 %v174, %v185
  %v196 = vld [vmem:[%s3] sm:$0x3]
  %v198 = vlaneseq
  %v199 = vshrl.u32 %v198, 7
  %v200 = vsub.s32 0, %v199
  %v201 = vrot.slane %v196, %v200
  %v202 = vlaneseq
  %v203 = vshrl.u32 %v202, 7
  %v204 = vsub.s32 1, %v203
  %v205 = vrot.slane %v196, %v204
  %v208 = vadd.f32 %v188, %v201
  %v209 = vadd.f32 %v189, %v205
  %v210 = vadd.f32 %v190, %v201
  %v211 = vadd.f32 %v191, %v205
  %v212 = vadd.f32 %v192, %v201
  %v213 = vadd.f32 %v193, %v205
  %v214 = vadd.f32 %v194, %v201
  %v215 = vadd.f32 %v195, %v205
  %v216 = vmul.f32 %v208, 0.5
  %v217 = vmul.f32 %v209, 0.5
  %v218 = vmul.f32 %v210, 0.5
  %v219 = vmul.f32 %v211, 0.5
  %v220 = vmul.f32 %v212, 0.5
  %v221 = vmul.f32 %v213, 0.5
  %v222 = vmul.f32 %v214, 0.5
  %v223 = vmul.f32 %v215, 0.5
  %v224 = vmul.f32 %v208, 0.044715
  %v225 = vmul.f32 %v209, 0.044715
  %v226 = vmul.f32 %v210, 0.044715
  %v227 = vmul.f32 %v211, 0.044715
  %v228 = vmul.f32 %v212, 0.044715
  %v229 = vmul.f32 %v213, 0.044715
  %v230 = vmul.f32 %v214, 0.044715
  %v231 = vmul.f32 %v215, 0.044715
  %v232 = vmul.f32 %v224, %v208
  %v233 = vmul.f32 %v225, %v209
  %v234 = vmul.f32 %v226, %v210
  %v235 = vmul.f32 %v227, %v211
  %v236 = vmul.f32 %v228, %v212
  %v237 = vmul.f32 %v229, %v213
  %v238 = vmul.f32 %v230, %v214
  %v239 = vmul.f32 %v231, %v215
  %v240 = vmul.f32 %v232, %v208
  %v241 = vmul.f32 %v233, %v209
  %v242 = vmul.f32 %v234, %v210
  %v243 = vmul.f32 %v235, %v211
  %v244 = vmul.f32 %v236, %v212
  %v245 = vmul.f32 %v237, %v213
  %v246 = vmul.f32 %v238, %v214
  %v247 = vmul.f32 %v239, %v215
  %v248 = vadd.f32 %v208, %v240
  %v249 = vadd.f32 %v209, %v241
  %v250 = vadd.f32 %v210, %v242
  %v251 = vadd.f32 %v211, %v243
  %v252 = vadd.f32 %v212, %v244
  %v253 = vadd.f32 %v213, %v245
  %v254 = vadd.f32 %v214, %v246
  %v255 = vadd.f32 %v215, %v247
  %v256 = vmul.f32 %v248, 0.7978846
  %v257 = vmul.f32 %v249, 0.7978846
  %v258 = vmul.f32 %v250, 0.7978846
  %v259 = vmul.f32 %v251, 0.7978846
  %v260 = vmul.f32 %v252, 0.7978846
  %v261 = vmul.f32 %v253, 0.7978846
  %v262 = vmul.f32 %v254, 0.7978846
  %v263 = vmul.f32 %v255, 0.7978846
  %v264 = vtanh.pop %v256
  %v265 = vtanh.pop %v257
  %v266 = vtanh.pop %v258
  %v267 = vtanh.pop %v259
  %v268 = vtanh.pop %v260
  %v269 = vtanh.pop %v261
  %v270 = vtanh.pop %v262
  %v271 = vtanh.pop %v263
  %v272 = vadd.f32 %v264, 1.0
  %v273 = vadd.f32 %v265, 1.0
  %v274 = vadd.f32 %v266, 1.0
  %v275 = vadd.f32 %v267, 1.0
  %v276 = vadd.f32 %v268, 1.0
  %v277 = vadd.f32 %v269, 1.0
  %v278 = vadd.f32 %v270, 1.0
  %v279 = vadd.f32 %v271, 1.0
  %v280 = vmul.f32 %v216, %v272
  %v281 = vmul.f32 %v217, %v273
  %v282 = vmul.f32 %v218, %v274
  %v283 = vmul.f32 %v219, %v275
  %v284 = vmul.f32 %v220, %v276
  %v285 = vmul.f32 %v221, %v277
  %v286 = vmul.f32 %v222, %v278
  %v287 = vmul.f32 %v223, %v279
  %288 = vst [vmem:[%s5] sm:$0xff] %v280
  %289 = vst [vmem:[%s5 + $0x8] sm:$0xff] %v281
  %290 = vst [vmem:[%s5 + $0x10] sm:$0xff] %v282
  %291 = vst [vmem:[%s5 + $0x18] sm:$0xff] %v283
  %292 = vst [vmem:[%s5 + $0x20] sm:$0xff] %v284
  %293 = vst [vmem:[%s5 + $0x28] sm:$0xff] %v285
  %294 = vst [vmem:[%s5 + $0x30] sm:$0xff] %v286
  %295 = vst [vmem:[%s5 + $0x38] sm:$0xff] %v287
  // Predicated region
  $region22: #{srnet_forward.19} parent=0 // pred_check
    _
  $region23: #{srnet_forward.19} parent=0 // pred_check_branch
    %297 = sbr.rel (0) target = $region25
  $region24: #{srnet_forward.19} parent=0 // pred_region
    _
  $region25: #{srnet_forward.19} parent=0 // pred_fallthru
    _
  // Predicated region
  $region26: #{srnet_forward.19} parent=0 // pred_check
    _
  $region27: #{srnet_forward.19} parent=0 // pred_check_branch
    %299 = sbr.rel (0) target = $region29
  $region28: #{srnet_forward.19} parent=0 // pred_region
    _
  $region29: #{srnet_forward.19} parent=0 // pred_fallthru
    _

// kernel: srnet_forward.18
$region0: #{srnet_forward.18}
  #allocation0 [shape = 'u32[]', space=smem, size = 0x4, offset = 0x4, fixed_abs, tag = 'smem constant byte address 0x4 - core index']
  #allocation1 [shape = 'u32[144,128]{1,0:T(1,128)}', space=vmem, size = 0x12000, scoped, tag = 'internal scratch']
  %s0 = inlined_call_operand.vmem [shape: f32[2,6,6,128], index: 0, kind: input, shape index: {}]
  %s1 = inlined_call_operand.vmem [shape: f32[3,3,128], index: 1, kind: input, shape index: {}]
  %s2 = inlined_call_operand.vmem [shape: f32[2,4,4,128], index: 2, kind: output, shape index: {}]
  %s3 = sld [smem:[#allocation0]]
  $region18: #{srnet_forward.18} parent=0
    _
  %s5 = ssub.s32 1, %s3
  %s6 = scalar_select 0, %s5, %s3
  // Predicated region
  $region2: #{srnet_forward.18} parent=0 // pred_check
    _
  $region3: #{srnet_forward.18} parent=0 // pred_check_branch
    %8 = sbr.rel (0) target = $region5
  $region4: #{srnet_forward.18} parent=0 // pred_region
    _
  $region5: #{srnet_forward.18} parent=0 // pred_fallthru
    _
  // Predicated region
  $region6: #{srnet_forward.18} parent=0 // pred_check
    _
  $region7: #{srnet_forward.18} parent=0 // pred_check_branch
    %10 = sbr.rel (0) target = $region9
  $region8: #{srnet_forward.18} parent=0 // pred_region
    _
  $region9: #{srnet_forward.18} parent=0 // pred_fallthru
    _
  %v11 = vld [vmem:[%s0] sm:$0x3f]
  %v12 = vld [vmem:[%s0 + $0x8] sm:$0x3f]
  %v13 = vld [vmem:[%s0 + $0x10] sm:$0x3f]
  %v14 = vld [vmem:[%s0 + $0x18] sm:$0x3f]
  %v15 = vld [vmem:[%s0 + $0x20] sm:$0x3f]
  %v16 = vld [vmem:[%s0 + $0x28] sm:$0x3f]
  %v17 = vld [vmem:[%s0 + $0x30] sm:$0x3f]
  %v18 = vld [vmem:[%s0 + $0x38] sm:$0x3f]
  %v19 = vld [vmem:[%s0 + $0x40] sm:$0x3f]
  %v20 = vld [vmem:[%s0 + $0x48] sm:$0x3f]
  %v21 = vld [vmem:[%s0 + $0x50] sm:$0x3f]
  %v22 = vld [vmem:[%s0 + $0x58] sm:$0x3f]
  %v23 = vld [vmem:[%s1] sm:$0x7]
  %v24 = vld [vmem:[%s1 + $0x4] sm:$0x7]
  %v25 = vld [vmem:[%s1 + $0x8] sm:$0x7]
  %v26 = vlaneseq
  %v27 = vshrl.u32 %v26, 7
  %v28 = vsub.s32 0, %v27
  %v29 = vrot.slane %v23, %v28
  %v30 = vmul.f32 %v11, %v29
  %v31 = vmul.f32 %v12, %v29
  %v32 = vmul.f32 %v13, %v29
  %v33 = vmul.f32 %v14, %v29
  %v34 = vmul.f32 %v17, %v29
  %v35 = vmul.f32 %v18, %v29
  %v36 = vmul.f32 %v19, %v29
  %v37 = vmul.f32 %v20, %v29
  %v46 = vrot.slane %v30, 7
  %v47 = vrot.slane %v31, 7
  %v48 = vrot.slane %v32, 7
  %v49 = vrot.slane %v33, 7
  %v50 = vrot.slane %v34, 7
  %v51 = vrot.slane %v35, 7
  %v52 = vrot.slane %v36, 7
  %v53 = vrot.slane %v37, 7
  %v62 = vadd.f32 %v12, %v46
  %v63 = vadd.f32 %v13, %v47
  %v64 = vadd.f32 %v14, %v48
  %v65 = vadd.f32 %v15, %v49
  %v66 = vadd.f32 %v18, %v50
  %v67 = vadd.f32 %v19, %v51
  %v68 = vadd.f32 %v20, %v52
  %v69 = vadd.f32 %v21, %v53
  %v70 = vlaneseq
  %v71 = vshrl.u32 %v70, 7
  %v72 = vsub.s32 1, %v71
  %v73 = vrot.slane %v23, %v72
  %v74 = vmul.f32 %v11, %v73
  %v75 = vmul.f32 %v12, %v73
  %v76 = vmul.f32 %v13, %v73
  %v77 = vmul.f32 %v14, %v73
  %v78 = vmul.f32 %v17, %v73
  %v79 = vmul.f32 %v18, %v73
  %v80 = vmul.f32 %v19, %v73
  %v81 = vmul.f32 %v20, %v73
  %v82 = vadd.f32 %v62, %v74
  %v83 = vadd.f32 %v63, %v75
  %v84 = vadd.f32 %v64, %v76
  %v85 = vadd.f32 %v65, %v77
  %v86 = vadd.f32 %v66, %v78
  %v87 = vadd.f32 %v67, %v79
  %v88 = vadd.f32 %v68, %v80
  %v89 = vadd.f32 %v69, %v81
  %v90 = vlaneseq
  %v91 = vshrl.u32 %v90, 7
  %v92 = vsub.s32 2, %v91
  %v93 = vrot.slane %v23, %v92
  %v94 = vmul.f32 %v11, %v93
  %v95 = vmul.f32 %v12, %v93
  %v96 = vmul.f32 %v13, %v93
  %v97 = vmul.f32 %v14, %v93
  %v98 = vmul.f32 %v17, %v93
  %v99 = vmul.f32 %v18, %v93
  %v100 = vmul.f32 %v19, %v93
  %v101 = vmul.f32 %v20, %v93
  %v110 = vrot.slane %v94, 1
  %v111 = vrot.slane %v95, 1
  %v112 = vrot.slane %v96, 1
  %v113 = vrot.slane %v97, 1
  %v114 = vrot.slane %v98, 1
  %v115 = vrot.slane %v99, 1
  %v116 = vrot.slane %v100, 1
  %v117 = vrot.slane %v101, 1
  %v126 = vadd.f32 %v82, %v110
  %v127 = vadd.f32 %v83, %v111
  %v128 = vadd.f32 %v84, %v112
  %v129 = vadd.f32 %v85, %v113
  %v130 = vadd.f32 %v86, %v114
  %v131 = vadd.f32 %v87, %v115
  %v132 = vadd.f32 %v88, %v116
  %v133 = vadd.f32 %v89, %v117
  %v134 = vlaneseq
  %v135 = vshrl.u32 %v134, 7
  %v136 = vsub.s32 0, %v135
  %v137 = vrot.slane %v24, %v136
  %v138 = vmul.f32 %v12, %v137
  %v139 = vmul.f32 %v13, %v137
  %v140 = vmul.f32 %v14, %v137
  %v141 = vmul.f32 %v15, %v137
  %v142 = vmul.f32 %v18, %v137
  %v143 = vmul.f32 %v19, %v137
  %v144 = vmul.f32 %v20, %v137
  %v145 = vmul.f32 %v21, %v137
  %v154 = vrot.slane %v138, 7
  %v155 = vrot.slane %v139, 7
  %v156 = vrot.slane %v140, 7
  %v157 = vrot.slane %v141, 7
  %v158 = vrot.slane %v142, 7
  %v159 = vrot.slane %v143, 7
  %v160 = vrot.slane %v144, 7
  %v161 = vrot.slane %v145, 7
  %v170 = vadd.f32 %v126, %v154
  %v171 = vadd.f32 %v127, %v155
  %v172 = vadd.f32 %v128, %v156
  %v173 = vadd.f32 %v129, %v157
  %v174 = vadd.f32 %v130, %v158
  %v175 = vadd.f32 %v131, %v159
  %v176 = vadd.f32 %v132, %v160
  %v177 = vadd.f32 %v133, %v161
  %v178 = vlaneseq
  %v179 = vshrl.u32 %v178, 7
  %v180 = vsub.s32 1, %v179
  %v181 = vrot.slane %v24, %v180
  %v182 = vmul.f32 %v12, %v181
  %v183 = vmul.f32 %v13, %v181
  %v184 = vmul.f32 %v14, %v181
  %v185 = vmul.f32 %v15, %v181
  %v186 = vmul.f32 %v18, %v181
  %v187 = vmul.f32 %v19, %v181
  %v188 = vmul.f32 %v20, %v181
  %v189 = vmul.f32 %v21, %v181
  %v190 = vadd.f32 %v170, %v182
  %v191 = vadd.f32 %v171, %v183
  %v192 = vadd.f32 %v172, %v184
  %v193 = vadd.f32 %v173, %v185
  %v194 = vadd.f32 %v174, %v186
  %v195 = vadd.f32 %v175, %v187
  %v196 = vadd.f32 %v176, %v188
  %v197 = vadd.f32 %v177, %v189
  %v198 = vlaneseq
  %v199 = vshrl.u32 %v198, 7
  %v200 = vsub.s32 2, %v199
  %v201 = vrot.slane %v24, %v200
  %v202 = vmul.f32 %v12, %v201
  %v203 = vmul.f32 %v13, %v201
  %v204 = vmul.f32 %v14, %v201
  %v205 = vmul.f32 %v15, %v201
  %v206 = vmul.f32 %v18, %v201
  %v207 = vmul.f32 %v19, %v201
  %v208 = vmul.f32 %v20, %v201
  %v209 = vmul.f32 %v21, %v201
  %v218 = vrot.slane %v202, 1
  %v219 = vrot.slane %v203, 1
  %v220 = vrot.slane %v204, 1
  %v221 = vrot.slane %v205, 1
  %v222 = vrot.slane %v206, 1
  %v223 = vrot.slane %v207, 1
  %v224 = vrot.slane %v208, 1
  %v225 = vrot.slane %v209, 1
  %v234 = vadd.f32 %v190, %v218
  %v235 = vadd.f32 %v191, %v219
  %v236 = vadd.f32 %v192, %v220
  %v237 = vadd.f32 %v193, %v221
  %v238 = vadd.f32 %v194, %v222
  %v239 = vadd.f32 %v195, %v223
  %v240 = vadd.f32 %v196, %v224
  %v241 = vadd.f32 %v197, %v225
  %v242 = vlaneseq
  %v243 = vshrl.u32 %v242, 7
  %v244 = vsub.s32 0, %v243
  %v245 = vrot.slane %v25, %v244
  %v246 = vmul.f32 %v13, %v245
  %v247 = vmul.f32 %v14, %v245
  %v248 = vmul.f32 %v15, %v245
  %v249 = vmul.f32 %v16, %v245
  %v250 = vmul.f32 %v19, %v245
  %v251 = vmul.f32 %v20, %v245
  %v252 = vmul.f32 %v21, %v245
  %v253 = vmul.f32 %v22, %v245
  %v262 = vrot.slane %v246, 7
  %v263 = vrot.slane %v247, 7
  %v264 = vrot.slane %v248, 7
  %v265 = vrot.slane %v249, 7
  %v266 = vrot.slane %v250, 7
  %v267 = vrot.slane %v251, 7
  %v268 = vrot.slane %v252, 7
  %v269 = vrot.slane %v253, 7
  %v278 = vadd.f32 %v234, %v262
  %v279 = vadd.f32 %v235, %v263
  %v280 = vadd.f32 %v236, %v264
  %v281 = vadd.f32 %v237, %v265
  %v282 = vadd.f32 %v238, %v266
  %v283 = vadd.f32 %v239, %v267
  %v284 = vadd.f32 %v240, %v268
  %v285 = vadd.f32 %v241, %v269
  %v286 = vlaneseq
  %v287 = vshrl.u32 %v286, 7
  %v288 = vsub.s32 1, %v287
  %v289 = vrot.slane %v25, %v288
  %v290 = vmul.f32 %v13, %v289
  %v291 = vmul.f32 %v14, %v289
  %v292 = vmul.f32 %v15, %v289
  %v293 = vmul.f32 %v16, %v289
  %v294 = vmul.f32 %v19, %v289
  %v295 = vmul.f32 %v20, %v289
  %v296 = vmul.f32 %v21, %v289
  %v297 = vmul.f32 %v22, %v289
  %v298 = vadd.f32 %v278, %v290
  %v299 = vadd.f32 %v279, %v291
  %v300 = vadd.f32 %v280, %v292
  %v301 = vadd.f32 %v281, %v293
  %v302 = vadd.f32 %v282, %v294
  %v303 = vadd.f32 %v283, %v295
  %v304 = vadd.f32 %v284, %v296
  %v305 = vadd.f32 %v285, %v297
  %v306 = vlaneseq
  %v307 = vshrl.u32 %v306, 7
  %v308 = vsub.s32 2, %v307
  %v309 = vrot.slane %v25, %v308
  %v310 = vmul.f32 %v13, %v309
  %v311 = vmul.f32 %v14, %v309
  %v312 = vmul.f32 %v15, %v309
  %v313 = vmul.f32 %v16, %v309
  %v314 = vmul.f32 %v19, %v309
  %v315 = vmul.f32 %v20, %v309
  %v316 = vmul.f32 %v21, %v309
  %v317 = vmul.f32 %v22, %v309
  %v326 = vrot.slane %v310, 1
  %v327 = vrot.slane %v311, 1
  %v328 = vrot.slane %v312, 1
  %v329 = vrot.slane %v313, 1
  %v330 = vrot.slane %v314, 1
  %v331 = vrot.slane %v315, 1
  %v332 = vrot.slane %v316, 1
  %v333 = vrot.slane %v317, 1
  %v342 = vadd.f32 %v298, %v326
  %v343 = vadd.f32 %v299, %v327
  %v344 = vadd.f32 %v300, %v328
  %v345 = vadd.f32 %v301, %v329
  %v346 = vadd.f32 %v302, %v330
  %v347 = vadd.f32 %v303, %v331
  %v348 = vadd.f32 %v304, %v332
  %v349 = vadd.f32 %v305, %v333
  %350 = vst [vmem:[%s2 - $0x1] sm:$0x1e] %v342
  %351 = vst [vmem:[%s2 + $0x3] sm:$0x1e] %v343
  %352 = vst [vmem:[%s2 + $0x7] sm:$0x1e] %v344
  %353 = vst [vmem:[%s2 + $0xb] sm:$0x1e] %v345
  %354 = vst [vmem:[%s2 + $0xf] sm:$0x1e] %v346
  %355 = vst [vmem:[%s2 + $0x13] sm:$0x1e] %v347
  %356 = vst [vmem:[%s2 + $0x17] sm:$0x1e] %v348
  %357 = vst [vmem:[%s2 + $0x1b] sm:$0x1e] %v349
  // Predicated region
  $region10: #{srnet_forward.18} parent=0 // pred_check
    _
  $region11: #{srnet_forward.18} parent=0 // pred_check_branch
    %359 = sbr.rel (0) target = $region13
  $region12: #{srnet_forward.18} parent=0 // pred_region
    _
  $region13: #{srnet_forward.18} parent=0 // pred_fallthru
    _
  // Predicated region
  $region14: #{srnet_forward.18} parent=0 // pred_check
    _
  $region15: #{srnet_forward.18} parent=0 // pred_check_branch
    %361 = sbr.rel (0) target = $region17
  $region16: #{srnet_forward.18} parent=0 // pred_region
    _
  $region17: #{srnet_forward.18} parent=0 // pred_fallthru
    _

// kernel: srnet_forward.20
$region0: #{srnet_forward.20}
  #allocation0 [shape = 'u32[]', space=smem, size = 0x4, offset = 0x4, fixed_abs, tag = 'smem constant byte address 0x4 - core index']
  #allocation1 [shape = 'u32[144,128]{1,0:T(1,128)}', space=vmem, size = 0x12000, scoped, tag = 'internal scratch']
  %s0 = inlined_call_operand.vmem [shape: f32[32,256], index: 0, kind: input, shape index: {}]
  %s1 = inlined_call_operand.vmem [shape: bf16[256,128], index: 1, kind: input, shape index: {}]
  %s2 = inlined_call_operand.vmem [shape: f32[1,128], index: 2, kind: input, shape index: {}]
  %s3 = inlined_call_operand.vmem [shape: f32[1,128], index: 3, kind: input, shape index: {}]
  %s4 = inlined_call_operand.vmem [shape: f32[1,128], index: 4, kind: input, shape index: {}]
  %s5 = inlined_call_operand.vmem [shape: f32[32,128], index: 5, kind: output, shape index: {}]
  %s6 = sld [smem:[#allocation0]]
  $region30: #{srnet_forward.20} parent=0
    _
  %s8 = ssub.s32 1, %s6
  %s9 = scalar_select 0, %s8, %s6
  // Predicated region
  $region2: #{srnet_forward.20} parent=0 // pred_check
    _
  $region3: #{srnet_forward.20} parent=0 // pred_check_branch
    %11 = sbr.rel (0) target = $region5
  $region4: #{srnet_forward.20} parent=0 // pred_region
    _
  $region5: #{srnet_forward.20} parent=0 // pred_fallthru
    _
  // Predicated region
  $region6: #{srnet_forward.20} parent=0 // pred_check
    _
  $region7: #{srnet_forward.20} parent=0 // pred_check_branch
    %13 = sbr.rel (0) target = $region9
  $region8: #{srnet_forward.20} parent=0 // pred_region
    _
  $region9: #{srnet_forward.20} parent=0 // pred_fallthru
    _
  // Predicated region
  $region10: #{srnet_forward.20} parent=0 // pred_check
    _
  $region11: #{srnet_forward.20} parent=0 // pred_check_branch
    %15 = sbr.rel (0) target = $region13
  $region12: #{srnet_forward.20} parent=0 // pred_region
    _
  $region13: #{srnet_forward.20} parent=0 // pred_fallthru
    _
  // Predicated region
  $region14: #{srnet_forward.20} parent=0 // pred_check
    _
  $region15: #{srnet_forward.20} parent=0 // pred_check_branch
    %17 = sbr.rel (0) target = $region17
  $region16: #{srnet_forward.20} parent=0 // pred_region
    _
  $region17: #{srnet_forward.20} parent=0 // pred_fallthru
    _
  // Predicated region
  $region18: #{srnet_forward.20} parent=0 // pred_check
    _
  $region19: #{srnet_forward.20} parent=0 // pred_check_branch
    %19 = sbr.rel (0) target = $region21
  $region20: #{srnet_forward.20} parent=0 // pred_region
    _
  $region21: #{srnet_forward.20} parent=0 // pred_fallthru
    _
  %v21 = vld [vmem:[%s0] sm:$0xff]
  %v22 = vld [vmem:[%s0 + $0x8] sm:$0xff]
  %v23 = vld [vmem:[%s0 + $0x10] sm:$0xff]
  %v24 = vld [vmem:[%s0 + $0x18] sm:$0xff]
  %v25 = vld [vmem:[%s0 + $0x20] sm:$0xff]
  %v26 = vld [vmem:[%s0 + $0x28] sm:$0xff]
  %v27 = vld [vmem:[%s0 + $0x30] sm:$0xff]
  %v28 = vld [vmem:[%s0 + $0x38] sm:$0xff]
  %v29 = vpack.c.bf16 %v23, %v21
  %v30 = vpack.c.bf16 %v24, %v22
  %v31 = vpack.c.bf16 %v27, %v25
  %v32 = vpack.c.bf16 %v28, %v26
  %v33 = vld [vmem:[%s1] sm:$0xf]
  %v34 = vld [vmem:[%s1 + $0x4] sm:$0xf]
  %v35 = vld [vmem:[%s1 + $0x8] sm:$0xf]
  %v36 = vld [vmem:[%s1 + $0xc] sm:$0xf]
  %v37 = vld [vmem:[%s1 + $0x10] sm:$0xf]
  %v38 = vld [vmem:[%s1 + $0x14] sm:$0xf]
  %v39 = vld [vmem:[%s1 + $0x18] sm:$0xf]
  %v40 = vld [vmem:[%s1 + $0x1c] sm:$0xf]
  %v41 = vld [vmem:[%s1 + $0x20] sm:$0xf]
  %v42 = vld [vmem:[%s1 + $0x24] sm:$0xf]
  %v43 = vld [vmem:[%s1 + $0x28] sm:$0xf]
  %v44 = vld [vmem:[%s1 + $0x2c] sm:$0xf]
  %v45 = vld [vmem:[%s1 + $0x30] sm:$0xf]
  %v46 = vld [vmem:[%s1 + $0x34] sm:$0xf]
  %v47 = vld [vmem:[%s1 + $0x38] sm:$0xf]
  %v48 = vld [vmem:[%s1 + $0x3c] sm:$0xf]
  %v49 = vld [vmem:[%s1 + $0x40] sm:$0xf]
  %v50 = vld [vmem:[%s1 + $0x44] sm:$0xf]
  %v51 = vld [vmem:[%s1 + $0x48] sm:$0xf]
  %v52 = vld [vmem:[%s1 + $0x4c] sm:$0xf]
  %v53 = vld [vmem:[%s1 + $0x50] sm:$0xf]
  %v54 = vld [vmem:[%s1 + $0x54] sm:$0xf]
  %v55 = vld [vmem:[%s1 + $0x58] sm:$0xf]
  %v56 = vld [vmem:[%s1 + $0x5c] sm:$0xf]
  %v57 = vld [vmem:[%s1 + $0x60] sm:$0xf]
  %v58 = vld [vmem:[%s1 + $0x64] sm:$0xf]
  %v59 = vld [vmem:[%s1 + $0x68] sm:$0xf]
  %v60 = vld [vmem:[%s1 + $0x6c] sm:$0xf]
  %v61 = vld [vmem:[%s1 + $0x70] sm:$0xf]
  %v62 = vld [vmem:[%s1 + $0x74] sm:$0xf]
  %v63 = vld [vmem:[%s1 + $0x78] sm:$0xf]
  %v64 = vld [vmem:[%s1 + $0x7c] sm:$0xf]
  %v97 = vunpack.c.l.b16 %v33
  %v98 = vunpack.c.l.b16 %v34
  %v99 = vunpack.c.l.b16 %v35
  %v100 = vunpack.c.l.b16 %v36
  %v101 = vunpack.c.l.b16 %v37
  %v102 = vunpack.c.l.b16 %v38
  %v103 = vunpack.c.l.b16 %v39
  %v104 = vunpack.c.l.b16 %v40
  %v105 = vunpack.c.l.b16 %v41
  %v106 = vunpack.c.l.b16 %v42
  %v107 = vunpack.c.l.b16 %v43
  %v108 = vunpack.c.l.b16 %v44
  %v109 = vunpack.c.l.b16 %v45
  %v110 = vunpack.c.l.b16 %v46
  %v111 = vunpack.c.l.b16 %v47
  %v112 = vunpack.c.l.b16 %v48
  %v113 = vunpack.c.l.b16 %v49
  %v114 = vunpack.c.l.b16 %v50
  %v115 = vunpack.c.l.b16 %v51
  %v116 = vunpack.c.l.b16 %v52
  %v117 = vunpack.c.l.b16 %v53
  %v118 = vunpack.c.l.b16 %v54
  %v119 = vunpack.c.l.b16 %v55
  %v120 = vunpack.c.l.b16 %v56
  %v121 = vunpack.c.l.b16 %v57
  %v122 = vunpack.c.l.b16 %v58
  %v123 = vunpack.c.l.b16 %v59
  %v124 = vunpack.c.l.b16 %v60
  %v125 = vunpack.c.l.b16 %v61
  %v126 = vunpack.c.l.b16 %v62
  %v127 = vunpack.c.l.b16 %v63
  %v128 = vunpack.c.l.b16 %v64
  %v129 = vpack.c.b16 %v98, %v97
  %v130 = vpack.c.b16 %v100, %v99
  %v131 = vpack.c.b16 %v102, %v101
  %v132 = vpack.c.b16 %v104, %v103
  %v133 = vpack.c.b16 %v106, %v105
  %v134 = vpack.c.b16 %v108, %v107
  %v135 = vpack.c.b16 %v110, %v109
  %v136 = vpack.c.b16 %v112, %v111
  %v137 = vpack.c.b16 %v114, %v113
  %v138 = vpack.c.b16 %v116, %v115
  %v139 = vpack.c.b16 %v118, %v117
  %v140 = vpack.c.b16 %v120, %v119
  %v141 = vpack.c.b16 %v122, %v121
  %v142 = vpack.c.b16 %v124, %v123
  %v143 = vpack.c.b16 %v126, %v125
  %v144 = vpack.c.b16 %v128, %v127
  %161 = vmatprep.subr.bf16.mxu0 0
  %162 = vmatpush1.bf16.msra.mxu0 %v136
  %163 = vmatprep.subr.bf16.mxu0 0
  %164 = vmatpush1.bf16.msra.mxu0 %v135
  %165 = vmatprep.subr.bf16.mxu0 0
  %166 = vmatpush1.bf16.msra.mxu0 %v134
  %167 = vmatprep.subr.bf16.mxu0 0
  %168 = vmatpush1.bf16.msra.mxu0 %v133
  %169 = vmatprep.subr.bf16.mxu0 0
  %170 = vmatpush1.bf16.msra.mxu0 %v132
  %171 = vmatprep.subr.bf16.mxu0 0
  %172 = vmatpush1.bf16.msra.mxu0 %v131
  %173 = vmatprep.subr.bf16.mxu0 0
  %174 = vmatpush1.bf16.msra.mxu0 %v130
  %175 = vmatprep.subr.bf16.mxu0 0
  %176 = vmatpush1.bf16.msra.mxu0 %v129
  %177 = vmatprep.subr.bf16.mxu0 0
  %178 = vmatpush2.bf16.msra.mxu0 %v144
  %179 = vmatprep.subr.bf16.mxu0 0
  %180 = vmatpush2.bf16.msra.mxu0 %v143
  %181 = vmatprep.subr.bf16.mxu0 0
  %182 = vmatpush2.bf16.msra.mxu0 %v142
  %183 = vmatprep.subr.bf16.mxu0 0
  %184 = vmatpush2.bf16.msra.mxu0 %v141
  %185 = vmatprep.subr.bf16.mxu0 0
  %186 = vmatpush2.bf16.msra.mxu0 %v140
  %187 = vmatprep.subr.bf16.mxu0 0
  %188 = vmatpush2.bf16.msra.mxu0 %v139
  %189 = vmatprep.subr.bf16.mxu0 0
  %190 = vmatpush2.bf16.msra.mxu0 %v138
  %191 = vmatprep.subr.bf16.mxu0 0
  %192 = vmatpush2.bf16.msra.mxu0 %v137
  %193 = vmatprep.mubr.bf16.mxu0 %v30
  %194 = vmatmul.mubr.bf16.gmra.mxu0 %v29
  %v195 = vpop.f32.mrf.mxu0
  %v196 = vadd.f32 0.0, %v195
  %v197 = vpop.f32.mrf.mxu0
  %v198 = vpop.f32.mrf.mxu0
  %v199 = vadd.f32 0.0, %v198
  %v200 = vpop.f32.mrf.mxu0
  %201 = vmatprep.mubr.bf16.mxu0 %v32
  %202 = vmatmul.mubr.bf16.gmra.mxu0 %v31
  %v203 = vpop.f32.mrf.mxu0
  %v204 = vadd.f32 0.0, %v203
  %v205 = vpop.f32.mrf.mxu0
  %v206 = vpop.f32.mrf.mxu0
  %v207 = vadd.f32 0.0, %v206
  %v208 = vpop.f32.mrf.mxu0
  %209 = vdwg.mxu0
  %v210 = vld [vmem:[%s2] sm:$0x1]
  %v212 = vlaneseq
  %v213 = vshrl.u32 %v212, 7
  %v214 = vsub.s32 0, %v213
  %v215 = vrot.slane %v210, %v214
  %v217 = vmul.f32 %v196, %v215
  %v218 = vmul.f32 %v199, %v215
  %v219 = vmul.f32 %v204, %v215
  %v220 = vmul.f32 %v207, %v215
  %v221 = vld [vmem:[%s3] sm:$0x1]
  %v223 = vlaneseq
  %v224 = vshrl.u32 %v223, 7
  %v225 = vsub.s32 0, %v224
  %v226 = vrot.slane %v221, %v225
  %v228 = vadd.f32 %v217, %v226
  %v229 = vadd.f32 %v218, %v226
  %v230 = vadd.f32 %v219, %v226
  %v231 = vadd.f32 %v220, %v226
  %232 = vst [vmem:[%s5] sm:$0xff] %v228
  %233 = vst [vmem:[%s5 + $0x8] sm:$0xff] %v229
  %234 = vst [vmem:[%s5 + $0x10] sm:$0xff] %v230
  %235 = vst [vmem:[%s5 + $0x18] sm:$0xff] %v231
  // Predicated region
  $region22: #{srnet_forward.20} parent=0 // pred_check
    _
  $region23: #{srnet_forward.20} parent=0 // pred_check_branch
    %237 = sbr.rel (0) target = $region25
  $region24: #{srnet_forward.20} parent=0 // pred_region
    _
  $region25: #{srnet_forward.20} parent=0 // pred_fallthru
    _
  // Predicated region
  $region26: #{srnet_forward.20} parent=0 // pred_check
    _
  $region27: #{srnet_forward.20} parent=0 // pred_check_branch
    %239 = sbr.rel (0) target = $region29
  $region28: #{srnet_forward.20} parent=0 // pred_region
    _
  $region29: #{srnet_forward.20} parent=0 // pred_fallthru
    _

// kernel: srnet_forward.21
$region0: #{srnet_forward.21}
  #allocation0 [shape = 'u32[]', space=smem, size = 0x4, offset = 0x4, fixed_abs, tag = 'smem constant byte address 0x4 - core index']
  #allocation1 [shape = 'u32[144,128]{1,0:T(1,128)}', space=vmem, size = 0x12000, scoped, tag = 'internal scratch']
  %s0 = inlined_call_operand.vmem [shape: f32[32,1152], index: 0, kind: input, shape index: {}]
  %s1 = inlined_call_operand.vmem [shape: bf16[1152,256], index: 1, kind: input, shape index: {}]
  %s2 = inlined_call_operand.vmem [shape: f32[1,256], index: 2, kind: input, shape index: {}]
  %s3 = inlined_call_operand.vmem [shape: f32[1,256], index: 3, kind: input, shape index: {}]
  %s4 = inlined_call_operand.vmem [shape: f32[1,256], index: 4, kind: input, shape index: {}]
  %s5 = inlined_call_operand.vmem [shape: f32[32,256], index: 5, kind: output, shape index: {}]
  %s6 = sld [smem:[#allocation0]]
  $region30: #{srnet_forward.21} parent=0
    _
  %s8 = ssub.s32 1, %s6
  %s9 = scalar_select 0, %s8, %s6
  // Predicated region
  $region2: #{srnet_forward.21} parent=0 // pred_check
    _
  $region3: #{srnet_forward.21} parent=0 // pred_check_branch
    %11 = sbr.rel (0) target = $region5
  $region4: #{srnet_forward.21} parent=0 // pred_region
    _
  $region5: #{srnet_forward.21} parent=0 // pred_fallthru
    _
  // Predicated region
  $region6: #{srnet_forward.21} parent=0 // pred_check
    _
  $region7: #{srnet_forward.21} parent=0 // pred_check_branch
    %13 = sbr.rel (0) target = $region9
  $region8: #{srnet_forward.21} parent=0 // pred_region
    _
  $region9: #{srnet_forward.21} parent=0 // pred_fallthru
    _
  // Predicated region
  $region10: #{srnet_forward.21} parent=0 // pred_check
    _
  $region11: #{srnet_forward.21} parent=0 // pred_check_branch
    %15 = sbr.rel (0) target = $region13
  $region12: #{srnet_forward.21} parent=0 // pred_region
    _
  $region13: #{srnet_forward.21} parent=0 // pred_fallthru
    _
  // Predicated region
  $region14: #{srnet_forward.21} parent=0 // pred_check
    _
  $region15: #{srnet_forward.21} parent=0 // pred_check_branch
    %17 = sbr.rel (0) target = $region17
  $region16: #{srnet_forward.21} parent=0 // pred_region
    _
  $region17: #{srnet_forward.21} parent=0 // pred_fallthru
    _
  // Predicated region
  $region18: #{srnet_forward.21} parent=0 // pred_check
    _
  $region19: #{srnet_forward.21} parent=0 // pred_check_branch
    %19 = sbr.rel (0) target = $region21
  $region20: #{srnet_forward.21} parent=0 // pred_region
    _
  $region21: #{srnet_forward.21} parent=0 // pred_fallthru
    _
  %v21 = vld [vmem:[%s0] sm:$0xff]
  %v22 = vld [vmem:[%s0 + $0x8] sm:$0xff]
  %v23 = vld [vmem:[%s0 + $0x10] sm:$0xff]
  %v24 = vld [vmem:[%s0 + $0x18] sm:$0xff]
  %v25 = vld [vmem:[%s0 + $0x20] sm:$0xff]
  %v26 = vld [vmem:[%s0 + $0x28] sm:$0xff]
  %v27 = vld [vmem:[%s0 + $0x30] sm:$0xff]
  %v28 = vld [vmem:[%s0 + $0x38] sm:$0xff]
  %v29 = vld [vmem:[%s0 + $0x40] sm:$0xff]
  %v30 = vld [vmem:[%s0 + $0x48] sm:$0xff]
  %v31 = vld [vmem:[%s0 + $0x50] sm:$0xff]
  %v32 = vld [vmem:[%s0 + $0x58] sm:$0xff]
  %v33 = vld [vmem:[%s0 + $0x60] sm:$0xff]
  %v34 = vld [vmem:[%s0 + $0x68] sm:$0xff]
  %v35 = vld [vmem:[%s0 + $0x70] sm:$0xff]
  %v36 = vld [vmem:[%s0 + $0x78] sm:$0xff]
  %v37 = vld [vmem:[%s0 + $0x80] sm:$0xff]
  %v38 = vld [vmem:[%s0 + $0x88] sm:$0xff]
  %v39 = vld [vmem:[%s0 + $0x90] sm:$0xff]
  %v40 = vld [vmem:[%s0 + $0x98] sm:$0xff]
  %v41 = vld [vmem:[%s0 + $0xa0] sm:$0xff]
  %v42 = vld [vmem:[%s0 + $0xa8] sm:$0xff]
  %v43 = vld [vmem:[%s0 + $0xb0] sm:$0xff]
  %v44 = vld [vmem:[%s0 + $0xb8] sm:$0xff]
  %v45 = vld [vmem:[%s0 + $0xc0] sm:$0xff]
  %v46 = vld [vmem:[%s0 + $0xc8] sm:$0xff]
  %v47 = vld [vmem:[%s0 + $0xd0] sm:$0xff]
  %v48 = vld [vmem:[%s0 + $0xd8] sm:$0xff]
  %v49 = vld [vmem:[%s0 + $0xe0] sm:$0xff]
  %v50 = vld [vmem:[%s0 + $0xe8] sm:$0xff]
  %v51 = vld [vmem:[%s0 + $0xf0] sm:$0xff]
  %v52 = vld [vmem:[%s0 + $0xf8] sm:$0xff]
  %v53 = vld [vmem:[%s0 + $0x100] sm:$0xff]
  %v54 = vld [vmem:[%s0 + $0x108] sm:$0xff]
  %v55 = vld [vmem:[%s0 + $0x110] sm:$0xff]
  %v56 = vld [vmem:[%s0 + $0x118] sm:$0xff]
  %v57 = vpack.c.bf16 %v30, %v21
  %v58 = vpack.c.bf16 %v31, %v22
  %v59 = vpack.c.bf16 %v32, %v23
  %v60 = vpack.c.bf16 %v33, %v24
  %v61 = vpack.c.bf16 %v34, %v25
  %v62 = vpack.c.bf16 %v35, %v26
  %v63 = vpack.c.bf16 %v36, %v27
  %v64 = vpack.c.bf16 %v37, %v28
  %v65 = vpack.c.bf16 %v38, %v29
  %v66 = vpack.c.bf16 %v48, %v39
  %v67 = vpack.c.bf16 %v49, %v40
  %v68 = vpack.c.bf16 %v50, %v41
  %v69 = vpack.c.bf16 %v51, %v42
  %v70 = vpack.c.bf16 %v52, %v43
  %v71 = vpack.c.bf16 %v53, %v44
  %v72 = vpack.c.bf16 %v54, %v45
  %v73 = vpack.c.bf16 %v55, %v46
  %v74 = vpack.c.bf16 %v56, %v47
  %v75 = vld [vmem:[%s1] sm:$0xff]
  %v76 = vld [vmem:[%s1 + $0x8] sm:$0xff]
  %v77 = vld [vmem:[%s1 + $0x10] sm:$0xff]
  %v78 = vld [vmem:[%s1 + $0x18] sm:$0xff]
  %v79 = vld [vmem:[%s1 + $0x20] sm:$0xff]
  %v80 = vld [vmem:[%s1 + $0x28] sm:$0xff]
  %v81 = vld [vmem:[%s1 + $0x30] sm:$0xff]
  %v82 = vld [vmem:[%s1 + $0x38] sm:$0xff]
  %v83 = vld [vmem:[%s1 + $0x40] sm:$0xff]
  %v84 = vld [vmem:[%s1 + $0x48] sm:$0xff]
  %v85 = vld [vmem:[%s1 + $0x50] sm:$0xff]
  %v86 = vld [vmem:[%s1 + $0x58] sm:$0xff]
  %v87 = vld [vmem:[%s1 + $0x60] sm:$0xff]
  %v88 = vld [vmem:[%s1 + $0x68] sm:$0xff]
  %v89 = vld [vmem:[%s1 + $0x70] sm:$0xff]
  %v90 = vld [vmem:[%s1 + $0x78] sm:$0xff]
  %v91 = vld [vmem:[%s1 + $0x80] sm:$0xff]
  %v92 = vld [vmem:[%s1 + $0x88] sm:$0xff]
  %v93 = vld [vmem:[%s1 + $0x90] sm:$0xff]
  %v94 = vld [vmem:[%s1 + $0x98] sm:$0xff]
  %v95 = vld [vmem:[%s1 + $0xa0] sm:$0xff]
  %v96 = vld [vmem:[%s1 + $0xa8] sm:$0xff]
  %v97 = vld [vmem:[%s1 + $0xb0] sm:$0xff]
  %v98 = vld [vmem:[%s1 + $0xb8] sm:$0xff]
  %v99 = vld [vmem:[%s1 + $0xc0] sm:$0xff]
  %v100 = vld [vmem:[%s1 + $0xc8] sm:$0xff]
  %v101 = vld [vmem:[%s1 + $0xd0] sm:$0xff]
  %v102 = vld [vmem:[%s1 + $0xd8] sm:$0xff]
  %v103 = vld [vmem:[%s1 + $0xe0] sm:$0xff]
  %v104 = vld [vmem:[%s1 + $0xe8] sm:$0xff]
  %v105 = vld [vmem:[%s1 + $0xf0] sm:$0xff]
  %v106 = vld [vmem:[%s1 + $0xf8] sm:$0xff]
  %v107 = vld [vmem:[%s1 + $0x100] sm:$0xff]
  %v108 = vld [vmem:[%s1 + $0x108] sm:$0xff]
  %v109 = vld [vmem:[%s1 + $0x110] sm:$0xff]
  %v110 = vld [vmem:[%s1 + $0x118] sm:$0xff]
  %v111 = vld [vmem:[%s1 + $0x120] sm:$0xff]
  %v112 = vld [vmem:[%s1 + $0x128] sm:$0xff]
  %v113 = vld [vmem:[%s1 + $0x130] sm:$0xff]
  %v114 = vld [vmem:[%s1 + $0x138] sm:$0xff]
  %v115 = vld [vmem:[%s1 + $0x140] sm:$0xff]
  %v116 = vld [vmem:[%s1 + $0x148] sm:$0xff]
  %v117 = vld [vmem:[%s1 + $0x150] sm:$0xff]
  %v118 = vld [vmem:[%s1 + $0x158] sm:$0xff]
  %v119 = vld [vmem:[%s1 + $0x160] sm:$0xff]
  %v120 = vld [vmem:[%s1 + $0x168] sm:$0xff]
  %v121 = vld [vmem:[%s1 + $0x170] sm:$0xff]
  %v122 = vld [vmem:[%s1 + $0x178] sm:$0xff]
  %v123 = vld [vmem:[%s1 + $0x180] sm:$0xff]
  %v124 = vld [vmem:[%s1 + $0x188] sm:$0xff]
  %v125 = vld [vmem:[%s1 + $0x190] sm:$0xff]
  %v126 = vld [vmem:[%s1 + $0x198] sm:$0xff]
  %v127 = vld [vmem:[%s1 + $0x1a0] sm:$0xff]
  %v128 = vld [vmem:[%s1 + $0x1a8] sm:$0xff]
  %v129 = vld [vmem:[%s1 + $0x1b0] sm:$0xff]
  %v130 = vld [vmem:[%s1 + $0x1b8] sm:$0xff]
  %v131 = vld [vmem:[%s1 + $0x1c0] sm:$0xff]
  %v132 = vld [vmem:[%s1 + $0x1c8] sm:$0xff]
  %v133 = vld [vmem:[%s1 + $0x1d0] sm:$0xff]
  %v134 = vld [vmem:[%s1 + $0x1d8] sm:$0xff]
  %v135 = vld [vmem:[%s1 + $0x1e0] sm:$0xff]
  %v136 = vld [vmem:[%s1 + $0x1e8] sm:$0xff]
  %v137 = vld [vmem:[%s1 + $0x1f0] sm:$0xff]
  %v138 = vld [vmem:[%s1 + $0x1f8] sm:$0xff]
  %v139 = vld [vmem:[%s1 + $0x200] sm:$0xff]
  %v140 = vld [vmem:[%s1 + $0x208] sm:$0xff]
  %v141 = vld [vmem:[%s1 + $0x210] sm:$0xff]
  %v142 = vld [vmem:[%s1 + $0x218] sm:$0xff]
  %v143 = vld [vmem:[%s1 + $0x220] sm:$0xff]
  %v144 = vld [vmem:[%s1 + $0x228] sm:$0xff]
  %v145 = vld [vmem:[%s1 + $0x230] sm:$0xff]
  %v146 = vld [vmem:[%s1 + $0x238] sm:$0xff]
  %v147 = vld [vmem:[%s1 + $0x240] sm:$0xff]
  %v148 = vld [vmem:[%s1 + $0x248] sm:$0xff]
  %v149 = vld [vmem:[%s1 + $0x250] sm:$0xff]
  %v150 = vld [vmem:[%s1 + $0x258] sm:$0xff]
  %v151 = vld [vmem:[%s1 + $0x260] sm:$0xff]
  %v152 = vld [vmem:[%s1 + $0x268] sm:$0xff]
  %v153 = vld [vmem:[%s1 + $0x270] sm:$0xff]
  %v154 = vld [vmem:[%s1 + $0x278] sm:$0xff]
  %v155 = vld [vmem:[%s1 + $0x280] sm:$0xff]
  %v156 = vld [vmem:[%s1 + $0x288] sm:$0xff]
  %v157 = vld [vmem:[%s1 + $0x290] sm:$0xff]
  %v158 = vld [vmem:[%s1 + $0x298] sm:$0xff]
  %v159 = vld [vmem:[%s1 + $0x2a0] sm:$0xff]
  %v160 = vld [vmem:[%s1 + $0x2a8] sm:$0xff]
  %v161 = vld [vmem:[%s1 + $0x2b0] sm:$0xff]
  %v162 = vld [vmem:[%s1 + $0x2b8] sm:$0xff]
  %v163 = vld [vmem:[%s1 + $0x2c0] sm:$0xff]
  %v164 = vld [vmem:[%s1 + $0x2c8] sm:$0xff]
  %v165 = vld [vmem:[%s1 + $0x2d0] sm:$0xff]
  %v166 = vld [vmem:[%s1 + $0x2d8] sm:$0xff]
  %v167 = vld [vmem:[%s1 + $0x2e0] sm:$0xff]
  %v168 = vld [vmem:[%s1 + $0x2e8] sm:$0xff]
  %v169 = vld [vmem:[%s1 + $0x2f0] sm:$0xff]
  %v170 = vld [vmem:[%s1 + $0x2f8] sm:$0xff]
  %v171 = vld [vmem:[%s1 + $0x300] sm:$0xff]
  %v172 = vld [vmem:[%s1 + $0x308] sm:$0xff]
  %v173 = vld [vmem:[%s1 + $0x310] sm:$0xff]
  %v174 = vld [vmem:[%s1 + $0x318] sm:$0xff]
  %v175 = vld [vmem:[%s1 + $0x320] sm:$0xff]
  %v176 = vld [vmem:[%s1 + $0x328] sm:$0xff]
  %v177 = vld [vmem:[%s1 + $0x330] sm:$0xff]
  %v178 = vld [vmem:[%s1 + $0x338] sm:$0xff]
  %v179 = vld [vmem:[%s1 + $0x340] sm:$0xff]
  %v180 = vld [vmem:[%s1 + $0x348] sm:$0xff]
  %v181 = vld [vmem:[%s1 + $0x350] sm:$0xff]
  %v182 = vld [vmem:[%s1 + $0x358] sm:$0xff]
  %v183 = vld [vmem:[%s1 + $0x360] sm:$0xff]
  %v184 = vld [vmem:[%s1 + $0x368] sm:$0xff]
  %v185 = vld [vmem:[%s1 + $0x370] sm:$0xff]
  %v186 = vld [vmem:[%s1 + $0x378] sm:$0xff]
  %v187 = vld [vmem:[%s1 + $0x380] sm:$0xff]
  %v188 = vld [vmem:[%s1 + $0x388] sm:$0xff]
  %v189 = vld [vmem:[%s1 + $0x390] sm:$0xff]
  %v190 = vld [vmem:[%s1 + $0x398] sm:$0xff]
  %v191 = vld [vmem:[%s1 + $0x3a0] sm:$0xff]
  %v192 = vld [vmem:[%s1 + $0x3a8] sm:$0xff]
  %v193 = vld [vmem:[%s1 + $0x3b0] sm:$0xff]
  %v194 = vld [vmem:[%s1 + $0x3b8] sm:$0xff]
  %v195 = vld [vmem:[%s1 + $0x3c0] sm:$0xff]
  %v196 = vld [vmem:[%s1 + $0x3c8] sm:$0xff]
  %v197 = vld [vmem:[%s1 + $0x3d0] sm:$0xff]
  %v198 = vld [vmem:[%s1 + $0x3d8] sm:$0xff]
  %v199 = vld [vmem:[%s1 + $0x3e0] sm:$0xff]
  %v200 = vld [vmem:[%s1 + $0x3e8] sm:$0xff]
  %v201 = vld [vmem:[%s1 + $0x3f0] sm:$0xff]
  %v202 = vld [vmem:[%s1 + $0x3f8] sm:$0xff]
  %v203 = vld [vmem:[%s1 + $0x400] sm:$0xff]
  %v204 = vld [vmem:[%s1 + $0x408] sm:$0xff]
  %v205 = vld [vmem:[%s1 + $0x410] sm:$0xff]
  %v206 = vld [vmem:[%s1 + $0x418] sm:$0xff]
  %v207 = vld [vmem:[%s1 + $0x420] sm:$0xff]
  %v208 = vld [vmem:[%s1 + $0x428] sm:$0xff]
  %v209 = vld [vmem:[%s1 + $0x430] sm:$0xff]
  %v210 = vld [vmem:[%s1 + $0x438] sm:$0xff]
  %v211 = vld [vmem:[%s1 + $0x440] sm:$0xff]
  %v212 = vld [vmem:[%s1 + $0x448] sm:$0xff]
  %v213 = vld [vmem:[%s1 + $0x450] sm:$0xff]
  %v214 = vld [vmem:[%s1 + $0x458] sm:$0xff]
  %v215 = vld [vmem:[%s1 + $0x460] sm:$0xff]
  %v216 = vld [vmem:[%s1 + $0x468] sm:$0xff]
  %v217 = vld [vmem:[%s1 + $0x470] sm:$0xff]
  %v218 = vld [vmem:[%s1 + $0x478] sm:$0xff]
  %v363 = vunpack.c.l.b16 %v75
  %v364 = vunpack.c.h.b16 %v75
  %v365 = vunpack.c.l.b16 %v76
  %v366 = vunpack.c.h.b16 %v76
  %v367 = vunpack.c.l.b16 %v77
  %v368 = vunpack.c.h.b16 %v77
  %v369 = vunpack.c.l.b16 %v78
  %v370 = vunpack.c.h.b16 %v78
  %v371 = vunpack.c.l.b16 %v79
  %v372 = vunpack.c.h.b16 %v79
  %v373 = vunpack.c.l.b16 %v80
  %v374 = vunpack.c.h.b16 %v80
  %v375 = vunpack.c.l.b16 %v81
  %v376 = vunpack.c.h.b16 %v81
  %v377 = vunpack.c.l.b16 %v82
  %v378 = vunpack.c.h.b16 %v82
  %v379 = vunpack.c.l.b16 %v83
  %v380 = vunpack.c.h.b16 %v83
  %v381 = vunpack.c.l.b16 %v84
  %v382 = vunpack.c.h.b16 %v84
  %v383 = vunpack.c.l.b16 %v85
  %v384 = vunpack.c.h.b16 %v85
  %v385 = vunpack.c.l.b16 %v86
  %v386 = vunpack.c.h.b16 %v86
  %v387 = vunpack.c.l.b16 %v87
  %v388 = vunpack.c.h.b16 %v87
  %v389 = vunpack.c.l.b16 %v88
  %v390 = vunpack.c.h.b16 %v88
  %v391 = vunpack.c.l.b16 %v89
  %v392 = vunpack.c.h.b16 %v89
  %v393 = vunpack.c.l.b16 %v90
  %v394 = vunpack.c.h.b16 %v90
  %v395 = vunpack.c.l.b16 %v91
  %v396 = vunpack.c.h.b16 %v91
  %v397 = vunpack.c.l.b16 %v92
  %v398 = vunpack.c.h.b16 %v92
  %v399 = vunpack.c.l.b16 %v93
  %v400 = vunpack.c.h.b16 %v93
  %v401 = vunpack.c.l.b16 %v94
  %v402 = vunpack.c.h.b16 %v94
  %v403 = vunpack.c.l.b16 %v95
  %v404 = vunpack.c.h.b16 %v95
  %v405 = vunpack.c.l.b16 %v96
  %v406 = vunpack.c.h.b16 %v96
  %v407 = vunpack.c.l.b16 %v97
  %v408 = vunpack.c.h.b16 %v97
  %v409 = vunpack.c.l.b16 %v98
  %v410 = vunpack.c.h.b16 %v98
  %v411 = vunpack.c.l.b16 %v99
  %v412 = vunpack.c.h.b16 %v99
  %v413 = vunpack.c.l.b16 %v100
  %v414 = vunpack.c.h.b16 %v100
  %v415 = vunpack.c.l.b16 %v101
  %v416 = vunpack.c.h.b16 %v101
  %v417 = vunpack.c.l.b16 %v102
  %v418 = vunpack.c.h.b16 %v102
  %v419 = vunpack.c.l.b16 %v103
  %v420 = vunpack.c.h.b16 %v103
  %v421 = vunpack.c.l.b16 %v104
  %v422 = vunpack.c.h.b16 %v104
  %v423 = vunpack.c.l.b16 %v105
  %v424 = vunpack.c.h.b16 %v105
  %v425 = vunpack.c.l.b16 %v106
  %v426 = vunpack.c.h.b16 %v106
  %v427 = vunpack.c.l.b16 %v107
  %v428 = vunpack.c.h.b16 %v107
  %v429 = vunpack.c.l.b16 %v108
  %v430 = vunpack.c.h.b16 %v108
  %v431 = vunpack.c.l.b16 %v109
  %v432 = vunpack.c.h.b16 %v109
  %v433 = vunpack.c.l.b16 %v110
  %v434 = vunpack.c.h.b16 %v110
  %v435 = vunpack.c.l.b16 %v111
  %v436 = vunpack.c.h.b16 %v111
  %v437 = vunpack.c.l.b16 %v112
  %v438 = vunpack.c.h.b16 %v112
  %v439 = vunpack.c.l.b16 %v113
  %v440 = vunpack.c.h.b16 %v113
  %v441 = vunpack.c.l.b16 %v114
  %v442 = vunpack.c.h.b16 %v114
  %v443 = vunpack.c.l.b16 %v115
  %v444 = vunpack.c.h.b16 %v115
  %v445 = vunpack.c.l.b16 %v116
  %v446 = vunpack.c.h.b16 %v116
  %v447 = vunpack.c.l.b16 %v117
  %v448 = vunpack.c.h.b16 %v117
  %v449 = vunpack.c.l.b16 %v118
  %v450 = vunpack.c.h.b16 %v118
  %v451 = vunpack.c.l.b16 %v119
  %v452 = vunpack.c.h.b16 %v119
  %v453 = vunpack.c.l.b16 %v120
  %v454 = vunpack.c.h.b16 %v120
  %v455 = vunpack.c.l.b16 %v121
  %v456 = vunpack.c.h.b16 %v121
  %v457 = vunpack.c.l.b16 %v122
  %v458 = vunpack.c.h.b16 %v122
  %v459 = vunpack.c.l.b16 %v123
  %v460 = vunpack.c.h.b16 %v123
  %v461 = vunpack.c.l.b16 %v124
  %v462 = vunpack.c.h.b16 %v124
  %v463 = vunpack.c.l.b16 %v125
  %v464 = vunpack.c.h.b16 %v125
  %v465 = vunpack.c.l.b16 %v126
  %v466 = vunpack.c.h.b16 %v126
  %v467 = vunpack.c.l.b16 %v127
  %v468 = vunpack.c.h.b16 %v127
  %v469 = vunpack.c.l.b16 %v128
  %v470 = vunpack.c.h.b16 %v128
  %v471 = vunpack.c.l.b16 %v129
  %v472 = vunpack.c.h.b16 %v129
  %v473 = vunpack.c.l.b16 %v130
  %v474 = vunpack.c.h.b16 %v130
  %v475 = vunpack.c.l.b16 %v131
  %v476 = vunpack.c.h.b16 %v131
  %v477 = vunpack.c.l.b16 %v132
  %v478 = vunpack.c.h.b16 %v132
  %v479 = vunpack.c.l.b16 %v133
  %v480 = vunpack.c.h.b16 %v133
  %v481 = vunpack.c.l.b16 %v134
  %v482 = vunpack.c.h.b16 %v134
  %v483 = vunpack.c.l.b16 %v135
  %v484 = vunpack.c.h.b16 %v135
  %v485 = vunpack.c.l.b16 %v136
  %v486 = vunpack.c.h.b16 %v136
  %v487 = vunpack.c.l.b16 %v137
  %v488 = vunpack.c.h.b16 %v137
  %v489 = vunpack.c.l.b16 %v138
  %v490 = vunpack.c.h.b16 %v138
  %v491 = vunpack.c.l.b16 %v139
  %v492 = vunpack.c.h.b16 %v139
  %v493 = vunpack.c.l.b16 %v140
  %v494 = vunpack.c.h.b16 %v140
  %v495 = vunpack.c.l.b16 %v141
  %v496 = vunpack.c.h.b16 %v141
  %v497 = vunpack.c.l.b16 %v142
  %v498 = vunpack.c.h.b16 %v142
  %v499 = vunpack.c.l.b16 %v143
  %v500 = vunpack.c.h.b16 %v143
  %v501 = vunpack.c.l.b16 %v144
  %v502 = vunpack.c.h.b16 %v144
  %v503 = vunpack.c.l.b16 %v145
  %v504 = vunpack.c.h.b16 %v145
  %v505 = vunpack.c.l.b16 %v146
  %v506 = vunpack.c.h.b16 %v146
  %v507 = vunpack.c.l.b16 %v147
  %v508 = vunpack.c.h.b16 %v147
  %v509 = vunpack.c.l.b16 %v148
  %v510 = vunpack.c.h.b16 %v148
  %v511 = vunpack.c.l.b16 %v149
  %v512 = vunpack.c.h.b16 %v149
  %v513 = vunpack.c.l.b16 %v150
  %v514 = vunpack.c.h.b16 %v150
  %v515 = vunpack.c.l.b16 %v151
  %v516 = vunpack.c.h.b16 %v151
  %v517 = vunpack.c.l.b16 %v152
  %v518 = vunpack.c.h.b16 %v152
  %v519 = vunpack.c.l.b16 %v153
  %v520 = vunpack.c.h.b16 %v153
  %v521 = vunpack.c.l.b16 %v154
  %v522 = vunpack.c.h.b16 %v154
  %v523 = vunpack.c.l.b16 %v155
  %v524 = vunpack.c.h.b16 %v155
  %v525 = vunpack.c.l.b16 %v156
  %v526 = vunpack.c.h.b16 %v156
  %v527 = vunpack.c.l.b16 %v157
  %v528 = vunpack.c.h.b16 %v157
  %v529 = vunpack.c.l.b16 %v158
  %v530 = vunpack.c.h.b16 %v158
  %v531 = vunpack.c.l.b16 %v159
  %v532 = vunpack.c.h.b16 %v159
  %v533 = vunpack.c.l.b16 %v160
  %v534 = vunpack.c.h.b16 %v160
  %v535 = vunpack.c.l.b16 %v161
  %v536 = vunpack.c.h.b16 %v161
  %v537 = vunpack.c.l.b16 %v162
  %v538 = vunpack.c.h.b16 %v162
  %v539 = vunpack.c.l.b16 %v163
  %v540 = vunpack.c.h.b16 %v163
  %v541 = vunpack.c.l.b16 %v164
  %v542 = vunpack.c.h.b16 %v164
  %v543 = vunpack.c.l.b16 %v165
  %v544 = vunpack.c.h.b16 %v165
  %v545 = vunpack.c.l.b16 %v166
  %v546 = vunpack.c.h.b16 %v166
  %v547 = vunpack.c.l.b16 %v167
  %v548 = vunpack.c.h.b16 %v167
  %v549 = vunpack.c.l.b16 %v168
  %v550 = vunpack.c.h.b16 %v168
  %v551 = vunpack.c.l.b16 %v169
  %v552 = vunpack.c.h.b16 %v169
  %v553 = vunpack.c.l.b16 %v170
  %v554 = vunpack.c.h.b16 %v170
  %v555 = vunpack.c.l.b16 %v171
  %v556 = vunpack.c.h.b16 %v171
  %v557 = vunpack.c.l.b16 %v172
  %v558 = vunpack.c.h.b16 %v172
  %v559 = vunpack.c.l.b16 %v173
  %v560 = vunpack.c.h.b16 %v173
  %v561 = vunpack.c.l.b16 %v174
  %v562 = vunpack.c.h.b16 %v174
  %v563 = vunpack.c.l.b16 %v175
  %v564 = vunpack.c.h.b16 %v175
  %v565 = vunpack.c.l.b16 %v176
  %v566 = vunpack.c.h.b16 %v176
  %v567 = vunpack.c.l.b16 %v177
  %v568 = vunpack.c.h.b16 %v177
  %v569 = vunpack.c.l.b16 %v178
  %v570 = vunpack.c.h.b16 %v178
  %v571 = vunpack.c.l.b16 %v179
  %v572 = vunpack.c.h.b16 %v179
  %v573 = vunpack.c.l.b16 %v180
  %v574 = vunpack.c.h.b16 %v180
  %v575 = vunpack.c.l.b16 %v181
  %v576 = vunpack.c.h.b16 %v181
  %v577 = vunpack.c.l.b16 %v182
  %v578 = vunpack.c.h.b16 %v182
  %v579 = vunpack.c.l.b16 %v183
  %v580 = vunpack.c.h.b16 %v183
  %v581 = vunpack.c.l.b16 %v184
  %v582 = vunpack.c.h.b16 %v184
  %v583 = vunpack.c.l.b16 %v185
  %v584 = vunpack.c.h.b16 %v185
  %v585 = vunpack.c.l.b16 %v186
  %v586 = vunpack.c.h.b16 %v186
  %v587 = vunpack.c.l.b16 %v187
  %v588 = vunpack.c.h.b16 %v187
  %v589 = vunpack.c.l.b16 %v188
  %v590 = vunpack.c.h.b16 %v188
  %v591 = vunpack.c.l.b16 %v189
  %v592 = vunpack.c.h.b16 %v189
  %v593 = vunpack.c.l.b16 %v190
  %v594 = vunpack.c.h.b16 %v190
  %v595 = vunpack.c.l.b16 %v191
  %v596 = vunpack.c.h.b16 %v191
  %v597 = vunpack.c.l.b16 %v192
  %v598 = vunpack.c.h.b16 %v192
  %v599 = vunpack.c.l.b16 %v193
  %v600 = vunpack.c.h.b16 %v193
  %v601 = vunpack.c.l.b16 %v194
  %v602 = vunpack.c.h.b16 %v194
  %v603 = vunpack.c.l.b16 %v195
  %v604 = vunpack.c.h.b16 %v195
  %v605 = vunpack.c.l.b16 %v196
  %v606 = vunpack.c.h.b16 %v196
  %v607 = vunpack.c.l.b16 %v197
  %v608 = vunpack.c.h.b16 %v197
  %v609 = vunpack.c.l.b16 %v198
  %v610 = vunpack.c.h.b16 %v198
  %v611 = vunpack.c.l.b16 %v199
  %v612 = vunpack.c.h.b16 %v199
  %v613 = vunpack.c.l.b16 %v200
  %v614 = vunpack.c.h.b16 %v200
  %v615 = vunpack.c.l.b16 %v201
  %v616 = vunpack.c.h.b16 %v201
  %v617 = vunpack.c.l.b16 %v202
  %v618 = vunpack.c.h.b16 %v202
  %v619 = vunpack.c.l.b16 %v203
  %v620 = vunpack.c.h.b16 %v203
  %v621 = vunpack.c.l.b16 %v204
  %v622 = vunpack.c.h.b16 %v204
  %v623 = vunpack.c.l.b16 %v205
  %v624 = vunpack.c.h.b16 %v205
  %v625 = vunpack.c.l.b16 %v206
  %v626 = vunpack.c.h.b16 %v206
  %v627 = vunpack.c.l.b16 %v207
  %v628 = vunpack.c.h.b16 %v207
  %v629 = vunpack.c.l.b16 %v208
  %v630 = vunpack.c.h.b16 %v208
  %v631 = vunpack.c.l.b16 %v209
  %v632 = vunpack.c.h.b16 %v209
  %v633 = vunpack.c.l.b16 %v210
  %v634 = vunpack.c.h.b16 %v210
  %v635 = vunpack.c.l.b16 %v211
  %v636 = vunpack.c.h.b16 %v211
  %v637 = vunpack.c.l.b16 %v212
  %v638 = vunpack.c.h.b16 %v212
  %v639 = vunpack.c.l.b16 %v213
  %v640 = vunpack.c.h.b16 %v213
  %v641 = vunpack.c.l.b16 %v214
  %v642 = vunpack.c.h.b16 %v214
  %v643 = vunpack.c.l.b16 %v215
  %v644 = vunpack.c.h.b16 %v215
  %v645 = vunpack.c.l.b16 %v216
  %v646 = vunpack.c.h.b16 %v216
  %v647 = vunpack.c.l.b16 %v217
  %v648 = vunpack.c.h.b16 %v217
  %v649 = vunpack.c.l.b16 %v218
  %v650 = vunpack.c.h.b16 %v218
  %v651 = vpack.c.b16 %v365, %v363
  %v652 = vpack.c.b16 %v366, %v364
  %v653 = vpack.c.b16 %v369, %v367
  %v654 = vpack.c.b16 %v370, %v368
  %v655 = vpack.c.b16 %v373, %v371
  %v656 = vpack.c.b16 %v374, %v372
  %v657 = vpack.c.b16 %v377, %v375
  %v658 = vpack.c.b16 %v378, %v376
  %v659 = vpack.c.b16 %v381, %v379
  %v660 = vpack.c.b16 %v382, %v380
  %v661 = vpack.c.b16 %v385, %v383
  %v662 = vpack.c.b16 %v386, %v384
  %v663 = vpack.c.b16 %v389, %v387
  %v664 = vpack.c.b16 %v390, %v388
  %v665 = vpack.c.b16 %v393, %v391
  %v666 = vpack.c.b16 %v394, %v392
  %v667 = vpack.c.b16 %v397, %v395
  %v668 = vpack.c.b16 %v398, %v396
  %v669 = vpack.c.b16 %v401, %v399
  %v670 = vpack.c.b16 %v402, %v400
  %v671 = vpack.c.b16 %v405, %v403
  %v672 = vpack.c.b16 %v406, %v404
  %v673 = vpack.c.b16 %v409, %v407
  %v674 = vpack.c.b16 %v410, %v408
  %v675 = vpack.c.b16 %v413, %v411
  %v676 = vpack.c.b16 %v414, %v412
  %v677 = vpack.c.b16 %v417, %v415
  %v678 = vpack.c.b16 %v418, %v416
  %v679 = vpack.c.b16 %v421, %v419
  %v680 = vpack.c.b16 %v422, %v420
  %v681 = vpack.c.b16 %v425, %v423
  %v682 = vpack.c.b16 %v426, %v424
  %v683 = vpack.c.b16 %v429, %v427
  %v684 = vpack.c.b16 %v430, %v428
  %v685 = vpack.c.b16 %v433, %v431
  %v686 = vpack.c.b16 %v434, %v432
  %v687 = vpack.c.b16 %v437, %v435
  %v688 = vpack.c.b16 %v438, %v436
  %v689 = vpack.c.b16 %v441, %v439
  %v690 = vpack.c.b16 %v442, %v440
  %v691 = vpack.c.b16 %v445, %v443
  %v692 = vpack.c.b16 %v446, %v444
  %v693 = vpack.c.b16 %v449, %v447
  %v694 = vpack.c.b16 %v450, %v448
  %v695 = vpack.c.b16 %v453, %v451
  %v696 = vpack.c.b16 %v454, %v452
  %v697 = vpack.c.b16 %v457, %v455
  %v698 = vpack.c.b16 %v458, %v456
  %v699 = vpack.c.b16 %v461, %v459
  %v700 = vpack.c.b16 %v462, %v460
  %v701 = vpack.c.b16 %v465, %v463
  %v702 = vpack.c.b16 %v466, %v464
  %v703 = vpack.c.b16 %v469, %v467
  %v704 = vpack.c.b16 %v470, %v468
  %v705 = vpack.c.b16 %v473, %v471
  %v706 = vpack.c.b16 %v474, %v472
  %v707 = vpack.c.b16 %v477, %v475
  %v708 = vpack.c.b16 %v478, %v476
  %v709 = vpack.c.b16 %v481, %v479
  %v710 = vpack.c.b16 %v482, %v480
  %v711 = vpack.c.b16 %v485, %v483
  %v712 = vpack.c.b16 %v486, %v484
  %v713 = vpack.c.b16 %v489, %v487
  %v714 = vpack.c.b16 %v490, %v488
  %v715 = vpack.c.b16 %v493, %v491
  %v716 = vpack.c.b16 %v494, %v492
  %v717 = vpack.c.b16 %v497, %v495
  %v718 = vpack.c.b16 %v498, %v496
  %v719 = vpack.c.b16 %v501, %v499
  %v720 = vpack.c.b16 %v502, %v500
  %v721 = vpack.c.b16 %v505, %v503
  %v722 = vpack.c.b16 %v506, %v504
  %v723 = vpack.c.b16 %v509, %v507
  %v724 = vpack.c.b16 %v510, %v508
  %v725 = vpack.c.b16 %v513, %v511
  %v726 = vpack.c.b16 %v514, %v512
  %v727 = vpack.c.b16 %v517, %v515
  %v728 = vpack.c.b16 %v518, %v516
  %v729 = vpack.c.b16 %v521, %v519
  %v730 = vpack.c.b16 %v522, %v520
  %v731 = vpack.c.b16 %v525, %v523
  %v732 = vpack.c.b16 %v526, %v524
  %v733 = vpack.c.b16 %v529, %v527
  %v734 = vpack.c.b16 %v530, %v528
  %v735 = vpack.c.b16 %v533, %v531
  %v736 = vpack.c.b16 %v534, %v532
  %v737 = vpack.c.b16 %v537, %v535
  %v738 = vpack.c.b16 %v538, %v536
  %v739 = vpack.c.b16 %v541, %v539
  %v740 = vpack.c.b16 %v542, %v540
  %v741 = vpack.c.b16 %v545, %v543
  %v742 = vpack.c.b16 %v546, %v544
  %v743 = vpack.c.b16 %v549, %v547
  %v744 = vpack.c.b16 %v550, %v548
  %v745 = vpack.c.b16 %v553, %v551
  %v746 = vpack.c.b16 %v554, %v552
  %v747 = vpack.c.b16 %v557, %v555
  %v748 = vpack.c.b16 %v558, %v556
  %v749 = vpack.c.b16 %v561, %v559
  %v750 = vpack.c.b16 %v562, %v560
  %v751 = vpack.c.b16 %v565, %v563
  %v752 = vpack.c.b16 %v566, %v564
  %v753 = vpack.c.b16 %v569, %v567
  %v754 = vpack.c.b16 %v570, %v568
  %v755 = vpack.c.b16 %v573, %v571
  %v756 = vpack.c.b16 %v574, %v572
  %v757 = vpack.c.b16 %v577, %v575
  %v758 = vpack.c.b16 %v578, %v576
  %v759 = vpack.c.b16 %v581, %v579
  %v760 = vpack.c.b16 %v582, %v580
  %v761 = vpack.c.b16 %v585, %v583
  %v762 = vpack.c.b16 %v586, %v584
  %v763 = vpack.c.b16 %v589, %v587
  %v764 = vpack.c.b16 %v590, %v588
  %v765 = vpack.c.b16 %v593, %v591
  %v766 = vpack.c.b16 %v594, %v592
  %v767 = vpack.c.b16 %v597, %v595
  %v768 = vpack.c.b16 %v598, %v596
  %v769 = vpack.c.b16 %v601, %v599
  %v770 = vpack.c.b16 %v602, %v600
  %v771 = vpack.c.b16 %v605, %v603
  %v772 = vpack.c.b16 %v606, %v604
  %v773 = vpack.c.b16 %v609, %v607
  %v774 = vpack.c.b16 %v610, %v608
  %v775 = vpack.c.b16 %v613, %v611
  %v776 = vpack.c.b16 %v614, %v612
  %v777 = vpack.c.b16 %v617, %v615
  %v778 = vpack.c.b16 %v618, %v616
  %v779 = vpack.c.b16 %v621, %v619
  %v780 = vpack.c.b16 %v622, %v620
  %v781 = vpack.c.b16 %v625, %v623
  %v782 = vpack.c.b16 %v626, %v624
  %v783 = vpack.c.b16 %v629, %v627
  %v784 = vpack.c.b16 %v630, %v628
  %v785 = vpack.c.b16 %v633, %v631
  %v786 = vpack.c.b16 %v634, %v632
  %v787 = vpack.c.b16 %v637, %v635
  %v788 = vpack.c.b16 %v638, %v636
  %v789 = vpack.c.b16 %v641, %v639
  %v790 = vpack.c.b16 %v642, %v640
  %v791 = vpack.c.b16 %v645, %v643
  %v792 = vpack.c.b16 %v646, %v644
  %v793 = vpack.c.b16 %v649, %v647
  %v794 = vpack.c.b16 %v650, %v648
  %939 = vmatprep.subr.bf16.mxu0 %v666
  %940 = vmatpush1.bf16.msra.mxu0 %v665
  %941 = vmatprep.subr.bf16.mxu0 %v664
  %942 = vmatpush1.bf16.msra.mxu0 %v663
  %943 = vmatprep.subr.bf16.mxu0 %v662
  %944 = vmatpush1.bf16.msra.mxu0 %v661
  %945 = vmatprep.subr.bf16.mxu0 %v660
  %946 = vmatpush1.bf16.msra.mxu0 %v659
  %947 = vmatprep.subr.bf16.mxu0 %v658
  %948 = vmatpush1.bf16.msra.mxu0 %v657
  %949 = vmatprep.subr.bf16.mxu0 %v656
  %950 = vmatpush1.bf16.msra.mxu0 %v655
  %951 = vmatprep.subr.bf16.mxu0 %v654
  %952 = vmatpush1.bf16.msra.mxu0 %v653
  %953 = vmatprep.subr.bf16.mxu0 %v652
  %954 = vmatpush1.bf16.msra.mxu0 %v651
  %955 = vmatprep.subr.bf16.mxu0 %v682
  %956 = vmatpush2.bf16.msra.mxu0 %v681
  %957 = vmatprep.subr.bf16.mxu0 %v680
  %958 = vmatpush2.bf16.msra.mxu0 %v679
  %959 = vmatprep.subr.bf16.mxu0 %v678
  %960 = vmatpush2.bf16.msra.mxu0 %v677
  %961 = vmatprep.subr.bf16.mxu0 %v676
  %962 = vmatpush2.bf16.msra.mxu0 %v675
  %963 = vmatprep.subr.bf16.mxu0 %v674
  %964 = vmatpush2.bf16.msra.mxu0 %v673
  %965 = vmatprep.subr.bf16.mxu0 %v672
  %966 = vmatpush2.bf16.msra.mxu0 %v671
  %967 = vmatprep.subr.bf16.mxu0 %v670
  %968 = vmatpush2.bf16.msra.mxu0 %v669
  %969 = vmatprep.subr.bf16.mxu0 %v668
  %970 = vmatpush2.bf16.msra.mxu0 %v667
  %971 = vmatprep.mubr.bf16.mxu0 %v58
  %972 = vmatmul.mubr.bf16.gmra.mxu0 %v57
  %v973 = vpop.f32.mrf.mxu0
  %v974 = vadd.f32 0.0, %v973
  %v975 = vpop.f32.mrf.mxu0
  %v976 = vadd.f32 0.0, %v975
  %v977 = vpop.f32.mrf.mxu0
  %v978 = vadd.f32 0.0, %v977
  %v979 = vpop.f32.mrf.mxu0
  %v980 = vadd.f32 0.0, %v979
  %981 = vmatprep.mubr.bf16.mxu0 %v67
  %982 = vmatmul.mubr.bf16.gmra.mxu0 %v66
  %v983 = vpop.f32.mrf.mxu0
  %v984 = vadd.f32 0.0, %v983
  %v985 = vpop.f32.mrf.mxu0
  %v986 = vadd.f32 0.0, %v985
  %v987 = vpop.f32.mrf.mxu0
  %v988 = vadd.f32 0.0, %v987
  %v989 = vpop.f32.mrf.mxu0
  %v990 = vadd.f32 0.0, %v989
  %991 = vdwg.mxu0
  %992 = vmatprep.subr.bf16.mxu0 %v698
  %993 = vmatpush1.bf16.msra.mxu0 %v697
  %994 = vmatprep.subr.bf16.mxu0 %v696
  %995 = vmatpush1.bf16.msra.mxu0 %v695
  %996 = vmatprep.subr.bf16.mxu0 %v694
  %997 = vmatpush1.bf16.msra.mxu0 %v693
  %998 = vmatprep.subr.bf16.mxu0 %v692
  %999 = vmatpush1.bf16.msra.mxu0 %v691
  %1000 = vmatprep.subr.bf16.mxu0 %v690
  %1001 = vmatpush1.bf16.msra.mxu0 %v689
  %1002 = vmatprep.subr.bf16.mxu0 %v688
  %1003 = vmatpush1.bf16.msra.mxu0 %v687
  %1004 = vmatprep.subr.bf16.mxu0 %v686
  %1005 = vmatpush1.bf16.msra.mxu0 %v685
  %1006 = vmatprep.subr.bf16.mxu0 %v684
  %1007 = vmatpush1.bf16.msra.mxu0 %v683
  %1008 = vmatprep.subr.bf16.mxu0 %v714
  %1009 = vmatpush2.bf16.msra.mxu0 %v713
  %1010 = vmatprep.subr.bf16.mxu0 %v712
  %1011 = vmatpush2.bf16.msra.mxu0 %v711
  %1012 = vmatprep.subr.bf16.mxu0 %v710
  %1013 = vmatpush2.bf16.msra.mxu0 %v709
  %1014 = vmatprep.subr.bf16.mxu0 %v708
  %1015 = vmatpush2.bf16.msra.mxu0 %v707
  %1016 = vmatprep.subr.bf16.mxu0 %v706
  %1017 = vmatpush2.bf16.msra.mxu0 %v705
  %1018 = vmatprep.subr.bf16.mxu0 %v704
  %1019 = vmatpush2.bf16.msra.mxu0 %v703
  %1020 = vmatprep.subr.bf16.mxu0 %v702
  %1021 = vmatpush2.bf16.msra.mxu0 %v701
  %1022 = vmatprep.subr.bf16.mxu0 %v700
  %1023 = vmatpush2.bf16.msra.mxu0 %v699
  %1024 = vmatprep.mubr.bf16.mxu0 %v60
  %1025 = vmatmul.mubr.bf16.gmra.mxu0 %v59
  %v1026 = vpop.f32.mrf.mxu0
  %v1027 = vadd.f32 %v974, %v1026
  %v1028 = vpop.f32.mrf.mxu0
  %v1029 = vadd.f32 %v976, %v1028
  %v1030 = vpop.f32.mrf.mxu0
  %v1031 = vadd.f32 %v978, %v1030
  %v1032 = vpop.f32.mrf.mxu0
  %v1033 = vadd.f32 %v980, %v1032
  %1034 = vmatprep.mubr.bf16.mxu0 %v69
  %1035 = vmatmul.mubr.bf16.gmra.mxu0 %v68
  %v1036 = vpop.f32.mrf.mxu0
  %v1037 = vadd.f32 %v984, %v1036
  %v1038 = vpop.f32.mrf.mxu0
  %v1039 = vadd.f32 %v986, %v1038
  %v1040 = vpop.f32.mrf.mxu0
  %v1041 = vadd.f32 %v988, %v1040
  %v1042 = vpop.f32.mrf.mxu0
  %v1043 = vadd.f32 %v990, %v1042
  %1044 = vdwg.mxu0
  %1045 = vmatprep.subr.bf16.mxu0 %v730
  %1046 = vmatpush1.bf16.msra.mxu0 %v729
  %1047 = vmatprep.subr.bf16.mxu0 %v728
  %1048 = vmatpush1.bf16.msra.mxu0 %v727
  %1049 = vmatprep.subr.bf16.mxu0 %v726
  %1050 = vmatpush1.bf16.msra.mxu0 %v725
  %1051 = vmatprep.subr.bf16.mxu0 %v724
  %1052 = vmatpush1.bf16.msra.mxu0 %v723
  %1053 = vmatprep.subr.bf16.mxu0 %v722
  %1054 = vmatpush1.bf16.msra.mxu0 %v721
  %1055 = vmatprep.subr.bf16.mxu0 %v720
  %1056 = vmatpush1.bf16.msra.mxu0 %v719
  %1057 = vmatprep.subr.bf16.mxu0 %v718
  %1058 = vmatpush1.bf16.msra.mxu0 %v717
  %1059 = vmatprep.subr.bf16.mxu0 %v716
  %1060 = vmatpush1.bf16.msra.mxu0 %v715
  %1061 = vmatprep.subr.bf16.mxu0 %v746
  %1062 = vmatpush2.bf16.msra.mxu0 %v745
  %1063 = vmatprep.subr.bf16.mxu0 %v744
  %1064 = vmatpush2.bf16.msra.mxu0 %v743
  %1065 = vmatprep.subr.bf16.mxu0 %v742
  %1066 = vmatpush2.bf16.msra.mxu0 %v741
  %1067 = vmatprep.subr.bf16.mxu0 %v740
  %1068 = vmatpush2.bf16.msra.mxu0 %v739
  %1069 = vmatprep.subr.bf16.mxu0 %v738
  %1070 = vmatpush2.bf16.msra.mxu0 %v737
  %1071 = vmatprep.subr.bf16.mxu0 %v736
  %1072 = vmatpush2.bf16.msra.mxu0 %v735
  %1073 = vmatprep.subr.bf16.mxu0 %v734
  %1074 = vmatpush2.bf16.msra.mxu0 %v733
  %1075 = vmatprep.subr.bf16.mxu0 %v732
  %1076 = vmatpush2.bf16.msra.mxu0 %v731
  %1077 = vmatprep.mubr.bf16.mxu0 %v62
  %1078 = vmatmul.mubr.bf16.gmra.mxu0 %v61
  %v1079 = vpop.f32.mrf.mxu0
  %v1080 = vadd.f32 %v1027, %v1079
  %v1081 = vpop.f32.mrf.mxu0
  %v1082 = vadd.f32 %v1029, %v1081
  %v1083 = vpop.f32.mrf.mxu0
  %v1084 = vadd.f32 %v1031, %v1083
  %v1085 = vpop.f32.mrf.mxu0
  %v1086 = vadd.f32 %v1033, %v1085
  %1087 = vmatprep.mubr.bf16.mxu0 %v71
  %1088 = vmatmul.mubr.bf16.gmra.mxu0 %v70
  %v1089 = vpop.f32.mrf.mxu0
  %v1090 = vadd.f32 %v1037, %v1089
  %v1091 = vpop.f32.mrf.mxu0
  %v1092 = vadd.f32 %v1039, %v1091
  %v1093 = vpop.f32.mrf.mxu0
  %v1094 = vadd.f32 %v1041, %v1093
  %v1095 = vpop.f32.mrf.mxu0
  %v1096 = vadd.f32 %v1043, %v1095
  %1097 = vdwg.mxu0
  %1098 = vmatprep.subr.bf16.mxu0 %v762
  %1099 = vmatpush1.bf16.msra.mxu0 %v761
  %1100 = vmatprep.subr.bf16.mxu0 %v760
  %1101 = vmatpush1.bf16.msra.mxu0 %v759
  %1102 = vmatprep.subr.bf16.mxu0 %v758
  %1103 = vmatpush1.bf16.msra.mxu0 %v757
  %1104 = vmatprep.subr.bf16.mxu0 %v756
  %1105 = vmatpush1.bf16.msra.mxu0 %v755
  %1106 = vmatprep.subr.bf16.mxu0 %v754
  %1107 = vmatpush1.bf16.msra.mxu0 %v753
  %1108 = vmatprep.subr.bf16.mxu0 %v752
  %1109 = vmatpush1.bf16.msra.mxu0 %v751
  %1110 = vmatprep.subr.bf16.mxu0 %v750
  %1111 = vmatpush1.bf16.msra.mxu0 %v749
  %1112 = vmatprep.subr.bf16.mxu0 %v748
  %1113 = vmatpush1.bf16.msra.mxu0 %v747
  %1114 = vmatprep.subr.bf16.mxu0 %v778
  %1115 = vmatpush2.bf16.msra.mxu0 %v777
  %1116 = vmatprep.subr.bf16.mxu0 %v776
  %1117 = vmatpush2.bf16.msra.mxu0 %v775
  %1118 = vmatprep.subr.bf16.mxu0 %v774
  %1119 = vmatpush2.bf16.msra.mxu0 %v773
  %1120 = vmatprep.subr.bf16.mxu0 %v772
  %1121 = vmatpush2.bf16.msra.mxu0 %v771
  %1122 = vmatprep.subr.bf16.mxu0 %v770
  %1123 = vmatpush2.bf16.msra.mxu0 %v769
  %1124 = vmatprep.subr.bf16.mxu0 %v768
  %1125 = vmatpush2.bf16.msra.mxu0 %v767
  %1126 = vmatprep.subr.bf16.mxu0 %v766
  %1127 = vmatpush2.bf16.msra.mxu0 %v765
  %1128 = vmatprep.subr.bf16.mxu0 %v764
  %1129 = vmatpush2.bf16.msra.mxu0 %v763
  %1130 = vmatprep.mubr.bf16.mxu0 %v64
  %1131 = vmatmul.mubr.bf16.gmra.mxu0 %v63
  %v1132 = vpop.f32.mrf.mxu0
  %v1133 = vadd.f32 %v1080, %v1132
  %v1134 = vpop.f32.mrf.mxu0
  %v1135 = vadd.f32 %v1082, %v1134
  %v1136 = vpop.f32.mrf.mxu0
  %v1137 = vadd.f32 %v1084, %v1136
  %v1138 = vpop.f32.mrf.mxu0
  %v1139 = vadd.f32 %v1086, %v1138
  %1140 = vmatprep.mubr.bf16.mxu0 %v73
  %1141 = vmatmul.mubr.bf16.gmra.mxu0 %v72
  %v1142 = vpop.f32.mrf.mxu0
  %v1143 = vadd.f32 %v1090, %v1142
  %v1144 = vpop.f32.mrf.mxu0
  %v1145 = vadd.f32 %v1092, %v1144
  %v1146 = vpop.f32.mrf.mxu0
  %v1147 = vadd.f32 %v1094, %v1146
  %v1148 = vpop.f32.mrf.mxu0
  %v1149 = vadd.f32 %v1096, %v1148
  %1150 = vdwg.mxu0
  %1151 = vmatprep.subr.bf16.mxu0 %v794
  %1152 = vmatpush1.bf16.msra.mxu0 %v793
  %1153 = vmatprep.subr.bf16.mxu0 %v792
  %1154 = vmatpush1.bf16.msra.mxu0 %v791
  %1155 = vmatprep.subr.bf16.mxu0 %v790
  %1156 = vmatpush1.bf16.msra.mxu0 %v789
  %1157 = vmatprep.subr.bf16.mxu0 %v788
  %1158 = vmatpush1.bf16.msra.mxu0 %v787
  %1159 = vmatprep.subr.bf16.mxu0 %v786
  %1160 = vmatpush1.bf16.msra.mxu0 %v785
  %1161 = vmatprep.subr.bf16.mxu0 %v784
  %1162 = vmatpush1.bf16.msra.mxu0 %v783
  %1163 = vmatprep.subr.bf16.mxu0 %v782
  %1164 = vmatpush1.bf16.msra.mxu0 %v781
  %1165 = vmatprep.subr.bf16.mxu0 %v780
  %1166 = vmatpush1.bf16.msra.mxu0 %v779
  %1167 = vmatprep.subr.bf16.mxu0 0
  %1168 = vmatpush2.bf16.msra.mxu0 0
  %1169 = vmatprep.subr.bf16.mxu0 0
  %1170 = vmatpush2.bf16.msra.mxu0 0
  %1171 = vmatprep.subr.bf16.mxu0 0
  %1172 = vmatpush2.bf16.msra.mxu0 0
  %1173 = vmatprep.subr.bf16.mxu0 0
  %1174 = vmatpush2.bf16.msra.mxu0 0
  %1175 = vmatprep.subr.bf16.mxu0 0
  %1176 = vmatpush2.bf16.msra.mxu0 0
  %1177 = vmatprep.subr.bf16.mxu0 0
  %1178 = vmatpush2.bf16.msra.mxu0 0
  %1179 = vmatprep.subr.bf16.mxu0 0
  %1180 = vmatpush2.bf16.msra.mxu0 0
  %1181 = vmatprep.subr.bf16.mxu0 0
  %1182 = vmatpush2.bf16.msra.mxu0 0
  %1183 = vmatprep.mubr.bf16.mxu0 0
  %1184 = vmatmul.mubr.bf16.gmra.mxu0 %v65
  %v1185 = vpop.f32.mrf.mxu0
  %v1186 = vadd.f32 %v1133, %v1185
  %v1187 = vpop.f32.mrf.mxu0
  %v1188 = vadd.f32 %v1135, %v1187
  %v1189 = vpop.f32.mrf.mxu0
  %v1190 = vadd.f32 %v1137, %v1189
  %v1191 = vpop.f32.mrf.mxu0
  %v1192 = vadd.f32 %v1139, %v1191
  %1193 = vmatprep.mubr.bf16.mxu0 0
  %1194 = vmatmul.mubr.bf16.gmra.mxu0 %v74
  %v1195 = vpop.f32.mrf.mxu0
  %v1196 = vadd.f32 %v1143, %v1195
  %v1197 = vpop.f32.mrf.mxu0
  %v1198 = vadd.f32 %v1145, %v1197
  %v1199 = vpop.f32.mrf.mxu0
  %v1200 = vadd.f32 %v1147, %v1199
  %v1201 = vpop.f32.mrf.mxu0
  %v1202 = vadd.f32 %v1149, %v1201
  %1203 = vdwg.mxu0
  %v1204 = vld [vmem:[%s2] sm:$0x3]
  %v1206 = vlaneseq
  %v1207 = vshrl.u32 %v1206, 7
  %v1208 = vsub.s32 0, %v1207
  %v1209 = vrot.slane %v1204, %v1208
  %v1210 = vlaneseq
  %v1211 = vshrl.u32 %v1210, 7
  %v1212 = vsub.s32 1, %v1211
  %v1213 = vrot.slane %v1204, %v1212
  %v1216 = vmul.f32 %v1186, %v1209
  %v1217 = vmul.f32 %v1188, %v1213
  %v1218 = vmul.f32 %v1190, %v1209
  %v1219 = vmul.f32 %v1192, %v1213
  %v1220 = vmul.f32 %v1196, %v1209
  %v1221 = vmul.f32 %v1198, %v1213
  %v1222 = vmul.f32 %v1200, %v1209
  %v1223 = vmul.f32 %v1202, %v1213
  %v1224 = vld [vmem:[%s3] sm:$0x3]
  %v1226 = vlaneseq
  %v1227 = vshrl.u32 %v1226, 7
  %v1228 = vsub.s32 0, %v1227
  %v1229 = vrot.slane %v1224, %v1228
  %v1230 = vlaneseq
  %v1231 = vshrl.u32 %v1230, 7
  %v1232 = vsub.s32 1, %v1231
  %v1233 = vrot.slane %v1224, %v1232
  %v1236 = vadd.f32 %v1216, %v1229
  %v1237 = vadd.f32 %v1217, %v1233
  %v1238 = vadd.f32 %v1218, %v1229
  %v1239 = vadd.f32 %v1219, %v1233
  %v1240 = vadd.f32 %v1220, %v1229
  %v1241 = vadd.f32 %v1221, %v1233
  %v1242 = vadd.f32 %v1222, %v1229
  %v1243 = vadd.f32 %v1223, %v1233
  %v1244 = vmul.f32 %v1236, 0.5
  %v1245 = vmul.f32 %v1237, 0.5
  %v1246 = vmul.f32 %v1238, 0.5
  %v1247 = vmul.f32 %v1239, 0.5
  %v1248 = vmul.f32 %v1240, 0.5
  %v1249 = vmul.f32 %v1241, 0.5
  %v1250 = vmul.f32 %v1242, 0.5
  %v1251 = vmul.f32 %v1243, 0.5
  %v1252 = vmul.f32 %v1236, 0.044715
  %v1253 = vmul.f32 %v1237, 0.044715
  %v1254 = vmul.f32 %v1238, 0.044715
  %v1255 = vmul.f32 %v1239, 0.044715
  %v1256 = vmul.f32 %v1240, 0.044715
  %v1257 = vmul.f32 %v1241, 0.044715
  %v1258 = vmul.f32 %v1242, 0.044715
  %v1259 = vmul.f32 %v1243, 0.044715
  %v1260 = vmul.f32 %v1252, %v1236
  %v1261 = vmul.f32 %v1253, %v1237
  %v1262 = vmul.f32 %v1254, %v1238
  %v1263 = vmul.f32 %v1255, %v1239
  %v1264 = vmul.f32 %v1256, %v1240
  %v1265 = vmul.f32 %v1257, %v1241
  %v1266 = vmul.f32 %v1258, %v1242
  %v1267 = vmul.f32 %v1259, %v1243
  %v1268 = vmul.f32 %v1260, %v1236
  %v1269 = vmul.f32 %v1261, %v1237
  %v1270 = vmul.f32 %v1262, %v1238
  %v1271 = vmul.f32 %v1263, %v1239
  %v1272 = vmul.f32 %v1264, %v1240
  %v1273 = vmul.f32 %v1265, %v1241
  %v1274 = vmul.f32 %v1266, %v1242
  %v1275 = vmul.f32 %v1267, %v1243
  %v1276 = vadd.f32 %v1236, %v1268
  %v1277 = vadd.f32 %v1237, %v1269
  %v1278 = vadd.f32 %v1238, %v1270
  %v1279 = vadd.f32 %v1239, %v1271
  %v1280 = vadd.f32 %v1240, %v1272
  %v1281 = vadd.f32 %v1241, %v1273
  %v1282 = vadd.f32 %v1242, %v1274
  %v1283 = vadd.f32 %v1243, %v1275
  %v1284 = vmul.f32 %v1276, 0.7978846
  %v1285 = vmul.f32 %v1277, 0.7978846
  %v1286 = vmul.f32 %v1278, 0.7978846
  %v1287 = vmul.f32 %v1279, 0.7978846
  %v1288 = vmul.f32 %v1280, 0.7978846
  %v1289 = vmul.f32 %v1281, 0.7978846
  %v1290 = vmul.f32 %v1282, 0.7978846
  %v1291 = vmul.f32 %v1283, 0.7978846
  %v1292 = vtanh.pop %v1284
  %v1293 = vtanh.pop %v1285
  %v1294 = vtanh.pop %v1286
  %v1295 = vtanh.pop %v1287
  %v1296 = vtanh.pop %v1288
  %v1297 = vtanh.pop %v1289
  %v1298 = vtanh.pop %v1290
  %v1299 = vtanh.pop %v1291
  %v1300 = vadd.f32 %v1292, 1.0
  %v1301 = vadd.f32 %v1293, 1.0
  %v1302 = vadd.f32 %v1294, 1.0
  %v1303 = vadd.f32 %v1295, 1.0
  %v1304 = vadd.f32 %v1296, 1.0
  %v1305 = vadd.f32 %v1297, 1.0
  %v1306 = vadd.f32 %v1298, 1.0
  %v1307 = vadd.f32 %v1299, 1.0
  %v1308 = vmul.f32 %v1244, %v1300
  %v1309 = vmul.f32 %v1245, %v1301
  %v1310 = vmul.f32 %v1246, %v1302
  %v1311 = vmul.f32 %v1247, %v1303
  %v1312 = vmul.f32 %v1248, %v1304
  %v1313 = vmul.f32 %v1249, %v1305
  %v1314 = vmul.f32 %v1250, %v1306
  %v1315 = vmul.f32 %v1251, %v1307
  %1316 = vst [vmem:[%s5] sm:$0xff] %v1308
  %1317 = vst [vmem:[%s5 + $0x8] sm:$0xff] %v1309
  %1318 = vst [vmem:[%s5 + $0x10] sm:$0xff] %v1310
  %1319 = vst [vmem:[%s5 + $0x18] sm:$0xff] %v1311
  %1320 = vst [vmem:[%s5 + $0x20] sm:$0xff] %v1312
  %1321 = vst [vmem:[%s5 + $0x28] sm:$0xff] %v1313
  %1322 = vst [vmem:[%s5 + $0x30] sm:$0xff] %v1314
  %1323 = vst [vmem:[%s5 + $0x38] sm:$0xff] %v1315
  // Predicated region
  $region22: #{srnet_forward.21} parent=0 // pred_check
    _
  $region23: #{srnet_forward.21} parent=0 // pred_check_branch
    %1325 = sbr.rel (0) target = $region25
  $region24: #{srnet_forward.21} parent=0 // pred_region
    _
  $region25: #{srnet_forward.21} parent=0 // pred_fallthru
    _
  // Predicated region
  $region26: #{srnet_forward.21} parent=0 // pred_check
    _
  $region27: #{srnet_forward.21} parent=0 // pred_check_branch
    %1327 = sbr.rel (0) target = $region29
  $region28: #{srnet_forward.21} parent=0 // pred_region
    _
  $region29: #{srnet_forward.21} parent=0 // pred_fallthru
    _

</llo_original>
